<compile_context>
chip_gen: v7x
topology: tpu7x:2x2x1
jax: 0.10.0
libtpu: 0.0.40
codegen_flags: <defaults>
</compile_context>

<pallas_src>
import functools

import jax
import jax.numpy as jnp
from jax.experimental import pallas as pl
from jax.experimental.pallas import tpu as pltpu


def _round_up(v, m):
    return ((v + m - 1) // m) * m


def _gat_conv_kernel(a_src_ref, a_dst_ref, xph_ref, hmask_ref, bias_ref,
                     colmask_ref, adj_ref, out_ref, m_s, l_s, acc_s, *,
                     heads, tk, negative_slope, apply_elu, apply_log_softmax):
    """One (row-block, source-chunk) grid step of a GATConv layer.

    Online softmax over source chunks: m_s / l_s hold the running max and
    denominator per (head, target row); acc_s holds the un-normalized weighted
    sum for all heads (disjoint column bands)."""
    k = pl.program_id(1)
    nk = pl.num_programs(1)
    neg_big = jnp.float32(-1e30)

    @pl.when(k == 0)
    def _():
        m_s[...] = jnp.full_like(m_s, neg_big)
        l_s[...] = jnp.zeros_like(l_s)
        acc_s[...] = jnp.zeros_like(acc_s)

    edge = adj_ref[...] != 0                              # [tm, tk] (int8 stream)
    a_dst = a_dst_ref[...]                                # [tm, H] f32
    tm = a_dst.shape[0]
    hf_pad = acc_s.shape[1]
    src0 = pl.multiple_of(k * tk, tk)

    upd = jnp.zeros((tm, hf_pad), jnp.float32)
    alpha_cols = jnp.zeros((tm, hf_pad), jnp.float32)
    for h in range(heads):                                # static unroll
        s = a_dst[:, h:h + 1] + a_src_ref[h:h + 1, :]     # [tm, tk] f32
        s = jnp.where(s > 0, s, negative_slope * s)       # LeakyReLU
        s = jnp.where(edge, s, neg_big)                   # mask non-edges
        m_old = m_s[h]                                    # [tm, 1]
        m_new = jnp.maximum(m_old, jnp.max(s, axis=1, keepdims=True))
        alpha = jnp.exp(m_old - m_new)                    # f32, [tm, 1]
        # bf16 exponent on the EUP; masked entries underflow to exactly 0.
        p = jnp.exp((s - m_new).astype(jnp.bfloat16))     # [tm, tk] bf16
        l_s[h] = alpha * l_s[h] + jnp.sum(p.astype(jnp.float32),
                                          axis=1, keepdims=True)
        m_s[h] = m_new
        alpha_cols = alpha_cols + alpha * hmask_ref[h:h + 1, :]
        # xph[h] is column-masked to head h's band, so these matmuls write
        # disjoint bands and their sum reproduces the concat over heads.
        upd = upd + jnp.dot(p, xph_ref[h, pl.ds(src0, tk), :],
                            preferred_element_type=jnp.float32)
    acc_s[...] = acc_s[...] * alpha_cols + upd

    @pl.when(k == nk - 1)
    def _():
        inv = pl.reciprocal(l_s[...], approx=True)        # [H, tm, 1]
        inv_cols = jnp.zeros((tm, hf_pad), jnp.float32)
        for h in range(heads):
            inv_cols = inv_cols + inv[h] * hmask_ref[h:h + 1, :]
        out = acc_s[...] * inv_cols + bias_ref[...]
        if apply_elu:
            out = jnp.where(out > 0, out,
                            jnp.exp(jnp.minimum(out, 0.0)) - 1.0)
        if apply_log_softmax:
            valid = colmask_ref[...] > 0                  # [1, hf_pad]
            msk = jnp.where(valid, out, neg_big)
            mm = jnp.max(msk, axis=1, keepdims=True)
            lse = jnp.log(jnp.sum(jnp.exp(msk - mm), axis=1,
                                  keepdims=True)) + mm
            out = out - lse
        out_ref[...] = out.astype(out_ref.dtype)


def gat_conv(x, w, att_src, att_dst, bias, adj, *, heads, f_out,
             negative_slope=0.2, apply_elu=False, apply_log_softmax=False,
             out_dtype=jnp.float32, block_rows=128, block_cols=512):
    """One GATConv layer (all heads).

    Grid-invariant projection / attention scores / head-masked features are
    hoisted out of the kernel; the kernel only streams the int8 adjacency in
    (tm, tk) blocks plus per-block score vectors, with an online softmax over
    source chunks."""
    n, _ = x.shape
    hf = heads * f_out
    hf_pad = _round_up(hf, 128)                 # lane-dense output width

    # ---- hoisted, grid-invariant precompute (plain XLA, computed once) -----
    x_bf = x.astype(jnp.bfloat16)
    w_bf = w.astype(jnp.bfloat16)
    xp = jnp.dot(x_bf, w_bf, preferred_element_type=jnp.float32)   # [n, hf]
    xp_h = xp.reshape(n, heads, f_out).astype(jnp.bfloat16)
    a_src = jnp.einsum("nhf,hf->hn", xp_h, att_src.astype(jnp.bfloat16),
                       preferred_element_type=jnp.float32)          # [H, n]
    a_dst = jnp.einsum("nhf,hf->nh", xp_h, att_dst.astype(jnp.bfloat16),
                       preferred_element_type=jnp.float32)          # [n, H]

    # ---- tiling: 32-aligned row blocks (int8-friendly) giving >=2 blocks
    #      when possible (megacore); 128-aligned source chunks ---------------
    tm = min(block_rows, _round_up(max((n + 1) // 2, 1), 32))
    tk = min(block_cols, _round_up(n, 128))
    n_rows = _round_up(n, tm)
    n_src = _round_up(n, tk)
    grid = (n_rows // tm, n_src // tk)

    col = jnp.arange(hf_pad)
    hmask = ((col[None, :] // f_out) == jnp.arange(heads)[:, None])
    hmask = (hmask & (col[None, :] < hf)).astype(jnp.float32)       # [H, hf_pad]
    colmask = (col < hf).astype(jnp.float32)[None, :]                # [1, hf_pad]
    bias2d = jnp.zeros((1, hf_pad), jnp.float32).at[0, :hf].set(bias)

    xp_pad = jnp.zeros((n_src, hf_pad), jnp.bfloat16)
    xp_pad = xp_pad.at[:n, :hf].set(xp.astype(jnp.bfloat16))
    # Per-head column-masked projected features, hoisted out of the kernel.
    xph = xp_pad[None, :, :] * hmask[:, None, :].astype(jnp.bfloat16)

    a_src_p = jnp.zeros((heads, n_src), jnp.float32).at[:, :n].set(a_src)
    a_dst_p = jnp.zeros((n_rows, heads), jnp.float32).at[:n, :].set(a_dst)
    adj_p = jnp.zeros((n_rows, n_src), jnp.int8).at[:n, :n].set(
        adj.astype(jnp.int8))

    kernel = functools.partial(
        _gat_conv_kernel, heads=heads, tk=tk, negative_slope=negative_slope,
        apply_elu=apply_elu, apply_log_softmax=apply_log_softmax)

    out = pl.pallas_call(
        kernel,
        grid=grid,
        in_specs=[
            pl.BlockSpec((heads, tk), lambda i, k: (0, k)),            # a_src
            pl.BlockSpec((tm, heads), lambda i, k: (i, 0)),            # a_dst
            pl.BlockSpec((heads, n_src, hf_pad),
                         lambda i, k: (0, 0, 0)),                      # xph (resident)
            pl.BlockSpec((heads, hf_pad), lambda i, k: (0, 0)),        # hmask
            pl.BlockSpec((1, hf_pad), lambda i, k: (0, 0)),            # bias
            pl.BlockSpec((1, hf_pad), lambda i, k: (0, 0)),            # colmask
            pl.BlockSpec((tm, tk), lambda i, k: (i, k)),               # adj block
        ],
        out_specs=pl.BlockSpec((tm, hf_pad), lambda i, k: (i, 0)),
        out_shape=jax.ShapeDtypeStruct((n_rows, hf_pad), out_dtype),
        scratch_shapes=[
            pltpu.VMEM((heads, tm, 1), jnp.float32),    # running max
            pltpu.VMEM((heads, tm, 1), jnp.float32),    # running denominator
            pltpu.VMEM((tm, hf_pad), jnp.float32),      # weighted-sum accumulator
        ],
        compiler_params=pltpu.CompilerParams(
            dimension_semantics=("parallel", "arbitrary"),
            vmem_limit_bytes=32 * 1024 * 1024),
    )(a_src_p, a_dst_p, xph, hmask, bias2d, colmask, adj_p)
    return out[:n, :hf]


def gat_forward(x, adj, params, *, heads, hidden, out_channels,
                block_rows=128, block_cols=512):
    """Full GAT forward (eval mode: dropout is identity)."""
    # TODO(synk): training-mode dropout (p=0.6) on features and attention
    #             coefficients is not reproduced (inference semantics only).
    h1 = gat_conv(x, params["w1"], params["att_src1"], params["att_dst1"],
                  params["b1"], adj, heads=heads, f_out=hidden,
                  apply_elu=True, out_dtype=jnp.bfloat16,
                  block_rows=block_rows, block_cols=block_cols)
    return gat_conv(h1, params["w2"], params["att_src2"], params["att_dst2"],
                    params["b2"], adj, heads=1, f_out=out_channels,
                    apply_log_softmax=True, out_dtype=jnp.float32,
                    block_rows=block_rows, block_cols=block_cols)


# ---------------------------- pure-JAX reference ----------------------------
def _gat_conv_ref(x, w, att_src, att_dst, bias, adj, heads, f_out,
                  negative_slope=0.2, match_kernel=False):
    # match_kernel=True mimics the kernel's bf16 MXU inputs and bf16 exponent.
    c = (lambda v: v.astype(jnp.bfloat16).astype(jnp.float32)) if match_kernel \
        else (lambda v: v)
    xp = c(x) @ c(w)
    outs = []
    for h in range(heads):
        xh = xp[:, h * f_out:(h + 1) * f_out]
        a_s = c(xh) @ c(att_src[h])
        a_d = c(xh) @ c(att_dst[h])
        s = a_d[:, None] + a_s[None, :]
        s = jnp.where(s > 0, s, negative_slope * s)
        s = jnp.where(adj > 0, s, -jnp.inf)
        if match_kernel:
            p = jnp.exp((s - jnp.max(s, axis=1, keepdims=True)
                         ).astype(jnp.bfloat16)).astype(jnp.float32)
            attn = p / jnp.sum(p, axis=1, keepdims=True)
        else:
            attn = jax.nn.softmax(s, axis=1)
        outs.append(c(attn) @ c(xh))
    return jnp.concatenate(outs, axis=1) + bias[None, :]


def _gat_forward_ref(x, adj, params, heads, hidden, out_channels,
                     match_kernel=False):
    h1 = _gat_conv_ref(x, params["w1"], params["att_src1"], params["att_dst1"],
                       params["b1"], adj, heads, hidden,
                       match_kernel=match_kernel)
    h1 = jnp.where(h1 > 0, h1, jnp.exp(jnp.minimum(h1, 0.0)) - 1.0)
    out = _gat_conv_ref(h1, params["w2"], params["att_src2"],
                        params["att_dst2"], params["b2"], adj, 1, out_channels,
                        match_kernel=match_kernel)
    return jax.nn.log_softmax(out, axis=1)


if __name__ == "__main__":
    N, C_IN, HIDDEN, HEADS, C_OUT, E = 200, 32, 16, 4, 8, 1000

    key = jax.random.PRNGKey(0)
    ks = jax.random.split(key, 9)

    # data.x, data.edge_index
    x = jax.random.normal(ks[0], (N, C_IN), jnp.float32)
    src = jax.random.randint(ks[1], (E,), 0, N)
    dst = jax.random.randint(ks[2], (E,), 0, N)
    adj = jnp.zeros((N, N), jnp.float32).at[dst, src].set(1.0)
    adj = adj.at[jnp.arange(N), jnp.arange(N)].set(1.0)   # add self-loops

    def glorot(k, shape):
        fan_in, fan_out = shape[-2], shape[-1]
        lim = (6.0 / (fan_in + fan_out)) ** 0.5
        return jax.random.uniform(k, shape, jnp.float32, -lim, lim)

    params = {
        "w1": glorot(ks[3], (C_IN, HEADS * HIDDEN)),
        "att_src1": glorot(ks[4], (HEADS, HIDDEN)),
        "att_dst1": glorot(ks[5], (HEADS, HIDDEN)),
        "b1": jnp.zeros((HEADS * HIDDEN,), jnp.float32),
        "w2": glorot(ks[6], (HEADS * HIDDEN, C_OUT)),
        "att_src2": glorot(ks[7], (1, C_OUT)),
        "att_dst2": glorot(ks[8], (1, C_OUT)),
        "b2": jnp.zeros((C_OUT,), jnp.float32),
    }

    # N=200 with block_rows=128 / block_cols=128 -> 2 row blocks x 2 source
    # chunks, exercising the online softmax, the padding paths and megacore.
    fwd = jax.jit(functools.partial(gat_forward, heads=HEADS, hidden=HIDDEN,
                                    out_channels=C_OUT, block_rows=128,
                                    block_cols=128))
    out = jax.block_until_ready(fwd(x, adj, params))

    assert out.shape == (N, C_OUT)
    assert bool(jnp.all(jnp.isfinite(out))), "non-finite values in output"
    assert jnp.allclose(jnp.sum(jnp.exp(out), axis=1), 1.0, atol=1e-3), \
        "log_softmax rows do not normalize"

    ref_m = _gat_forward_ref(x, adj, params, HEADS, HIDDEN, C_OUT,
                             match_kernel=True)
    ref_f = _gat_forward_ref(x, adj, params, HEADS, HIDDEN, C_OUT,
                             match_kernel=False)
    err_m = float(jnp.max(jnp.abs(out - ref_m)))
    err_f = float(jnp.max(jnp.abs(out - ref_f)))
    assert jnp.allclose(out, ref_m, atol=3e-2, rtol=3e-2), \
        f"mismatch vs bf16-matched reference: max err {err_m}"
    assert jnp.allclose(out, ref_f, atol=1e-1, rtol=1e-1), \
        f"mismatch vs f32 reference: max err {err_f}"

    print("KERNEL_OK")
</pallas_src>

<mosaic_0001>
module attributes {stable_mosaic.version = 11 : i64} {
  func.func @_gat_conv_kernel(%arg0: i32, %arg1: i32, %arg2: memref<4x128xf32, #tpu.memory_space<vmem>>, %arg3: memref<128x4xf32, #tpu.memory_space<vmem>>, %arg4: memref<4x256x128xbf16, #tpu.memory_space<vmem>>, %arg5: memref<4x128xf32, #tpu.memory_space<vmem>>, %arg6: memref<1x128xf32, #tpu.memory_space<vmem>>, %arg7: memref<1x128xf32, #tpu.memory_space<vmem>>, %arg8: memref<128x128xi8, #tpu.memory_space<vmem>>, %arg9: memref<128x128xbf16, #tpu.memory_space<vmem>>, %arg10: memref<4x128x1xf32, #tpu.memory_space<vmem>>, %arg11: memref<4x128x1xf32, #tpu.memory_space<vmem>>, %arg12: memref<128x128xf32, #tpu.memory_space<vmem>>) attributes {dimension_semantics = [#tpu.dimension_semantics<parallel>, #tpu.dimension_semantics<arbitrary>], iteration_bounds = array<i64: 2, 2>, scalar_prefetch = 0 : i64, scratch_operands = 3 : i64, tpu.core_type = #tpu.core_type<tc>, window_params = [{transform_indices = @transform_0, window_bounds = array<i64: 4, 128>}, {transform_indices = @transform_1, window_bounds = array<i64: 128, 4>}, {pipeline_mode = #tpu.pipeline_mode<synchronous>, transform_indices = @transform_2, window_bounds = array<i64: 4, 256, 128>}, {pipeline_mode = #tpu.pipeline_mode<synchronous>, transform_indices = @transform_3, window_bounds = array<i64: 4, 128>}, {pipeline_mode = #tpu.pipeline_mode<synchronous>, transform_indices = @transform_4, window_bounds = array<i64: 1, 128>}, {pipeline_mode = #tpu.pipeline_mode<synchronous>, transform_indices = @transform_5, window_bounds = array<i64: 1, 128>}, {transform_indices = @transform_6, window_bounds = array<i64: 128, 128>}, {transform_indices = @transform_7, window_bounds = array<i64: 128, 128>}]} {
    %c0_i32 = arith.constant 0 : i32
    %0 = arith.cmpi eq, %arg1, %c0_i32 : i32
    %1 = arith.extui %0 : i1 to i32
    %cst = arith.constant -1.000000e+30 : f32
    %c0_i32_0 = arith.constant 0 : i32
    %2 = arith.cmpi ne, %1, %c0_i32_0 : i32
    scf.if %2 {
      %202 = vector.broadcast %cst : f32 to vector<4x128x1xf32>
      %c0_104 = arith.constant 0 : index
      %c0_105 = arith.constant 0 : index
      %c0_106 = arith.constant 0 : index
      %203 = vector.load %arg10[%c0_104, %c0_105, %c0_106] : memref<4x128x1xf32, #tpu.memory_space<vmem>>, vector<4x128x1xf32>
      tpu.vector_store %arg10[%c0_104, %c0_105, %c0_106], %202 {strides = array<i32>} : memref<4x128x1xf32, #tpu.memory_space<vmem>>, vector<4x128x1xf32>,
      %cst_107 = arith.constant 0.000000e+00 : f32
      %204 = vector.broadcast %cst_107 : f32 to vector<4x128x1xf32>
      %c0_108 = arith.constant 0 : index
      %c0_109 = arith.constant 0 : index
      %c0_110 = arith.constant 0 : index
      %205 = vector.load %arg11[%c0_108, %c0_109, %c0_110] : memref<4x128x1xf32, #tpu.memory_space<vmem>>, vector<4x128x1xf32>
      tpu.vector_store %arg11[%c0_108, %c0_109, %c0_110], %204 {strides = array<i32>} : memref<4x128x1xf32, #tpu.memory_space<vmem>>, vector<4x128x1xf32>,
      %cst_111 = arith.constant 0.000000e+00 : f32
      %206 = vector.broadcast %cst_111 : f32 to vector<128x128xf32>
      %c0_112 = arith.constant 0 : index
      %c0_113 = arith.constant 0 : index
      %207 = vector.load %arg12[%c0_112, %c0_113] : memref<128x128xf32, #tpu.memory_space<vmem>>, vector<128x128xf32>
      tpu.vector_store %arg12[%c0_112, %c0_113], %206 {strides = array<i32>} : memref<128x128xf32, #tpu.memory_space<vmem>>, vector<128x128xf32>,
    } else {
    }
    %c0 = arith.constant 0 : index
    %c0_1 = arith.constant 0 : index
    %3 = vector.load %arg8[%c0, %c0_1] : memref<128x128xi8, #tpu.memory_space<vmem>>, vector<128x128xi8>
    %c0_i8 = arith.constant 0 : i8
    %4 = vector.broadcast %c0_i8 : i8 to vector<128x128xi8>
    %5 = arith.cmpi ne, %3, %4 : vector<128x128xi8>
    %c0_2 = arith.constant 0 : index
    %c0_3 = arith.constant 0 : index
    %6 = vector.load %arg3[%c0_2, %c0_3] : memref<128x4xf32, #tpu.memory_space<vmem>>, vector<128x4xf32>
    %c128_i32 = arith.constant 128 : i32
    %7 = arith.muli %arg1, %c128_i32 : i32
    %8 = tpu.assume_multiple %7, 128 : i32
    %cst_4 = arith.constant 0.000000e+00 : f32
    %9 = vector.broadcast %cst_4 : f32 to vector<128x128xf32>
    %cst_5 = arith.constant 0.000000e+00 : f32
    %10 = vector.broadcast %cst_5 : f32 to vector<128x128xf32>
    %11 = vector.extract_strided_slice %6 {offsets = [0, 0], sizes = [128, 1], strides = [1, 1]} : vector<128x4xf32> to vector<128x1xf32>
    %c0_6 = arith.constant 0 : index
    %c0_7 = arith.constant 0 : index
    %12 = vector.load %arg2[%c0_6, %c0_7] : memref<4x128xf32, #tpu.memory_space<vmem>>, vector<1x128xf32>
    %13 = vector.broadcast %11 : vector<128x1xf32> to vector<128x128xf32>
    %14 = vector.broadcast %12 : vector<1x128xf32> to vector<128x128xf32>
    %15 = arith.addf %13, %14 : vector<128x128xf32>
    %cst_8 = arith.constant 0.000000e+00 : f32
    %16 = vector.broadcast %cst_8 : f32 to vector<128x128xf32>
    %17 = arith.cmpf ogt, %15, %16 : vector<128x128xf32>
    %cst_9 = arith.constant 2.000000e-01 : f32
    %18 = vector.broadcast %cst_9 : f32 to vector<128x128xf32>
    %19 = arith.mulf %18, %15 : vector<128x128xf32>
    %20 = arith.select %17, %15, %19 : vector<128x128xi1>, vector<128x128xf32>
    %cst_10 = arith.constant -1.000000e+30 : f32
    %21 = vector.broadcast %cst_10 : f32 to vector<128x128xf32>
    %22 = arith.select %5, %20, %21 : vector<128x128xi1>, vector<128x128xf32>
    %c0_11 = arith.constant 0 : index
    %c0_12 = arith.constant 0 : index
    %c0_13 = arith.constant 0 : index
    %23 = vector.load %arg10[%c0_11, %c0_12, %c0_13] : memref<4x128x1xf32, #tpu.memory_space<vmem>>, vector<1x128x1xf32>
    %24 = vector.shape_cast %23 : vector<1x128x1xf32> to vector<128x1xf32>
    %cst_14 = arith.constant dense<0xFF800000> : vector<128xf32>
    %25 = vector.multi_reduction <maximumf>, %22, %cst_14 [1] : vector<128x128xf32> to vector<128xf32>
    %26 = vector.shape_cast %25 : vector<128xf32> to vector<128x1xf32>
    %27 = arith.maximumf %24, %26 : vector<128x1xf32>
    %28 = arith.subf %24, %27 : vector<128x1xf32>
    %29 = math.exp %28 : vector<128x1xf32>
    %30 = vector.broadcast %27 : vector<128x1xf32> to vector<128x128xf32>
    %31 = arith.subf %22, %30 : vector<128x128xf32>
    %32 = arith.truncf %31 : vector<128x128xf32> to vector<128x128xbf16>
    %33 = math.exp %32 : vector<128x128xbf16>
    %c0_15 = arith.constant 0 : index
    %c0_16 = arith.constant 0 : index
    %c0_17 = arith.constant 0 : index
    %34 = vector.load %arg11[%c0_15, %c0_16, %c0_17] : memref<4x128x1xf32, #tpu.memory_space<vmem>>, vector<1x128x1xf32>
    %35 = vector.shape_cast %34 : vector<1x128x1xf32> to vector<128x1xf32>
    %36 = arith.mulf %29, %35 : vector<128x1xf32>
    %37 = arith.extf %33 : vector<128x128xbf16> to vector<128x128xf32>
    %cst_18 = arith.constant dense<0.000000e+00> : vector<128xf32>
    %38 = vector.multi_reduction <add>, %37, %cst_18 [1] : vector<128x128xf32> to vector<128xf32>
    %39 = vector.shape_cast %38 : vector<128xf32> to vector<128x1xf32>
    %40 = arith.addf %36, %39 : vector<128x1xf32>
    %c0_19 = arith.constant 0 : index
    %c0_20 = arith.constant 0 : index
    %c0_21 = arith.constant 0 : index
    %41 = vector.load %arg11[%c0_19, %c0_20, %c0_21] : memref<4x128x1xf32, #tpu.memory_space<vmem>>, vector<1x128x1xf32>
    %42 = vector.shape_cast %41 : vector<1x128x1xf32> to vector<128x1xf32>
    %43 = vector.shape_cast %40 : vector<128x1xf32> to vector<1x128x1xf32>
    tpu.vector_store %arg11[%c0_19, %c0_20, %c0_21], %43 {strides = array<i32>} : memref<4x128x1xf32, #tpu.memory_space<vmem>>, vector<1x128x1xf32>,
    %c0_22 = arith.constant 0 : index
    %c0_23 = arith.constant 0 : index
    %c0_24 = arith.constant 0 : index
    %44 = vector.load %arg10[%c0_22, %c0_23, %c0_24] : memref<4x128x1xf32, #tpu.memory_space<vmem>>, vector<1x128x1xf32>
    %45 = vector.shape_cast %44 : vector<1x128x1xf32> to vector<128x1xf32>
    %46 = vector.shape_cast %27 : vector<128x1xf32> to vector<1x128x1xf32>
    tpu.vector_store %arg10[%c0_22, %c0_23, %c0_24], %46 {strides = array<i32>} : memref<4x128x1xf32, #tpu.memory_space<vmem>>, vector<1x128x1xf32>,
    %c0_25 = arith.constant 0 : index
    %c0_26 = arith.constant 0 : index
    %47 = vector.load %arg5[%c0_25, %c0_26] : memref<4x128xf32, #tpu.memory_space<vmem>>, vector<1x128xf32>
    %48 = vector.broadcast %29 : vector<128x1xf32> to vector<128x128xf32>
    %49 = vector.broadcast %47 : vector<1x128xf32> to vector<128x128xf32>
    %50 = arith.mulf %48, %49 : vector<128x128xf32>
    %51 = arith.addf %10, %50 : vector<128x128xf32>
    %c0_27 = arith.constant 0 : index
    %52 = arith.index_cast %8 : i32 to index
    %c0_28 = arith.constant 0 : index
    %53 = vector.load %arg4[%c0_27, %52, %c0_28] : memref<4x256x128xbf16, #tpu.memory_space<vmem>>, vector<1x128x128xbf16>
    %54 = vector.shape_cast %53 : vector<1x128x128xbf16> to vector<128x128xbf16>
    %cst_29 = arith.constant dense<0.000000e+00> : vector<128x128xf32>
    %55 = tpu.matmul %33, %54, %cst_29 {dimension_numbers = #tpu.dot_dimension_numbers<[1], [0], [0], [1], [0, 0, 1, 1], [], []>} : vector<128x128xbf16>, vector<128x128xbf16>, vector<128x128xf32> -> vector<128x128xf32>
    %56 = arith.addf %9, %55 : vector<128x128xf32>
    %57 = vector.extract_strided_slice %6 {offsets = [0, 1], sizes = [128, 1], strides = [1, 1]} : vector<128x4xf32> to vector<128x1xf32>
    %c1 = arith.constant 1 : index
    %c0_30 = arith.constant 0 : index
    %58 = vector.load %arg2[%c1, %c0_30] : memref<4x128xf32, #tpu.memory_space<vmem>>, vector<1x128xf32>
    %59 = vector.broadcast %57 : vector<128x1xf32> to vector<128x128xf32>
    %60 = vector.broadcast %58 : vector<1x128xf32> to vector<128x128xf32>
    %61 = arith.addf %59, %60 : vector<128x128xf32>
    %cst_31 = arith.constant 0.000000e+00 : f32
    %62 = vector.broadcast %cst_31 : f32 to vector<128x128xf32>
    %63 = arith.cmpf ogt, %61, %62 : vector<128x128xf32>
    %cst_32 = arith.constant 2.000000e-01 : f32
    %64 = vector.broadcast %cst_32 : f32 to vector<128x128xf32>
    %65 = arith.mulf %64, %61 : vector<128x128xf32>
    %66 = arith.select %63, %61, %65 : vector<128x128xi1>, vector<128x128xf32>
    %cst_33 = arith.constant -1.000000e+30 : f32
    %67 = vector.broadcast %cst_33 : f32 to vector<128x128xf32>
    %68 = arith.select %5, %66, %67 : vector<128x128xi1>, vector<128x128xf32>
    %c1_34 = arith.constant 1 : index
    %c0_35 = arith.constant 0 : index
    %c0_36 = arith.constant 0 : index
    %69 = vector.load %arg10[%c1_34, %c0_35, %c0_36] : memref<4x128x1xf32, #tpu.memory_space<vmem>>, vector<1x128x1xf32>
    %70 = vector.shape_cast %69 : vector<1x128x1xf32> to vector<128x1xf32>
    %cst_37 = arith.constant dense<0xFF800000> : vector<128xf32>
    %71 = vector.multi_reduction <maximumf>, %68, %cst_37 [1] : vector<128x128xf32> to vector<128xf32>
    %72 = vector.shape_cast %71 : vector<128xf32> to vector<128x1xf32>
    %73 = arith.maximumf %70, %72 : vector<128x1xf32>
    %74 = arith.subf %70, %73 : vector<128x1xf32>
    %75 = math.exp %74 : vector<128x1xf32>
    %76 = vector.broadcast %73 : vector<128x1xf32> to vector<128x128xf32>
    %77 = arith.subf %68, %76 : vector<128x128xf32>
    %78 = arith.truncf %77 : vector<128x128xf32> to vector<128x128xbf16>
    %79 = math.exp %78 : vector<128x128xbf16>
    %c1_38 = arith.constant 1 : index
    %c0_39 = arith.constant 0 : index
    %c0_40 = arith.constant 0 : index
    %80 = vector.load %arg11[%c1_38, %c0_39, %c0_40] : memref<4x128x1xf32, #tpu.memory_space<vmem>>, vector<1x128x1xf32>
    %81 = vector.shape_cast %80 : vector<1x128x1xf32> to vector<128x1xf32>
    %82 = arith.mulf %75, %81 : vector<128x1xf32>
    %83 = arith.extf %79 : vector<128x128xbf16> to vector<128x128xf32>
    %cst_41 = arith.constant dense<0.000000e+00> : vector<128xf32>
    %84 = vector.multi_reduction <add>, %83, %cst_41 [1] : vector<128x128xf32> to vector<128xf32>
    %85 = vector.shape_cast %84 : vector<128xf32> to vector<128x1xf32>
    %86 = arith.addf %82, %85 : vector<128x1xf32>
    %c1_42 = arith.constant 1 : index
    %c0_43 = arith.constant 0 : index
    %c0_44 = arith.constant 0 : index
    %87 = vector.load %arg11[%c1_42, %c0_43, %c0_44] : memref<4x128x1xf32, #tpu.memory_space<vmem>>, vector<1x128x1xf32>
    %88 = vector.shape_cast %87 : vector<1x128x1xf32> to vector<128x1xf32>
    %89 = vector.shape_cast %86 : vector<128x1xf32> to vector<1x128x1xf32>
    tpu.vector_store %arg11[%c1_42, %c0_43, %c0_44], %89 {strides = array<i32>} : memref<4x128x1xf32, #tpu.memory_space<vmem>>, vector<1x128x1xf32>,
    %c1_45 = arith.constant 1 : index
    %c0_46 = arith.constant 0 : index
    %c0_47 = arith.constant 0 : index
    %90 = vector.load %arg10[%c1_45, %c0_46, %c0_47] : memref<4x128x1xf32, #tpu.memory_space<vmem>>, vector<1x128x1xf32>
    %91 = vector.shape_cast %90 : vector<1x128x1xf32> to vector<128x1xf32>
    %92 = vector.shape_cast %73 : vector<128x1xf32> to vector<1x128x1xf32>
    tpu.vector_store %arg10[%c1_45, %c0_46, %c0_47], %92 {strides = array<i32>} : memref<4x128x1xf32, #tpu.memory_space<vmem>>, vector<1x128x1xf32>,
    %c1_48 = arith.constant 1 : index
    %c0_49 = arith.constant 0 : index
    %93 = vector.load %arg5[%c1_48, %c0_49] : memref<4x128xf32, #tpu.memory_space<vmem>>, vector<1x128xf32>
    %94 = vector.broadcast %75 : vector<128x1xf32> to vector<128x128xf32>
    %95 = vector.broadcast %93 : vector<1x128xf32> to vector<128x128xf32>
    %96 = arith.mulf %94, %95 : vector<128x128xf32>
    %97 = arith.addf %51, %96 : vector<128x128xf32>
    %c1_50 = arith.constant 1 : index
    %98 = arith.index_cast %8 : i32 to index
    %c0_51 = arith.constant 0 : index
    %99 = vector.load %arg4[%c1_50, %98, %c0_51] : memref<4x256x128xbf16, #tpu.memory_space<vmem>>, vector<1x128x128xbf16>
    %100 = vector.shape_cast %99 : vector<1x128x128xbf16> to vector<128x128xbf16>
    %cst_52 = arith.constant dense<0.000000e+00> : vector<128x128xf32>
    %101 = tpu.matmul %79, %100, %cst_52 {dimension_numbers = #tpu.dot_dimension_numbers<[1], [0], [0], [1], [0, 0, 1, 1], [], []>} : vector<128x128xbf16>, vector<128x128xbf16>, vector<128x128xf32> -> vector<128x128xf32>
    %102 = arith.addf %56, %101 : vector<128x128xf32>
    %103 = vector.extract_strided_slice %6 {offsets = [0, 2], sizes = [128, 1], strides = [1, 1]} : vector<128x4xf32> to vector<128x1xf32>
    %c2 = arith.constant 2 : index
    %c0_53 = arith.constant 0 : index
    %104 = vector.load %arg2[%c2, %c0_53] : memref<4x128xf32, #tpu.memory_space<vmem>>, vector<1x128xf32>
    %105 = vector.broadcast %103 : vector<128x1xf32> to vector<128x128xf32>
    %106 = vector.broadcast %104 : vector<1x128xf32> to vector<128x128xf32>
    %107 = arith.addf %105, %106 : vector<128x128xf32>
    %cst_54 = arith.constant 0.000000e+00 : f32
    %108 = vector.broadcast %cst_54 : f32 to vector<128x128xf32>
    %109 = arith.cmpf ogt, %107, %108 : vector<128x128xf32>
    %cst_55 = arith.constant 2.000000e-01 : f32
    %110 = vector.broadcast %cst_55 : f32 to vector<128x128xf32>
    %111 = arith.mulf %110, %107 : vector<128x128xf32>
    %112 = arith.select %109, %107, %111 : vector<128x128xi1>, vector<128x128xf32>
    %cst_56 = arith.constant -1.000000e+30 : f32
    %113 = vector.broadcast %cst_56 : f32 to vector<128x128xf32>
    %114 = arith.select %5, %112, %113 : vector<128x128xi1>, vector<128x128xf32>
    %c2_57 = arith.constant 2 : index
    %c0_58 = arith.constant 0 : index
    %c0_59 = arith.constant 0 : index
    %115 = vector.load %arg10[%c2_57, %c0_58, %c0_59] : memref<4x128x1xf32, #tpu.memory_space<vmem>>, vector<1x128x1xf32>
    %116 = vector.shape_cast %115 : vector<1x128x1xf32> to vector<128x1xf32>
    %cst_60 = arith.constant dense<0xFF800000> : vector<128xf32>
    %117 = vector.multi_reduction <maximumf>, %114, %cst_60 [1] : vector<128x128xf32> to vector<128xf32>
    %118 = vector.shape_cast %117 : vector<128xf32> to vector<128x1xf32>
    %119 = arith.maximumf %116, %118 : vector<128x1xf32>
    %120 = arith.subf %116, %119 : vector<128x1xf32>
    %121 = math.exp %120 : vector<128x1xf32>
    %122 = vector.broadcast %119 : vector<128x1xf32> to vector<128x128xf32>
    %123 = arith.subf %114, %122 : vector<128x128xf32>
    %124 = arith.truncf %123 : vector<128x128xf32> to vector<128x128xbf16>
    %125 = math.exp %124 : vector<128x128xbf16>
    %c2_61 = arith.constant 2 : index
    %c0_62 = arith.constant 0 : index
    %c0_63 = arith.constant 0 : index
    %126 = vector.load %arg11[%c2_61, %c0_62, %c0_63] : memref<4x128x1xf32, #tpu.memory_space<vmem>>, vector<1x128x1xf32>
    %127 = vector.shape_cast %126 : vector<1x128x1xf32> to vector<128x1xf32>
    %128 = arith.mulf %121, %127 : vector<128x1xf32>
    %129 = arith.extf %125 : vector<128x128xbf16> to vector<128x128xf32>
    %cst_64 = arith.constant dense<0.000000e+00> : vector<128xf32>
    %130 = vector.multi_reduction <add>, %129, %cst_64 [1] : vector<128x128xf32> to vector<128xf32>
    %131 = vector.shape_cast %130 : vector<128xf32> to vector<128x1xf32>
    %132 = arith.addf %128, %131 : vector<128x1xf32>
    %c2_65 = arith.constant 2 : index
    %c0_66 = arith.constant 0 : index
    %c0_67 = arith.constant 0 : index
    %133 = vector.load %arg11[%c2_65, %c0_66, %c0_67] : memref<4x128x1xf32, #tpu.memory_space<vmem>>, vector<1x128x1xf32>
    %134 = vector.shape_cast %133 : vector<1x128x1xf32> to vector<128x1xf32>
    %135 = vector.shape_cast %132 : vector<128x1xf32> to vector<1x128x1xf32>
    tpu.vector_store %arg11[%c2_65, %c0_66, %c0_67], %135 {strides = array<i32>} : memref<4x128x1xf32, #tpu.memory_space<vmem>>, vector<1x128x1xf32>,
    %c2_68 = arith.constant 2 : index
    %c0_69 = arith.constant 0 : index
    %c0_70 = arith.constant 0 : index
    %136 = vector.load %arg10[%c2_68, %c0_69, %c0_70] : memref<4x128x1xf32, #tpu.memory_space<vmem>>, vector<1x128x1xf32>
    %137 = vector.shape_cast %136 : vector<1x128x1xf32> to vector<128x1xf32>
    %138 = vector.shape_cast %119 : vector<128x1xf32> to vector<1x128x1xf32>
    tpu.vector_store %arg10[%c2_68, %c0_69, %c0_70], %138 {strides = array<i32>} : memref<4x128x1xf32, #tpu.memory_space<vmem>>, vector<1x128x1xf32>,
    %c2_71 = arith.constant 2 : index
    %c0_72 = arith.constant 0 : index
    %139 = vector.load %arg5[%c2_71, %c0_72] : memref<4x128xf32, #tpu.memory_space<vmem>>, vector<1x128xf32>
    %140 = vector.broadcast %121 : vector<128x1xf32> to vector<128x128xf32>
    %141 = vector.broadcast %139 : vector<1x128xf32> to vector<128x128xf32>
    %142 = arith.mulf %140, %141 : vector<128x128xf32>
    %143 = arith.addf %97, %142 : vector<128x128xf32>
    %c2_73 = arith.constant 2 : index
    %144 = arith.index_cast %8 : i32 to index
    %c0_74 = arith.constant 0 : index
    %145 = vector.load %arg4[%c2_73, %144, %c0_74] : memref<4x256x128xbf16, #tpu.memory_space<vmem>>, vector<1x128x128xbf16>
    %146 = vector.shape_cast %145 : vector<1x128x128xbf16> to vector<128x128xbf16>
    %cst_75 = arith.constant dense<0.000000e+00> : vector<128x128xf32>
    %147 = tpu.matmul %125, %146, %cst_75 {dimension_numbers = #tpu.dot_dimension_numbers<[1], [0], [0], [1], [0, 0, 1, 1], [], []>} : vector<128x128xbf16>, vector<128x128xbf16>, vector<128x128xf32> -> vector<128x128xf32>
    %148 = arith.addf %102, %147 : vector<128x128xf32>
    %149 = vector.extract_strided_slice %6 {offsets = [0, 3], sizes = [128, 1], strides = [1, 1]} : vector<128x4xf32> to vector<128x1xf32>
    %c3 = arith.constant 3 : index
    %c0_76 = arith.constant 0 : index
    %150 = vector.load %arg2[%c3, %c0_76] : memref<4x128xf32, #tpu.memory_space<vmem>>, vector<1x128xf32>
    %151 = vector.broadcast %149 : vector<128x1xf32> to vector<128x128xf32>
    %152 = vector.broadcast %150 : vector<1x128xf32> to vector<128x128xf32>
    %153 = arith.addf %151, %152 : vector<128x128xf32>
    %cst_77 = arith.constant 0.000000e+00 : f32
    %154 = vector.broadcast %cst_77 : f32 to vector<128x128xf32>
    %155 = arith.cmpf ogt, %153, %154 : vector<128x128xf32>
    %cst_78 = arith.constant 2.000000e-01 : f32
    %156 = vector.broadcast %cst_78 : f32 to vector<128x128xf32>
    %157 = arith.mulf %156, %153 : vector<128x128xf32>
    %158 = arith.select %155, %153, %157 : vector<128x128xi1>, vector<128x128xf32>
    %cst_79 = arith.constant -1.000000e+30 : f32
    %159 = vector.broadcast %cst_79 : f32 to vector<128x128xf32>
    %160 = arith.select %5, %158, %159 : vector<128x128xi1>, vector<128x128xf32>
    %c3_80 = arith.constant 3 : index
    %c0_81 = arith.constant 0 : index
    %c0_82 = arith.constant 0 : index
    %161 = vector.load %arg10[%c3_80, %c0_81, %c0_82] : memref<4x128x1xf32, #tpu.memory_space<vmem>>, vector<1x128x1xf32>
    %162 = vector.shape_cast %161 : vector<1x128x1xf32> to vector<128x1xf32>
    %cst_83 = arith.constant dense<0xFF800000> : vector<128xf32>
    %163 = vector.multi_reduction <maximumf>, %160, %cst_83 [1] : vector<128x128xf32> to vector<128xf32>
    %164 = vector.shape_cast %163 : vector<128xf32> to vector<128x1xf32>
    %165 = arith.maximumf %162, %164 : vector<128x1xf32>
    %166 = arith.subf %162, %165 : vector<128x1xf32>
    %167 = math.exp %166 : vector<128x1xf32>
    %168 = vector.broadcast %165 : vector<128x1xf32> to vector<128x128xf32>
    %169 = arith.subf %160, %168 : vector<128x128xf32>
    %170 = arith.truncf %169 : vector<128x128xf32> to vector<128x128xbf16>
    %171 = math.exp %170 : vector<128x128xbf16>
    %c3_84 = arith.constant 3 : index
    %c0_85 = arith.constant 0 : index
    %c0_86 = arith.constant 0 : index
    %172 = vector.load %arg11[%c3_84, %c0_85, %c0_86] : memref<4x128x1xf32, #tpu.memory_space<vmem>>, vector<1x128x1xf32>
    %173 = vector.shape_cast %172 : vector<1x128x1xf32> to vector<128x1xf32>
    %174 = arith.mulf %167, %173 : vector<128x1xf32>
    %175 = arith.extf %171 : vector<128x128xbf16> to vector<128x128xf32>
    %cst_87 = arith.constant dense<0.000000e+00> : vector<128xf32>
    %176 = vector.multi_reduction <add>, %175, %cst_87 [1] : vector<128x128xf32> to vector<128xf32>
    %177 = vector.shape_cast %176 : vector<128xf32> to vector<128x1xf32>
    %178 = arith.addf %174, %177 : vector<128x1xf32>
    %c3_88 = arith.constant 3 : index
    %c0_89 = arith.constant 0 : index
    %c0_90 = arith.constant 0 : index
    %179 = vector.load %arg11[%c3_88, %c0_89, %c0_90] : memref<4x128x1xf32, #tpu.memory_space<vmem>>, vector<1x128x1xf32>
    %180 = vector.shape_cast %179 : vector<1x128x1xf32> to vector<128x1xf32>
    %181 = vector.shape_cast %178 : vector<128x1xf32> to vector<1x128x1xf32>
    tpu.vector_store %arg11[%c3_88, %c0_89, %c0_90], %181 {strides = array<i32>} : memref<4x128x1xf32, #tpu.memory_space<vmem>>, vector<1x128x1xf32>,
    %c3_91 = arith.constant 3 : index
    %c0_92 = arith.constant 0 : index
    %c0_93 = arith.constant 0 : index
    %182 = vector.load %arg10[%c3_91, %c0_92, %c0_93] : memref<4x128x1xf32, #tpu.memory_space<vmem>>, vector<1x128x1xf32>
    %183 = vector.shape_cast %182 : vector<1x128x1xf32> to vector<128x1xf32>
    %184 = vector.shape_cast %165 : vector<128x1xf32> to vector<1x128x1xf32>
    tpu.vector_store %arg10[%c3_91, %c0_92, %c0_93], %184 {strides = array<i32>} : memref<4x128x1xf32, #tpu.memory_space<vmem>>, vector<1x128x1xf32>,
    %c3_94 = arith.constant 3 : index
    %c0_95 = arith.constant 0 : index
    %185 = vector.load %arg5[%c3_94, %c0_95] : memref<4x128xf32, #tpu.memory_space<vmem>>, vector<1x128xf32>
    %186 = vector.broadcast %167 : vector<128x1xf32> to vector<128x128xf32>
    %187 = vector.broadcast %185 : vector<1x128xf32> to vector<128x128xf32>
    %188 = arith.mulf %186, %187 : vector<128x128xf32>
    %189 = arith.addf %143, %188 : vector<128x128xf32>
    %c3_96 = arith.constant 3 : index
    %190 = arith.index_cast %8 : i32 to index
    %c0_97 = arith.constant 0 : index
    %191 = vector.load %arg4[%c3_96, %190, %c0_97] : memref<4x256x128xbf16, #tpu.memory_space<vmem>>, vector<1x128x128xbf16>
    %192 = vector.shape_cast %191 : vector<1x128x128xbf16> to vector<128x128xbf16>
    %cst_98 = arith.constant dense<0.000000e+00> : vector<128x128xf32>
    %193 = tpu.matmul %171, %192, %cst_98 {dimension_numbers = #tpu.dot_dimension_numbers<[1], [0], [0], [1], [0, 0, 1, 1], [], []>} : vector<128x128xbf16>, vector<128x128xbf16>, vector<128x128xf32> -> vector<128x128xf32>
    %194 = arith.addf %148, %193 : vector<128x128xf32>
    %c0_99 = arith.constant 0 : index
    %c0_100 = arith.constant 0 : index
    %195 = vector.load %arg12[%c0_99, %c0_100] : memref<128x128xf32, #tpu.memory_space<vmem>>, vector<128x128xf32>
    %196 = arith.mulf %195, %189 : vector<128x128xf32>
    %197 = arith.addf %196, %194 : vector<128x128xf32>
    %c0_101 = arith.constant 0 : index
    %c0_102 = arith.constant 0 : index
    %198 = vector.load %arg12[%c0_101, %c0_102] : memref<128x128xf32, #tpu.memory_space<vmem>>, vector<128x128xf32>
    tpu.vector_store %arg12[%c0_101, %c0_102], %197 {strides = array<i32>} : memref<128x128xf32, #tpu.memory_space<vmem>>, vector<128x128xf32>,
    %c1_i32 = arith.constant 1 : i32
    %199 = arith.cmpi eq, %arg1, %c1_i32 : i32
    %200 = arith.extui %199 : i1 to i32
    %c0_i32_103 = arith.constant 0 : i32
    %201 = arith.cmpi ne, %200, %c0_i32_103 : i32
    scf.if %201 {
      %c0_104 = arith.constant 0 : index
      %c0_105 = arith.constant 0 : index
      %c0_106 = arith.constant 0 : index
      %202 = vector.load %arg11[%c0_104, %c0_105, %c0_106] : memref<4x128x1xf32, #tpu.memory_space<vmem>>, vector<4x128x1xf32>
      %203 = tpu.reciprocal %202 {approx = true} : vector<4x128x1xf32> -> vector<4x128x1xf32>
      %cst_107 = arith.constant 0.000000e+00 : f32
      %204 = vector.broadcast %cst_107 : f32 to vector<128x128xf32>
      %205 = vector.extract_strided_slice %203 {offsets = [0, 0, 0], sizes = [1, 128, 1], strides = [1, 1, 1]} : vector<4x128x1xf32> to vector<1x128x1xf32>
      %206 = vector.shape_cast %205 : vector<1x128x1xf32> to vector<128x1xf32>
      %c0_108 = arith.constant 0 : index
      %c0_109 = arith.constant 0 : index
      %207 = vector.load %arg5[%c0_108, %c0_109] : memref<4x128xf32, #tpu.memory_space<vmem>>, vector<1x128xf32>
      %208 = vector.broadcast %206 : vector<128x1xf32> to vector<128x128xf32>
      %209 = vector.broadcast %207 : vector<1x128xf32> to vector<128x128xf32>
      %210 = arith.mulf %208, %209 : vector<128x128xf32>
      %211 = arith.addf %204, %210 : vector<128x128xf32>
      %212 = vector.extract_strided_slice %203 {offsets = [1, 0, 0], sizes = [1, 128, 1], strides = [1, 1, 1]} : vector<4x128x1xf32> to vector<1x128x1xf32>
      %213 = vector.shape_cast %212 : vector<1x128x1xf32> to vector<128x1xf32>
      %c1_110 = arith.constant 1 : index
      %c0_111 = arith.constant 0 : index
      %214 = vector.load %arg5[%c1_110, %c0_111] : memref<4x128xf32, #tpu.memory_space<vmem>>, vector<1x128xf32>
      %215 = vector.broadcast %213 : vector<128x1xf32> to vector<128x128xf32>
      %216 = vector.broadcast %214 : vector<1x128xf32> to vector<128x128xf32>
      %217 = arith.mulf %215, %216 : vector<128x128xf32>
      %218 = arith.addf %211, %217 : vector<128x128xf32>
      %219 = vector.extract_strided_slice %203 {offsets = [2, 0, 0], sizes = [1, 128, 1], strides = [1, 1, 1]} : vector<4x128x1xf32> to vector<1x128x1xf32>
      %220 = vector.shape_cast %219 : vector<1x128x1xf32> to vector<128x1xf32>
      %c2_112 = arith.constant 2 : index
      %c0_113 = arith.constant 0 : index
      %221 = vector.load %arg5[%c2_112, %c0_113] : memref<4x128xf32, #tpu.memory_space<vmem>>, vector<1x128xf32>
      %222 = vector.broadcast %220 : vector<128x1xf32> to vector<128x128xf32>
      %223 = vector.broadcast %221 : vector<1x128xf32> to vector<128x128xf32>
      %224 = arith.mulf %222, %223 : vector<128x128xf32>
      %225 = arith.addf %218, %224 : vector<128x128xf32>
      %226 = vector.extract_strided_slice %203 {offsets = [3, 0, 0], sizes = [1, 128, 1], strides = [1, 1, 1]} : vector<4x128x1xf32> to vector<1x128x1xf32>
      %227 = vector.shape_cast %226 : vector<1x128x1xf32> to vector<128x1xf32>
      %c3_114 = arith.constant 3 : index
      %c0_115 = arith.constant 0 : index
      %228 = vector.load %arg5[%c3_114, %c0_115] : memref<4x128xf32, #tpu.memory_space<vmem>>, vector<1x128xf32>
      %229 = vector.broadcast %227 : vector<128x1xf32> to vector<128x128xf32>
      %230 = vector.broadcast %228 : vector<1x128xf32> to vector<128x128xf32>
      %231 = arith.mulf %229, %230 : vector<128x128xf32>
      %232 = arith.addf %225, %231 : vector<128x128xf32>
      %c0_116 = arith.constant 0 : index
      %c0_117 = arith.constant 0 : index
      %233 = vector.load %arg12[%c0_116, %c0_117] : memref<128x128xf32, #tpu.memory_space<vmem>>, vector<128x128xf32>
      %234 = arith.mulf %233, %232 : vector<128x128xf32>
      %c0_118 = arith.constant 0 : index
      %c0_119 = arith.constant 0 : index
      %235 = vector.load %arg6[%c0_118, %c0_119] : memref<1x128xf32, #tpu.memory_space<vmem>>, vector<1x128xf32>
      %236 = vector.broadcast %235 : vector<1x128xf32> to vector<128x128xf32>
      %237 = arith.addf %234, %236 : vector<128x128xf32>
      %cst_120 = arith.constant 0.000000e+00 : f32
      %238 = vector.broadcast %cst_120 : f32 to vector<128x128xf32>
      %239 = arith.cmpf ogt, %237, %238 : vector<128x128xf32>
      %cst_121 = arith.constant 0.000000e+00 : f32
      %240 = vector.broadcast %cst_121 : f32 to vector<128x128xf32>
      %241 = arith.minimumf %237, %240 : vector<128x128xf32>
      %242 = math.exp %241 : vector<128x128xf32>
      %cst_122 = arith.constant 1.000000e+00 : f32
      %243 = vector.broadcast %cst_122 : f32 to vector<128x128xf32>
      %244 = arith.subf %242, %243 : vector<128x128xf32>
      %245 = arith.select %239, %237, %244 : vector<128x128xi1>, vector<128x128xf32>
      %246 = arith.truncf %245 : vector<128x128xf32> to vector<128x128xbf16>
      %c0_123 = arith.constant 0 : index
      %c0_124 = arith.constant 0 : index
      %247 = vector.load %arg9[%c0_123, %c0_124] : memref<128x128xbf16, #tpu.memory_space<vmem>>, vector<128x128xbf16>
      tpu.vector_store %arg9[%c0_123, %c0_124], %246 {strides = array<i32>} : memref<128x128xbf16, #tpu.memory_space<vmem>>, vector<128x128xbf16>,
    } else {
    }
    return
  }
  func.func @transform_0(%arg0: i32, %arg1: i32) -> (i32, i32) {
    %c0_i32 = arith.constant 0 : i32
    %c0_i32_0 = arith.constant 0 : i32
    return %c0_i32, %arg1 : i32, i32
  }
  func.func @transform_1(%arg0: i32, %arg1: i32) -> (i32, i32) {
    %c0_i32 = arith.constant 0 : i32
    %c0_i32_0 = arith.constant 0 : i32
    return %arg0, %c0_i32 : i32, i32
  }
  func.func @transform_2(%arg0: i32, %arg1: i32) -> (i32, i32, i32) {
    %c0_i32 = arith.constant 0 : i32
    %c0_i32_0 = arith.constant 0 : i32
    %c0_i32_1 = arith.constant 0 : i32
    %c0_i32_2 = arith.constant 0 : i32
    return %c0_i32, %c0_i32_0, %c0_i32_1 : i32, i32, i32
  }
  func.func @transform_3(%arg0: i32, %arg1: i32) -> (i32, i32) {
    %c0_i32 = arith.constant 0 : i32
    %c0_i32_0 = arith.constant 0 : i32
    %c0_i32_1 = arith.constant 0 : i32
    return %c0_i32, %c0_i32_0 : i32, i32
  }
  func.func @transform_4(%arg0: i32, %arg1: i32) -> (i32, i32) {
    %c0_i32 = arith.constant 0 : i32
    %c0_i32_0 = arith.constant 0 : i32
    %c0_i32_1 = arith.constant 0 : i32
    return %c0_i32, %c0_i32_0 : i32, i32
  }
  func.func @transform_5(%arg0: i32, %arg1: i32) -> (i32, i32) {
    %c0_i32 = arith.constant 0 : i32
    %c0_i32_0 = arith.constant 0 : i32
    %c0_i32_1 = arith.constant 0 : i32
    return %c0_i32, %c0_i32_0 : i32, i32
  }
  func.func @transform_6(%arg0: i32, %arg1: i32) -> (i32, i32) {
    %c0_i32 = arith.constant 0 : i32
    return %arg0, %arg1 : i32, i32
  }
  func.func @transform_7(%arg0: i32, %arg1: i32) -> (i32, i32) {
    %c0_i32 = arith.constant 0 : i32
    %c0_i32_0 = arith.constant 0 : i32
    return %arg0, %c0_i32 : i32, i32
  }
}

module attributes {stable_mosaic.version = 11 : i64} {
  func.func @_gat_conv_kernel(%arg0: i32, %arg1: i32, %arg2: memref<1x128xf32, #tpu.memory_space<vmem>>, %arg3: memref<128x1xf32, #tpu.memory_space<vmem>>, %arg4: memref<1x256x128xbf16, #tpu.memory_space<vmem>>, %arg5: memref<1x128xf32, #tpu.memory_space<vmem>>, %arg6: memref<1x128xf32, #tpu.memory_space<vmem>>, %arg7: memref<1x128xf32, #tpu.memory_space<vmem>>, %arg8: memref<128x128xi8, #tpu.memory_space<vmem>>, %arg9: memref<128x128xf32, #tpu.memory_space<vmem>>, %arg10: memref<1x128x1xf32, #tpu.memory_space<vmem>>, %arg11: memref<1x128x1xf32, #tpu.memory_space<vmem>>, %arg12: memref<128x128xf32, #tpu.memory_space<vmem>>) attributes {dimension_semantics = [#tpu.dimension_semantics<parallel>, #tpu.dimension_semantics<arbitrary>], iteration_bounds = array<i64: 2, 2>, scalar_prefetch = 0 : i64, scratch_operands = 3 : i64, tpu.core_type = #tpu.core_type<tc>, window_params = [{transform_indices = @transform_0, window_bounds = array<i64: 1, 128>}, {transform_indices = @transform_1, window_bounds = array<i64: 128, 1>}, {pipeline_mode = #tpu.pipeline_mode<synchronous>, transform_indices = @transform_2, window_bounds = array<i64: 1, 256, 128>}, {pipeline_mode = #tpu.pipeline_mode<synchronous>, transform_indices = @transform_3, window_bounds = array<i64: 1, 128>}, {pipeline_mode = #tpu.pipeline_mode<synchronous>, transform_indices = @transform_4, window_bounds = array<i64: 1, 128>}, {pipeline_mode = #tpu.pipeline_mode<synchronous>, transform_indices = @transform_5, window_bounds = array<i64: 1, 128>}, {transform_indices = @transform_6, window_bounds = array<i64: 128, 128>}, {transform_indices = @transform_7, window_bounds = array<i64: 128, 128>}]} {
    %c0_i32 = arith.constant 0 : i32
    %0 = arith.cmpi eq, %arg1, %c0_i32 : i32
    %1 = arith.extui %0 : i1 to i32
    %cst = arith.constant -1.000000e+30 : f32
    %c0_i32_0 = arith.constant 0 : i32
    %2 = arith.cmpi ne, %1, %c0_i32_0 : i32
    scf.if %2 {
      %63 = vector.broadcast %cst : f32 to vector<1x128x1xf32>
      %c0_36 = arith.constant 0 : index
      %c0_37 = arith.constant 0 : index
      %c0_38 = arith.constant 0 : index
      %64 = vector.load %arg10[%c0_36, %c0_37, %c0_38] : memref<1x128x1xf32, #tpu.memory_space<vmem>>, vector<1x128x1xf32>
      tpu.vector_store %arg10[%c0_36, %c0_37, %c0_38], %63 {strides = array<i32>} : memref<1x128x1xf32, #tpu.memory_space<vmem>>, vector<1x128x1xf32>,
      %cst_39 = arith.constant 0.000000e+00 : f32
      %65 = vector.broadcast %cst_39 : f32 to vector<1x128x1xf32>
      %c0_40 = arith.constant 0 : index
      %c0_41 = arith.constant 0 : index
      %c0_42 = arith.constant 0 : index
      %66 = vector.load %arg11[%c0_40, %c0_41, %c0_42] : memref<1x128x1xf32, #tpu.memory_space<vmem>>, vector<1x128x1xf32>
      tpu.vector_store %arg11[%c0_40, %c0_41, %c0_42], %65 {strides = array<i32>} : memref<1x128x1xf32, #tpu.memory_space<vmem>>, vector<1x128x1xf32>,
      %cst_43 = arith.constant 0.000000e+00 : f32
      %67 = vector.broadcast %cst_43 : f32 to vector<128x128xf32>
      %c0_44 = arith.constant 0 : index
      %c0_45 = arith.constant 0 : index
      %68 = vector.load %arg12[%c0_44, %c0_45] : memref<128x128xf32, #tpu.memory_space<vmem>>, vector<128x128xf32>
      tpu.vector_store %arg12[%c0_44, %c0_45], %67 {strides = array<i32>} : memref<128x128xf32, #tpu.memory_space<vmem>>, vector<128x128xf32>,
    } else {
    }
    %c0 = arith.constant 0 : index
    %c0_1 = arith.constant 0 : index
    %3 = vector.load %arg8[%c0, %c0_1] : memref<128x128xi8, #tpu.memory_space<vmem>>, vector<128x128xi8>
    %c0_i8 = arith.constant 0 : i8
    %4 = vector.broadcast %c0_i8 : i8 to vector<128x128xi8>
    %5 = arith.cmpi ne, %3, %4 : vector<128x128xi8>
    %c0_2 = arith.constant 0 : index
    %c0_3 = arith.constant 0 : index
    %6 = vector.load %arg3[%c0_2, %c0_3] : memref<128x1xf32, #tpu.memory_space<vmem>>, vector<128x1xf32>
    %c128_i32 = arith.constant 128 : i32
    %7 = arith.muli %arg1, %c128_i32 : i32
    %8 = tpu.assume_multiple %7, 128 : i32
    %cst_4 = arith.constant 0.000000e+00 : f32
    %9 = vector.broadcast %cst_4 : f32 to vector<128x128xf32>
    %cst_5 = arith.constant 0.000000e+00 : f32
    %10 = vector.broadcast %cst_5 : f32 to vector<128x128xf32>
    %c0_6 = arith.constant 0 : index
    %c0_7 = arith.constant 0 : index
    %11 = vector.load %arg2[%c0_6, %c0_7] : memref<1x128xf32, #tpu.memory_space<vmem>>, vector<1x128xf32>
    %12 = vector.broadcast %6 : vector<128x1xf32> to vector<128x128xf32>
    %13 = vector.broadcast %11 : vector<1x128xf32> to vector<128x128xf32>
    %14 = arith.addf %12, %13 : vector<128x128xf32>
    %cst_8 = arith.constant 0.000000e+00 : f32
    %15 = vector.broadcast %cst_8 : f32 to vector<128x128xf32>
    %16 = arith.cmpf ogt, %14, %15 : vector<128x128xf32>
    %cst_9 = arith.constant 2.000000e-01 : f32
    %17 = vector.broadcast %cst_9 : f32 to vector<128x128xf32>
    %18 = arith.mulf %17, %14 : vector<128x128xf32>
    %19 = arith.select %16, %14, %18 : vector<128x128xi1>, vector<128x128xf32>
    %cst_10 = arith.constant -1.000000e+30 : f32
    %20 = vector.broadcast %cst_10 : f32 to vector<128x128xf32>
    %21 = arith.select %5, %19, %20 : vector<128x128xi1>, vector<128x128xf32>
    %c0_11 = arith.constant 0 : index
    %c0_12 = arith.constant 0 : index
    %c0_13 = arith.constant 0 : index
    %22 = vector.load %arg10[%c0_11, %c0_12, %c0_13] : memref<1x128x1xf32, #tpu.memory_space<vmem>>, vector<1x128x1xf32>
    %23 = vector.shape_cast %22 : vector<1x128x1xf32> to vector<128x1xf32>
    %cst_14 = arith.constant dense<0xFF800000> : vector<128xf32>
    %24 = vector.multi_reduction <maximumf>, %21, %cst_14 [1] : vector<128x128xf32> to vector<128xf32>
    %25 = vector.shape_cast %24 : vector<128xf32> to vector<128x1xf32>
    %26 = arith.maximumf %23, %25 : vector<128x1xf32>
    %27 = arith.subf %23, %26 : vector<128x1xf32>
    %28 = math.exp %27 : vector<128x1xf32>
    %29 = vector.broadcast %26 : vector<128x1xf32> to vector<128x128xf32>
    %30 = arith.subf %21, %29 : vector<128x128xf32>
    %31 = arith.truncf %30 : vector<128x128xf32> to vector<128x128xbf16>
    %32 = math.exp %31 : vector<128x128xbf16>
    %c0_15 = arith.constant 0 : index
    %c0_16 = arith.constant 0 : index
    %c0_17 = arith.constant 0 : index
    %33 = vector.load %arg11[%c0_15, %c0_16, %c0_17] : memref<1x128x1xf32, #tpu.memory_space<vmem>>, vector<1x128x1xf32>
    %34 = vector.shape_cast %33 : vector<1x128x1xf32> to vector<128x1xf32>
    %35 = arith.mulf %28, %34 : vector<128x1xf32>
    %36 = arith.extf %32 : vector<128x128xbf16> to vector<128x128xf32>
    %cst_18 = arith.constant dense<0.000000e+00> : vector<128xf32>
    %37 = vector.multi_reduction <add>, %36, %cst_18 [1] : vector<128x128xf32> to vector<128xf32>
    %38 = vector.shape_cast %37 : vector<128xf32> to vector<128x1xf32>
    %39 = arith.addf %35, %38 : vector<128x1xf32>
    %c0_19 = arith.constant 0 : index
    %c0_20 = arith.constant 0 : index
    %c0_21 = arith.constant 0 : index
    %40 = vector.load %arg11[%c0_19, %c0_20, %c0_21] : memref<1x128x1xf32, #tpu.memory_space<vmem>>, vector<1x128x1xf32>
    %41 = vector.shape_cast %40 : vector<1x128x1xf32> to vector<128x1xf32>
    %42 = vector.shape_cast %39 : vector<128x1xf32> to vector<1x128x1xf32>
    tpu.vector_store %arg11[%c0_19, %c0_20, %c0_21], %42 {strides = array<i32>} : memref<1x128x1xf32, #tpu.memory_space<vmem>>, vector<1x128x1xf32>,
    %c0_22 = arith.constant 0 : index
    %c0_23 = arith.constant 0 : index
    %c0_24 = arith.constant 0 : index
    %43 = vector.load %arg10[%c0_22, %c0_23, %c0_24] : memref<1x128x1xf32, #tpu.memory_space<vmem>>, vector<1x128x1xf32>
    %44 = vector.shape_cast %43 : vector<1x128x1xf32> to vector<128x1xf32>
    %45 = vector.shape_cast %26 : vector<128x1xf32> to vector<1x128x1xf32>
    tpu.vector_store %arg10[%c0_22, %c0_23, %c0_24], %45 {strides = array<i32>} : memref<1x128x1xf32, #tpu.memory_space<vmem>>, vector<1x128x1xf32>,
    %c0_25 = arith.constant 0 : index
    %c0_26 = arith.constant 0 : index
    %46 = vector.load %arg5[%c0_25, %c0_26] : memref<1x128xf32, #tpu.memory_space<vmem>>, vector<1x128xf32>
    %47 = vector.broadcast %28 : vector<128x1xf32> to vector<128x128xf32>
    %48 = vector.broadcast %46 : vector<1x128xf32> to vector<128x128xf32>
    %49 = arith.mulf %47, %48 : vector<128x128xf32>
    %50 = arith.addf %10, %49 : vector<128x128xf32>
    %c0_27 = arith.constant 0 : index
    %51 = arith.index_cast %8 : i32 to index
    %c0_28 = arith.constant 0 : index
    %52 = vector.load %arg4[%c0_27, %51, %c0_28] : memref<1x256x128xbf16, #tpu.memory_space<vmem>>, vector<1x128x128xbf16>
    %53 = vector.shape_cast %52 : vector<1x128x128xbf16> to vector<128x128xbf16>
    %cst_29 = arith.constant dense<0.000000e+00> : vector<128x128xf32>
    %54 = tpu.matmul %32, %53, %cst_29 {dimension_numbers = #tpu.dot_dimension_numbers<[1], [0], [0], [1], [0, 0, 1, 1], [], []>} : vector<128x128xbf16>, vector<128x128xbf16>, vector<128x128xf32> -> vector<128x128xf32>
    %55 = arith.addf %9, %54 : vector<128x128xf32>
    %c0_30 = arith.constant 0 : index
    %c0_31 = arith.constant 0 : index
    %56 = vector.load %arg12[%c0_30, %c0_31] : memref<128x128xf32, #tpu.memory_space<vmem>>, vector<128x128xf32>
    %57 = arith.mulf %56, %50 : vector<128x128xf32>
    %58 = arith.addf %57, %55 : vector<128x128xf32>
    %c0_32 = arith.constant 0 : index
    %c0_33 = arith.constant 0 : index
    %59 = vector.load %arg12[%c0_32, %c0_33] : memref<128x128xf32, #tpu.memory_space<vmem>>, vector<128x128xf32>
    tpu.vector_store %arg12[%c0_32, %c0_33], %58 {strides = array<i32>} : memref<128x128xf32, #tpu.memory_space<vmem>>, vector<128x128xf32>,
    %c1_i32 = arith.constant 1 : i32
    %60 = arith.cmpi eq, %arg1, %c1_i32 : i32
    %61 = arith.extui %60 : i1 to i32
    %cst_34 = arith.constant -1.000000e+30 : f32
    %c0_i32_35 = arith.constant 0 : i32
    %62 = arith.cmpi ne, %61, %c0_i32_35 : i32
    scf.if %62 {
      %c0_36 = arith.constant 0 : index
      %c0_37 = arith.constant 0 : index
      %c0_38 = arith.constant 0 : index
      %63 = vector.load %arg11[%c0_36, %c0_37, %c0_38] : memref<1x128x1xf32, #tpu.memory_space<vmem>>, vector<1x128x1xf32>
      %64 = tpu.reciprocal %63 {approx = true} : vector<1x128x1xf32> -> vector<1x128x1xf32>
      %cst_39 = arith.constant 0.000000e+00 : f32
      %65 = vector.broadcast %cst_39 : f32 to vector<128x128xf32>
      %66 = vector.shape_cast %64 : vector<1x128x1xf32> to vector<128x1xf32>
      %c0_40 = arith.constant 0 : index
      %c0_41 = arith.constant 0 : index
      %67 = vector.load %arg5[%c0_40, %c0_41] : memref<1x128xf32, #tpu.memory_space<vmem>>, vector<1x128xf32>
      %68 = vector.broadcast %66 : vector<128x1xf32> to vector<128x128xf32>
      %69 = vector.broadcast %67 : vector<1x128xf32> to vector<128x128xf32>
      %70 = arith.mulf %68, %69 : vector<128x128xf32>
      %71 = arith.addf %65, %70 : vector<128x128xf32>
      %c0_42 = arith.constant 0 : index
      %c0_43 = arith.constant 0 : index
      %72 = vector.load %arg12[%c0_42, %c0_43] : memref<128x128xf32, #tpu.memory_space<vmem>>, vector<128x128xf32>
      %73 = arith.mulf %72, %71 : vector<128x128xf32>
      %c0_44 = arith.constant 0 : index
      %c0_45 = arith.constant 0 : index
      %74 = vector.load %arg6[%c0_44, %c0_45] : memref<1x128xf32, #tpu.memory_space<vmem>>, vector<1x128xf32>
      %75 = vector.broadcast %74 : vector<1x128xf32> to vector<128x128xf32>
      %76 = arith.addf %73, %75 : vector<128x128xf32>
      %c0_46 = arith.constant 0 : index
      %c0_47 = arith.constant 0 : index
      %77 = vector.load %arg7[%c0_46, %c0_47] : memref<1x128xf32, #tpu.memory_space<vmem>>, vector<1x128xf32>
      %cst_48 = arith.constant 0.000000e+00 : f32
      %78 = vector.broadcast %cst_48 : f32 to vector<1x128xf32>
      %79 = arith.cmpf ogt, %77, %78 : vector<1x128xf32>
      %80 = vector.shape_cast %79 : vector<1x128xi1> to vector<1x128xi1>
      %81 = vector.broadcast %80 : vector<1x128xi1> to vector<128x128xi1>
      %82 = vector.broadcast %cst_34 : f32 to vector<128x128xf32>
      %83 = arith.select %81, %76, %82 : vector<128x128xi1>, vector<128x128xf32>
      %cst_49 = arith.constant dense<0xFF800000> : vector<128xf32>
      %84 = vector.multi_reduction <maximumf>, %83, %cst_49 [1] : vector<128x128xf32> to vector<128xf32>
      %85 = vector.shape_cast %84 : vector<128xf32> to vector<128x1xf32>
      %86 = vector.broadcast %85 : vector<128x1xf32> to vector<128x128xf32>
      %87 = arith.subf %83, %86 : vector<128x128xf32>
      %88 = math.exp %87 : vector<128x128xf32>
      %cst_50 = arith.constant dense<0.000000e+00> : vector<128xf32>
      %89 = vector.multi_reduction <add>, %88, %cst_50 [1] : vector<128x128xf32> to vector<128xf32>
      %90 = vector.shape_cast %89 : vector<128xf32> to vector<128x1xf32>
      %91 = math.log %90 : vector<128x1xf32>
      %92 = arith.addf %91, %85 : vector<128x1xf32>
      %93 = vector.broadcast %92 : vector<128x1xf32> to vector<128x128xf32>
      %94 = arith.subf %76, %93 : vector<128x128xf32>
      %c0_51 = arith.constant 0 : index
      %c0_52 = arith.constant 0 : index
      %95 = vector.load %arg9[%c0_51, %c0_52] : memref<128x128xf32, #tpu.memory_space<vmem>>, vector<128x128xf32>
      tpu.vector_store %arg9[%c0_51, %c0_52], %94 {strides = array<i32>} : memref<128x128xf32, #tpu.memory_space<vmem>>, vector<128x128xf32>,
    } else {
    }
    return
  }
  func.func @transform_0(%arg0: i32, %arg1: i32) -> (i32, i32) {
    %c0_i32 = arith.constant 0 : i32
    %c0_i32_0 = arith.constant 0 : i32
    return %c0_i32, %arg1 : i32, i32
  }
  func.func @transform_1(%arg0: i32, %arg1: i32) -> (i32, i32) {
    %c0_i32 = arith.constant 0 : i32
    %c0_i32_0 = arith.constant 0 : i32
    return %arg0, %c0_i32 : i32, i32
  }
  func.func @transform_2(%arg0: i32, %arg1: i32) -> (i32, i32, i32) {
    %c0_i32 = arith.constant 0 : i32
    %c0_i32_0 = arith.constant 0 : i32
    %c0_i32_1 = arith.constant 0 : i32
    %c0_i32_2 = arith.constant 0 : i32
    return %c0_i32, %c0_i32_0, %c0_i32_1 : i32, i32, i32
  }
  func.func @transform_3(%arg0: i32, %arg1: i32) -> (i32, i32) {
    %c0_i32 = arith.constant 0 : i32
    %c0_i32_0 = arith.constant 0 : i32
    %c0_i32_1 = arith.constant 0 : i32
    return %c0_i32, %c0_i32_0 : i32, i32
  }
  func.func @transform_4(%arg0: i32, %arg1: i32) -> (i32, i32) {
    %c0_i32 = arith.constant 0 : i32
    %c0_i32_0 = arith.constant 0 : i32
    %c0_i32_1 = arith.constant 0 : i32
    return %c0_i32, %c0_i32_0 : i32, i32
  }
  func.func @transform_5(%arg0: i32, %arg1: i32) -> (i32, i32) {
    %c0_i32 = arith.constant 0 : i32
    %c0_i32_0 = arith.constant 0 : i32
    %c0_i32_1 = arith.constant 0 : i32
    return %c0_i32, %c0_i32_0 : i32, i32
  }
  func.func @transform_6(%arg0: i32, %arg1: i32) -> (i32, i32) {
    %c0_i32 = arith.constant 0 : i32
    return %arg0, %arg1 : i32, i32
  }
  func.func @transform_7(%arg0: i32, %arg1: i32) -> (i32, i32) {
    %c0_i32 = arith.constant 0 : i32
    %c0_i32_0 = arith.constant 0 : i32
    return %arg0, %c0_i32 : i32, i32
  }
}

</mosaic_0001>

<llo_original>
// kernel: gat_forward.3
$region0: #{gat_forward.3}
  #allocation0 [shape = 'u32[]', space=smem, size = 0x4, offset = 0x4, fixed_abs, tag = 'smem constant byte address 0x4 - core index']
  #allocation1 [shape = 'u32[144,128]{1,0:T(1,128)}', space=vmem, size = 0x12000, scoped, tag = 'internal scratch']
  #allocation2 [shape = 'f32[1,128,1]{2,1,0:T(8,128)}', space=vmem, size = 0x10000, scoped, tag = 'scratch operand']
  #allocation3 [shape = 'f32[1,128,1]{2,1,0:T(8,128)}', space=vmem, size = 0x10000, scoped, tag = 'scratch operand']
  #allocation4 [shape = 'f32[128,128]{1,0:T(8,128)}', space=vmem, size = 0x10000, scoped, tag = 'scratch operand']
  %s0 = inlined_call_operand.vmem [shape: f32[1,256], index: 0, kind: input, shape index: {}]
  %s1 = inlined_call_operand.vmem [shape: f32[256,1], index: 1, kind: input, shape index: {}]
  %s2 = inlined_call_operand.vmem [shape: bf16[1,256,128], index: 2, kind: input, shape index: {}]
  %s3 = inlined_call_operand.vmem [shape: f32[1,128], index: 3, kind: input, shape index: {}]
  %s4 = inlined_call_operand.vmem [shape: f32[1,128], index: 4, kind: input, shape index: {}]
  %s5 = inlined_call_operand.vmem [shape: f32[1,128], index: 5, kind: input, shape index: {}]
  %s6 = inlined_call_operand.vmem [shape: s8[256,256], index: 6, kind: input, shape index: {}]
  %s7 = inlined_call_operand.vmem [shape: f32[256,128], index: 7, kind: output, shape index: {}]
  %s8 = sld [smem:[#allocation0]]
  $region107: #{gat_forward.3} parent=0
    _
  %s10 = ssub.s32 1, %s8
  %s11 = scalar_select 0, %s10, %s8
  $region1: #{gat_forward.3} parent=0
    #allocation5 [shape = 'u8[32768]{0}', space=vmem, size = 0x8000, scoped, tag = 'input window, operand 6']
    loop: start=0, step=1, limit=6
    $region2: #{gat_forward.3} parent=1 // loop_pre_header
      _
    $region3: #{gat_forward.3} parent=1 // loop_header
      %s13 = sphi 0, %s17
      %p14 = scmp.ge.s32.totalorder %s13, 6
      %s20 = sphi 0, %s32
      %s21 = sphi 0, %s28
      %s22 = sphi 0, %s20
      %s23 = sphi 0, %s21
      %s24 = sphi 0, %s22
      %s25 = sphi 0, %s23
      %s35 = sphi 0, %s37
      %s38 = sphi 0, %s35
      %s39 = sphi 0, %s38
      %s55 = sphi 0, %s39
      %s61 = sphi 0, %s63
      %s64 = sphi 0, %s61
      %s65 = sphi 0, %s64
      %s81 = sphi 0, %s65
      %s85 = sphi 0, %s85
      %s87 = sphi 0, %s85
      %s88 = sphi 0, %s87
      %s102 = sphi 0, %s88
      %s106 = sphi 0, %s106
      %s108 = sphi 0, %s106
      %s109 = sphi 0, %s108
      %s123 = sphi 0, %s109
      %s127 = sphi 0, %s127
      %s129 = sphi 0, %s127
      %s130 = sphi 0, %s129
      %s144 = sphi 0, %s130
      %s148 = sphi 0, %s148
      %s150 = sphi 0, %s148
      %s151 = sphi 0, %s150
      %s165 = sphi 0, %s151
      %s173 = sphi 0, %s175
      %s176 = sphi 0, %s173
      %s177 = sphi 0, %s176
      %s193 = sphi 0, %s177
      %s199 = sphi 0, %s201
      %s202 = sphi 0, %s199
      %s203 = sphi 0, %s202
      %s219 = sphi 0, %s203
    $region4: #{gat_forward.3} parent=1 // loop_header_branch
      %16 = sbr.rel (%p14) target = $region8
    $region5: #{gat_forward.3} parent=1 // loop_body
      %s18 = ssub.s32 %s13, 1
      %s19 = ssub.s32 %s13, 2
      %s26 = sadd.s32 1, %s21
      %p27 = scmp.ge.s32.totalorder %s26, 2
      %s28 = scalar_select %p27, 0, %s26
      %s29 = sadd.s32 1, %s20
      %s30 = scalar_select %p27, %s29, %s20
      %p31 = scmp.ge.s32.totalorder %s30, 2
      %s32 = scalar_select %p31, 0, %s30
      %s33 = ssub.s32 %s21, %s28
      %p34 = scmp.eq.s32.totalorder %s33, 0
      %s36 = sadd.s32 %s35, 1
      %s37 = scalar_select %p34, %s35, %s36
      %p40 = pneg %p34
      %p41 = scmp.eq.s32.totalorder %s13, 3
      %p42 = por %p40, %p41
      %p43 = scmp.ne.s32.totalorder %s35, %s38
      %p44 = scmp.eq.s32.totalorder %s13, 0
      %p45 = por %p43, %p44
      %p46 = scmp.ne.s32.totalorder %s35, %s38
      %p47 = scmp.eq.s32.totalorder %s18, 3
      %p48 = por %p46, %p47
      %p49 = scmp.ne.s32.totalorder %s38, %s39
      %p50 = scmp.eq.s32.totalorder %s18, 0
      %p51 = por %p49, %p50
      %p52 = scmp.ne.s32.totalorder %s38, %s39
      %p53 = scmp.eq.s32.totalorder %s19, 3
      %p54 = por %p52, %p53
      %p56 = scmp.ne.s32.totalorder %s39, %s55
      %p57 = scmp.eq.s32.totalorder %s19, 0
      %p58 = por %p56, %p57
      %s59 = ssub.s32 %s20, %s32
      %p60 = scmp.eq.s32.totalorder %s59, 0
      %s62 = sadd.s32 %s61, 1
      %s63 = scalar_select %p60, %s61, %s62
      %p66 = pneg %p60
      %p67 = scmp.eq.s32.totalorder %s13, 3
      %p68 = por %p66, %p67
      %p69 = scmp.ne.s32.totalorder %s61, %s64
      %p70 = scmp.eq.s32.totalorder %s13, 0
      %p71 = por %p69, %p70
      %p72 = scmp.ne.s32.totalorder %s61, %s64
      %p73 = scmp.eq.s32.totalorder %s18, 3
      %p74 = por %p72, %p73
      %p75 = scmp.ne.s32.totalorder %s64, %s65
      %p76 = scmp.eq.s32.totalorder %s18, 0
      %p77 = por %p75, %p76
      %p78 = scmp.ne.s32.totalorder %s64, %s65
      %p79 = scmp.eq.s32.totalorder %s19, 3
      %p80 = por %p78, %p79
      %p82 = scmp.ne.s32.totalorder %s65, %s81
      %p83 = scmp.eq.s32.totalorder %s19, 0
      %p84 = por %p82, %p83
      %s86 = sadd.s32 %s85, 1
      %p89 = scmp.eq.s32.totalorder %s13, 3
      %p90 = scmp.ne.s32.totalorder %s85, %s87
      %p91 = scmp.eq.s32.totalorder %s13, 0
      %p92 = por %p90, %p91
      %p93 = scmp.ne.s32.totalorder %s85, %s87
      %p94 = scmp.eq.s32.totalorder %s18, 3
      %p95 = por %p93, %p94
      %p96 = scmp.ne.s32.totalorder %s87, %s88
      %p97 = scmp.eq.s32.totalorder %s18, 0
      %p98 = por %p96, %p97
      %p99 = scmp.ne.s32.totalorder %s87, %s88
      %p100 = scmp.eq.s32.totalorder %s19, 3
      %p101 = por %p99, %p100
      %p103 = scmp.ne.s32.totalorder %s88, %s102
      %p104 = scmp.eq.s32.totalorder %s19, 0
      %p105 = por %p103, %p104
      %s107 = sadd.s32 %s106, 1
      %p110 = scmp.eq.s32.totalorder %s13, 3
      %p111 = scmp.ne.s32.totalorder %s106, %s108
      %p112 = scmp.eq.s32.totalorder %s13, 0
      %p113 = por %p111, %p112
      %p114 = scmp.ne.s32.totalorder %s106, %s108
      %p115 = scmp.eq.s32.totalorder %s18, 3
      %p116 = por %p114, %p115
      %p117 = scmp.ne.s32.totalorder %s108, %s109
      %p118 = scmp.eq.s32.totalorder %s18, 0
      %p119 = por %p117, %p118
      %p120 = scmp.ne.s32.totalorder %s108, %s109
      %p121 = scmp.eq.s32.totalorder %s19, 3
      %p122 = por %p120, %p121
      %p124 = scmp.ne.s32.totalorder %s109, %s123
      %p125 = scmp.eq.s32.totalorder %s19, 0
      %p126 = por %p124, %p125
      %s128 = sadd.s32 %s127, 1
      %p131 = scmp.eq.s32.totalorder %s13, 3
      %p132 = scmp.ne.s32.totalorder %s127, %s129
      %p133 = scmp.eq.s32.totalorder %s13, 0
      %p134 = por %p132, %p133
      %p135 = scmp.ne.s32.totalorder %s127, %s129
      %p136 = scmp.eq.s32.totalorder %s18, 3
      %p137 = por %p135, %p136
      %p138 = scmp.ne.s32.totalorder %s129, %s130
      %p139 = scmp.eq.s32.totalorder %s18, 0
      %p140 = por %p138, %p139
      %p141 = scmp.ne.s32.totalorder %s129, %s130
      %p142 = scmp.eq.s32.totalorder %s19, 3
      %p143 = por %p141, %p142
      %p145 = scmp.ne.s32.totalorder %s130, %s144
      %p146 = scmp.eq.s32.totalorder %s19, 0
      %p147 = por %p145, %p146
      %s149 = sadd.s32 %s148, 1
      %p152 = scmp.eq.s32.totalorder %s13, 3
      %p153 = scmp.ne.s32.totalorder %s148, %s150
      %p154 = scmp.eq.s32.totalorder %s13, 0
      %p155 = por %p153, %p154
      %p156 = scmp.ne.s32.totalorder %s148, %s150
      %p157 = scmp.eq.s32.totalorder %s18, 3
      %p158 = por %p156, %p157
      %p159 = scmp.ne.s32.totalorder %s150, %s151
      %p160 = scmp.eq.s32.totalorder %s18, 0
      %p161 = por %p159, %p160
      %p162 = scmp.ne.s32.totalorder %s150, %s151
      %p163 = scmp.eq.s32.totalorder %s19, 3
      %p164 = por %p162, %p163
      %p166 = scmp.ne.s32.totalorder %s151, %s165
      %p167 = scmp.eq.s32.totalorder %s19, 0
      %p168 = por %p166, %p167
      %s169 = ssub.s32 %s20, %s32
      %s170 = ssub.s32 %s21, %s28
      %s171 = sor.u32 %s169, %s170
      %p172 = scmp.eq.s32.totalorder %s171, 0
      %s174 = sadd.s32 %s173, 1
      %s175 = scalar_select %p172, %s173, %s174
      %p178 = pneg %p172
      %p179 = scmp.eq.s32.totalorder %s13, 3
      %p180 = por %p178, %p179
      %p181 = scmp.ne.s32.totalorder %s173, %s176
      %p182 = scmp.eq.s32.totalorder %s13, 0
      %p183 = por %p181, %p182
      %p184 = scmp.ne.s32.totalorder %s173, %s176
      %p185 = scmp.eq.s32.totalorder %s18, 3
      %p186 = por %p184, %p185
      %p187 = scmp.ne.s32.totalorder %s176, %s177
      %p188 = scmp.eq.s32.totalorder %s18, 0
      %p189 = por %p187, %p188
      %p190 = scmp.ne.s32.totalorder %s176, %s177
      %p191 = scmp.eq.s32.totalorder %s19, 3
      %p192 = por %p190, %p191
      %p194 = scmp.ne.s32.totalorder %s177, %s193
      %p195 = scmp.eq.s32.totalorder %s19, 0
      %p196 = por %p194, %p195
      %s197 = ssub.s32 %s20, %s32
      %p198 = scmp.eq.s32.totalorder %s197, 0
      %s200 = sadd.s32 %s199, 1
      %s201 = scalar_select %p198, %s199, %s200
      %p204 = pneg %p198
      %p205 = scmp.eq.s32.totalorder %s13, 3
      %p206 = por %p204, %p205
      %p207 = scmp.ne.s32.totalorder %s199, %s202
      %p208 = scmp.eq.s32.totalorder %s13, 0
      %p209 = por %p207, %p208
      %p210 = scmp.ne.s32.totalorder %s199, %s202
      %p211 = scmp.eq.s32.totalorder %s18, 3
      %p212 = por %p210, %p211
      %p213 = scmp.ne.s32.totalorder %s202, %s203
      %p214 = scmp.eq.s32.totalorder %s18, 0
      %p215 = por %p213, %p214
      %p216 = scmp.ne.s32.totalorder %s202, %s203
      %p217 = scmp.eq.s32.totalorder %s19, 3
      %p218 = por %p216, %p217
      %p220 = scmp.ne.s32.totalorder %s203, %s219
      %p221 = scmp.eq.s32.totalorder %s19, 0
      %p222 = por %p220, %p221
      %p223 = scmp.le.s32.totalorder 1, %s13
      %p224 = scmp.lt.s32.totalorder %s13, 5
      %p225 = pnand %p223, %p224
      %p226 = pneg %p225
      // Predicated region
      $region9: #{gat_forward.3} parent=5 // pred_check
        _
      $region10: #{gat_forward.3} parent=5 // pred_check_branch
        %228 = sbr.rel (%p225) target = $region12
      $region11: #{gat_forward.3} parent=5 // pred_region
        %s229 = ssub.s32 %s13, 1
        // Predicated region
        $region13: #{gat_forward.3} parent=11 // pred_check
          %p230 = pneg %p98
        $region14: #{gat_forward.3} parent=11 // pred_check_branch
          %232 = sbr.rel (%p230) target = $region16
        $region15: #{gat_forward.3} parent=11 // pred_region
          _
        $region16: #{gat_forward.3} parent=11 // pred_fallthru
          _
        // Predicated region
        $region17: #{gat_forward.3} parent=11 // pred_check
          %p233 = pneg %p119
        $region18: #{gat_forward.3} parent=11 // pred_check_branch
          %235 = sbr.rel (%p233) target = $region20
        $region19: #{gat_forward.3} parent=11 // pred_region
          _
        $region20: #{gat_forward.3} parent=11 // pred_fallthru
          _
        // Predicated region
        $region21: #{gat_forward.3} parent=11 // pred_check
          %p236 = pneg %p140
        $region22: #{gat_forward.3} parent=11 // pred_check_branch
          %238 = sbr.rel (%p236) target = $region24
        $region23: #{gat_forward.3} parent=11 // pred_region
          _
        $region24: #{gat_forward.3} parent=11 // pred_fallthru
          _
        // Predicated region
        $region25: #{gat_forward.3} parent=11 // pred_check
          %p239 = pneg %p161
        $region26: #{gat_forward.3} parent=11 // pred_check_branch
          %241 = sbr.rel (%p239) target = $region28
        $region27: #{gat_forward.3} parent=11 // pred_region
          _
        $region28: #{gat_forward.3} parent=11 // pred_fallthru
          _
      $region12: #{gat_forward.3} parent=5 // pred_fallthru
        _
      %p242 = scmp.lt.s32.totalorder %s13, 4
      // Predicated region
      $region29: #{gat_forward.3} parent=5 // pred_check
        %p243 = pneg %p242
      $region30: #{gat_forward.3} parent=5 // pred_check_branch
        %245 = sbr.rel (%p243) target = $region32
      $region31: #{gat_forward.3} parent=5 // pred_region
        // Predicated region
        $region33: #{gat_forward.3} parent=31 // pred_check
          %p246 = pneg %p45
        $region34: #{gat_forward.3} parent=31 // pred_check_branch
          %248 = sbr.rel (%p246) target = $region36
        $region35: #{gat_forward.3} parent=31 // pred_region
          %p249 = scmp.lt.s32.totalorder %s21, 1
          %s250 = scalar_select %p249, %s21, 1
          %s251 = scalar_lea.vmem %s0, %s250
        $region36: #{gat_forward.3} parent=31 // pred_fallthru
          _
        // Predicated region
        $region37: #{gat_forward.3} parent=31 // pred_check
          %p252 = pneg %p71
        $region38: #{gat_forward.3} parent=31 // pred_check_branch
          %254 = sbr.rel (%p252) target = $region40
        $region39: #{gat_forward.3} parent=31 // pred_region
          %s255 = smul.u32 16, %s20
          %p256 = scmp.lt.s32.totalorder %s255, 31
          %s257 = scalar_select %p256, %s255, 31
          %s258 = smul.addr %s257, 8
          %s259 = scalar_lea.vmem %s1, %s258
          %s260 = smul.u32 16, %s20
        $region40: #{gat_forward.3} parent=31 // pred_fallthru
          _
        // Predicated region
        $region41: #{gat_forward.3} parent=31 // pred_check
          %p261 = pneg %p183
        $region42: #{gat_forward.3} parent=31 // pred_check_branch
          %263 = sbr.rel (%p261) target = $region44
        $region43: #{gat_forward.3} parent=31 // pred_region
          %s264 = sand.u32 %s173, 1
          %s265 = sand.u32 %s173, 1
          %s266 = smul.addr %s265, 32
          %s267 = scalar_lea.vmem [#allocation5], %s266
          %s268 = smul.u32 4, %s20
          %s269 = smul.addr %s268, 2
          %s270 = sadd.s32 %s21, %s269
          %s271 = smul.addr %s270, 8
          %s272 = scalar_lea.vmem %s6, %s271
          // Predicated region
          $region45: #{gat_forward.3} parent=43 // pred_check
            _
          $region46: #{gat_forward.3} parent=43 // pred_check_branch
            %274 = sbr.rel (0) target = $region48
          $region47: #{gat_forward.3} parent=43 // pred_region
            // Predicated region
            $region49: #{gat_forward.3} parent=47 // pred_check
              _
            $region50: #{gat_forward.3} parent=47 // pred_check_branch
              %276 = sbr.rel (0) target = $region52
            $region51: #{gat_forward.3} parent=47 // pred_region
              // Predicated region
              $region64: #{gat_forward.3} parent=51 // pred_check
                _
              $region65: #{gat_forward.3} parent=51 // pred_check_branch
                %297 = sbr.rel (0) target = $region67
              $region66: #{gat_forward.3} parent=51 // pred_region
                loop: start=0, step=1, limit=1
                $region68: #{gat_forward.3} parent=66 // loop_pre_header
                  _
                $region69: #{gat_forward.3} parent=66 // loop_header
                  %s299 = sphi 0, %s303
                  %p300 = scmp.ge.s32.totalorder %s299, 1
                  %s304 = sphi %s272, %s272
                  %s305 = sphi %s267, %s267
                $region70: #{gat_forward.3} parent=66 // loop_header_branch
                  %302 = sbr.rel (%p300) target = $region74
                $region71: #{gat_forward.3} parent=66 // loop_body
                  %v306 = vld [vmem:[%s304] sm:$0xff]
                  %307 = vst [vmem:[%s305] sm:$0xff] %v306
                  %v308 = vld [vmem:[%s304 + $0x10] sm:$0xff]
                  %309 = vst [vmem:[%s305 + $0x8] sm:$0xff] %v308
                  %v310 = vld [vmem:[%s304 + $0x20] sm:$0xff]
                  %311 = vst [vmem:[%s305 + $0x10] sm:$0xff] %v310
                  %v312 = vld [vmem:[%s304 + $0x30] sm:$0xff]
                  %313 = vst [vmem:[%s305 + $0x18] sm:$0xff] %v312
                $region72: #{gat_forward.3} parent=66 // loop_footer
                  %s303 = sadd.s32 1, %s299
                $region73: #{gat_forward.3} parent=66 // loop_footer_branch
                  %298 = sbr.rel target = $region69
                $region74: #{gat_forward.3} parent=66 // loop_exit
                  _
              $region67: #{gat_forward.3} parent=51 // pred_fallthru
                _
              // Predicated region
              $region75: #{gat_forward.3} parent=51 // pred_check
                _
              $region76: #{gat_forward.3} parent=51 // pred_check_branch
                %315 = sbr.rel target = $region78
              $region77: #{gat_forward.3} parent=51 // pred_region
                _
              $region78: #{gat_forward.3} parent=51 // pred_fallthru
                _
            $region52: #{gat_forward.3} parent=47 // pred_fallthru
              _
            // Predicated region
            $region53: #{gat_forward.3} parent=47 // pred_check
              _
            $region54: #{gat_forward.3} parent=47 // pred_check_branch
              %278 = sbr.rel target = $region56
            $region55: #{gat_forward.3} parent=47 // pred_region
              loop: start=0, step=1, limit=1
              $region57: #{gat_forward.3} parent=55 // loop_pre_header
                _
              $region58: #{gat_forward.3} parent=55 // loop_header
                %s281 = sphi 0, %s285
                %p282 = scmp.ge.s32.totalorder %s281, 1
                %s286 = sphi %s272, %s272
                %s287 = sphi %s267, %s267
              $region59: #{gat_forward.3} parent=55 // loop_header_branch
                %284 = sbr.rel (%p282) target = $region63
              $region60: #{gat_forward.3} parent=55 // loop_body
                %v288 = vld [vmem:[%s286] sm:$0xff]
                %289 = vst [vmem:[%s287] sm:$0xff] %v288
                %v290 = vld [vmem:[%s286 + $0x10] sm:$0xff]
                %291 = vst [vmem:[%s287 + $0x8] sm:$0xff] %v290
                %v292 = vld [vmem:[%s286 + $0x20] sm:$0xff]
                %293 = vst [vmem:[%s287 + $0x10] sm:$0xff] %v292
                %v294 = vld [vmem:[%s286 + $0x30] sm:$0xff]
                %295 = vst [vmem:[%s287 + $0x18] sm:$0xff] %v294
              $region61: #{gat_forward.3} parent=55 // loop_footer
                %s285 = sadd.s32 1, %s281
              $region62: #{gat_forward.3} parent=55 // loop_footer_branch
                %280 = sbr.rel target = $region58
              $region63: #{gat_forward.3} parent=55 // loop_exit
                _
            $region56: #{gat_forward.3} parent=47 // pred_fallthru
              _
          $region48: #{gat_forward.3} parent=43 // pred_fallthru
            _
          %316 = vnop
        $region44: #{gat_forward.3} parent=31 // pred_fallthru
          _
      $region32: #{gat_forward.3} parent=5 // pred_fallthru
        _
      %p317 = scmp.le.s32.totalorder 1, %s13
      %p318 = scmp.lt.s32.totalorder %s13, 5
      %p319 = pnand %p317, %p318
      %p320 = pneg %p319
      // Predicated region
      $region79: #{gat_forward.3} parent=5 // pred_check
        _
      $region80: #{gat_forward.3} parent=5 // pred_check_branch
        %322 = sbr.rel (%p319) target = $region82
      $region81: #{gat_forward.3} parent=5 // pred_region
        %s323 = ssub.s32 %s13, 1
        %s324 = sand.u32 %s176, 1
        %s325 = sand.u32 %s176, 1
        %s326 = smul.addr %s325, 32
        %s327 = scalar_lea.vmem [#allocation5], %s326
        // Predicated region
        $region83: #{gat_forward.3} parent=81 // pred_check
          %p328 = pneg %p189
        $region84: #{gat_forward.3} parent=81 // pred_check_branch
          %330 = sbr.rel (%p328) target = $region86
        $region85: #{gat_forward.3} parent=81 // pred_region
          _
        $region86: #{gat_forward.3} parent=81 // pred_fallthru
          _
        %p331 = scmp.lt.s32.totalorder %s23, 1
        %s332 = scalar_select %p331, %s23, 1
        %s333 = scalar_lea.vmem %s0, %s332
        %p334 = pneg %p51
        %p335 = pneg %p48
        %s336 = smul.u32 16, %s22
        %p337 = scmp.lt.s32.totalorder %s336, 31
        %s338 = scalar_select %p337, %s336, 31
        %s339 = smul.addr %s338, 8
        %s340 = scalar_lea.vmem %s1, %s339
        %p341 = pneg %p77
        %p342 = pneg %p74
        %p343 = pneg %p98
        %p344 = pneg %p95
        %p345 = pneg %p119
        %p346 = pneg %p116
        %p347 = pneg %p140
        %p348 = pneg %p137
        %p349 = pneg %p161
        %p350 = pneg %p158
        %s351 = sand.u32 %s176, 1
        %s352 = sand.u32 %s176, 1
        %s353 = smul.addr %s352, 32
        %s354 = scalar_lea.vmem [#allocation5], %s353
        %p355 = pneg %p189
        %p356 = pneg %p186
        %p357 = pneg %p215
        %p358 = pneg %p212
        %s359 = smul.u32 16, %s22
        %p360 = scmp.lt.s32.totalorder %s359, 31
        %s361 = scalar_select %p360, %s359, 31
        %s362 = smul.addr %s361, 8
        %s363 = scalar_lea.vmem %s7, %s362
        %p364 = scmp.lt.s32.totalorder %s23, 1
        %s365 = scalar_select %p364, %s23, 1
        %s366 = scalar_lea.vmem %s0, %s365
        %s367 = smul.u32 16, %s22
        %p368 = scmp.lt.s32.totalorder %s367, 31
        %s369 = scalar_select %p368, %s367, 31
        %s370 = smul.addr %s369, 8
        %s371 = scalar_lea.vmem %s1, %s370
        %s372 = smul.u32 16, %s22
        %s373 = smul.u32 4, %s22
        %s374 = smul.u32 16, %s22
        %p375 = scmp.lt.s32.totalorder %s374, 31
        %s376 = scalar_select %p375, %s374, 31
        %s377 = smul.addr %s376, 8
        %s378 = scalar_lea.vmem %s7, %s377
        %s379 = smul.u32 16, %s22
        %p383 = scmp.eq.s32.totalorder %s23, 0
        // Predicated region
        $region87: #{gat_forward.3} parent=81 // pred_check
          %p384 = pneg %p383
        $region88: #{gat_forward.3} parent=81 // pred_check_branch
          %386 = sbr.rel (%p384) target = $region90
        $region89: #{gat_forward.3} parent=81 // pred_region
          %vm387 = vcmask 7168
          %388 = vst.msk [vmem:[#allocation2] sm:$0xff] %vm387, -1e+30
          %389 = vst.msk [vmem:[#allocation2 + $0x8] sm:$0xff] %vm387, -1e+30
          %390 = vst.msk [vmem:[#allocation2 + $0x10] sm:$0xff] %vm387, -1e+30
          %391 = vst.msk [vmem:[#allocation2 + $0x18] sm:$0xff] %vm387, -1e+30
          %392 = vst.msk [vmem:[#allocation2 + $0x20] sm:$0xff] %vm387, -1e+30
          %393 = vst.msk [vmem:[#allocation2 + $0x28] sm:$0xff] %vm387, -1e+30
          %394 = vst.msk [vmem:[#allocation2 + $0x30] sm:$0xff] %vm387, -1e+30
          %395 = vst.msk [vmem:[#allocation2 + $0x38] sm:$0xff] %vm387, -1e+30
          %396 = vst.msk [vmem:[#allocation2 + $0x40] sm:$0xff] %vm387, -1e+30
          %397 = vst.msk [vmem:[#allocation2 + $0x48] sm:$0xff] %vm387, -1e+30
          %398 = vst.msk [vmem:[#allocation2 + $0x50] sm:$0xff] %vm387, -1e+30
          %399 = vst.msk [vmem:[#allocation2 + $0x58] sm:$0xff] %vm387, -1e+30
          %400 = vst.msk [vmem:[#allocation2 + $0x60] sm:$0xff] %vm387, -1e+30
          %401 = vst.msk [vmem:[#allocation2 + $0x68] sm:$0xff] %vm387, -1e+30
          %402 = vst.msk [vmem:[#allocation2 + $0x70] sm:$0xff] %vm387, -1e+30
          %403 = vst.msk [vmem:[#allocation2 + $0x78] sm:$0xff] %vm387, -1e+30
          %404 = vst.msk [vmem:[#allocation3] sm:$0xff] %vm387, 0.0
          %405 = vst.msk [vmem:[#allocation3 + $0x8] sm:$0xff] %vm387, 0.0
          %406 = vst.msk [vmem:[#allocation3 + $0x10] sm:$0xff] %vm387, 0.0
          %407 = vst.msk [vmem:[#allocation3 + $0x18] sm:$0xff] %vm387, 0.0
          %408 = vst.msk [vmem:[#allocation3 + $0x20] sm:$0xff] %vm387, 0.0
          %409 = vst.msk [vmem:[#allocation3 + $0x28] sm:$0xff] %vm387, 0.0
          %410 = vst.msk [vmem:[#allocation3 + $0x30] sm:$0xff] %vm387, 0.0
          %411 = vst.msk [vmem:[#allocation3 + $0x38] sm:$0xff] %vm387, 0.0
          %412 = vst.msk [vmem:[#allocation3 + $0x40] sm:$0xff] %vm387, 0.0
          %413 = vst.msk [vmem:[#allocation3 + $0x48] sm:$0xff] %vm387, 0.0
          %414 = vst.msk [vmem:[#allocation3 + $0x50] sm:$0xff] %vm387, 0.0
          %415 = vst.msk [vmem:[#allocation3 + $0x58] sm:$0xff] %vm387, 0.0
          %416 = vst.msk [vmem:[#allocation3 + $0x60] sm:$0xff] %vm387, 0.0
          %417 = vst.msk [vmem:[#allocation3 + $0x68] sm:$0xff] %vm387, 0.0
          %418 = vst.msk [vmem:[#allocation3 + $0x70] sm:$0xff] %vm387, 0.0
          %419 = vst.msk [vmem:[#allocation3 + $0x78] sm:$0xff] %vm387, 0.0
          %420 = vst [vmem:[#allocation4] sm:$0xff] 0.0
          %421 = vst [vmem:[#allocation4 + $0x8] sm:$0xff] 0.0
          %422 = vst [vmem:[#allocation4 + $0x10] sm:$0xff] 0.0
          %423 = vst [vmem:[#allocation4 + $0x18] sm:$0xff] 0.0
          %424 = vst [vmem:[#allocation4 + $0x20] sm:$0xff] 0.0
          %425 = vst [vmem:[#allocation4 + $0x28] sm:$0xff] 0.0
          %426 = vst [vmem:[#allocation4 + $0x30] sm:$0xff] 0.0
          %427 = vst [vmem:[#allocation4 + $0x38] sm:$0xff] 0.0
          %428 = vst [vmem:[#allocation4 + $0x40] sm:$0xff] 0.0
          %429 = vst [vmem:[#allocation4 + $0x48] sm:$0xff] 0.0
          %430 = vst [vmem:[#allocation4 + $0x50] sm:$0xff] 0.0
          %431 = vst [vmem:[#allocation4 + $0x58] sm:$0xff] 0.0
          %432 = vst [vmem:[#allocation4 + $0x60] sm:$0xff] 0.0
          %433 = vst [vmem:[#allocation4 + $0x68] sm:$0xff] 0.0
          %434 = vst [vmem:[#allocation4 + $0x70] sm:$0xff] 0.0
          %435 = vst [vmem:[#allocation4 + $0x78] sm:$0xff] 0.0
        $region90: #{gat_forward.3} parent=81 // pred_fallthru
          _
        %v436 = vld [vmem:[%s327] sm:$0xff]
        %v437 = vld [vmem:[%s327 + $0x8] sm:$0xff]
        %v438 = vld [vmem:[%s327 + $0x10] sm:$0xff]
        %v439 = vld [vmem:[%s327 + $0x18] sm:$0xff]
        %vm440 = vnez %v436
        %vm441 = vnez %v437
        %vm442 = vnez %v438
        %vm443 = vnez %v439
        %v444 = vld [vmem:[%s371] sm:$0xff]
        %v445 = vld [vmem:[%s371 + $0x8] sm:$0xff]
        %v446 = vld [vmem:[%s371 + $0x10] sm:$0xff]
        %v447 = vld [vmem:[%s371 + $0x18] sm:$0xff]
        %v448 = vld [vmem:[%s371 + $0x20] sm:$0xff]
        %v449 = vld [vmem:[%s371 + $0x28] sm:$0xff]
        %v450 = vld [vmem:[%s371 + $0x30] sm:$0xff]
        %v451 = vld [vmem:[%s371 + $0x38] sm:$0xff]
        %v452 = vld [vmem:[%s371 + $0x40] sm:$0xff]
        %v453 = vld [vmem:[%s371 + $0x48] sm:$0xff]
        %v454 = vld [vmem:[%s371 + $0x50] sm:$0xff]
        %v455 = vld [vmem:[%s371 + $0x58] sm:$0xff]
        %v456 = vld [vmem:[%s371 + $0x60] sm:$0xff]
        %v457 = vld [vmem:[%s371 + $0x68] sm:$0xff]
        %v458 = vld [vmem:[%s371 + $0x70] sm:$0xff]
        %v459 = vld [vmem:[%s371 + $0x78] sm:$0xff]
        %s460 = smul.u32 %s23, 128
        %v461 = vld [vmem:[%s366] sm:$0x1]
        %463 = vset.pattern.permute.xlu0 0
        %464 = vperm.xlu0 %463, %v444
        %v465 = vpop.permute.xlu0 %464
        %468 = vset.pattern.permute.xlu0 0
        %469 = vperm.xlu0 %468, %v445
        %v470 = vpop.permute.xlu0 %469
        %473 = vset.pattern.permute.xlu0 0
        %474 = vperm.xlu0 %473, %v446
        %v475 = vpop.permute.xlu0 %474
        %478 = vset.pattern.permute.xlu0 0
        %479 = vperm.xlu0 %478, %v447
        %v480 = vpop.permute.xlu0 %479
        %483 = vset.pattern.permute.xlu0 0
        %484 = vperm.xlu0 %483, %v448
        %v485 = vpop.permute.xlu0 %484
        %488 = vset.pattern.permute.xlu0 0
        %489 = vperm.xlu0 %488, %v449
        %v490 = vpop.permute.xlu0 %489
        %493 = vset.pattern.permute.xlu0 0
        %494 = vperm.xlu0 %493, %v450
        %v495 = vpop.permute.xlu0 %494
        %498 = vset.pattern.permute.xlu0 0
        %499 = vperm.xlu0 %498, %v451
        %v500 = vpop.permute.xlu0 %499
        %503 = vset.pattern.permute.xlu0 0
        %504 = vperm.xlu0 %503, %v452
        %v505 = vpop.permute.xlu0 %504
        %508 = vset.pattern.permute.xlu0 0
        %509 = vperm.xlu0 %508, %v453
        %v510 = vpop.permute.xlu0 %509
        %513 = vset.pattern.permute.xlu0 0
        %514 = vperm.xlu0 %513, %v454
        %v515 = vpop.permute.xlu0 %514
        %518 = vset.pattern.permute.xlu0 0
        %519 = vperm.xlu0 %518, %v455
        %v520 = vpop.permute.xlu0 %519
        %523 = vset.pattern.permute.xlu0 0
        %524 = vperm.xlu0 %523, %v456
        %v525 = vpop.permute.xlu0 %524
        %528 = vset.pattern.permute.xlu0 0
        %529 = vperm.xlu0 %528, %v457
        %v530 = vpop.permute.xlu0 %529
        %533 = vset.pattern.permute.xlu0 0
        %534 = vperm.xlu0 %533, %v458
        %v535 = vpop.permute.xlu0 %534
        %538 = vset.pattern.permute.xlu0 0
        %539 = vperm.xlu0 %538, %v459
        %v540 = vpop.permute.xlu0 %539
        %v543 = vlaneseq
        %v544 = vshrl.u32 %v543, 7
        %v545 = vsub.s32 0, %v544
        %v546 = vrot.slane %v461, %v545
        %v548 = vadd.f32 %v465, %v546
        %v549 = vadd.f32 %v470, %v546
        %v550 = vadd.f32 %v475, %v546
        %v551 = vadd.f32 %v480, %v546
        %v552 = vadd.f32 %v485, %v546
        %v553 = vadd.f32 %v490, %v546
        %v554 = vadd.f32 %v495, %v546
        %v555 = vadd.f32 %v500, %v546
        %v556 = vadd.f32 %v505, %v546
        %v557 = vadd.f32 %v510, %v546
        %v558 = vadd.f32 %v515, %v546
        %v559 = vadd.f32 %v520, %v546
        %v560 = vadd.f32 %v525, %v546
        %v561 = vadd.f32 %v530, %v546
        %v562 = vadd.f32 %v535, %v546
        %v563 = vadd.f32 %v540, %v546
        %vm564 = vcmp.gt.f32.partialorder %v548, 0.0
        %vm565 = vcmp.gt.f32.partialorder %v549, 0.0
        %vm566 = vcmp.gt.f32.partialorder %v550, 0.0
        %vm567 = vcmp.gt.f32.partialorder %v551, 0.0
        %vm568 = vcmp.gt.f32.partialorder %v552, 0.0
        %vm569 = vcmp.gt.f32.partialorder %v553, 0.0
        %vm570 = vcmp.gt.f32.partialorder %v554, 0.0
        %vm571 = vcmp.gt.f32.partialorder %v555, 0.0
        %vm572 = vcmp.gt.f32.partialorder %v556, 0.0
        %vm573 = vcmp.gt.f32.partialorder %v557, 0.0
        %vm574 = vcmp.gt.f32.partialorder %v558, 0.0
        %vm575 = vcmp.gt.f32.partialorder %v559, 0.0
        %vm576 = vcmp.gt.f32.partialorder %v560, 0.0
        %vm577 = vcmp.gt.f32.partialorder %v561, 0.0
        %vm578 = vcmp.gt.f32.partialorder %v562, 0.0
        %vm579 = vcmp.gt.f32.partialorder %v563, 0.0
        %v580 = vmul.f32 %v548, 0.2
        %v581 = vmul.f32 %v549, 0.2
        %v582 = vmul.f32 %v550, 0.2
        %v583 = vmul.f32 %v551, 0.2
        %v584 = vmul.f32 %v552, 0.2
        %v585 = vmul.f32 %v553, 0.2
        %v586 = vmul.f32 %v554, 0.2
        %v587 = vmul.f32 %v555, 0.2
        %v588 = vmul.f32 %v556, 0.2
        %v589 = vmul.f32 %v557, 0.2
        %v590 = vmul.f32 %v558, 0.2
        %v591 = vmul.f32 %v559, 0.2
        %v592 = vmul.f32 %v560, 0.2
        %v593 = vmul.f32 %v561, 0.2
        %v594 = vmul.f32 %v562, 0.2
        %v595 = vmul.f32 %v563, 0.2
        %v596 = vsel %vm564, %v548, %v580
        %v597 = vsel %vm565, %v549, %v581
        %v598 = vsel %vm566, %v550, %v582
        %v599 = vsel %vm567, %v551, %v583
        %v600 = vsel %vm568, %v552, %v584
        %v601 = vsel %vm569, %v553, %v585
        %v602 = vsel %vm570, %v554, %v586
        %v603 = vsel %vm571, %v555, %v587
        %v604 = vsel %vm572, %v556, %v588
        %v605 = vsel %vm573, %v557, %v589
        %v606 = vsel %vm574, %v558, %v590
        %v607 = vsel %vm575, %v559, %v591
        %v608 = vsel %vm576, %v560, %v592
        %v609 = vsel %vm577, %v561, %v593
        %v610 = vsel %vm578, %v562, %v594
        %v611 = vsel %vm579, %v563, %v595
        %v612 = vsel %vm440, 16843009, 0
        %v613 = vsel %vm441, 16843009, 0
        %v614 = vsel %vm442, 16843009, 0
        %v615 = vsel %vm443, 16843009, 0
        %v616 = vunpack.c.0.s8 %v612
        %v617 = vunpack.c.1.s8 %v612
        %v618 = vunpack.c.2.s8 %v612
        %v619 = vunpack.c.3.s8 %v612
        %v620 = vunpack.c.0.s8 %v613
        %v621 = vunpack.c.1.s8 %v613
        %v622 = vunpack.c.2.s8 %v613
        %v623 = vunpack.c.3.s8 %v613
        %v624 = vunpack.c.0.s8 %v614
        %v625 = vunpack.c.1.s8 %v614
        %v626 = vunpack.c.2.s8 %v614
        %v627 = vunpack.c.3.s8 %v614
        %v628 = vunpack.c.0.s8 %v615
        %v629 = vunpack.c.1.s8 %v615
        %v630 = vunpack.c.2.s8 %v615
        %v631 = vunpack.c.3.s8 %v615
        %v632 = vpack.c.b16 %v616, %v616
        %v633 = vpack.c.b8 %v632, %v632
        %v634 = vpack.c.b16 %v617, %v617
        %v635 = vpack.c.b8 %v634, %v634
        %v636 = vpack.c.b16 %v618, %v618
        %v637 = vpack.c.b8 %v636, %v636
        %v638 = vpack.c.b16 %v619, %v619
        %v639 = vpack.c.b8 %v638, %v638
        %v640 = vpack.c.b16 %v620, %v620
        %v641 = vpack.c.b8 %v640, %v640
        %v642 = vpack.c.b16 %v621, %v621
        %v643 = vpack.c.b8 %v642, %v642
        %v644 = vpack.c.b16 %v622, %v622
        %v645 = vpack.c.b8 %v644, %v644
        %v646 = vpack.c.b16 %v623, %v623
        %v647 = vpack.c.b8 %v646, %v646
        %v648 = vpack.c.b16 %v624, %v624
        %v649 = vpack.c.b8 %v648, %v648
        %v650 = vpack.c.b16 %v625, %v625
        %v651 = vpack.c.b8 %v650, %v650
        %v652 = vpack.c.b16 %v626, %v626
        %v653 = vpack.c.b8 %v652, %v652
        %v654 = vpack.c.b16 %v627, %v627
        %v655 = vpack.c.b8 %v654, %v654
        %v656 = vpack.c.b16 %v628, %v628
        %v657 = vpack.c.b8 %v656, %v656
        %v658 = vpack.c.b16 %v629, %v629
        %v659 = vpack.c.b8 %v658, %v658
        %v660 = vpack.c.b16 %v630, %v630
        %v661 = vpack.c.b8 %v660, %v660
        %v662 = vpack.c.b16 %v631, %v631
        %v663 = vpack.c.b8 %v662, %v662
        %vm664 = vnez %v633
        %vm665 = vnez %v635
        %vm666 = vnez %v637
        %vm667 = vnez %v639
        %vm668 = vnez %v641
        %vm669 = vnez %v643
        %vm670 = vnez %v645
        %vm671 = vnez %v647
        %vm672 = vnez %v649
        %vm673 = vnez %v651
        %vm674 = vnez %v653
        %vm675 = vnez %v655
        %vm676 = vnez %v657
        %vm677 = vnez %v659
        %vm678 = vnez %v661
        %vm679 = vnez %v663
        %v680 = vsel %vm664, 16843009, 0
        %v681 = vsel %vm665, 16843009, 0
        %v682 = vsel %vm666, 16843009, 0
        %v683 = vsel %vm667, 16843009, 0
        %v684 = vsel %vm668, 16843009, 0
        %v685 = vsel %vm669, 16843009, 0
        %v686 = vsel %vm670, 16843009, 0
        %v687 = vsel %vm671, 16843009, 0
        %v688 = vsel %vm672, 16843009, 0
        %v689 = vsel %vm673, 16843009, 0
        %v690 = vsel %vm674, 16843009, 0
        %v691 = vsel %vm675, 16843009, 0
        %v692 = vsel %vm676, 16843009, 0
        %v693 = vsel %vm677, 16843009, 0
        %v694 = vsel %vm678, 16843009, 0
        %v695 = vsel %vm679, 16843009, 0
        %v696 = vunpack.c.0.s8 %v680
        %v697 = vunpack.c.0.s8 %v681
        %v698 = vunpack.c.0.s8 %v682
        %v699 = vunpack.c.0.s8 %v683
        %v700 = vunpack.c.0.s8 %v684
        %v701 = vunpack.c.0.s8 %v685
        %v702 = vunpack.c.0.s8 %v686
        %v703 = vunpack.c.0.s8 %v687
        %v704 = vunpack.c.0.s8 %v688
        %v705 = vunpack.c.0.s8 %v689
        %v706 = vunpack.c.0.s8 %v690
        %v707 = vunpack.c.0.s8 %v691
        %v708 = vunpack.c.0.s8 %v692
        %v709 = vunpack.c.0.s8 %v693
        %v710 = vunpack.c.0.s8 %v694
        %v711 = vunpack.c.0.s8 %v695
        %vm712 = vcmp.ne.s32.totalorder %v696, 0
        %vm713 = vcmp.ne.s32.totalorder %v697, 0
        %vm714 = vcmp.ne.s32.totalorder %v698, 0
        %vm715 = vcmp.ne.s32.totalorder %v699, 0
        %vm716 = vcmp.ne.s32.totalorder %v700, 0
        %vm717 = vcmp.ne.s32.totalorder %v701, 0
        %vm718 = vcmp.ne.s32.totalorder %v702, 0
        %vm719 = vcmp.ne.s32.totalorder %v703, 0
        %vm720 = vcmp.ne.s32.totalorder %v704, 0
        %vm721 = vcmp.ne.s32.totalorder %v705, 0
        %vm722 = vcmp.ne.s32.totalorder %v706, 0
        %vm723 = vcmp.ne.s32.totalorder %v707, 0
        %vm724 = vcmp.ne.s32.totalorder %v708, 0
        %vm725 = vcmp.ne.s32.totalorder %v709, 0
        %vm726 = vcmp.ne.s32.totalorder %v710, 0
        %vm727 = vcmp.ne.s32.totalorder %v711, 0
        %v728 = vsel %vm712, %v596, -1e+30
        %v729 = vsel %vm713, %v597, -1e+30
        %v730 = vsel %vm714, %v598, -1e+30
        %v731 = vsel %vm715, %v599, -1e+30
        %v732 = vsel %vm716, %v600, -1e+30
        %v733 = vsel %vm717, %v601, -1e+30
        %v734 = vsel %vm718, %v602, -1e+30
        %v735 = vsel %vm719, %v603, -1e+30
        %v736 = vsel %vm720, %v604, -1e+30
        %v737 = vsel %vm721, %v605, -1e+30
        %v738 = vsel %vm722, %v606, -1e+30
        %v739 = vsel %vm723, %v607, -1e+30
        %v740 = vsel %vm724, %v608, -1e+30
        %v741 = vsel %vm725, %v609, -1e+30
        %v742 = vsel %vm726, %v610, -1e+30
        %v743 = vsel %vm727, %v611, -1e+30
        %v744 = vld [vmem:[#allocation2] sm:$0xff]
        %v745 = vld [vmem:[#allocation2 + $0x8] sm:$0xff]
        %v746 = vld [vmem:[#allocation2 + $0x10] sm:$0xff]
        %v747 = vld [vmem:[#allocation2 + $0x18] sm:$0xff]
        %v748 = vld [vmem:[#allocation2 + $0x20] sm:$0xff]
        %v749 = vld [vmem:[#allocation2 + $0x28] sm:$0xff]
        %v750 = vld [vmem:[#allocation2 + $0x30] sm:$0xff]
        %v751 = vld [vmem:[#allocation2 + $0x38] sm:$0xff]
        %v752 = vld [vmem:[#allocation2 + $0x40] sm:$0xff]
        %v753 = vld [vmem:[#allocation2 + $0x48] sm:$0xff]
        %v754 = vld [vmem:[#allocation2 + $0x50] sm:$0xff]
        %v755 = vld [vmem:[#allocation2 + $0x58] sm:$0xff]
        %v756 = vld [vmem:[#allocation2 + $0x60] sm:$0xff]
        %v757 = vld [vmem:[#allocation2 + $0x68] sm:$0xff]
        %v758 = vld [vmem:[#allocation2 + $0x70] sm:$0xff]
        %v759 = vld [vmem:[#allocation2 + $0x78] sm:$0xff]
        %760 = vmax.xlane.f32.xlu0 %v728
        %v761 = vpop.xlane.xlu0 %760
        %762 = vmax.xlane.f32.xlu0 %v729
        %v763 = vpop.xlane.xlu0 %762
        %764 = vmax.xlane.f32.xlu0 %v730
        %v765 = vpop.xlane.xlu0 %764
        %766 = vmax.xlane.f32.xlu0 %v731
        %v767 = vpop.xlane.xlu0 %766
        %768 = vmax.xlane.f32.xlu0 %v732
        %v769 = vpop.xlane.xlu0 %768
        %770 = vmax.xlane.f32.xlu0 %v733
        %v771 = vpop.xlane.xlu0 %770
        %772 = vmax.xlane.f32.xlu0 %v734
        %v773 = vpop.xlane.xlu0 %772
        %774 = vmax.xlane.f32.xlu0 %v735
        %v775 = vpop.xlane.xlu0 %774
        %776 = vmax.xlane.f32.xlu0 %v736
        %v777 = vpop.xlane.xlu0 %776
        %778 = vmax.xlane.f32.xlu0 %v737
        %v779 = vpop.xlane.xlu0 %778
        %780 = vmax.xlane.f32.xlu0 %v738
        %v781 = vpop.xlane.xlu0 %780
        %782 = vmax.xlane.f32.xlu0 %v739
        %v783 = vpop.xlane.xlu0 %782
        %784 = vmax.xlane.f32.xlu0 %v740
        %v785 = vpop.xlane.xlu0 %784
        %786 = vmax.xlane.f32.xlu0 %v741
        %v787 = vpop.xlane.xlu0 %786
        %788 = vmax.xlane.f32.xlu0 %v742
        %v789 = vpop.xlane.xlu0 %788
        %790 = vmax.xlane.f32.xlu0 %v743
        %v791 = vpop.xlane.xlu0 %790
        %v792 = vmax.f32 %v744, %v761
        %v793 = vmax.f32 %v745, %v763
        %v794 = vmax.f32 %v746, %v765
        %v795 = vmax.f32 %v747, %v767
        %v796 = vmax.f32 %v748, %v769
        %v797 = vmax.f32 %v749, %v771
        %v798 = vmax.f32 %v750, %v773
        %v799 = vmax.f32 %v751, %v775
        %v800 = vmax.f32 %v752, %v777
        %v801 = vmax.f32 %v753, %v779
        %v802 = vmax.f32 %v754, %v781
        %v803 = vmax.f32 %v755, %v783
        %v804 = vmax.f32 %v756, %v785
        %v805 = vmax.f32 %v757, %v787
        %v806 = vmax.f32 %v758, %v789
        %v807 = vmax.f32 %v759, %v791
        %v808 = vsub.f32 %v744, %v792
        %v809 = vsub.f32 %v745, %v793
        %v810 = vsub.f32 %v746, %v794
        %v811 = vsub.f32 %v747, %v795
        %v812 = vsub.f32 %v748, %v796
        %v813 = vsub.f32 %v749, %v797
        %v814 = vsub.f32 %v750, %v798
        %v815 = vsub.f32 %v751, %v799
        %v816 = vsub.f32 %v752, %v800
        %v817 = vsub.f32 %v753, %v801
        %v818 = vsub.f32 %v754, %v802
        %v819 = vsub.f32 %v755, %v803
        %v820 = vsub.f32 %v756, %v804
        %v821 = vsub.f32 %v757, %v805
        %v822 = vsub.f32 %v758, %v806
        %v823 = vsub.f32 %v759, %v807
        %v824 = vmul.f32 %v808, 1.442695
        %v825 = vpow.pop %v824
        %v826 = vmul.f32 %v809, 1.442695
        %v827 = vpow.pop %v826
        %v828 = vmul.f32 %v810, 1.442695
        %v829 = vpow.pop %v828
        %v830 = vmul.f32 %v811, 1.442695
        %v831 = vpow.pop %v830
        %v832 = vmul.f32 %v812, 1.442695
        %v833 = vpow.pop %v832
        %v834 = vmul.f32 %v813, 1.442695
        %v835 = vpow.pop %v834
        %v836 = vmul.f32 %v814, 1.442695
        %v837 = vpow.pop %v836
        %v838 = vmul.f32 %v815, 1.442695
        %v839 = vpow.pop %v838
        %v840 = vmul.f32 %v816, 1.442695
        %v841 = vpow.pop %v840
        %v842 = vmul.f32 %v817, 1.442695
        %v843 = vpow.pop %v842
        %v844 = vmul.f32 %v818, 1.442695
        %v845 = vpow.pop %v844
        %v846 = vmul.f32 %v819, 1.442695
        %v847 = vpow.pop %v846
        %v848 = vmul.f32 %v820, 1.442695
        %v849 = vpow.pop %v848
        %v850 = vmul.f32 %v821, 1.442695
        %v851 = vpow.pop %v850
        %v852 = vmul.f32 %v822, 1.442695
        %v853 = vpow.pop %v852
        %v854 = vmul.f32 %v823, 1.442695
        %v855 = vpow.pop %v854
        %857 = vset.pattern.permute.xlu0 0
        %858 = vperm.xlu0 %857, %v792
        %v859 = vpop.permute.xlu0 %858
        %862 = vset.pattern.permute.xlu0 0
        %863 = vperm.xlu0 %862, %v793
        %v864 = vpop.permute.xlu0 %863
        %867 = vset.pattern.permute.xlu0 0
        %868 = vperm.xlu0 %867, %v794
        %v869 = vpop.permute.xlu0 %868
        %872 = vset.pattern.permute.xlu0 0
        %873 = vperm.xlu0 %872, %v795
        %v874 = vpop.permute.xlu0 %873
        %877 = vset.pattern.permute.xlu0 0
        %878 = vperm.xlu0 %877, %v796
        %v879 = vpop.permute.xlu0 %878
        %882 = vset.pattern.permute.xlu0 0
        %883 = vperm.xlu0 %882, %v797
        %v884 = vpop.permute.xlu0 %883
        %887 = vset.pattern.permute.xlu0 0
        %888 = vperm.xlu0 %887, %v798
        %v889 = vpop.permute.xlu0 %888
        %892 = vset.pattern.permute.xlu0 0
        %893 = vperm.xlu0 %892, %v799
        %v894 = vpop.permute.xlu0 %893
        %897 = vset.pattern.permute.xlu0 0
        %898 = vperm.xlu0 %897, %v800
        %v899 = vpop.permute.xlu0 %898
        %902 = vset.pattern.permute.xlu0 0
        %903 = vperm.xlu0 %902, %v801
        %v904 = vpop.permute.xlu0 %903
        %907 = vset.pattern.permute.xlu0 0
        %908 = vperm.xlu0 %907, %v802
        %v909 = vpop.permute.xlu0 %908
        %912 = vset.pattern.permute.xlu0 0
        %913 = vperm.xlu0 %912, %v803
        %v914 = vpop.permute.xlu0 %913
        %917 = vset.pattern.permute.xlu0 0
        %918 = vperm.xlu0 %917, %v804
        %v919 = vpop.permute.xlu0 %918
        %922 = vset.pattern.permute.xlu0 0
        %923 = vperm.xlu0 %922, %v805
        %v924 = vpop.permute.xlu0 %923
        %927 = vset.pattern.permute.xlu0 0
        %928 = vperm.xlu0 %927, %v806
        %v929 = vpop.permute.xlu0 %928
        %932 = vset.pattern.permute.xlu0 0
        %933 = vperm.xlu0 %932, %v807
        %v934 = vpop.permute.xlu0 %933
        %v936 = vsub.f32 %v728, %v859
        %v937 = vsub.f32 %v729, %v864
        %v938 = vsub.f32 %v730, %v869
        %v939 = vsub.f32 %v731, %v874
        %v940 = vsub.f32 %v732, %v879
        %v941 = vsub.f32 %v733, %v884
        %v942 = vsub.f32 %v734, %v889
        %v943 = vsub.f32 %v735, %v894
        %v944 = vsub.f32 %v736, %v899
        %v945 = vsub.f32 %v737, %v904
        %v946 = vsub.f32 %v738, %v909
        %v947 = vsub.f32 %v739, %v914
        %v948 = vsub.f32 %v740, %v919
        %v949 = vsub.f32 %v741, %v924
        %v950 = vsub.f32 %v742, %v929
        %v951 = vsub.f32 %v743, %v934
        %v952 = vpack.c.bf16 %v937, %v936
        %v953 = vpack.c.bf16 %v939, %v938
        %v954 = vpack.c.bf16 %v941, %v940
        %v955 = vpack.c.bf16 %v943, %v942
        %v956 = vpack.c.bf16 %v945, %v944
        %v957 = vpack.c.bf16 %v947, %v946
        %v958 = vpack.c.bf16 %v949, %v948
        %v959 = vpack.c.bf16 %v951, %v950
        %v961 = vmul.bf16 %v952, 1069105081
        %v962 = vpow.bf16.pop %v961
        %v964 = vmul.bf16 %v953, 1069105081
        %v965 = vpow.bf16.pop %v964
        %v967 = vmul.bf16 %v954, 1069105081
        %v968 = vpow.bf16.pop %v967
        %v970 = vmul.bf16 %v955, 1069105081
        %v971 = vpow.bf16.pop %v970
        %v973 = vmul.bf16 %v956, 1069105081
        %v974 = vpow.bf16.pop %v973
        %v976 = vmul.bf16 %v957, 1069105081
        %v977 = vpow.bf16.pop %v976
        %v979 = vmul.bf16 %v958, 1069105081
        %v980 = vpow.bf16.pop %v979
        %v982 = vmul.bf16 %v959, 1069105081
        %v983 = vpow.bf16.pop %v982
        %v984 = vld [vmem:[#allocation3] sm:$0xff]
        %v985 = vld [vmem:[#allocation3 + $0x8] sm:$0xff]
        %v986 = vld [vmem:[#allocation3 + $0x10] sm:$0xff]
        %v987 = vld [vmem:[#allocation3 + $0x18] sm:$0xff]
        %v988 = vld [vmem:[#allocation3 + $0x20] sm:$0xff]
        %v989 = vld [vmem:[#allocation3 + $0x28] sm:$0xff]
        %v990 = vld [vmem:[#allocation3 + $0x30] sm:$0xff]
        %v991 = vld [vmem:[#allocation3 + $0x38] sm:$0xff]
        %v992 = vld [vmem:[#allocation3 + $0x40] sm:$0xff]
        %v993 = vld [vmem:[#allocation3 + $0x48] sm:$0xff]
        %v994 = vld [vmem:[#allocation3 + $0x50] sm:$0xff]
        %v995 = vld [vmem:[#allocation3 + $0x58] sm:$0xff]
        %v996 = vld [vmem:[#allocation3 + $0x60] sm:$0xff]
        %v997 = vld [vmem:[#allocation3 + $0x68] sm:$0xff]
        %v998 = vld [vmem:[#allocation3 + $0x70] sm:$0xff]
        %v999 = vld [vmem:[#allocation3 + $0x78] sm:$0xff]
        %v1000 = vmul.f32 %v825, %v984
        %v1001 = vmul.f32 %v827, %v985
        %v1002 = vmul.f32 %v829, %v986
        %v1003 = vmul.f32 %v831, %v987
        %v1004 = vmul.f32 %v833, %v988
        %v1005 = vmul.f32 %v835, %v989
        %v1006 = vmul.f32 %v837, %v990
        %v1007 = vmul.f32 %v839, %v991
        %v1008 = vmul.f32 %v841, %v992
        %v1009 = vmul.f32 %v843, %v993
        %v1010 = vmul.f32 %v845, %v994
        %v1011 = vmul.f32 %v847, %v995
        %v1012 = vmul.f32 %v849, %v996
        %v1013 = vmul.f32 %v851, %v997
        %v1014 = vmul.f32 %v853, %v998
        %v1015 = vmul.f32 %v855, %v999
        %v1016 = vunpack.c.l.bf16 %v962
        %v1017 = vunpack.c.h.bf16 %v962
        %v1018 = vunpack.c.l.bf16 %v965
        %v1019 = vunpack.c.h.bf16 %v965
        %v1020 = vunpack.c.l.bf16 %v968
        %v1021 = vunpack.c.h.bf16 %v968
        %v1022 = vunpack.c.l.bf16 %v971
        %v1023 = vunpack.c.h.bf16 %v971
        %v1024 = vunpack.c.l.bf16 %v974
        %v1025 = vunpack.c.h.bf16 %v974
        %v1026 = vunpack.c.l.bf16 %v977
        %v1027 = vunpack.c.h.bf16 %v977
        %v1028 = vunpack.c.l.bf16 %v980
        %v1029 = vunpack.c.h.bf16 %v980
        %v1030 = vunpack.c.l.bf16 %v983
        %v1031 = vunpack.c.h.bf16 %v983
        %1032 = vadd.xlane.f32.xlu0 %v1016
        %v1033 = vpop.xlane.xlu0 %1032
        %1034 = vadd.xlane.f32.xlu0 %v1017
        %v1035 = vpop.xlane.xlu0 %1034
        %1036 = vadd.xlane.f32.xlu0 %v1018
        %v1037 = vpop.xlane.xlu0 %1036
        %1038 = vadd.xlane.f32.xlu0 %v1019
        %v1039 = vpop.xlane.xlu0 %1038
        %1040 = vadd.xlane.f32.xlu0 %v1020
        %v1041 = vpop.xlane.xlu0 %1040
        %1042 = vadd.xlane.f32.xlu0 %v1021
        %v1043 = vpop.xlane.xlu0 %1042
        %1044 = vadd.xlane.f32.xlu0 %v1022
        %v1045 = vpop.xlane.xlu0 %1044
        %1046 = vadd.xlane.f32.xlu0 %v1023
        %v1047 = vpop.xlane.xlu0 %1046
        %1048 = vadd.xlane.f32.xlu0 %v1024
        %v1049 = vpop.xlane.xlu0 %1048
        %1050 = vadd.xlane.f32.xlu0 %v1025
        %v1051 = vpop.xlane.xlu0 %1050
        %1052 = vadd.xlane.f32.xlu0 %v1026
        %v1053 = vpop.xlane.xlu0 %1052
        %1054 = vadd.xlane.f32.xlu0 %v1027
        %v1055 = vpop.xlane.xlu0 %1054
        %1056 = vadd.xlane.f32.xlu0 %v1028
        %v1057 = vpop.xlane.xlu0 %1056
        %1058 = vadd.xlane.f32.xlu0 %v1029
        %v1059 = vpop.xlane.xlu0 %1058
        %1060 = vadd.xlane.f32.xlu0 %v1030
        %v1061 = vpop.xlane.xlu0 %1060
        %1062 = vadd.xlane.f32.xlu0 %v1031
        %v1063 = vpop.xlane.xlu0 %1062
        %v1064 = vadd.f32 %v1000, %v1033
        %v1065 = vadd.f32 %v1001, %v1035
        %v1066 = vadd.f32 %v1002, %v1037
        %v1067 = vadd.f32 %v1003, %v1039
        %v1068 = vadd.f32 %v1004, %v1041
        %v1069 = vadd.f32 %v1005, %v1043
        %v1070 = vadd.f32 %v1006, %v1045
        %v1071 = vadd.f32 %v1007, %v1047
        %v1072 = vadd.f32 %v1008, %v1049
        %v1073 = vadd.f32 %v1009, %v1051
        %v1074 = vadd.f32 %v1010, %v1053
        %v1075 = vadd.f32 %v1011, %v1055
        %v1076 = vadd.f32 %v1012, %v1057
        %v1077 = vadd.f32 %v1013, %v1059
        %v1078 = vadd.f32 %v1014, %v1061
        %v1079 = vadd.f32 %v1015, %v1063
        %vm1080 = vcmask 7168
        %1081 = vst.msk [vmem:[#allocation3] sm:$0xff] %vm1080, %v1064
        %1082 = vst.msk [vmem:[#allocation3 + $0x8] sm:$0xff] %vm1080, %v1065
        %1083 = vst.msk [vmem:[#allocation3 + $0x10] sm:$0xff] %vm1080, %v1066
        %1084 = vst.msk [vmem:[#allocation3 + $0x18] sm:$0xff] %vm1080, %v1067
        %1085 = vst.msk [vmem:[#allocation3 + $0x20] sm:$0xff] %vm1080, %v1068
        %1086 = vst.msk [vmem:[#allocation3 + $0x28] sm:$0xff] %vm1080, %v1069
        %1087 = vst.msk [vmem:[#allocation3 + $0x30] sm:$0xff] %vm1080, %v1070
        %1088 = vst.msk [vmem:[#allocation3 + $0x38] sm:$0xff] %vm1080, %v1071
        %1089 = vst.msk [vmem:[#allocation3 + $0x40] sm:$0xff] %vm1080, %v1072
        %1090 = vst.msk [vmem:[#allocation3 + $0x48] sm:$0xff] %vm1080, %v1073
        %1091 = vst.msk [vmem:[#allocation3 + $0x50] sm:$0xff] %vm1080, %v1074
        %1092 = vst.msk [vmem:[#allocation3 + $0x58] sm:$0xff] %vm1080, %v1075
        %1093 = vst.msk [vmem:[#allocation3 + $0x60] sm:$0xff] %vm1080, %v1076
        %1094 = vst.msk [vmem:[#allocation3 + $0x68] sm:$0xff] %vm1080, %v1077
        %1095 = vst.msk [vmem:[#allocation3 + $0x70] sm:$0xff] %vm1080, %v1078
        %1096 = vst.msk [vmem:[#allocation3 + $0x78] sm:$0xff] %vm1080, %v1079
        %1097 = vst.msk [vmem:[#allocation2] sm:$0xff] %vm1080, %v792
        %1098 = vst.msk [vmem:[#allocation2 + $0x8] sm:$0xff] %vm1080, %v793
        %1099 = vst.msk [vmem:[#allocation2 + $0x10] sm:$0xff] %vm1080, %v794
        %1100 = vst.msk [vmem:[#allocation2 + $0x18] sm:$0xff] %vm1080, %v795
        %1101 = vst.msk [vmem:[#allocation2 + $0x20] sm:$0xff] %vm1080, %v796
        %1102 = vst.msk [vmem:[#allocation2 + $0x28] sm:$0xff] %vm1080, %v797
        %1103 = vst.msk [vmem:[#allocation2 + $0x30] sm:$0xff] %vm1080, %v798
        %1104 = vst.msk [vmem:[#allocation2 + $0x38] sm:$0xff] %vm1080, %v799
        %1105 = vst.msk [vmem:[#allocation2 + $0x40] sm:$0xff] %vm1080, %v800
        %1106 = vst.msk [vmem:[#allocation2 + $0x48] sm:$0xff] %vm1080, %v801
        %1107 = vst.msk [vmem:[#allocation2 + $0x50] sm:$0xff] %vm1080, %v802
        %1108 = vst.msk [vmem:[#allocation2 + $0x58] sm:$0xff] %vm1080, %v803
        %1109 = vst.msk [vmem:[#allocation2 + $0x60] sm:$0xff] %vm1080, %v804
        %1110 = vst.msk [vmem:[#allocation2 + $0x68] sm:$0xff] %vm1080, %v805
        %1111 = vst.msk [vmem:[#allocation2 + $0x70] sm:$0xff] %vm1080, %v806
        %1112 = vst.msk [vmem:[#allocation2 + $0x78] sm:$0xff] %vm1080, %v807
        %v1113 = vld [vmem:[%s3] sm:$0x1]
        %1115 = vset.pattern.permute.xlu0 0
        %1116 = vperm.xlu0 %1115, %v825
        %v1117 = vpop.permute.xlu0 %1116
        %1120 = vset.pattern.permute.xlu0 0
        %1121 = vperm.xlu0 %1120, %v827
        %v1122 = vpop.permute.xlu0 %1121
        %1125 = vset.pattern.permute.xlu0 0
        %1126 = vperm.xlu0 %1125, %v829
        %v1127 = vpop.permute.xlu0 %1126
        %1130 = vset.pattern.permute.xlu0 0
        %1131 = vperm.xlu0 %1130, %v831
        %v1132 = vpop.permute.xlu0 %1131
        %1135 = vset.pattern.permute.xlu0 0
        %1136 = vperm.xlu0 %1135, %v833
        %v1137 = vpop.permute.xlu0 %1136
        %1140 = vset.pattern.permute.xlu0 0
        %1141 = vperm.xlu0 %1140, %v835
        %v1142 = vpop.permute.xlu0 %1141
        %1145 = vset.pattern.permute.xlu0 0
        %1146 = vperm.xlu0 %1145, %v837
        %v1147 = vpop.permute.xlu0 %1146
        %1150 = vset.pattern.permute.xlu0 0
        %1151 = vperm.xlu0 %1150, %v839
        %v1152 = vpop.permute.xlu0 %1151
        %1155 = vset.pattern.permute.xlu0 0
        %1156 = vperm.xlu0 %1155, %v841
        %v1157 = vpop.permute.xlu0 %1156
        %1160 = vset.pattern.permute.xlu0 0
        %1161 = vperm.xlu0 %1160, %v843
        %v1162 = vpop.permute.xlu0 %1161
        %1165 = vset.pattern.permute.xlu0 0
        %1166 = vperm.xlu0 %1165, %v845
        %v1167 = vpop.permute.xlu0 %1166
        %1170 = vset.pattern.permute.xlu0 0
        %1171 = vperm.xlu0 %1170, %v847
        %v1172 = vpop.permute.xlu0 %1171
        %1175 = vset.pattern.permute.xlu0 0
        %1176 = vperm.xlu0 %1175, %v849
        %v1177 = vpop.permute.xlu0 %1176
        %1180 = vset.pattern.permute.xlu0 0
        %1181 = vperm.xlu0 %1180, %v851
        %v1182 = vpop.permute.xlu0 %1181
        %1185 = vset.pattern.permute.xlu0 0
        %1186 = vperm.xlu0 %1185, %v853
        %v1187 = vpop.permute.xlu0 %1186
        %1190 = vset.pattern.permute.xlu0 0
        %1191 = vperm.xlu0 %1190, %v855
        %v1192 = vpop.permute.xlu0 %1191
        %v1195 = vlaneseq
        %v1196 = vshrl.u32 %v1195, 7
        %v1197 = vsub.s32 0, %v1196
        %v1198 = vrot.slane %v1113, %v1197
        %v1200 = vmul.f32 %v1117, %v1198
        %v1201 = vmul.f32 %v1122, %v1198
        %v1202 = vmul.f32 %v1127, %v1198
        %v1203 = vmul.f32 %v1132, %v1198
        %v1204 = vmul.f32 %v1137, %v1198
        %v1205 = vmul.f32 %v1142, %v1198
        %v1206 = vmul.f32 %v1147, %v1198
        %v1207 = vmul.f32 %v1152, %v1198
        %v1208 = vmul.f32 %v1157, %v1198
        %v1209 = vmul.f32 %v1162, %v1198
        %v1210 = vmul.f32 %v1167, %v1198
        %v1211 = vmul.f32 %v1172, %v1198
        %v1212 = vmul.f32 %v1177, %v1198
        %v1213 = vmul.f32 %v1182, %v1198
        %v1214 = vmul.f32 %v1187, %v1198
        %v1215 = vmul.f32 %v1192, %v1198
        %v1216 = vadd.f32 %v1200, 0.0
        %v1217 = vadd.f32 %v1201, 0.0
        %v1218 = vadd.f32 %v1202, 0.0
        %v1219 = vadd.f32 %v1203, 0.0
        %v1220 = vadd.f32 %v1204, 0.0
        %v1221 = vadd.f32 %v1205, 0.0
        %v1222 = vadd.f32 %v1206, 0.0
        %v1223 = vadd.f32 %v1207, 0.0
        %v1224 = vadd.f32 %v1208, 0.0
        %v1225 = vadd.f32 %v1209, 0.0
        %v1226 = vadd.f32 %v1210, 0.0
        %v1227 = vadd.f32 %v1211, 0.0
        %v1228 = vadd.f32 %v1212, 0.0
        %v1229 = vadd.f32 %v1213, 0.0
        %v1230 = vadd.f32 %v1214, 0.0
        %v1231 = vadd.f32 %v1215, 0.0
        %s1232 = sshra.s32 %s460, 3
        %s1233 = sand.u32 %s460, 7
        %s1234 = smul.addr %s1232, 4
        %s1235 = scalar_lea.vmem %s2, %s1234
        %v1236 = vld [vmem:[%s1235] sm:$0xf]
        %v1237 = vld [vmem:[%s1235 + $0x4] sm:$0xf]
        %v1238 = vld [vmem:[%s1235 + $0x8] sm:$0xf]
        %v1239 = vld [vmem:[%s1235 + $0xc] sm:$0xf]
        %v1240 = vld [vmem:[%s1235 + $0x10] sm:$0xf]
        %v1241 = vld [vmem:[%s1235 + $0x14] sm:$0xf]
        %v1242 = vld [vmem:[%s1235 + $0x18] sm:$0xf]
        %v1243 = vld [vmem:[%s1235 + $0x1c] sm:$0xf]
        %v1244 = vld [vmem:[%s1235 + $0x20] sm:$0xf]
        %v1245 = vld [vmem:[%s1235 + $0x24] sm:$0xf]
        %v1246 = vld [vmem:[%s1235 + $0x28] sm:$0xf]
        %v1247 = vld [vmem:[%s1235 + $0x2c] sm:$0xf]
        %v1248 = vld [vmem:[%s1235 + $0x30] sm:$0xf]
        %v1249 = vld [vmem:[%s1235 + $0x34] sm:$0xf]
        %v1250 = vld [vmem:[%s1235 + $0x38] sm:$0xf]
        %v1251 = vld [vmem:[%s1235 + $0x3c] sm:$0xf]
        %v1268 = vunpack.c.l.b16 %v1236
        %v1269 = vunpack.c.l.b16 %v1237
        %v1270 = vunpack.c.l.b16 %v1238
        %v1271 = vunpack.c.l.b16 %v1239
        %v1272 = vunpack.c.l.b16 %v1240
        %v1273 = vunpack.c.l.b16 %v1241
        %v1274 = vunpack.c.l.b16 %v1242
        %v1275 = vunpack.c.l.b16 %v1243
        %v1276 = vunpack.c.l.b16 %v1244
        %v1277 = vunpack.c.l.b16 %v1245
        %v1278 = vunpack.c.l.b16 %v1246
        %v1279 = vunpack.c.l.b16 %v1247
        %v1280 = vunpack.c.l.b16 %v1248
        %v1281 = vunpack.c.l.b16 %v1249
        %v1282 = vunpack.c.l.b16 %v1250
        %v1283 = vunpack.c.l.b16 %v1251
        %v1284 = vpack.c.b16 %v1269, %v1268
        %v1285 = vpack.c.b16 %v1271, %v1270
        %v1286 = vpack.c.b16 %v1273, %v1272
        %v1287 = vpack.c.b16 %v1275, %v1274
        %v1288 = vpack.c.b16 %v1277, %v1276
        %v1289 = vpack.c.b16 %v1279, %v1278
        %v1290 = vpack.c.b16 %v1281, %v1280
        %v1291 = vpack.c.b16 %v1283, %v1282
        %1300 = vmatprep.subr.bf16.mxu0 0
        %1301 = vmatpush1.bf16.msra.mxu0 %v1284
        %1302 = vmatprep.subr.bf16.mxu0 0
        %1303 = vmatpush1.bf16.msra.mxu0 %v1285
        %1304 = vmatprep.subr.bf16.mxu0 0
        %1305 = vmatpush1.bf16.msra.mxu0 %v1286
        %1306 = vmatprep.subr.bf16.mxu0 0
        %1307 = vmatpush1.bf16.msra.mxu0 %v1287
        %1308 = vmatprep.subr.bf16.mxu0 0
        %1309 = vmatpush1.bf16.msra.mxu0 %v1288
        %1310 = vmatprep.subr.bf16.mxu0 0
        %1311 = vmatpush1.bf16.msra.mxu0 %v1289
        %1312 = vmatprep.subr.bf16.mxu0 0
        %1313 = vmatpush1.bf16.msra.mxu0 %v1290
        %1314 = vmatprep.subr.bf16.mxu0 0
        %1315 = vmatpush1.bf16.msra.mxu0 %v1291
        %1316 = vmatprep.subr.bf16.mxu0 0
        %1317 = vmatpush1.bf16.msra.mxu0 0
        %1318 = vmatprep.subr.bf16.mxu0 0
        %1319 = vmatpush1.bf16.msra.mxu0 0
        %1320 = vmatprep.subr.bf16.mxu0 0
        %1321 = vmatpush1.bf16.msra.mxu0 0
        %1322 = vmatprep.subr.bf16.mxu0 0
        %1323 = vmatpush1.bf16.msra.mxu0 0
        %1324 = vmatprep.subr.bf16.mxu0 0
        %1325 = vmatpush1.bf16.msra.mxu0 0
        %1326 = vmatprep.subr.bf16.mxu0 0
        %1327 = vmatpush1.bf16.msra.mxu0 0
        %1328 = vmatprep.subr.bf16.mxu0 0
        %1329 = vmatpush1.bf16.msra.mxu0 0
        %1330 = vmatprep.subr.bf16.mxu0 0
        %1331 = vmatpush1.bf16.msra.mxu0 0
        %1332 = vmatprep.mubr.bf16.mxu0 0
        %1333 = vmatmul.mubr.bf16.gmra.mrb[0].mxu0 %v962
        %v1334 = vpop.f32.mrb[0].mxu0
        %v1335 = vadd.f32 0.0, %v1334
        %v1336 = vpop.f32.mrb[0].mxu0
        %v1337 = vpop.f32.mrb[0].mxu0
        %v1338 = vadd.f32 0.0, %v1337
        %v1339 = vpop.f32.mrb[0].mxu0
        %1340 = vmatprep.mubr.bf16.mxu0 0
        %1341 = vmatmul.mubr.bf16.gmra.mrb[0].mxu0 %v965
        %v1342 = vpop.f32.mrb[0].mxu0
        %v1343 = vadd.f32 0.0, %v1342
        %v1344 = vpop.f32.mrb[0].mxu0
        %v1345 = vpop.f32.mrb[0].mxu0
        %v1346 = vadd.f32 0.0, %v1345
        %v1347 = vpop.f32.mrb[0].mxu0
        %1348 = vmatprep.mubr.bf16.mxu0 0
        %1349 = vmatmul.mubr.bf16.gmra.mrb[0].mxu0 %v968
        %v1350 = vpop.f32.mrb[0].mxu0
        %v1351 = vadd.f32 0.0, %v1350
        %v1352 = vpop.f32.mrb[0].mxu0
        %v1353 = vpop.f32.mrb[0].mxu0
        %v1354 = vadd.f32 0.0, %v1353
        %v1355 = vpop.f32.mrb[0].mxu0
        %1356 = vmatprep.mubr.bf16.mxu0 0
        %1357 = vmatmul.mubr.bf16.gmra.mrb[0].mxu0 %v971
        %v1358 = vpop.f32.mrb[0].mxu0
        %v1359 = vadd.f32 0.0, %v1358
        %v1360 = vpop.f32.mrb[0].mxu0
        %v1361 = vpop.f32.mrb[0].mxu0
        %v1362 = vadd.f32 0.0, %v1361
        %v1363 = vpop.f32.mrb[0].mxu0
        %1364 = vmatprep.mubr.bf16.mxu0 0
        %1365 = vmatmul.mubr.bf16.gmra.mrb[0].mxu0 %v974
        %v1366 = vpop.f32.mrb[0].mxu0
        %v1367 = vadd.f32 0.0, %v1366
        %v1368 = vpop.f32.mrb[0].mxu0
        %v1369 = vpop.f32.mrb[0].mxu0
        %v1370 = vadd.f32 0.0, %v1369
        %v1371 = vpop.f32.mrb[0].mxu0
        %1372 = vmatprep.mubr.bf16.mxu0 0
        %1373 = vmatmul.mubr.bf16.gmra.mrb[0].mxu0 %v977
        %v1374 = vpop.f32.mrb[0].mxu0
        %v1375 = vadd.f32 0.0, %v1374
        %v1376 = vpop.f32.mrb[0].mxu0
        %v1377 = vpop.f32.mrb[0].mxu0
        %v1378 = vadd.f32 0.0, %v1377
        %v1379 = vpop.f32.mrb[0].mxu0
        %1380 = vmatprep.mubr.bf16.mxu0 0
        %1381 = vmatmul.mubr.bf16.gmra.mrb[0].mxu0 %v980
        %v1382 = vpop.f32.mrb[0].mxu0
        %v1383 = vadd.f32 0.0, %v1382
        %v1384 = vpop.f32.mrb[0].mxu0
        %v1385 = vpop.f32.mrb[0].mxu0
        %v1386 = vadd.f32 0.0, %v1385
        %v1387 = vpop.f32.mrb[0].mxu0
        %1388 = vmatprep.mubr.bf16.mxu0 0
        %1389 = vmatmul.mubr.bf16.gmra.mrb[0].mxu0 %v983
        %v1390 = vpop.f32.mrb[0].mxu0
        %v1391 = vadd.f32 0.0, %v1390
        %v1392 = vpop.f32.mrb[0].mxu0
        %v1393 = vpop.f32.mrb[0].mxu0
        %v1394 = vadd.f32 0.0, %v1393
        %v1395 = vpop.f32.mrb[0].mxu0
        %1396 = vdwg.mxu0
        %v1397 = vld [vmem:[#allocation4] sm:$0xff]
        %v1398 = vld [vmem:[#allocation4 + $0x8] sm:$0xff]
        %v1399 = vld [vmem:[#allocation4 + $0x10] sm:$0xff]
        %v1400 = vld [vmem:[#allocation4 + $0x18] sm:$0xff]
        %v1401 = vld [vmem:[#allocation4 + $0x20] sm:$0xff]
        %v1402 = vld [vmem:[#allocation4 + $0x28] sm:$0xff]
        %v1403 = vld [vmem:[#allocation4 + $0x30] sm:$0xff]
        %v1404 = vld [vmem:[#allocation4 + $0x38] sm:$0xff]
        %v1405 = vld [vmem:[#allocation4 + $0x40] sm:$0xff]
        %v1406 = vld [vmem:[#allocation4 + $0x48] sm:$0xff]
        %v1407 = vld [vmem:[#allocation4 + $0x50] sm:$0xff]
        %v1408 = vld [vmem:[#allocation4 + $0x58] sm:$0xff]
        %v1409 = vld [vmem:[#allocation4 + $0x60] sm:$0xff]
        %v1410 = vld [vmem:[#allocation4 + $0x68] sm:$0xff]
        %v1411 = vld [vmem:[#allocation4 + $0x70] sm:$0xff]
        %v1412 = vld [vmem:[#allocation4 + $0x78] sm:$0xff]
        %v1413 = vmul.f32 %v1397, %v1216
        %v1414 = vmul.f32 %v1398, %v1217
        %v1415 = vmul.f32 %v1399, %v1218
        %v1416 = vmul.f32 %v1400, %v1219
        %v1417 = vmul.f32 %v1401, %v1220
        %v1418 = vmul.f32 %v1402, %v1221
        %v1419 = vmul.f32 %v1403, %v1222
        %v1420 = vmul.f32 %v1404, %v1223
        %v1421 = vmul.f32 %v1405, %v1224
        %v1422 = vmul.f32 %v1406, %v1225
        %v1423 = vmul.f32 %v1407, %v1226
        %v1424 = vmul.f32 %v1408, %v1227
        %v1425 = vmul.f32 %v1409, %v1228
        %v1426 = vmul.f32 %v1410, %v1229
        %v1427 = vmul.f32 %v1411, %v1230
        %v1428 = vmul.f32 %v1412, %v1231
        %v1429 = vadd.f32 %v1413, %v1335
        %v1430 = vadd.f32 %v1414, %v1338
        %v1431 = vadd.f32 %v1415, %v1343
        %v1432 = vadd.f32 %v1416, %v1346
        %v1433 = vadd.f32 %v1417, %v1351
        %v1434 = vadd.f32 %v1418, %v1354
        %v1435 = vadd.f32 %v1419, %v1359
        %v1436 = vadd.f32 %v1420, %v1362
        %v1437 = vadd.f32 %v1421, %v1367
        %v1438 = vadd.f32 %v1422, %v1370
        %v1439 = vadd.f32 %v1423, %v1375
        %v1440 = vadd.f32 %v1424, %v1378
        %v1441 = vadd.f32 %v1425, %v1383
        %v1442 = vadd.f32 %v1426, %v1386
        %v1443 = vadd.f32 %v1427, %v1391
        %v1444 = vadd.f32 %v1428, %v1394
        %1445 = vst [vmem:[#allocation4] sm:$0xff] %v1429
        %1446 = vst [vmem:[#allocation4 + $0x8] sm:$0xff] %v1430
        %1447 = vst [vmem:[#allocation4 + $0x10] sm:$0xff] %v1431
        %1448 = vst [vmem:[#allocation4 + $0x18] sm:$0xff] %v1432
        %1449 = vst [vmem:[#allocation4 + $0x20] sm:$0xff] %v1433
        %1450 = vst [vmem:[#allocation4 + $0x28] sm:$0xff] %v1434
        %1451 = vst [vmem:[#allocation4 + $0x30] sm:$0xff] %v1435
        %1452 = vst [vmem:[#allocation4 + $0x38] sm:$0xff] %v1436
        %1453 = vst [vmem:[#allocation4 + $0x40] sm:$0xff] %v1437
        %1454 = vst [vmem:[#allocation4 + $0x48] sm:$0xff] %v1438
        %1455 = vst [vmem:[#allocation4 + $0x50] sm:$0xff] %v1439
        %1456 = vst [vmem:[#allocation4 + $0x58] sm:$0xff] %v1440
        %1457 = vst [vmem:[#allocation4 + $0x60] sm:$0xff] %v1441
        %1458 = vst [vmem:[#allocation4 + $0x68] sm:$0xff] %v1442
        %1459 = vst [vmem:[#allocation4 + $0x70] sm:$0xff] %v1443
        %1460 = vst [vmem:[#allocation4 + $0x78] sm:$0xff] %v1444
        %p1461 = scmp.eq.s32.totalorder %s23, 1
        // Predicated region
        $region91: #{gat_forward.3} parent=81 // pred_check
          %p1462 = pneg %p1461
        $region92: #{gat_forward.3} parent=81 // pred_check_branch
          %1464 = sbr.rel (%p1462) target = $region94
        $region93: #{gat_forward.3} parent=81 // pred_region
          %v1465 = vld [vmem:[#allocation3] sm:$0xff]
          %v1466 = vld [vmem:[#allocation3 + $0x8] sm:$0xff]
          %v1467 = vld [vmem:[#allocation3 + $0x10] sm:$0xff]
          %v1468 = vld [vmem:[#allocation3 + $0x18] sm:$0xff]
          %v1469 = vld [vmem:[#allocation3 + $0x20] sm:$0xff]
          %v1470 = vld [vmem:[#allocation3 + $0x28] sm:$0xff]
          %v1471 = vld [vmem:[#allocation3 + $0x30] sm:$0xff]
          %v1472 = vld [vmem:[#allocation3 + $0x38] sm:$0xff]
          %v1473 = vld [vmem:[#allocation3 + $0x40] sm:$0xff]
          %v1474 = vld [vmem:[#allocation3 + $0x48] sm:$0xff]
          %v1475 = vld [vmem:[#allocation3 + $0x50] sm:$0xff]
          %v1476 = vld [vmem:[#allocation3 + $0x58] sm:$0xff]
          %v1477 = vld [vmem:[#allocation3 + $0x60] sm:$0xff]
          %v1478 = vld [vmem:[#allocation3 + $0x68] sm:$0xff]
          %v1479 = vld [vmem:[#allocation3 + $0x70] sm:$0xff]
          %v1480 = vld [vmem:[#allocation3 + $0x78] sm:$0xff]
          %v1481 = vrcp.pop %v1465
          %v1482 = vrcp.pop %v1466
          %v1483 = vrcp.pop %v1467
          %v1484 = vrcp.pop %v1468
          %v1485 = vrcp.pop %v1469
          %v1486 = vrcp.pop %v1470
          %v1487 = vrcp.pop %v1471
          %v1488 = vrcp.pop %v1472
          %v1489 = vrcp.pop %v1473
          %v1490 = vrcp.pop %v1474
          %v1491 = vrcp.pop %v1475
          %v1492 = vrcp.pop %v1476
          %v1493 = vrcp.pop %v1477
          %v1494 = vrcp.pop %v1478
          %v1495 = vrcp.pop %v1479
          %v1496 = vrcp.pop %v1480
          %v1497 = vld [vmem:[%s3] sm:$0x1]
          %1499 = vset.pattern.permute.xlu0 0
          %1500 = vperm.xlu0 %1499, %v1481
          %v1501 = vpop.permute.xlu0 %1500
          %1504 = vset.pattern.permute.xlu0 0
          %1505 = vperm.xlu0 %1504, %v1482
          %v1506 = vpop.permute.xlu0 %1505
          %1509 = vset.pattern.permute.xlu0 0
          %1510 = vperm.xlu0 %1509, %v1483
          %v1511 = vpop.permute.xlu0 %1510
          %1514 = vset.pattern.permute.xlu0 0
          %1515 = vperm.xlu0 %1514, %v1484
          %v1516 = vpop.permute.xlu0 %1515
          %1519 = vset.pattern.permute.xlu0 0
          %1520 = vperm.xlu0 %1519, %v1485
          %v1521 = vpop.permute.xlu0 %1520
          %1524 = vset.pattern.permute.xlu0 0
          %1525 = vperm.xlu0 %1524, %v1486
          %v1526 = vpop.permute.xlu0 %1525
          %1529 = vset.pattern.permute.xlu0 0
          %1530 = vperm.xlu0 %1529, %v1487
          %v1531 = vpop.permute.xlu0 %1530
          %1534 = vset.pattern.permute.xlu0 0
          %1535 = vperm.xlu0 %1534, %v1488
          %v1536 = vpop.permute.xlu0 %1535
          %1539 = vset.pattern.permute.xlu0 0
          %1540 = vperm.xlu0 %1539, %v1489
          %v1541 = vpop.permute.xlu0 %1540
          %1544 = vset.pattern.permute.xlu0 0
          %1545 = vperm.xlu0 %1544, %v1490
          %v1546 = vpop.permute.xlu0 %1545
          %1549 = vset.pattern.permute.xlu0 0
          %1550 = vperm.xlu0 %1549, %v1491
          %v1551 = vpop.permute.xlu0 %1550
          %1554 = vset.pattern.permute.xlu0 0
          %1555 = vperm.xlu0 %1554, %v1492
          %v1556 = vpop.permute.xlu0 %1555
          %1559 = vset.pattern.permute.xlu0 0
          %1560 = vperm.xlu0 %1559, %v1493
          %v1561 = vpop.permute.xlu0 %1560
          %1564 = vset.pattern.permute.xlu0 0
          %1565 = vperm.xlu0 %1564, %v1494
          %v1566 = vpop.permute.xlu0 %1565
          %1569 = vset.pattern.permute.xlu0 0
          %1570 = vperm.xlu0 %1569, %v1495
          %v1571 = vpop.permute.xlu0 %1570
          %1574 = vset.pattern.permute.xlu0 0
          %1575 = vperm.xlu0 %1574, %v1496
          %v1576 = vpop.permute.xlu0 %1575
          %v1579 = vlaneseq
          %v1580 = vshrl.u32 %v1579, 7
          %v1581 = vsub.s32 0, %v1580
          %v1582 = vrot.slane %v1497, %v1581
          %v1584 = vmul.f32 %v1501, %v1582
          %v1585 = vmul.f32 %v1506, %v1582
          %v1586 = vmul.f32 %v1511, %v1582
          %v1587 = vmul.f32 %v1516, %v1582
          %v1588 = vmul.f32 %v1521, %v1582
          %v1589 = vmul.f32 %v1526, %v1582
          %v1590 = vmul.f32 %v1531, %v1582
          %v1591 = vmul.f32 %v1536, %v1582
          %v1592 = vmul.f32 %v1541, %v1582
          %v1593 = vmul.f32 %v1546, %v1582
          %v1594 = vmul.f32 %v1551, %v1582
          %v1595 = vmul.f32 %v1556, %v1582
          %v1596 = vmul.f32 %v1561, %v1582
          %v1597 = vmul.f32 %v1566, %v1582
          %v1598 = vmul.f32 %v1571, %v1582
          %v1599 = vmul.f32 %v1576, %v1582
          %v1600 = vadd.f32 %v1584, 0.0
          %v1601 = vadd.f32 %v1585, 0.0
          %v1602 = vadd.f32 %v1586, 0.0
          %v1603 = vadd.f32 %v1587, 0.0
          %v1604 = vadd.f32 %v1588, 0.0
          %v1605 = vadd.f32 %v1589, 0.0
          %v1606 = vadd.f32 %v1590, 0.0
          %v1607 = vadd.f32 %v1591, 0.0
          %v1608 = vadd.f32 %v1592, 0.0
          %v1609 = vadd.f32 %v1593, 0.0
          %v1610 = vadd.f32 %v1594, 0.0
          %v1611 = vadd.f32 %v1595, 0.0
          %v1612 = vadd.f32 %v1596, 0.0
          %v1613 = vadd.f32 %v1597, 0.0
          %v1614 = vadd.f32 %v1598, 0.0
          %v1615 = vadd.f32 %v1599, 0.0
          %v1616 = vld [vmem:[#allocation4] sm:$0xff]
          %v1617 = vld [vmem:[#allocation4 + $0x8] sm:$0xff]
          %v1618 = vld [vmem:[#allocation4 + $0x10] sm:$0xff]
          %v1619 = vld [vmem:[#allocation4 + $0x18] sm:$0xff]
          %v1620 = vld [vmem:[#allocation4 + $0x20] sm:$0xff]
          %v1621 = vld [vmem:[#allocation4 + $0x28] sm:$0xff]
          %v1622 = vld [vmem:[#allocation4 + $0x30] sm:$0xff]
          %v1623 = vld [vmem:[#allocation4 + $0x38] sm:$0xff]
          %v1624 = vld [vmem:[#allocation4 + $0x40] sm:$0xff]
          %v1625 = vld [vmem:[#allocation4 + $0x48] sm:$0xff]
          %v1626 = vld [vmem:[#allocation4 + $0x50] sm:$0xff]
          %v1627 = vld [vmem:[#allocation4 + $0x58] sm:$0xff]
          %v1628 = vld [vmem:[#allocation4 + $0x60] sm:$0xff]
          %v1629 = vld [vmem:[#allocation4 + $0x68] sm:$0xff]
          %v1630 = vld [vmem:[#allocation4 + $0x70] sm:$0xff]
          %v1631 = vld [vmem:[#allocation4 + $0x78] sm:$0xff]
          %v1632 = vmul.f32 %v1616, %v1600
          %v1633 = vmul.f32 %v1617, %v1601
          %v1634 = vmul.f32 %v1618, %v1602
          %v1635 = vmul.f32 %v1619, %v1603
          %v1636 = vmul.f32 %v1620, %v1604
          %v1637 = vmul.f32 %v1621, %v1605
          %v1638 = vmul.f32 %v1622, %v1606
          %v1639 = vmul.f32 %v1623, %v1607
          %v1640 = vmul.f32 %v1624, %v1608
          %v1641 = vmul.f32 %v1625, %v1609
          %v1642 = vmul.f32 %v1626, %v1610
          %v1643 = vmul.f32 %v1627, %v1611
          %v1644 = vmul.f32 %v1628, %v1612
          %v1645 = vmul.f32 %v1629, %v1613
          %v1646 = vmul.f32 %v1630, %v1614
          %v1647 = vmul.f32 %v1631, %v1615
          %v1648 = vld [vmem:[%s4] sm:$0x1]
          %v1650 = vlaneseq
          %v1651 = vshrl.u32 %v1650, 7
          %v1652 = vsub.s32 0, %v1651
          %v1653 = vrot.slane %v1648, %v1652
          %v1655 = vadd.f32 %v1632, %v1653
          %v1656 = vadd.f32 %v1633, %v1653
          %v1657 = vadd.f32 %v1634, %v1653
          %v1658 = vadd.f32 %v1635, %v1653
          %v1659 = vadd.f32 %v1636, %v1653
          %v1660 = vadd.f32 %v1637, %v1653
          %v1661 = vadd.f32 %v1638, %v1653
          %v1662 = vadd.f32 %v1639, %v1653
          %v1663 = vadd.f32 %v1640, %v1653
          %v1664 = vadd.f32 %v1641, %v1653
          %v1665 = vadd.f32 %v1642, %v1653
          %v1666 = vadd.f32 %v1643, %v1653
          %v1667 = vadd.f32 %v1644, %v1653
          %v1668 = vadd.f32 %v1645, %v1653
          %v1669 = vadd.f32 %v1646, %v1653
          %v1670 = vadd.f32 %v1647, %v1653
          %v1671 = vld [vmem:[%s5] sm:$0x1]
          %vm1672 = vcmp.gt.f32.partialorder %v1671, 0.0
          %v1673 = vsel %vm1672, 1, 0
          %v1674 = vlaneseq
          %v1675 = vshrl.u32 %v1674, 7
          %v1676 = vsub.s32 0, %v1675
          %v1677 = vrot.slane %v1673, %v1676
          %vm1678 = vcmp.eq.s32.totalorder %v1677, 1
          %v1679 = vsel %vm1678, %v1655, -1e+30
          %v1680 = vsel %vm1678, %v1656, -1e+30
          %v1681 = vsel %vm1678, %v1657, -1e+30
          %v1682 = vsel %vm1678, %v1658, -1e+30
          %v1683 = vsel %vm1678, %v1659, -1e+30
          %v1684 = vsel %vm1678, %v1660, -1e+30
          %v1685 = vsel %vm1678, %v1661, -1e+30
          %v1686 = vsel %vm1678, %v1662, -1e+30
          %v1687 = vsel %vm1678, %v1663, -1e+30
          %v1688 = vsel %vm1678, %v1664, -1e+30
          %v1689 = vsel %vm1678, %v1665, -1e+30
          %v1690 = vsel %vm1678, %v1666, -1e+30
          %v1691 = vsel %vm1678, %v1667, -1e+30
          %v1692 = vsel %vm1678, %v1668, -1e+30
          %v1693 = vsel %vm1678, %v1669, -1e+30
          %v1694 = vsel %vm1678, %v1670, -1e+30
          %1695 = vmax.xlane.f32.xlu0 %v1679
          %v1696 = vpop.xlane.xlu0 %1695
          %1697 = vmax.xlane.f32.xlu0 %v1680
          %v1698 = vpop.xlane.xlu0 %1697
          %1699 = vmax.xlane.f32.xlu0 %v1681
          %v1700 = vpop.xlane.xlu0 %1699
          %1701 = vmax.xlane.f32.xlu0 %v1682
          %v1702 = vpop.xlane.xlu0 %1701
          %1703 = vmax.xlane.f32.xlu0 %v1683
          %v1704 = vpop.xlane.xlu0 %1703
          %1705 = vmax.xlane.f32.xlu0 %v1684
          %v1706 = vpop.xlane.xlu0 %1705
          %1707 = vmax.xlane.f32.xlu0 %v1685
          %v1708 = vpop.xlane.xlu0 %1707
          %1709 = vmax.xlane.f32.xlu0 %v1686
          %v1710 = vpop.xlane.xlu0 %1709
          %1711 = vmax.xlane.f32.xlu0 %v1687
          %v1712 = vpop.xlane.xlu0 %1711
          %1713 = vmax.xlane.f32.xlu0 %v1688
          %v1714 = vpop.xlane.xlu0 %1713
          %1715 = vmax.xlane.f32.xlu0 %v1689
          %v1716 = vpop.xlane.xlu0 %1715
          %1717 = vmax.xlane.f32.xlu0 %v1690
          %v1718 = vpop.xlane.xlu0 %1717
          %1719 = vmax.xlane.f32.xlu0 %v1691
          %v1720 = vpop.xlane.xlu0 %1719
          %1721 = vmax.xlane.f32.xlu0 %v1692
          %v1722 = vpop.xlane.xlu0 %1721
          %1723 = vmax.xlane.f32.xlu0 %v1693
          %v1724 = vpop.xlane.xlu0 %1723
          %1725 = vmax.xlane.f32.xlu0 %v1694
          %v1726 = vpop.xlane.xlu0 %1725
          %v1727 = vsub.f32 %v1679, %v1696
          %v1728 = vsub.f32 %v1680, %v1698
          %v1729 = vsub.f32 %v1681, %v1700
          %v1730 = vsub.f32 %v1682, %v1702
          %v1731 = vsub.f32 %v1683, %v1704
          %v1732 = vsub.f32 %v1684, %v1706
          %v1733 = vsub.f32 %v1685, %v1708
          %v1734 = vsub.f32 %v1686, %v1710
          %v1735 = vsub.f32 %v1687, %v1712
          %v1736 = vsub.f32 %v1688, %v1714
          %v1737 = vsub.f32 %v1689, %v1716
          %v1738 = vsub.f32 %v1690, %v1718
          %v1739 = vsub.f32 %v1691, %v1720
          %v1740 = vsub.f32 %v1692, %v1722
          %v1741 = vsub.f32 %v1693, %v1724
          %v1742 = vsub.f32 %v1694, %v1726
          %v1743 = vmul.f32 %v1727, 1.442695
          %v1744 = vpow.pop %v1743
          %v1745 = vmul.f32 %v1728, 1.442695
          %v1746 = vpow.pop %v1745
          %v1747 = vmul.f32 %v1729, 1.442695
          %v1748 = vpow.pop %v1747
          %v1749 = vmul.f32 %v1730, 1.442695
          %v1750 = vpow.pop %v1749
          %v1751 = vmul.f32 %v1731, 1.442695
          %v1752 = vpow.pop %v1751
          %v1753 = vmul.f32 %v1732, 1.442695
          %v1754 = vpow.pop %v1753
          %v1755 = vmul.f32 %v1733, 1.442695
          %v1756 = vpow.pop %v1755
          %v1757 = vmul.f32 %v1734, 1.442695
          %v1758 = vpow.pop %v1757
          %v1759 = vmul.f32 %v1735, 1.442695
          %v1760 = vpow.pop %v1759
          %v1761 = vmul.f32 %v1736, 1.442695
          %v1762 = vpow.pop %v1761
          %v1763 = vmul.f32 %v1737, 1.442695
          %v1764 = vpow.pop %v1763
          %v1765 = vmul.f32 %v1738, 1.442695
          %v1766 = vpow.pop %v1765
          %v1767 = vmul.f32 %v1739, 1.442695
          %v1768 = vpow.pop %v1767
          %v1769 = vmul.f32 %v1740, 1.442695
          %v1770 = vpow.pop %v1769
          %v1771 = vmul.f32 %v1741, 1.442695
          %v1772 = vpow.pop %v1771
          %v1773 = vmul.f32 %v1742, 1.442695
          %v1774 = vpow.pop %v1773
          %1775 = vadd.xlane.f32.xlu0 %v1744
          %v1776 = vpop.xlane.xlu0 %1775
          %1777 = vadd.xlane.f32.xlu0 %v1746
          %v1778 = vpop.xlane.xlu0 %1777
          %1779 = vadd.xlane.f32.xlu0 %v1748
          %v1780 = vpop.xlane.xlu0 %1779
          %1781 = vadd.xlane.f32.xlu0 %v1750
          %v1782 = vpop.xlane.xlu0 %1781
          %1783 = vadd.xlane.f32.xlu0 %v1752
          %v1784 = vpop.xlane.xlu0 %1783
          %1785 = vadd.xlane.f32.xlu0 %v1754
          %v1786 = vpop.xlane.xlu0 %1785
          %1787 = vadd.xlane.f32.xlu0 %v1756
          %v1788 = vpop.xlane.xlu0 %1787
          %1789 = vadd.xlane.f32.xlu0 %v1758
          %v1790 = vpop.xlane.xlu0 %1789
          %1791 = vadd.xlane.f32.xlu0 %v1760
          %v1792 = vpop.xlane.xlu0 %1791
          %1793 = vadd.xlane.f32.xlu0 %v1762
          %v1794 = vpop.xlane.xlu0 %1793
          %1795 = vadd.xlane.f32.xlu0 %v1764
          %v1796 = vpop.xlane.xlu0 %1795
          %1797 = vadd.xlane.f32.xlu0 %v1766
          %v1798 = vpop.xlane.xlu0 %1797
          %1799 = vadd.xlane.f32.xlu0 %v1768
          %v1800 = vpop.xlane.xlu0 %1799
          %1801 = vadd.xlane.f32.xlu0 %v1770
          %v1802 = vpop.xlane.xlu0 %1801
          %1803 = vadd.xlane.f32.xlu0 %v1772
          %v1804 = vpop.xlane.xlu0 %1803
          %1805 = vadd.xlane.f32.xlu0 %v1774
          %v1806 = vpop.xlane.xlu0 %1805
          %v1807 = vlog2.pop %v1776
          %v1808 = vmul.f32 %v1807, 0.6931472
          %v1809 = vlog2.pop %v1778
          %v1810 = vmul.f32 %v1809, 0.6931472
          %v1811 = vlog2.pop %v1780
          %v1812 = vmul.f32 %v1811, 0.6931472
          %v1813 = vlog2.pop %v1782
          %v1814 = vmul.f32 %v1813, 0.6931472
          %v1815 = vlog2.pop %v1784
          %v1816 = vmul.f32 %v1815, 0.6931472
          %v1817 = vlog2.pop %v1786
          %v1818 = vmul.f32 %v1817, 0.6931472
          %v1819 = vlog2.pop %v1788
          %v1820 = vmul.f32 %v1819, 0.6931472
          %v1821 = vlog2.pop %v1790
          %v1822 = vmul.f32 %v1821, 0.6931472
          %v1823 = vlog2.pop %v1792
          %v1824 = vmul.f32 %v1823, 0.6931472
          %v1825 = vlog2.pop %v1794
          %v1826 = vmul.f32 %v1825, 0.6931472
          %v1827 = vlog2.pop %v1796
          %v1828 = vmul.f32 %v1827, 0.6931472
          %v1829 = vlog2.pop %v1798
          %v1830 = vmul.f32 %v1829, 0.6931472
          %v1831 = vlog2.pop %v1800
          %v1832 = vmul.f32 %v1831, 0.6931472
          %v1833 = vlog2.pop %v1802
          %v1834 = vmul.f32 %v1833, 0.6931472
          %v1835 = vlog2.pop %v1804
          %v1836 = vmul.f32 %v1835, 0.6931472
          %v1837 = vlog2.pop %v1806
          %v1838 = vmul.f32 %v1837, 0.6931472
          %v1839 = vadd.f32 %v1808, %v1696
          %v1840 = vadd.f32 %v1810, %v1698
          %v1841 = vadd.f32 %v1812, %v1700
          %v1842 = vadd.f32 %v1814, %v1702
          %v1843 = vadd.f32 %v1816, %v1704
          %v1844 = vadd.f32 %v1818, %v1706
          %v1845 = vadd.f32 %v1820, %v1708
          %v1846 = vadd.f32 %v1822, %v1710
          %v1847 = vadd.f32 %v1824, %v1712
          %v1848 = vadd.f32 %v1826, %v1714
          %v1849 = vadd.f32 %v1828, %v1716
          %v1850 = vadd.f32 %v1830, %v1718
          %v1851 = vadd.f32 %v1832, %v1720
          %v1852 = vadd.f32 %v1834, %v1722
          %v1853 = vadd.f32 %v1836, %v1724
          %v1854 = vadd.f32 %v1838, %v1726
          %v1855 = vsub.f32 %v1655, %v1839
          %v1856 = vsub.f32 %v1656, %v1840
          %v1857 = vsub.f32 %v1657, %v1841
          %v1858 = vsub.f32 %v1658, %v1842
          %v1859 = vsub.f32 %v1659, %v1843
          %v1860 = vsub.f32 %v1660, %v1844
          %v1861 = vsub.f32 %v1661, %v1845
          %v1862 = vsub.f32 %v1662, %v1846
          %v1863 = vsub.f32 %v1663, %v1847
          %v1864 = vsub.f32 %v1664, %v1848
          %v1865 = vsub.f32 %v1665, %v1849
          %v1866 = vsub.f32 %v1666, %v1850
          %v1867 = vsub.f32 %v1667, %v1851
          %v1868 = vsub.f32 %v1668, %v1852
          %v1869 = vsub.f32 %v1669, %v1853
          %v1870 = vsub.f32 %v1670, %v1854
          %1871 = vst [vmem:[%s378] sm:$0xff] %v1855
          %1872 = vst [vmem:[%s378 + $0x8] sm:$0xff] %v1856
          %1873 = vst [vmem:[%s378 + $0x10] sm:$0xff] %v1857
          %1874 = vst [vmem:[%s378 + $0x18] sm:$0xff] %v1858
          %1875 = vst [vmem:[%s378 + $0x20] sm:$0xff] %v1859
          %1876 = vst [vmem:[%s378 + $0x28] sm:$0xff] %v1860
          %1877 = vst [vmem:[%s378 + $0x30] sm:$0xff] %v1861
          %1878 = vst [vmem:[%s378 + $0x38] sm:$0xff] %v1862
          %1879 = vst [vmem:[%s378 + $0x40] sm:$0xff] %v1863
          %1880 = vst [vmem:[%s378 + $0x48] sm:$0xff] %v1864
          %1881 = vst [vmem:[%s378 + $0x50] sm:$0xff] %v1865
          %1882 = vst [vmem:[%s378 + $0x58] sm:$0xff] %v1866
          %1883 = vst [vmem:[%s378 + $0x60] sm:$0xff] %v1867
          %1884 = vst [vmem:[%s378 + $0x68] sm:$0xff] %v1868
          %1885 = vst [vmem:[%s378 + $0x70] sm:$0xff] %v1869
          %1886 = vst [vmem:[%s378 + $0x78] sm:$0xff] %v1870
        $region94: #{gat_forward.3} parent=81 // pred_fallthru
          _
        %s1887 = smul.u32 16, %s22
        %p1888 = scmp.lt.s32.totalorder %s1887, 31
        %s1889 = scalar_select %p1888, %s1887, 31
        %s1890 = smul.addr %s1889, 8
        %s1891 = scalar_lea.vmem %s7, %s1890
        // Predicated region
        $region95: #{gat_forward.3} parent=81 // pred_check
          %p1892 = pneg %p212
        $region96: #{gat_forward.3} parent=81 // pred_check_branch
          %1894 = sbr.rel (%p1892) target = $region98
        $region97: #{gat_forward.3} parent=81 // pred_region
          %s1895 = smul.u32 16, %s22
        $region98: #{gat_forward.3} parent=81 // pred_fallthru
          _
      $region82: #{gat_forward.3} parent=5 // pred_fallthru
        _
      %p1896 = scmp.le.s32.totalorder 2, %s13
      // Predicated region
      $region99: #{gat_forward.3} parent=5 // pred_check
        %p1897 = pneg %p1896
      $region100: #{gat_forward.3} parent=5 // pred_check_branch
        %1899 = sbr.rel (%p1897) target = $region102
      $region101: #{gat_forward.3} parent=5 // pred_region
        %s1900 = ssub.s32 %s13, 2
        // Predicated region
        $region103: #{gat_forward.3} parent=101 // pred_check
          %p1901 = pneg %p218
        $region104: #{gat_forward.3} parent=101 // pred_check_branch
          %1903 = sbr.rel (%p1901) target = $region106
        $region105: #{gat_forward.3} parent=101 // pred_region
          %s1904 = smul.u32 16, %s24
          %p1905 = scmp.lt.s32.totalorder %s1904, 31
          %s1906 = scalar_select %p1905, %s1904, 31
          %s1907 = smul.addr %s1906, 8
          %s1908 = scalar_lea.vmem %s7, %s1907
        $region106: #{gat_forward.3} parent=101 // pred_fallthru
          _
      $region102: #{gat_forward.3} parent=5 // pred_fallthru
        _
    $region6: #{gat_forward.3} parent=1 // loop_footer
      %s17 = sadd.s32 1, %s13
    $region7: #{gat_forward.3} parent=1 // loop_footer_branch
      %12 = sbr.rel target = $region3
    $region8: #{gat_forward.3} parent=1 // loop_exit
      _

// kernel: gat_forward.2
$region0: #{gat_forward.2}
  #allocation0 [shape = 'u32[]', space=smem, size = 0x4, offset = 0x4, fixed_abs, tag = 'smem constant byte address 0x4 - core index']
  #allocation1 [shape = 'u32[144,128]{1,0:T(1,128)}', space=vmem, size = 0x12000, scoped, tag = 'internal scratch']
  #allocation2 [shape = 'f32[4,128,1]{2,1,0:T(8,128)}', space=vmem, size = 0x40000, scoped, tag = 'scratch operand']
  #allocation3 [shape = 'f32[4,128,1]{2,1,0:T(8,128)}', space=vmem, size = 0x40000, scoped, tag = 'scratch operand']
  #allocation4 [shape = 'f32[128,128]{1,0:T(8,128)}', space=vmem, size = 0x10000, scoped, tag = 'scratch operand']
  %s0 = inlined_call_operand.vmem [shape: f32[4,256], index: 0, kind: input, shape index: {}]
  %s1 = inlined_call_operand.vmem [shape: f32[256,4], index: 1, kind: input, shape index: {}]
  %s2 = inlined_call_operand.vmem [shape: bf16[4,256,128], index: 2, kind: input, shape index: {}]
  %s3 = inlined_call_operand.vmem [shape: f32[4,128], index: 3, kind: input, shape index: {}]
  %s4 = inlined_call_operand.vmem [shape: f32[1,128], index: 4, kind: input, shape index: {}]
  %s5 = inlined_call_operand.vmem [shape: f32[1,128], index: 5, kind: input, shape index: {}]
  %s6 = inlined_call_operand.vmem [shape: s8[256,256], index: 6, kind: input, shape index: {}]
  %s7 = inlined_call_operand.vmem [shape: bf16[256,128], index: 7, kind: output, shape index: {}]
  %s8 = sld [smem:[#allocation0]]
  $region107: #{gat_forward.2} parent=0
    _
  %s10 = ssub.s32 1, %s8
  %s11 = scalar_select 0, %s10, %s8
  $region1: #{gat_forward.2} parent=0
    #allocation5 [shape = 'u8[32768]{0}', space=vmem, size = 0x8000, scoped, tag = 'input window, operand 6']
    loop: start=0, step=1, limit=6
    $region2: #{gat_forward.2} parent=1 // loop_pre_header
      _
    $region3: #{gat_forward.2} parent=1 // loop_header
      %s13 = sphi 0, %s17
      %p14 = scmp.ge.s32.totalorder %s13, 6
      %s20 = sphi 0, %s32
      %s21 = sphi 0, %s28
      %s22 = sphi 0, %s20
      %s23 = sphi 0, %s21
      %s24 = sphi 0, %s22
      %s25 = sphi 0, %s23
      %s35 = sphi 0, %s37
      %s38 = sphi 0, %s35
      %s39 = sphi 0, %s38
      %s55 = sphi 0, %s39
      %s61 = sphi 0, %s63
      %s64 = sphi 0, %s61
      %s65 = sphi 0, %s64
      %s81 = sphi 0, %s65
      %s85 = sphi 0, %s85
      %s87 = sphi 0, %s85
      %s88 = sphi 0, %s87
      %s102 = sphi 0, %s88
      %s106 = sphi 0, %s106
      %s108 = sphi 0, %s106
      %s109 = sphi 0, %s108
      %s123 = sphi 0, %s109
      %s127 = sphi 0, %s127
      %s129 = sphi 0, %s127
      %s130 = sphi 0, %s129
      %s144 = sphi 0, %s130
      %s148 = sphi 0, %s148
      %s150 = sphi 0, %s148
      %s151 = sphi 0, %s150
      %s165 = sphi 0, %s151
      %s173 = sphi 0, %s175
      %s176 = sphi 0, %s173
      %s177 = sphi 0, %s176
      %s193 = sphi 0, %s177
      %s199 = sphi 0, %s201
      %s202 = sphi 0, %s199
      %s203 = sphi 0, %s202
      %s219 = sphi 0, %s203
    $region4: #{gat_forward.2} parent=1 // loop_header_branch
      %16 = sbr.rel (%p14) target = $region8
    $region5: #{gat_forward.2} parent=1 // loop_body
      %s18 = ssub.s32 %s13, 1
      %s19 = ssub.s32 %s13, 2
      %s26 = sadd.s32 1, %s21
      %p27 = scmp.ge.s32.totalorder %s26, 2
      %s28 = scalar_select %p27, 0, %s26
      %s29 = sadd.s32 1, %s20
      %s30 = scalar_select %p27, %s29, %s20
      %p31 = scmp.ge.s32.totalorder %s30, 2
      %s32 = scalar_select %p31, 0, %s30
      %s33 = ssub.s32 %s21, %s28
      %p34 = scmp.eq.s32.totalorder %s33, 0
      %s36 = sadd.s32 %s35, 1
      %s37 = scalar_select %p34, %s35, %s36
      %p40 = pneg %p34
      %p41 = scmp.eq.s32.totalorder %s13, 3
      %p42 = por %p40, %p41
      %p43 = scmp.ne.s32.totalorder %s35, %s38
      %p44 = scmp.eq.s32.totalorder %s13, 0
      %p45 = por %p43, %p44
      %p46 = scmp.ne.s32.totalorder %s35, %s38
      %p47 = scmp.eq.s32.totalorder %s18, 3
      %p48 = por %p46, %p47
      %p49 = scmp.ne.s32.totalorder %s38, %s39
      %p50 = scmp.eq.s32.totalorder %s18, 0
      %p51 = por %p49, %p50
      %p52 = scmp.ne.s32.totalorder %s38, %s39
      %p53 = scmp.eq.s32.totalorder %s19, 3
      %p54 = por %p52, %p53
      %p56 = scmp.ne.s32.totalorder %s39, %s55
      %p57 = scmp.eq.s32.totalorder %s19, 0
      %p58 = por %p56, %p57
      %s59 = ssub.s32 %s20, %s32
      %p60 = scmp.eq.s32.totalorder %s59, 0
      %s62 = sadd.s32 %s61, 1
      %s63 = scalar_select %p60, %s61, %s62
      %p66 = pneg %p60
      %p67 = scmp.eq.s32.totalorder %s13, 3
      %p68 = por %p66, %p67
      %p69 = scmp.ne.s32.totalorder %s61, %s64
      %p70 = scmp.eq.s32.totalorder %s13, 0
      %p71 = por %p69, %p70
      %p72 = scmp.ne.s32.totalorder %s61, %s64
      %p73 = scmp.eq.s32.totalorder %s18, 3
      %p74 = por %p72, %p73
      %p75 = scmp.ne.s32.totalorder %s64, %s65
      %p76 = scmp.eq.s32.totalorder %s18, 0
      %p77 = por %p75, %p76
      %p78 = scmp.ne.s32.totalorder %s64, %s65
      %p79 = scmp.eq.s32.totalorder %s19, 3
      %p80 = por %p78, %p79
      %p82 = scmp.ne.s32.totalorder %s65, %s81
      %p83 = scmp.eq.s32.totalorder %s19, 0
      %p84 = por %p82, %p83
      %s86 = sadd.s32 %s85, 1
      %p89 = scmp.eq.s32.totalorder %s13, 3
      %p90 = scmp.ne.s32.totalorder %s85, %s87
      %p91 = scmp.eq.s32.totalorder %s13, 0
      %p92 = por %p90, %p91
      %p93 = scmp.ne.s32.totalorder %s85, %s87
      %p94 = scmp.eq.s32.totalorder %s18, 3
      %p95 = por %p93, %p94
      %p96 = scmp.ne.s32.totalorder %s87, %s88
      %p97 = scmp.eq.s32.totalorder %s18, 0
      %p98 = por %p96, %p97
      %p99 = scmp.ne.s32.totalorder %s87, %s88
      %p100 = scmp.eq.s32.totalorder %s19, 3
      %p101 = por %p99, %p100
      %p103 = scmp.ne.s32.totalorder %s88, %s102
      %p104 = scmp.eq.s32.totalorder %s19, 0
      %p105 = por %p103, %p104
      %s107 = sadd.s32 %s106, 1
      %p110 = scmp.eq.s32.totalorder %s13, 3
      %p111 = scmp.ne.s32.totalorder %s106, %s108
      %p112 = scmp.eq.s32.totalorder %s13, 0
      %p113 = por %p111, %p112
      %p114 = scmp.ne.s32.totalorder %s106, %s108
      %p115 = scmp.eq.s32.totalorder %s18, 3
      %p116 = por %p114, %p115
      %p117 = scmp.ne.s32.totalorder %s108, %s109
      %p118 = scmp.eq.s32.totalorder %s18, 0
      %p119 = por %p117, %p118
      %p120 = scmp.ne.s32.totalorder %s108, %s109
      %p121 = scmp.eq.s32.totalorder %s19, 3
      %p122 = por %p120, %p121
      %p124 = scmp.ne.s32.totalorder %s109, %s123
      %p125 = scmp.eq.s32.totalorder %s19, 0
      %p126 = por %p124, %p125
      %s128 = sadd.s32 %s127, 1
      %p131 = scmp.eq.s32.totalorder %s13, 3
      %p132 = scmp.ne.s32.totalorder %s127, %s129
      %p133 = scmp.eq.s32.totalorder %s13, 0
      %p134 = por %p132, %p133
      %p135 = scmp.ne.s32.totalorder %s127, %s129
      %p136 = scmp.eq.s32.totalorder %s18, 3
      %p137 = por %p135, %p136
      %p138 = scmp.ne.s32.totalorder %s129, %s130
      %p139 = scmp.eq.s32.totalorder %s18, 0
      %p140 = por %p138, %p139
      %p141 = scmp.ne.s32.totalorder %s129, %s130
      %p142 = scmp.eq.s32.totalorder %s19, 3
      %p143 = por %p141, %p142
      %p145 = scmp.ne.s32.totalorder %s130, %s144
      %p146 = scmp.eq.s32.totalorder %s19, 0
      %p147 = por %p145, %p146
      %s149 = sadd.s32 %s148, 1
      %p152 = scmp.eq.s32.totalorder %s13, 3
      %p153 = scmp.ne.s32.totalorder %s148, %s150
      %p154 = scmp.eq.s32.totalorder %s13, 0
      %p155 = por %p153, %p154
      %p156 = scmp.ne.s32.totalorder %s148, %s150
      %p157 = scmp.eq.s32.totalorder %s18, 3
      %p158 = por %p156, %p157
      %p159 = scmp.ne.s32.totalorder %s150, %s151
      %p160 = scmp.eq.s32.totalorder %s18, 0
      %p161 = por %p159, %p160
      %p162 = scmp.ne.s32.totalorder %s150, %s151
      %p163 = scmp.eq.s32.totalorder %s19, 3
      %p164 = por %p162, %p163
      %p166 = scmp.ne.s32.totalorder %s151, %s165
      %p167 = scmp.eq.s32.totalorder %s19, 0
      %p168 = por %p166, %p167
      %s169 = ssub.s32 %s20, %s32
      %s170 = ssub.s32 %s21, %s28
      %s171 = sor.u32 %s169, %s170
      %p172 = scmp.eq.s32.totalorder %s171, 0
      %s174 = sadd.s32 %s173, 1
      %s175 = scalar_select %p172, %s173, %s174
      %p178 = pneg %p172
      %p179 = scmp.eq.s32.totalorder %s13, 3
      %p180 = por %p178, %p179
      %p181 = scmp.ne.s32.totalorder %s173, %s176
      %p182 = scmp.eq.s32.totalorder %s13, 0
      %p183 = por %p181, %p182
      %p184 = scmp.ne.s32.totalorder %s173, %s176
      %p185 = scmp.eq.s32.totalorder %s18, 3
      %p186 = por %p184, %p185
      %p187 = scmp.ne.s32.totalorder %s176, %s177
      %p188 = scmp.eq.s32.totalorder %s18, 0
      %p189 = por %p187, %p188
      %p190 = scmp.ne.s32.totalorder %s176, %s177
      %p191 = scmp.eq.s32.totalorder %s19, 3
      %p192 = por %p190, %p191
      %p194 = scmp.ne.s32.totalorder %s177, %s193
      %p195 = scmp.eq.s32.totalorder %s19, 0
      %p196 = por %p194, %p195
      %s197 = ssub.s32 %s20, %s32
      %p198 = scmp.eq.s32.totalorder %s197, 0
      %s200 = sadd.s32 %s199, 1
      %s201 = scalar_select %p198, %s199, %s200
      %p204 = pneg %p198
      %p205 = scmp.eq.s32.totalorder %s13, 3
      %p206 = por %p204, %p205
      %p207 = scmp.ne.s32.totalorder %s199, %s202
      %p208 = scmp.eq.s32.totalorder %s13, 0
      %p209 = por %p207, %p208
      %p210 = scmp.ne.s32.totalorder %s199, %s202
      %p211 = scmp.eq.s32.totalorder %s18, 3
      %p212 = por %p210, %p211
      %p213 = scmp.ne.s32.totalorder %s202, %s203
      %p214 = scmp.eq.s32.totalorder %s18, 0
      %p215 = por %p213, %p214
      %p216 = scmp.ne.s32.totalorder %s202, %s203
      %p217 = scmp.eq.s32.totalorder %s19, 3
      %p218 = por %p216, %p217
      %p220 = scmp.ne.s32.totalorder %s203, %s219
      %p221 = scmp.eq.s32.totalorder %s19, 0
      %p222 = por %p220, %p221
      %p223 = scmp.le.s32.totalorder 1, %s13
      %p224 = scmp.lt.s32.totalorder %s13, 5
      %p225 = pnand %p223, %p224
      %p226 = pneg %p225
      // Predicated region
      $region9: #{gat_forward.2} parent=5 // pred_check
        _
      $region10: #{gat_forward.2} parent=5 // pred_check_branch
        %228 = sbr.rel (%p225) target = $region12
      $region11: #{gat_forward.2} parent=5 // pred_region
        %s229 = ssub.s32 %s13, 1
        // Predicated region
        $region13: #{gat_forward.2} parent=11 // pred_check
          %p230 = pneg %p98
        $region14: #{gat_forward.2} parent=11 // pred_check_branch
          %232 = sbr.rel (%p230) target = $region16
        $region15: #{gat_forward.2} parent=11 // pred_region
          _
        $region16: #{gat_forward.2} parent=11 // pred_fallthru
          _
        // Predicated region
        $region17: #{gat_forward.2} parent=11 // pred_check
          %p233 = pneg %p119
        $region18: #{gat_forward.2} parent=11 // pred_check_branch
          %235 = sbr.rel (%p233) target = $region20
        $region19: #{gat_forward.2} parent=11 // pred_region
          _
        $region20: #{gat_forward.2} parent=11 // pred_fallthru
          _
        // Predicated region
        $region21: #{gat_forward.2} parent=11 // pred_check
          %p236 = pneg %p140
        $region22: #{gat_forward.2} parent=11 // pred_check_branch
          %238 = sbr.rel (%p236) target = $region24
        $region23: #{gat_forward.2} parent=11 // pred_region
          _
        $region24: #{gat_forward.2} parent=11 // pred_fallthru
          _
        // Predicated region
        $region25: #{gat_forward.2} parent=11 // pred_check
          %p239 = pneg %p161
        $region26: #{gat_forward.2} parent=11 // pred_check_branch
          %241 = sbr.rel (%p239) target = $region28
        $region27: #{gat_forward.2} parent=11 // pred_region
          _
        $region28: #{gat_forward.2} parent=11 // pred_fallthru
          _
      $region12: #{gat_forward.2} parent=5 // pred_fallthru
        _
      %p242 = scmp.lt.s32.totalorder %s13, 4
      // Predicated region
      $region29: #{gat_forward.2} parent=5 // pred_check
        %p243 = pneg %p242
      $region30: #{gat_forward.2} parent=5 // pred_check_branch
        %245 = sbr.rel (%p243) target = $region32
      $region31: #{gat_forward.2} parent=5 // pred_region
        // Predicated region
        $region33: #{gat_forward.2} parent=31 // pred_check
          %p246 = pneg %p45
        $region34: #{gat_forward.2} parent=31 // pred_check_branch
          %248 = sbr.rel (%p246) target = $region36
        $region35: #{gat_forward.2} parent=31 // pred_region
          %p249 = scmp.lt.s32.totalorder %s21, 1
          %s250 = scalar_select %p249, %s21, 1
          %s251 = smul.addr %s250, 4
          %s252 = scalar_lea.vmem %s0, %s251
        $region36: #{gat_forward.2} parent=31 // pred_fallthru
          _
        // Predicated region
        $region37: #{gat_forward.2} parent=31 // pred_check
          %p253 = pneg %p71
        $region38: #{gat_forward.2} parent=31 // pred_check_branch
          %255 = sbr.rel (%p253) target = $region40
        $region39: #{gat_forward.2} parent=31 // pred_region
          %s256 = smul.u32 16, %s20
          %p257 = scmp.lt.s32.totalorder %s256, 31
          %s258 = scalar_select %p257, %s256, 31
          %s259 = smul.addr %s258, 8
          %s260 = scalar_lea.vmem %s1, %s259
          %s261 = smul.u32 16, %s20
        $region40: #{gat_forward.2} parent=31 // pred_fallthru
          _
        // Predicated region
        $region41: #{gat_forward.2} parent=31 // pred_check
          %p262 = pneg %p183
        $region42: #{gat_forward.2} parent=31 // pred_check_branch
          %264 = sbr.rel (%p262) target = $region44
        $region43: #{gat_forward.2} parent=31 // pred_region
          %s265 = sand.u32 %s173, 1
          %s266 = sand.u32 %s173, 1
          %s267 = smul.addr %s266, 32
          %s268 = scalar_lea.vmem [#allocation5], %s267
          %s269 = smul.u32 4, %s20
          %s270 = smul.addr %s269, 2
          %s271 = sadd.s32 %s21, %s270
          %s272 = smul.addr %s271, 8
          %s273 = scalar_lea.vmem %s6, %s272
          // Predicated region
          $region45: #{gat_forward.2} parent=43 // pred_check
            _
          $region46: #{gat_forward.2} parent=43 // pred_check_branch
            %275 = sbr.rel (0) target = $region48
          $region47: #{gat_forward.2} parent=43 // pred_region
            // Predicated region
            $region49: #{gat_forward.2} parent=47 // pred_check
              _
            $region50: #{gat_forward.2} parent=47 // pred_check_branch
              %277 = sbr.rel (0) target = $region52
            $region51: #{gat_forward.2} parent=47 // pred_region
              // Predicated region
              $region64: #{gat_forward.2} parent=51 // pred_check
                _
              $region65: #{gat_forward.2} parent=51 // pred_check_branch
                %298 = sbr.rel (0) target = $region67
              $region66: #{gat_forward.2} parent=51 // pred_region
                loop: start=0, step=1, limit=1
                $region68: #{gat_forward.2} parent=66 // loop_pre_header
                  _
                $region69: #{gat_forward.2} parent=66 // loop_header
                  %s300 = sphi 0, %s304
                  %p301 = scmp.ge.s32.totalorder %s300, 1
                  %s305 = sphi %s273, %s273
                  %s306 = sphi %s268, %s268
                $region70: #{gat_forward.2} parent=66 // loop_header_branch
                  %303 = sbr.rel (%p301) target = $region74
                $region71: #{gat_forward.2} parent=66 // loop_body
                  %v307 = vld [vmem:[%s305] sm:$0xff]
                  %308 = vst [vmem:[%s306] sm:$0xff] %v307
                  %v309 = vld [vmem:[%s305 + $0x10] sm:$0xff]
                  %310 = vst [vmem:[%s306 + $0x8] sm:$0xff] %v309
                  %v311 = vld [vmem:[%s305 + $0x20] sm:$0xff]
                  %312 = vst [vmem:[%s306 + $0x10] sm:$0xff] %v311
                  %v313 = vld [vmem:[%s305 + $0x30] sm:$0xff]
                  %314 = vst [vmem:[%s306 + $0x18] sm:$0xff] %v313
                $region72: #{gat_forward.2} parent=66 // loop_footer
                  %s304 = sadd.s32 1, %s300
                $region73: #{gat_forward.2} parent=66 // loop_footer_branch
                  %299 = sbr.rel target = $region69
                $region74: #{gat_forward.2} parent=66 // loop_exit
                  _
              $region67: #{gat_forward.2} parent=51 // pred_fallthru
                _
              // Predicated region
              $region75: #{gat_forward.2} parent=51 // pred_check
                _
              $region76: #{gat_forward.2} parent=51 // pred_check_branch
                %316 = sbr.rel target = $region78
              $region77: #{gat_forward.2} parent=51 // pred_region
                _
              $region78: #{gat_forward.2} parent=51 // pred_fallthru
                _
            $region52: #{gat_forward.2} parent=47 // pred_fallthru
              _
            // Predicated region
            $region53: #{gat_forward.2} parent=47 // pred_check
              _
            $region54: #{gat_forward.2} parent=47 // pred_check_branch
              %279 = sbr.rel target = $region56
            $region55: #{gat_forward.2} parent=47 // pred_region
              loop: start=0, step=1, limit=1
              $region57: #{gat_forward.2} parent=55 // loop_pre_header
                _
              $region58: #{gat_forward.2} parent=55 // loop_header
                %s282 = sphi 0, %s286
                %p283 = scmp.ge.s32.totalorder %s282, 1
                %s287 = sphi %s273, %s273
                %s288 = sphi %s268, %s268
              $region59: #{gat_forward.2} parent=55 // loop_header_branch
                %285 = sbr.rel (%p283) target = $region63
              $region60: #{gat_forward.2} parent=55 // loop_body
                %v289 = vld [vmem:[%s287] sm:$0xff]
                %290 = vst [vmem:[%s288] sm:$0xff] %v289
                %v291 = vld [vmem:[%s287 + $0x10] sm:$0xff]
                %292 = vst [vmem:[%s288 + $0x8] sm:$0xff] %v291
                %v293 = vld [vmem:[%s287 + $0x20] sm:$0xff]
                %294 = vst [vmem:[%s288 + $0x10] sm:$0xff] %v293
                %v295 = vld [vmem:[%s287 + $0x30] sm:$0xff]
                %296 = vst [vmem:[%s288 + $0x18] sm:$0xff] %v295
              $region61: #{gat_forward.2} parent=55 // loop_footer
                %s286 = sadd.s32 1, %s282
              $region62: #{gat_forward.2} parent=55 // loop_footer_branch
                %281 = sbr.rel target = $region58
              $region63: #{gat_forward.2} parent=55 // loop_exit
                _
            $region56: #{gat_forward.2} parent=47 // pred_fallthru
              _
          $region48: #{gat_forward.2} parent=43 // pred_fallthru
            _
          %317 = vnop
        $region44: #{gat_forward.2} parent=31 // pred_fallthru
          _
      $region32: #{gat_forward.2} parent=5 // pred_fallthru
        _
      %p318 = scmp.le.s32.totalorder 1, %s13
      %p319 = scmp.lt.s32.totalorder %s13, 5
      %p320 = pnand %p318, %p319
      %p321 = pneg %p320
      // Predicated region
      $region79: #{gat_forward.2} parent=5 // pred_check
        _
      $region80: #{gat_forward.2} parent=5 // pred_check_branch
        %323 = sbr.rel (%p320) target = $region82
      $region81: #{gat_forward.2} parent=5 // pred_region
        %s324 = ssub.s32 %s13, 1
        %s325 = sand.u32 %s176, 1
        %s326 = sand.u32 %s176, 1
        %s327 = smul.addr %s326, 32
        %s328 = scalar_lea.vmem [#allocation5], %s327
        // Predicated region
        $region83: #{gat_forward.2} parent=81 // pred_check
          %p329 = pneg %p189
        $region84: #{gat_forward.2} parent=81 // pred_check_branch
          %331 = sbr.rel (%p329) target = $region86
        $region85: #{gat_forward.2} parent=81 // pred_region
          _
        $region86: #{gat_forward.2} parent=81 // pred_fallthru
          _
        %p332 = scmp.lt.s32.totalorder %s23, 1
        %s333 = scalar_select %p332, %s23, 1
        %s334 = smul.addr %s333, 4
        %s335 = scalar_lea.vmem %s0, %s334
        %p336 = pneg %p51
        %p337 = pneg %p48
        %s338 = smul.u32 16, %s22
        %p339 = scmp.lt.s32.totalorder %s338, 31
        %s340 = scalar_select %p339, %s338, 31
        %s341 = smul.addr %s340, 8
        %s342 = scalar_lea.vmem %s1, %s341
        %p343 = pneg %p77
        %p344 = pneg %p74
        %p345 = pneg %p98
        %p346 = pneg %p95
        %p347 = pneg %p119
        %p348 = pneg %p116
        %p349 = pneg %p140
        %p350 = pneg %p137
        %p351 = pneg %p161
        %p352 = pneg %p158
        %s353 = sand.u32 %s176, 1
        %s354 = sand.u32 %s176, 1
        %s355 = smul.addr %s354, 32
        %s356 = scalar_lea.vmem [#allocation5], %s355
        %p357 = pneg %p189
        %p358 = pneg %p186
        %p359 = pneg %p215
        %p360 = pneg %p212
        %s361 = smul.u32 16, %s22
        %p362 = scmp.lt.s32.totalorder %s361, 31
        %s363 = scalar_select %p362, %s361, 31
        %s364 = smul.addr %s363, 4
        %s365 = scalar_lea.vmem %s7, %s364
        %p366 = scmp.lt.s32.totalorder %s23, 1
        %s367 = scalar_select %p366, %s23, 1
        %s368 = smul.addr %s367, 4
        %s369 = scalar_lea.vmem %s0, %s368
        %s370 = smul.u32 16, %s22
        %p371 = scmp.lt.s32.totalorder %s370, 31
        %s372 = scalar_select %p371, %s370, 31
        %s373 = smul.addr %s372, 8
        %s374 = scalar_lea.vmem %s1, %s373
        %s375 = smul.u32 16, %s22
        %s376 = smul.u32 4, %s22
        %s377 = smul.u32 16, %s22
        %p378 = scmp.lt.s32.totalorder %s377, 31
        %s379 = scalar_select %p378, %s377, 31
        %s380 = smul.addr %s379, 4
        %s381 = scalar_lea.vmem %s7, %s380
        %s382 = smul.u32 16, %s22
        %p386 = scmp.eq.s32.totalorder %s23, 0
        // Predicated region
        $region87: #{gat_forward.2} parent=81 // pred_check
          %p387 = pneg %p386
        $region88: #{gat_forward.2} parent=81 // pred_check_branch
          %389 = sbr.rel (%p387) target = $region90
        $region89: #{gat_forward.2} parent=81 // pred_region
          %vm390 = vcmask 7168
          %391 = vst.msk [vmem:[#allocation2] sm:$0xff] %vm390, -1e+30
          %392 = vst.msk [vmem:[#allocation2 + $0x8] sm:$0xff] %vm390, -1e+30
          %393 = vst.msk [vmem:[#allocation2 + $0x10] sm:$0xff] %vm390, -1e+30
          %394 = vst.msk [vmem:[#allocation2 + $0x18] sm:$0xff] %vm390, -1e+30
          %395 = vst.msk [vmem:[#allocation2 + $0x20] sm:$0xff] %vm390, -1e+30
          %396 = vst.msk [vmem:[#allocation2 + $0x28] sm:$0xff] %vm390, -1e+30
          %397 = vst.msk [vmem:[#allocation2 + $0x30] sm:$0xff] %vm390, -1e+30
          %398 = vst.msk [vmem:[#allocation2 + $0x38] sm:$0xff] %vm390, -1e+30
          %399 = vst.msk [vmem:[#allocation2 + $0x40] sm:$0xff] %vm390, -1e+30
          %400 = vst.msk [vmem:[#allocation2 + $0x48] sm:$0xff] %vm390, -1e+30
          %401 = vst.msk [vmem:[#allocation2 + $0x50] sm:$0xff] %vm390, -1e+30
          %402 = vst.msk [vmem:[#allocation2 + $0x58] sm:$0xff] %vm390, -1e+30
          %403 = vst.msk [vmem:[#allocation2 + $0x60] sm:$0xff] %vm390, -1e+30
          %404 = vst.msk [vmem:[#allocation2 + $0x68] sm:$0xff] %vm390, -1e+30
          %405 = vst.msk [vmem:[#allocation2 + $0x70] sm:$0xff] %vm390, -1e+30
          %406 = vst.msk [vmem:[#allocation2 + $0x78] sm:$0xff] %vm390, -1e+30
          %407 = vst.msk [vmem:[#allocation2 + $0x80] sm:$0xff] %vm390, -1e+30
          %408 = vst.msk [vmem:[#allocation2 + $0x88] sm:$0xff] %vm390, -1e+30
          %409 = vst.msk [vmem:[#allocation2 + $0x90] sm:$0xff] %vm390, -1e+30
          %410 = vst.msk [vmem:[#allocation2 + $0x98] sm:$0xff] %vm390, -1e+30
          %411 = vst.msk [vmem:[#allocation2 + $0xa0] sm:$0xff] %vm390, -1e+30
          %412 = vst.msk [vmem:[#allocation2 + $0xa8] sm:$0xff] %vm390, -1e+30
          %413 = vst.msk [vmem:[#allocation2 + $0xb0] sm:$0xff] %vm390, -1e+30
          %414 = vst.msk [vmem:[#allocation2 + $0xb8] sm:$0xff] %vm390, -1e+30
          %415 = vst.msk [vmem:[#allocation2 + $0xc0] sm:$0xff] %vm390, -1e+30
          %416 = vst.msk [vmem:[#allocation2 + $0xc8] sm:$0xff] %vm390, -1e+30
          %417 = vst.msk [vmem:[#allocation2 + $0xd0] sm:$0xff] %vm390, -1e+30
          %418 = vst.msk [vmem:[#allocation2 + $0xd8] sm:$0xff] %vm390, -1e+30
          %419 = vst.msk [vmem:[#allocation2 + $0xe0] sm:$0xff] %vm390, -1e+30
          %420 = vst.msk [vmem:[#allocation2 + $0xe8] sm:$0xff] %vm390, -1e+30
          %421 = vst.msk [vmem:[#allocation2 + $0xf0] sm:$0xff] %vm390, -1e+30
          %422 = vst.msk [vmem:[#allocation2 + $0xf8] sm:$0xff] %vm390, -1e+30
          %423 = vst.msk [vmem:[#allocation2 + $0x100] sm:$0xff] %vm390, -1e+30
          %424 = vst.msk [vmem:[#allocation2 + $0x108] sm:$0xff] %vm390, -1e+30
          %425 = vst.msk [vmem:[#allocation2 + $0x110] sm:$0xff] %vm390, -1e+30
          %426 = vst.msk [vmem:[#allocation2 + $0x118] sm:$0xff] %vm390, -1e+30
          %427 = vst.msk [vmem:[#allocation2 + $0x120] sm:$0xff] %vm390, -1e+30
          %428 = vst.msk [vmem:[#allocation2 + $0x128] sm:$0xff] %vm390, -1e+30
          %429 = vst.msk [vmem:[#allocation2 + $0x130] sm:$0xff] %vm390, -1e+30
          %430 = vst.msk [vmem:[#allocation2 + $0x138] sm:$0xff] %vm390, -1e+30
          %431 = vst.msk [vmem:[#allocation2 + $0x140] sm:$0xff] %vm390, -1e+30
          %432 = vst.msk [vmem:[#allocation2 + $0x148] sm:$0xff] %vm390, -1e+30
          %433 = vst.msk [vmem:[#allocation2 + $0x150] sm:$0xff] %vm390, -1e+30
          %434 = vst.msk [vmem:[#allocation2 + $0x158] sm:$0xff] %vm390, -1e+30
          %435 = vst.msk [vmem:[#allocation2 + $0x160] sm:$0xff] %vm390, -1e+30
          %436 = vst.msk [vmem:[#allocation2 + $0x168] sm:$0xff] %vm390, -1e+30
          %437 = vst.msk [vmem:[#allocation2 + $0x170] sm:$0xff] %vm390, -1e+30
          %438 = vst.msk [vmem:[#allocation2 + $0x178] sm:$0xff] %vm390, -1e+30
          %439 = vst.msk [vmem:[#allocation2 + $0x180] sm:$0xff] %vm390, -1e+30
          %440 = vst.msk [vmem:[#allocation2 + $0x188] sm:$0xff] %vm390, -1e+30
          %441 = vst.msk [vmem:[#allocation2 + $0x190] sm:$0xff] %vm390, -1e+30
          %442 = vst.msk [vmem:[#allocation2 + $0x198] sm:$0xff] %vm390, -1e+30
          %443 = vst.msk [vmem:[#allocation2 + $0x1a0] sm:$0xff] %vm390, -1e+30
          %444 = vst.msk [vmem:[#allocation2 + $0x1a8] sm:$0xff] %vm390, -1e+30
          %445 = vst.msk [vmem:[#allocation2 + $0x1b0] sm:$0xff] %vm390, -1e+30
          %446 = vst.msk [vmem:[#allocation2 + $0x1b8] sm:$0xff] %vm390, -1e+30
          %447 = vst.msk [vmem:[#allocation2 + $0x1c0] sm:$0xff] %vm390, -1e+30
          %448 = vst.msk [vmem:[#allocation2 + $0x1c8] sm:$0xff] %vm390, -1e+30
          %449 = vst.msk [vmem:[#allocation2 + $0x1d0] sm:$0xff] %vm390, -1e+30
          %450 = vst.msk [vmem:[#allocation2 + $0x1d8] sm:$0xff] %vm390, -1e+30
          %451 = vst.msk [vmem:[#allocation2 + $0x1e0] sm:$0xff] %vm390, -1e+30
          %452 = vst.msk [vmem:[#allocation2 + $0x1e8] sm:$0xff] %vm390, -1e+30
          %453 = vst.msk [vmem:[#allocation2 + $0x1f0] sm:$0xff] %vm390, -1e+30
          %454 = vst.msk [vmem:[#allocation2 + $0x1f8] sm:$0xff] %vm390, -1e+30
          %455 = vst.msk [vmem:[#allocation3] sm:$0xff] %vm390, 0.0
          %456 = vst.msk [vmem:[#allocation3 + $0x8] sm:$0xff] %vm390, 0.0
          %457 = vst.msk [vmem:[#allocation3 + $0x10] sm:$0xff] %vm390, 0.0
          %458 = vst.msk [vmem:[#allocation3 + $0x18] sm:$0xff] %vm390, 0.0
          %459 = vst.msk [vmem:[#allocation3 + $0x20] sm:$0xff] %vm390, 0.0
          %460 = vst.msk [vmem:[#allocation3 + $0x28] sm:$0xff] %vm390, 0.0
          %461 = vst.msk [vmem:[#allocation3 + $0x30] sm:$0xff] %vm390, 0.0
          %462 = vst.msk [vmem:[#allocation3 + $0x38] sm:$0xff] %vm390, 0.0
          %463 = vst.msk [vmem:[#allocation3 + $0x40] sm:$0xff] %vm390, 0.0
          %464 = vst.msk [vmem:[#allocation3 + $0x48] sm:$0xff] %vm390, 0.0
          %465 = vst.msk [vmem:[#allocation3 + $0x50] sm:$0xff] %vm390, 0.0
          %466 = vst.msk [vmem:[#allocation3 + $0x58] sm:$0xff] %vm390, 0.0
          %467 = vst.msk [vmem:[#allocation3 + $0x60] sm:$0xff] %vm390, 0.0
          %468 = vst.msk [vmem:[#allocation3 + $0x68] sm:$0xff] %vm390, 0.0
          %469 = vst.msk [vmem:[#allocation3 + $0x70] sm:$0xff] %vm390, 0.0
          %470 = vst.msk [vmem:[#allocation3 + $0x78] sm:$0xff] %vm390, 0.0
          %471 = vst.msk [vmem:[#allocation3 + $0x80] sm:$0xff] %vm390, 0.0
          %472 = vst.msk [vmem:[#allocation3 + $0x88] sm:$0xff] %vm390, 0.0
          %473 = vst.msk [vmem:[#allocation3 + $0x90] sm:$0xff] %vm390, 0.0
          %474 = vst.msk [vmem:[#allocation3 + $0x98] sm:$0xff] %vm390, 0.0
          %475 = vst.msk [vmem:[#allocation3 + $0xa0] sm:$0xff] %vm390, 0.0
          %476 = vst.msk [vmem:[#allocation3 + $0xa8] sm:$0xff] %vm390, 0.0
          %477 = vst.msk [vmem:[#allocation3 + $0xb0] sm:$0xff] %vm390, 0.0
          %478 = vst.msk [vmem:[#allocation3 + $0xb8] sm:$0xff] %vm390, 0.0
          %479 = vst.msk [vmem:[#allocation3 + $0xc0] sm:$0xff] %vm390, 0.0
          %480 = vst.msk [vmem:[#allocation3 + $0xc8] sm:$0xff] %vm390, 0.0
          %481 = vst.msk [vmem:[#allocation3 + $0xd0] sm:$0xff] %vm390, 0.0
          %482 = vst.msk [vmem:[#allocation3 + $0xd8] sm:$0xff] %vm390, 0.0
          %483 = vst.msk [vmem:[#allocation3 + $0xe0] sm:$0xff] %vm390, 0.0
          %484 = vst.msk [vmem:[#allocation3 + $0xe8] sm:$0xff] %vm390, 0.0
          %485 = vst.msk [vmem:[#allocation3 + $0xf0] sm:$0xff] %vm390, 0.0
          %486 = vst.msk [vmem:[#allocation3 + $0xf8] sm:$0xff] %vm390, 0.0
          %487 = vst.msk [vmem:[#allocation3 + $0x100] sm:$0xff] %vm390, 0.0
          %488 = vst.msk [vmem:[#allocation3 + $0x108] sm:$0xff] %vm390, 0.0
          %489 = vst.msk [vmem:[#allocation3 + $0x110] sm:$0xff] %vm390, 0.0
          %490 = vst.msk [vmem:[#allocation3 + $0x118] sm:$0xff] %vm390, 0.0
          %491 = vst.msk [vmem:[#allocation3 + $0x120] sm:$0xff] %vm390, 0.0
          %492 = vst.msk [vmem:[#allocation3 + $0x128] sm:$0xff] %vm390, 0.0
          %493 = vst.msk [vmem:[#allocation3 + $0x130] sm:$0xff] %vm390, 0.0
          %494 = vst.msk [vmem:[#allocation3 + $0x138] sm:$0xff] %vm390, 0.0
          %495 = vst.msk [vmem:[#allocation3 + $0x140] sm:$0xff] %vm390, 0.0
          %496 = vst.msk [vmem:[#allocation3 + $0x148] sm:$0xff] %vm390, 0.0
          %497 = vst.msk [vmem:[#allocation3 + $0x150] sm:$0xff] %vm390, 0.0
          %498 = vst.msk [vmem:[#allocation3 + $0x158] sm:$0xff] %vm390, 0.0
          %499 = vst.msk [vmem:[#allocation3 + $0x160] sm:$0xff] %vm390, 0.0
          %500 = vst.msk [vmem:[#allocation3 + $0x168] sm:$0xff] %vm390, 0.0
          %501 = vst.msk [vmem:[#allocation3 + $0x170] sm:$0xff] %vm390, 0.0
          %502 = vst.msk [vmem:[#allocation3 + $0x178] sm:$0xff] %vm390, 0.0
          %503 = vst.msk [vmem:[#allocation3 + $0x180] sm:$0xff] %vm390, 0.0
          %504 = vst.msk [vmem:[#allocation3 + $0x188] sm:$0xff] %vm390, 0.0
          %505 = vst.msk [vmem:[#allocation3 + $0x190] sm:$0xff] %vm390, 0.0
          %506 = vst.msk [vmem:[#allocation3 + $0x198] sm:$0xff] %vm390, 0.0
          %507 = vst.msk [vmem:[#allocation3 + $0x1a0] sm:$0xff] %vm390, 0.0
          %508 = vst.msk [vmem:[#allocation3 + $0x1a8] sm:$0xff] %vm390, 0.0
          %509 = vst.msk [vmem:[#allocation3 + $0x1b0] sm:$0xff] %vm390, 0.0
          %510 = vst.msk [vmem:[#allocation3 + $0x1b8] sm:$0xff] %vm390, 0.0
          %511 = vst.msk [vmem:[#allocation3 + $0x1c0] sm:$0xff] %vm390, 0.0
          %512 = vst.msk [vmem:[#allocation3 + $0x1c8] sm:$0xff] %vm390, 0.0
          %513 = vst.msk [vmem:[#allocation3 + $0x1d0] sm:$0xff] %vm390, 0.0
          %514 = vst.msk [vmem:[#allocation3 + $0x1d8] sm:$0xff] %vm390, 0.0
          %515 = vst.msk [vmem:[#allocation3 + $0x1e0] sm:$0xff] %vm390, 0.0
          %516 = vst.msk [vmem:[#allocation3 + $0x1e8] sm:$0xff] %vm390, 0.0
          %517 = vst.msk [vmem:[#allocation3 + $0x1f0] sm:$0xff] %vm390, 0.0
          %518 = vst.msk [vmem:[#allocation3 + $0x1f8] sm:$0xff] %vm390, 0.0
          %519 = vst [vmem:[#allocation4] sm:$0xff] 0.0
          %520 = vst [vmem:[#allocation4 + $0x8] sm:$0xff] 0.0
          %521 = vst [vmem:[#allocation4 + $0x10] sm:$0xff] 0.0
          %522 = vst [vmem:[#allocation4 + $0x18] sm:$0xff] 0.0
          %523 = vst [vmem:[#allocation4 + $0x20] sm:$0xff] 0.0
          %524 = vst [vmem:[#allocation4 + $0x28] sm:$0xff] 0.0
          %525 = vst [vmem:[#allocation4 + $0x30] sm:$0xff] 0.0
          %526 = vst [vmem:[#allocation4 + $0x38] sm:$0xff] 0.0
          %527 = vst [vmem:[#allocation4 + $0x40] sm:$0xff] 0.0
          %528 = vst [vmem:[#allocation4 + $0x48] sm:$0xff] 0.0
          %529 = vst [vmem:[#allocation4 + $0x50] sm:$0xff] 0.0
          %530 = vst [vmem:[#allocation4 + $0x58] sm:$0xff] 0.0
          %531 = vst [vmem:[#allocation4 + $0x60] sm:$0xff] 0.0
          %532 = vst [vmem:[#allocation4 + $0x68] sm:$0xff] 0.0
          %533 = vst [vmem:[#allocation4 + $0x70] sm:$0xff] 0.0
          %534 = vst [vmem:[#allocation4 + $0x78] sm:$0xff] 0.0
        $region90: #{gat_forward.2} parent=81 // pred_fallthru
          _
        %v535 = vld [vmem:[%s328] sm:$0xff]
        %v536 = vld [vmem:[%s328 + $0x8] sm:$0xff]
        %v537 = vld [vmem:[%s328 + $0x10] sm:$0xff]
        %v538 = vld [vmem:[%s328 + $0x18] sm:$0xff]
        %vm539 = vnez %v535
        %vm540 = vnez %v536
        %vm541 = vnez %v537
        %vm542 = vnez %v538
        %v543 = vld [vmem:[%s374] sm:$0xff]
        %v544 = vld [vmem:[%s374 + $0x8] sm:$0xff]
        %v545 = vld [vmem:[%s374 + $0x10] sm:$0xff]
        %v546 = vld [vmem:[%s374 + $0x18] sm:$0xff]
        %v547 = vld [vmem:[%s374 + $0x20] sm:$0xff]
        %v548 = vld [vmem:[%s374 + $0x28] sm:$0xff]
        %v549 = vld [vmem:[%s374 + $0x30] sm:$0xff]
        %v550 = vld [vmem:[%s374 + $0x38] sm:$0xff]
        %v551 = vld [vmem:[%s374 + $0x40] sm:$0xff]
        %v552 = vld [vmem:[%s374 + $0x48] sm:$0xff]
        %v553 = vld [vmem:[%s374 + $0x50] sm:$0xff]
        %v554 = vld [vmem:[%s374 + $0x58] sm:$0xff]
        %v555 = vld [vmem:[%s374 + $0x60] sm:$0xff]
        %v556 = vld [vmem:[%s374 + $0x68] sm:$0xff]
        %v557 = vld [vmem:[%s374 + $0x70] sm:$0xff]
        %v558 = vld [vmem:[%s374 + $0x78] sm:$0xff]
        %s559 = smul.u32 %s23, 128
        %v560 = vld [vmem:[%s369] sm:$0x1]
        %562 = vset.pattern.permute.xlu0 0
        %563 = vperm.xlu0 %562, %v543
        %v564 = vpop.permute.xlu0 %563
        %567 = vset.pattern.permute.xlu0 0
        %568 = vperm.xlu0 %567, %v544
        %v569 = vpop.permute.xlu0 %568
        %572 = vset.pattern.permute.xlu0 0
        %573 = vperm.xlu0 %572, %v545
        %v574 = vpop.permute.xlu0 %573
        %577 = vset.pattern.permute.xlu0 0
        %578 = vperm.xlu0 %577, %v546
        %v579 = vpop.permute.xlu0 %578
        %582 = vset.pattern.permute.xlu0 0
        %583 = vperm.xlu0 %582, %v547
        %v584 = vpop.permute.xlu0 %583
        %587 = vset.pattern.permute.xlu0 0
        %588 = vperm.xlu0 %587, %v548
        %v589 = vpop.permute.xlu0 %588
        %592 = vset.pattern.permute.xlu0 0
        %593 = vperm.xlu0 %592, %v549
        %v594 = vpop.permute.xlu0 %593
        %597 = vset.pattern.permute.xlu0 0
        %598 = vperm.xlu0 %597, %v550
        %v599 = vpop.permute.xlu0 %598
        %602 = vset.pattern.permute.xlu0 0
        %603 = vperm.xlu0 %602, %v551
        %v604 = vpop.permute.xlu0 %603
        %607 = vset.pattern.permute.xlu0 0
        %608 = vperm.xlu0 %607, %v552
        %v609 = vpop.permute.xlu0 %608
        %612 = vset.pattern.permute.xlu0 0
        %613 = vperm.xlu0 %612, %v553
        %v614 = vpop.permute.xlu0 %613
        %617 = vset.pattern.permute.xlu0 0
        %618 = vperm.xlu0 %617, %v554
        %v619 = vpop.permute.xlu0 %618
        %622 = vset.pattern.permute.xlu0 0
        %623 = vperm.xlu0 %622, %v555
        %v624 = vpop.permute.xlu0 %623
        %627 = vset.pattern.permute.xlu0 0
        %628 = vperm.xlu0 %627, %v556
        %v629 = vpop.permute.xlu0 %628
        %632 = vset.pattern.permute.xlu0 0
        %633 = vperm.xlu0 %632, %v557
        %v634 = vpop.permute.xlu0 %633
        %637 = vset.pattern.permute.xlu0 0
        %638 = vperm.xlu0 %637, %v558
        %v639 = vpop.permute.xlu0 %638
        %v641 = vlaneseq
        %v642 = vshrl.u32 %v641, 7
        %v643 = vsub.s32 0, %v642
        %v644 = vrot.slane %v560, %v643
        %v645 = vadd.f32 %v564, %v644
        %v646 = vadd.f32 %v569, %v644
        %v647 = vadd.f32 %v574, %v644
        %v648 = vadd.f32 %v579, %v644
        %v649 = vadd.f32 %v584, %v644
        %v650 = vadd.f32 %v589, %v644
        %v651 = vadd.f32 %v594, %v644
        %v652 = vadd.f32 %v599, %v644
        %v653 = vadd.f32 %v604, %v644
        %v654 = vadd.f32 %v609, %v644
        %v655 = vadd.f32 %v614, %v644
        %v656 = vadd.f32 %v619, %v644
        %v657 = vadd.f32 %v624, %v644
        %v658 = vadd.f32 %v629, %v644
        %v659 = vadd.f32 %v634, %v644
        %v660 = vadd.f32 %v639, %v644
        %vm661 = vcmp.gt.f32.partialorder %v645, 0.0
        %vm662 = vcmp.gt.f32.partialorder %v646, 0.0
        %vm663 = vcmp.gt.f32.partialorder %v647, 0.0
        %vm664 = vcmp.gt.f32.partialorder %v648, 0.0
        %vm665 = vcmp.gt.f32.partialorder %v649, 0.0
        %vm666 = vcmp.gt.f32.partialorder %v650, 0.0
        %vm667 = vcmp.gt.f32.partialorder %v651, 0.0
        %vm668 = vcmp.gt.f32.partialorder %v652, 0.0
        %vm669 = vcmp.gt.f32.partialorder %v653, 0.0
        %vm670 = vcmp.gt.f32.partialorder %v654, 0.0
        %vm671 = vcmp.gt.f32.partialorder %v655, 0.0
        %vm672 = vcmp.gt.f32.partialorder %v656, 0.0
        %vm673 = vcmp.gt.f32.partialorder %v657, 0.0
        %vm674 = vcmp.gt.f32.partialorder %v658, 0.0
        %vm675 = vcmp.gt.f32.partialorder %v659, 0.0
        %vm676 = vcmp.gt.f32.partialorder %v660, 0.0
        %v677 = vmul.f32 %v645, 0.2
        %v678 = vmul.f32 %v646, 0.2
        %v679 = vmul.f32 %v647, 0.2
        %v680 = vmul.f32 %v648, 0.2
        %v681 = vmul.f32 %v649, 0.2
        %v682 = vmul.f32 %v650, 0.2
        %v683 = vmul.f32 %v651, 0.2
        %v684 = vmul.f32 %v652, 0.2
        %v685 = vmul.f32 %v653, 0.2
        %v686 = vmul.f32 %v654, 0.2
        %v687 = vmul.f32 %v655, 0.2
        %v688 = vmul.f32 %v656, 0.2
        %v689 = vmul.f32 %v657, 0.2
        %v690 = vmul.f32 %v658, 0.2
        %v691 = vmul.f32 %v659, 0.2
        %v692 = vmul.f32 %v660, 0.2
        %v693 = vsel %vm661, %v645, %v677
        %v694 = vsel %vm662, %v646, %v678
        %v695 = vsel %vm663, %v647, %v679
        %v696 = vsel %vm664, %v648, %v680
        %v697 = vsel %vm665, %v649, %v681
        %v698 = vsel %vm666, %v650, %v682
        %v699 = vsel %vm667, %v651, %v683
        %v700 = vsel %vm668, %v652, %v684
        %v701 = vsel %vm669, %v653, %v685
        %v702 = vsel %vm670, %v654, %v686
        %v703 = vsel %vm671, %v655, %v687
        %v704 = vsel %vm672, %v656, %v688
        %v705 = vsel %vm673, %v657, %v689
        %v706 = vsel %vm674, %v658, %v690
        %v707 = vsel %vm675, %v659, %v691
        %v708 = vsel %vm676, %v660, %v692
        %v709 = vsel %vm539, 16843009, 0
        %v710 = vsel %vm540, 16843009, 0
        %v711 = vsel %vm541, 16843009, 0
        %v712 = vsel %vm542, 16843009, 0
        %v713 = vunpack.c.0.s8 %v709
        %v714 = vunpack.c.1.s8 %v709
        %v715 = vunpack.c.2.s8 %v709
        %v716 = vunpack.c.3.s8 %v709
        %v717 = vunpack.c.0.s8 %v710
        %v718 = vunpack.c.1.s8 %v710
        %v719 = vunpack.c.2.s8 %v710
        %v720 = vunpack.c.3.s8 %v710
        %v721 = vunpack.c.0.s8 %v711
        %v722 = vunpack.c.1.s8 %v711
        %v723 = vunpack.c.2.s8 %v711
        %v724 = vunpack.c.3.s8 %v711
        %v725 = vunpack.c.0.s8 %v712
        %v726 = vunpack.c.1.s8 %v712
        %v727 = vunpack.c.2.s8 %v712
        %v728 = vunpack.c.3.s8 %v712
        %v729 = vpack.c.b16 %v713, %v713
        %v730 = vpack.c.b8 %v729, %v729
        %v731 = vpack.c.b16 %v714, %v714
        %v732 = vpack.c.b8 %v731, %v731
        %v733 = vpack.c.b16 %v715, %v715
        %v734 = vpack.c.b8 %v733, %v733
        %v735 = vpack.c.b16 %v716, %v716
        %v736 = vpack.c.b8 %v735, %v735
        %v737 = vpack.c.b16 %v717, %v717
        %v738 = vpack.c.b8 %v737, %v737
        %v739 = vpack.c.b16 %v718, %v718
        %v740 = vpack.c.b8 %v739, %v739
        %v741 = vpack.c.b16 %v719, %v719
        %v742 = vpack.c.b8 %v741, %v741
        %v743 = vpack.c.b16 %v720, %v720
        %v744 = vpack.c.b8 %v743, %v743
        %v745 = vpack.c.b16 %v721, %v721
        %v746 = vpack.c.b8 %v745, %v745
        %v747 = vpack.c.b16 %v722, %v722
        %v748 = vpack.c.b8 %v747, %v747
        %v749 = vpack.c.b16 %v723, %v723
        %v750 = vpack.c.b8 %v749, %v749
        %v751 = vpack.c.b16 %v724, %v724
        %v752 = vpack.c.b8 %v751, %v751
        %v753 = vpack.c.b16 %v725, %v725
        %v754 = vpack.c.b8 %v753, %v753
        %v755 = vpack.c.b16 %v726, %v726
        %v756 = vpack.c.b8 %v755, %v755
        %v757 = vpack.c.b16 %v727, %v727
        %v758 = vpack.c.b8 %v757, %v757
        %v759 = vpack.c.b16 %v728, %v728
        %v760 = vpack.c.b8 %v759, %v759
        %vm761 = vnez %v730
        %vm762 = vnez %v732
        %vm763 = vnez %v734
        %vm764 = vnez %v736
        %vm765 = vnez %v738
        %vm766 = vnez %v740
        %vm767 = vnez %v742
        %vm768 = vnez %v744
        %vm769 = vnez %v746
        %vm770 = vnez %v748
        %vm771 = vnez %v750
        %vm772 = vnez %v752
        %vm773 = vnez %v754
        %vm774 = vnez %v756
        %vm775 = vnez %v758
        %vm776 = vnez %v760
        %v777 = vsel %vm761, 16843009, 0
        %v778 = vsel %vm762, 16843009, 0
        %v779 = vsel %vm763, 16843009, 0
        %v780 = vsel %vm764, 16843009, 0
        %v781 = vsel %vm765, 16843009, 0
        %v782 = vsel %vm766, 16843009, 0
        %v783 = vsel %vm767, 16843009, 0
        %v784 = vsel %vm768, 16843009, 0
        %v785 = vsel %vm769, 16843009, 0
        %v786 = vsel %vm770, 16843009, 0
        %v787 = vsel %vm771, 16843009, 0
        %v788 = vsel %vm772, 16843009, 0
        %v789 = vsel %vm773, 16843009, 0
        %v790 = vsel %vm774, 16843009, 0
        %v791 = vsel %vm775, 16843009, 0
        %v792 = vsel %vm776, 16843009, 0
        %v793 = vunpack.c.0.s8 %v777
        %v794 = vunpack.c.0.s8 %v778
        %v795 = vunpack.c.0.s8 %v779
        %v796 = vunpack.c.0.s8 %v780
        %v797 = vunpack.c.0.s8 %v781
        %v798 = vunpack.c.0.s8 %v782
        %v799 = vunpack.c.0.s8 %v783
        %v800 = vunpack.c.0.s8 %v784
        %v801 = vunpack.c.0.s8 %v785
        %v802 = vunpack.c.0.s8 %v786
        %v803 = vunpack.c.0.s8 %v787
        %v804 = vunpack.c.0.s8 %v788
        %v805 = vunpack.c.0.s8 %v789
        %v806 = vunpack.c.0.s8 %v790
        %v807 = vunpack.c.0.s8 %v791
        %v808 = vunpack.c.0.s8 %v792
        %vm809 = vcmp.ne.s32.totalorder %v793, 0
        %vm810 = vcmp.ne.s32.totalorder %v794, 0
        %vm811 = vcmp.ne.s32.totalorder %v795, 0
        %vm812 = vcmp.ne.s32.totalorder %v796, 0
        %vm813 = vcmp.ne.s32.totalorder %v797, 0
        %vm814 = vcmp.ne.s32.totalorder %v798, 0
        %vm815 = vcmp.ne.s32.totalorder %v799, 0
        %vm816 = vcmp.ne.s32.totalorder %v800, 0
        %vm817 = vcmp.ne.s32.totalorder %v801, 0
        %vm818 = vcmp.ne.s32.totalorder %v802, 0
        %vm819 = vcmp.ne.s32.totalorder %v803, 0
        %vm820 = vcmp.ne.s32.totalorder %v804, 0
        %vm821 = vcmp.ne.s32.totalorder %v805, 0
        %vm822 = vcmp.ne.s32.totalorder %v806, 0
        %vm823 = vcmp.ne.s32.totalorder %v807, 0
        %vm824 = vcmp.ne.s32.totalorder %v808, 0
        %v825 = vsel %vm809, %v693, -1e+30
        %v826 = vsel %vm810, %v694, -1e+30
        %v827 = vsel %vm811, %v695, -1e+30
        %v828 = vsel %vm812, %v696, -1e+30
        %v829 = vsel %vm813, %v697, -1e+30
        %v830 = vsel %vm814, %v698, -1e+30
        %v831 = vsel %vm815, %v699, -1e+30
        %v832 = vsel %vm816, %v700, -1e+30
        %v833 = vsel %vm817, %v701, -1e+30
        %v834 = vsel %vm818, %v702, -1e+30
        %v835 = vsel %vm819, %v703, -1e+30
        %v836 = vsel %vm820, %v704, -1e+30
        %v837 = vsel %vm821, %v705, -1e+30
        %v838 = vsel %vm822, %v706, -1e+30
        %v839 = vsel %vm823, %v707, -1e+30
        %v840 = vsel %vm824, %v708, -1e+30
        %v841 = vld [vmem:[#allocation2] sm:$0xff]
        %v842 = vld [vmem:[#allocation2 + $0x8] sm:$0xff]
        %v843 = vld [vmem:[#allocation2 + $0x10] sm:$0xff]
        %v844 = vld [vmem:[#allocation2 + $0x18] sm:$0xff]
        %v845 = vld [vmem:[#allocation2 + $0x20] sm:$0xff]
        %v846 = vld [vmem:[#allocation2 + $0x28] sm:$0xff]
        %v847 = vld [vmem:[#allocation2 + $0x30] sm:$0xff]
        %v848 = vld [vmem:[#allocation2 + $0x38] sm:$0xff]
        %v849 = vld [vmem:[#allocation2 + $0x40] sm:$0xff]
        %v850 = vld [vmem:[#allocation2 + $0x48] sm:$0xff]
        %v851 = vld [vmem:[#allocation2 + $0x50] sm:$0xff]
        %v852 = vld [vmem:[#allocation2 + $0x58] sm:$0xff]
        %v853 = vld [vmem:[#allocation2 + $0x60] sm:$0xff]
        %v854 = vld [vmem:[#allocation2 + $0x68] sm:$0xff]
        %v855 = vld [vmem:[#allocation2 + $0x70] sm:$0xff]
        %v856 = vld [vmem:[#allocation2 + $0x78] sm:$0xff]
        %857 = vmax.xlane.f32.xlu0 %v825
        %v858 = vpop.xlane.xlu0 %857
        %859 = vmax.xlane.f32.xlu0 %v826
        %v860 = vpop.xlane.xlu0 %859
        %861 = vmax.xlane.f32.xlu0 %v827
        %v862 = vpop.xlane.xlu0 %861
        %863 = vmax.xlane.f32.xlu0 %v828
        %v864 = vpop.xlane.xlu0 %863
        %865 = vmax.xlane.f32.xlu0 %v829
        %v866 = vpop.xlane.xlu0 %865
        %867 = vmax.xlane.f32.xlu0 %v830
        %v868 = vpop.xlane.xlu0 %867
        %869 = vmax.xlane.f32.xlu0 %v831
        %v870 = vpop.xlane.xlu0 %869
        %871 = vmax.xlane.f32.xlu0 %v832
        %v872 = vpop.xlane.xlu0 %871
        %873 = vmax.xlane.f32.xlu0 %v833
        %v874 = vpop.xlane.xlu0 %873
        %875 = vmax.xlane.f32.xlu0 %v834
        %v876 = vpop.xlane.xlu0 %875
        %877 = vmax.xlane.f32.xlu0 %v835
        %v878 = vpop.xlane.xlu0 %877
        %879 = vmax.xlane.f32.xlu0 %v836
        %v880 = vpop.xlane.xlu0 %879
        %881 = vmax.xlane.f32.xlu0 %v837
        %v882 = vpop.xlane.xlu0 %881
        %883 = vmax.xlane.f32.xlu0 %v838
        %v884 = vpop.xlane.xlu0 %883
        %885 = vmax.xlane.f32.xlu0 %v839
        %v886 = vpop.xlane.xlu0 %885
        %887 = vmax.xlane.f32.xlu0 %v840
        %v888 = vpop.xlane.xlu0 %887
        %v889 = vmax.f32 %v841, %v858
        %v890 = vmax.f32 %v842, %v860
        %v891 = vmax.f32 %v843, %v862
        %v892 = vmax.f32 %v844, %v864
        %v893 = vmax.f32 %v845, %v866
        %v894 = vmax.f32 %v846, %v868
        %v895 = vmax.f32 %v847, %v870
        %v896 = vmax.f32 %v848, %v872
        %v897 = vmax.f32 %v849, %v874
        %v898 = vmax.f32 %v850, %v876
        %v899 = vmax.f32 %v851, %v878
        %v900 = vmax.f32 %v852, %v880
        %v901 = vmax.f32 %v853, %v882
        %v902 = vmax.f32 %v854, %v884
        %v903 = vmax.f32 %v855, %v886
        %v904 = vmax.f32 %v856, %v888
        %v905 = vsub.f32 %v841, %v889
        %v906 = vsub.f32 %v842, %v890
        %v907 = vsub.f32 %v843, %v891
        %v908 = vsub.f32 %v844, %v892
        %v909 = vsub.f32 %v845, %v893
        %v910 = vsub.f32 %v846, %v894
        %v911 = vsub.f32 %v847, %v895
        %v912 = vsub.f32 %v848, %v896
        %v913 = vsub.f32 %v849, %v897
        %v914 = vsub.f32 %v850, %v898
        %v915 = vsub.f32 %v851, %v899
        %v916 = vsub.f32 %v852, %v900
        %v917 = vsub.f32 %v853, %v901
        %v918 = vsub.f32 %v854, %v902
        %v919 = vsub.f32 %v855, %v903
        %v920 = vsub.f32 %v856, %v904
        %v921 = vmul.f32 %v905, 1.442695
        %v922 = vpow.pop %v921
        %v923 = vmul.f32 %v906, 1.442695
        %v924 = vpow.pop %v923
        %v925 = vmul.f32 %v907, 1.442695
        %v926 = vpow.pop %v925
        %v927 = vmul.f32 %v908, 1.442695
        %v928 = vpow.pop %v927
        %v929 = vmul.f32 %v909, 1.442695
        %v930 = vpow.pop %v929
        %v931 = vmul.f32 %v910, 1.442695
        %v932 = vpow.pop %v931
        %v933 = vmul.f32 %v911, 1.442695
        %v934 = vpow.pop %v933
        %v935 = vmul.f32 %v912, 1.442695
        %v936 = vpow.pop %v935
        %v937 = vmul.f32 %v913, 1.442695
        %v938 = vpow.pop %v937
        %v939 = vmul.f32 %v914, 1.442695
        %v940 = vpow.pop %v939
        %v941 = vmul.f32 %v915, 1.442695
        %v942 = vpow.pop %v941
        %v943 = vmul.f32 %v916, 1.442695
        %v944 = vpow.pop %v943
        %v945 = vmul.f32 %v917, 1.442695
        %v946 = vpow.pop %v945
        %v947 = vmul.f32 %v918, 1.442695
        %v948 = vpow.pop %v947
        %v949 = vmul.f32 %v919, 1.442695
        %v950 = vpow.pop %v949
        %v951 = vmul.f32 %v920, 1.442695
        %v952 = vpow.pop %v951
        %954 = vset.pattern.permute.xlu0 0
        %955 = vperm.xlu0 %954, %v889
        %v956 = vpop.permute.xlu0 %955
        %959 = vset.pattern.permute.xlu0 0
        %960 = vperm.xlu0 %959, %v890
        %v961 = vpop.permute.xlu0 %960
        %964 = vset.pattern.permute.xlu0 0
        %965 = vperm.xlu0 %964, %v891
        %v966 = vpop.permute.xlu0 %965
        %969 = vset.pattern.permute.xlu0 0
        %970 = vperm.xlu0 %969, %v892
        %v971 = vpop.permute.xlu0 %970
        %974 = vset.pattern.permute.xlu0 0
        %975 = vperm.xlu0 %974, %v893
        %v976 = vpop.permute.xlu0 %975
        %979 = vset.pattern.permute.xlu0 0
        %980 = vperm.xlu0 %979, %v894
        %v981 = vpop.permute.xlu0 %980
        %984 = vset.pattern.permute.xlu0 0
        %985 = vperm.xlu0 %984, %v895
        %v986 = vpop.permute.xlu0 %985
        %989 = vset.pattern.permute.xlu0 0
        %990 = vperm.xlu0 %989, %v896
        %v991 = vpop.permute.xlu0 %990
        %994 = vset.pattern.permute.xlu0 0
        %995 = vperm.xlu0 %994, %v897
        %v996 = vpop.permute.xlu0 %995
        %999 = vset.pattern.permute.xlu0 0
        %1000 = vperm.xlu0 %999, %v898
        %v1001 = vpop.permute.xlu0 %1000
        %1004 = vset.pattern.permute.xlu0 0
        %1005 = vperm.xlu0 %1004, %v899
        %v1006 = vpop.permute.xlu0 %1005
        %1009 = vset.pattern.permute.xlu0 0
        %1010 = vperm.xlu0 %1009, %v900
        %v1011 = vpop.permute.xlu0 %1010
        %1014 = vset.pattern.permute.xlu0 0
        %1015 = vperm.xlu0 %1014, %v901
        %v1016 = vpop.permute.xlu0 %1015
        %1019 = vset.pattern.permute.xlu0 0
        %1020 = vperm.xlu0 %1019, %v902
        %v1021 = vpop.permute.xlu0 %1020
        %1024 = vset.pattern.permute.xlu0 0
        %1025 = vperm.xlu0 %1024, %v903
        %v1026 = vpop.permute.xlu0 %1025
        %1029 = vset.pattern.permute.xlu0 0
        %1030 = vperm.xlu0 %1029, %v904
        %v1031 = vpop.permute.xlu0 %1030
        %v1033 = vsub.f32 %v825, %v956
        %v1034 = vsub.f32 %v826, %v961
        %v1035 = vsub.f32 %v827, %v966
        %v1036 = vsub.f32 %v828, %v971
        %v1037 = vsub.f32 %v829, %v976
        %v1038 = vsub.f32 %v830, %v981
        %v1039 = vsub.f32 %v831, %v986
        %v1040 = vsub.f32 %v832, %v991
        %v1041 = vsub.f32 %v833, %v996
        %v1042 = vsub.f32 %v834, %v1001
        %v1043 = vsub.f32 %v835, %v1006
        %v1044 = vsub.f32 %v836, %v1011
        %v1045 = vsub.f32 %v837, %v1016
        %v1046 = vsub.f32 %v838, %v1021
        %v1047 = vsub.f32 %v839, %v1026
        %v1048 = vsub.f32 %v840, %v1031
        %v1049 = vpack.c.bf16 %v1034, %v1033
        %v1050 = vpack.c.bf16 %v1036, %v1035
        %v1051 = vpack.c.bf16 %v1038, %v1037
        %v1052 = vpack.c.bf16 %v1040, %v1039
        %v1053 = vpack.c.bf16 %v1042, %v1041
        %v1054 = vpack.c.bf16 %v1044, %v1043
        %v1055 = vpack.c.bf16 %v1046, %v1045
        %v1056 = vpack.c.bf16 %v1048, %v1047
        %v1058 = vmul.bf16 %v1049, 1069105081
        %v1059 = vpow.bf16.pop %v1058
        %v1061 = vmul.bf16 %v1050, 1069105081
        %v1062 = vpow.bf16.pop %v1061
        %v1064 = vmul.bf16 %v1051, 1069105081
        %v1065 = vpow.bf16.pop %v1064
        %v1067 = vmul.bf16 %v1052, 1069105081
        %v1068 = vpow.bf16.pop %v1067
        %v1070 = vmul.bf16 %v1053, 1069105081
        %v1071 = vpow.bf16.pop %v1070
        %v1073 = vmul.bf16 %v1054, 1069105081
        %v1074 = vpow.bf16.pop %v1073
        %v1076 = vmul.bf16 %v1055, 1069105081
        %v1077 = vpow.bf16.pop %v1076
        %v1079 = vmul.bf16 %v1056, 1069105081
        %v1080 = vpow.bf16.pop %v1079
        %v1081 = vld [vmem:[#allocation3] sm:$0xff]
        %v1082 = vld [vmem:[#allocation3 + $0x8] sm:$0xff]
        %v1083 = vld [vmem:[#allocation3 + $0x10] sm:$0xff]
        %v1084 = vld [vmem:[#allocation3 + $0x18] sm:$0xff]
        %v1085 = vld [vmem:[#allocation3 + $0x20] sm:$0xff]
        %v1086 = vld [vmem:[#allocation3 + $0x28] sm:$0xff]
        %v1087 = vld [vmem:[#allocation3 + $0x30] sm:$0xff]
        %v1088 = vld [vmem:[#allocation3 + $0x38] sm:$0xff]
        %v1089 = vld [vmem:[#allocation3 + $0x40] sm:$0xff]
        %v1090 = vld [vmem:[#allocation3 + $0x48] sm:$0xff]
        %v1091 = vld [vmem:[#allocation3 + $0x50] sm:$0xff]
        %v1092 = vld [vmem:[#allocation3 + $0x58] sm:$0xff]
        %v1093 = vld [vmem:[#allocation3 + $0x60] sm:$0xff]
        %v1094 = vld [vmem:[#allocation3 + $0x68] sm:$0xff]
        %v1095 = vld [vmem:[#allocation3 + $0x70] sm:$0xff]
        %v1096 = vld [vmem:[#allocation3 + $0x78] sm:$0xff]
        %v1097 = vmul.f32 %v922, %v1081
        %v1098 = vmul.f32 %v924, %v1082
        %v1099 = vmul.f32 %v926, %v1083
        %v1100 = vmul.f32 %v928, %v1084
        %v1101 = vmul.f32 %v930, %v1085
        %v1102 = vmul.f32 %v932, %v1086
        %v1103 = vmul.f32 %v934, %v1087
        %v1104 = vmul.f32 %v936, %v1088
        %v1105 = vmul.f32 %v938, %v1089
        %v1106 = vmul.f32 %v940, %v1090
        %v1107 = vmul.f32 %v942, %v1091
        %v1108 = vmul.f32 %v944, %v1092
        %v1109 = vmul.f32 %v946, %v1093
        %v1110 = vmul.f32 %v948, %v1094
        %v1111 = vmul.f32 %v950, %v1095
        %v1112 = vmul.f32 %v952, %v1096
        %v1113 = vunpack.c.l.bf16 %v1059
        %v1114 = vunpack.c.h.bf16 %v1059
        %v1115 = vunpack.c.l.bf16 %v1062
        %v1116 = vunpack.c.h.bf16 %v1062
        %v1117 = vunpack.c.l.bf16 %v1065
        %v1118 = vunpack.c.h.bf16 %v1065
        %v1119 = vunpack.c.l.bf16 %v1068
        %v1120 = vunpack.c.h.bf16 %v1068
        %v1121 = vunpack.c.l.bf16 %v1071
        %v1122 = vunpack.c.h.bf16 %v1071
        %v1123 = vunpack.c.l.bf16 %v1074
        %v1124 = vunpack.c.h.bf16 %v1074
        %v1125 = vunpack.c.l.bf16 %v1077
        %v1126 = vunpack.c.h.bf16 %v1077
        %v1127 = vunpack.c.l.bf16 %v1080
        %v1128 = vunpack.c.h.bf16 %v1080
        %1129 = vadd.xlane.f32.xlu0 %v1113
        %v1130 = vpop.xlane.xlu0 %1129
        %1131 = vadd.xlane.f32.xlu0 %v1114
        %v1132 = vpop.xlane.xlu0 %1131
        %1133 = vadd.xlane.f32.xlu0 %v1115
        %v1134 = vpop.xlane.xlu0 %1133
        %1135 = vadd.xlane.f32.xlu0 %v1116
        %v1136 = vpop.xlane.xlu0 %1135
        %1137 = vadd.xlane.f32.xlu0 %v1117
        %v1138 = vpop.xlane.xlu0 %1137
        %1139 = vadd.xlane.f32.xlu0 %v1118
        %v1140 = vpop.xlane.xlu0 %1139
        %1141 = vadd.xlane.f32.xlu0 %v1119
        %v1142 = vpop.xlane.xlu0 %1141
        %1143 = vadd.xlane.f32.xlu0 %v1120
        %v1144 = vpop.xlane.xlu0 %1143
        %1145 = vadd.xlane.f32.xlu0 %v1121
        %v1146 = vpop.xlane.xlu0 %1145
        %1147 = vadd.xlane.f32.xlu0 %v1122
        %v1148 = vpop.xlane.xlu0 %1147
        %1149 = vadd.xlane.f32.xlu0 %v1123
        %v1150 = vpop.xlane.xlu0 %1149
        %1151 = vadd.xlane.f32.xlu0 %v1124
        %v1152 = vpop.xlane.xlu0 %1151
        %1153 = vadd.xlane.f32.xlu0 %v1125
        %v1154 = vpop.xlane.xlu0 %1153
        %1155 = vadd.xlane.f32.xlu0 %v1126
        %v1156 = vpop.xlane.xlu0 %1155
        %1157 = vadd.xlane.f32.xlu0 %v1127
        %v1158 = vpop.xlane.xlu0 %1157
        %1159 = vadd.xlane.f32.xlu0 %v1128
        %v1160 = vpop.xlane.xlu0 %1159
        %v1161 = vadd.f32 %v1097, %v1130
        %v1162 = vadd.f32 %v1098, %v1132
        %v1163 = vadd.f32 %v1099, %v1134
        %v1164 = vadd.f32 %v1100, %v1136
        %v1165 = vadd.f32 %v1101, %v1138
        %v1166 = vadd.f32 %v1102, %v1140
        %v1167 = vadd.f32 %v1103, %v1142
        %v1168 = vadd.f32 %v1104, %v1144
        %v1169 = vadd.f32 %v1105, %v1146
        %v1170 = vadd.f32 %v1106, %v1148
        %v1171 = vadd.f32 %v1107, %v1150
        %v1172 = vadd.f32 %v1108, %v1152
        %v1173 = vadd.f32 %v1109, %v1154
        %v1174 = vadd.f32 %v1110, %v1156
        %v1175 = vadd.f32 %v1111, %v1158
        %v1176 = vadd.f32 %v1112, %v1160
        %vm1177 = vcmask 7168
        %1178 = vst.msk [vmem:[#allocation3] sm:$0xff] %vm1177, %v1161
        %1179 = vst.msk [vmem:[#allocation3 + $0x8] sm:$0xff] %vm1177, %v1162
        %1180 = vst.msk [vmem:[#allocation3 + $0x10] sm:$0xff] %vm1177, %v1163
        %1181 = vst.msk [vmem:[#allocation3 + $0x18] sm:$0xff] %vm1177, %v1164
        %1182 = vst.msk [vmem:[#allocation3 + $0x20] sm:$0xff] %vm1177, %v1165
        %1183 = vst.msk [vmem:[#allocation3 + $0x28] sm:$0xff] %vm1177, %v1166
        %1184 = vst.msk [vmem:[#allocation3 + $0x30] sm:$0xff] %vm1177, %v1167
        %1185 = vst.msk [vmem:[#allocation3 + $0x38] sm:$0xff] %vm1177, %v1168
        %1186 = vst.msk [vmem:[#allocation3 + $0x40] sm:$0xff] %vm1177, %v1169
        %1187 = vst.msk [vmem:[#allocation3 + $0x48] sm:$0xff] %vm1177, %v1170
        %1188 = vst.msk [vmem:[#allocation3 + $0x50] sm:$0xff] %vm1177, %v1171
        %1189 = vst.msk [vmem:[#allocation3 + $0x58] sm:$0xff] %vm1177, %v1172
        %1190 = vst.msk [vmem:[#allocation3 + $0x60] sm:$0xff] %vm1177, %v1173
        %1191 = vst.msk [vmem:[#allocation3 + $0x68] sm:$0xff] %vm1177, %v1174
        %1192 = vst.msk [vmem:[#allocation3 + $0x70] sm:$0xff] %vm1177, %v1175
        %1193 = vst.msk [vmem:[#allocation3 + $0x78] sm:$0xff] %vm1177, %v1176
        %1194 = vst.msk [vmem:[#allocation2] sm:$0xff] %vm1177, %v889
        %1195 = vst.msk [vmem:[#allocation2 + $0x8] sm:$0xff] %vm1177, %v890
        %1196 = vst.msk [vmem:[#allocation2 + $0x10] sm:$0xff] %vm1177, %v891
        %1197 = vst.msk [vmem:[#allocation2 + $0x18] sm:$0xff] %vm1177, %v892
        %1198 = vst.msk [vmem:[#allocation2 + $0x20] sm:$0xff] %vm1177, %v893
        %1199 = vst.msk [vmem:[#allocation2 + $0x28] sm:$0xff] %vm1177, %v894
        %1200 = vst.msk [vmem:[#allocation2 + $0x30] sm:$0xff] %vm1177, %v895
        %1201 = vst.msk [vmem:[#allocation2 + $0x38] sm:$0xff] %vm1177, %v896
        %1202 = vst.msk [vmem:[#allocation2 + $0x40] sm:$0xff] %vm1177, %v897
        %1203 = vst.msk [vmem:[#allocation2 + $0x48] sm:$0xff] %vm1177, %v898
        %1204 = vst.msk [vmem:[#allocation2 + $0x50] sm:$0xff] %vm1177, %v899
        %1205 = vst.msk [vmem:[#allocation2 + $0x58] sm:$0xff] %vm1177, %v900
        %1206 = vst.msk [vmem:[#allocation2 + $0x60] sm:$0xff] %vm1177, %v901
        %1207 = vst.msk [vmem:[#allocation2 + $0x68] sm:$0xff] %vm1177, %v902
        %1208 = vst.msk [vmem:[#allocation2 + $0x70] sm:$0xff] %vm1177, %v903
        %1209 = vst.msk [vmem:[#allocation2 + $0x78] sm:$0xff] %vm1177, %v904
        %v1210 = vld [vmem:[%s3] sm:$0x1]
        %1212 = vset.pattern.permute.xlu0 0
        %1213 = vperm.xlu0 %1212, %v922
        %v1214 = vpop.permute.xlu0 %1213
        %1217 = vset.pattern.permute.xlu0 0
        %1218 = vperm.xlu0 %1217, %v924
        %v1219 = vpop.permute.xlu0 %1218
        %1222 = vset.pattern.permute.xlu0 0
        %1223 = vperm.xlu0 %1222, %v926
        %v1224 = vpop.permute.xlu0 %1223
        %1227 = vset.pattern.permute.xlu0 0
        %1228 = vperm.xlu0 %1227, %v928
        %v1229 = vpop.permute.xlu0 %1228
        %1232 = vset.pattern.permute.xlu0 0
        %1233 = vperm.xlu0 %1232, %v930
        %v1234 = vpop.permute.xlu0 %1233
        %1237 = vset.pattern.permute.xlu0 0
        %1238 = vperm.xlu0 %1237, %v932
        %v1239 = vpop.permute.xlu0 %1238
        %1242 = vset.pattern.permute.xlu0 0
        %1243 = vperm.xlu0 %1242, %v934
        %v1244 = vpop.permute.xlu0 %1243
        %1247 = vset.pattern.permute.xlu0 0
        %1248 = vperm.xlu0 %1247, %v936
        %v1249 = vpop.permute.xlu0 %1248
        %1252 = vset.pattern.permute.xlu0 0
        %1253 = vperm.xlu0 %1252, %v938
        %v1254 = vpop.permute.xlu0 %1253
        %1257 = vset.pattern.permute.xlu0 0
        %1258 = vperm.xlu0 %1257, %v940
        %v1259 = vpop.permute.xlu0 %1258
        %1262 = vset.pattern.permute.xlu0 0
        %1263 = vperm.xlu0 %1262, %v942
        %v1264 = vpop.permute.xlu0 %1263
        %1267 = vset.pattern.permute.xlu0 0
        %1268 = vperm.xlu0 %1267, %v944
        %v1269 = vpop.permute.xlu0 %1268
        %1272 = vset.pattern.permute.xlu0 0
        %1273 = vperm.xlu0 %1272, %v946
        %v1274 = vpop.permute.xlu0 %1273
        %1277 = vset.pattern.permute.xlu0 0
        %1278 = vperm.xlu0 %1277, %v948
        %v1279 = vpop.permute.xlu0 %1278
        %1282 = vset.pattern.permute.xlu0 0
        %1283 = vperm.xlu0 %1282, %v950
        %v1284 = vpop.permute.xlu0 %1283
        %1287 = vset.pattern.permute.xlu0 0
        %1288 = vperm.xlu0 %1287, %v952
        %v1289 = vpop.permute.xlu0 %1288
        %v1291 = vlaneseq
        %v1292 = vshrl.u32 %v1291, 7
        %v1293 = vsub.s32 0, %v1292
        %v1294 = vrot.slane %v1210, %v1293
        %v1295 = vmul.f32 %v1214, %v1294
        %v1296 = vmul.f32 %v1219, %v1294
        %v1297 = vmul.f32 %v1224, %v1294
        %v1298 = vmul.f32 %v1229, %v1294
        %v1299 = vmul.f32 %v1234, %v1294
        %v1300 = vmul.f32 %v1239, %v1294
        %v1301 = vmul.f32 %v1244, %v1294
        %v1302 = vmul.f32 %v1249, %v1294
        %v1303 = vmul.f32 %v1254, %v1294
        %v1304 = vmul.f32 %v1259, %v1294
        %v1305 = vmul.f32 %v1264, %v1294
        %v1306 = vmul.f32 %v1269, %v1294
        %v1307 = vmul.f32 %v1274, %v1294
        %v1308 = vmul.f32 %v1279, %v1294
        %v1309 = vmul.f32 %v1284, %v1294
        %v1310 = vmul.f32 %v1289, %v1294
        %v1311 = vadd.f32 %v1295, 0.0
        %v1312 = vadd.f32 %v1296, 0.0
        %v1313 = vadd.f32 %v1297, 0.0
        %v1314 = vadd.f32 %v1298, 0.0
        %v1315 = vadd.f32 %v1299, 0.0
        %v1316 = vadd.f32 %v1300, 0.0
        %v1317 = vadd.f32 %v1301, 0.0
        %v1318 = vadd.f32 %v1302, 0.0
        %v1319 = vadd.f32 %v1303, 0.0
        %v1320 = vadd.f32 %v1304, 0.0
        %v1321 = vadd.f32 %v1305, 0.0
        %v1322 = vadd.f32 %v1306, 0.0
        %v1323 = vadd.f32 %v1307, 0.0
        %v1324 = vadd.f32 %v1308, 0.0
        %v1325 = vadd.f32 %v1309, 0.0
        %v1326 = vadd.f32 %v1310, 0.0
        %s1327 = sshra.s32 %s559, 3
        %s1328 = sand.u32 %s559, 7
        %s1329 = smul.addr %s1327, 4
        %s1330 = scalar_lea.vmem %s2, %s1329
        %v1331 = vld [vmem:[%s1330] sm:$0xf]
        %v1332 = vld [vmem:[%s1330 + $0x4] sm:$0xf]
        %v1333 = vld [vmem:[%s1330 + $0x8] sm:$0xf]
        %v1334 = vld [vmem:[%s1330 + $0xc] sm:$0xf]
        %v1335 = vld [vmem:[%s1330 + $0x10] sm:$0xf]
        %v1336 = vld [vmem:[%s1330 + $0x14] sm:$0xf]
        %v1337 = vld [vmem:[%s1330 + $0x18] sm:$0xf]
        %v1338 = vld [vmem:[%s1330 + $0x1c] sm:$0xf]
        %v1339 = vld [vmem:[%s1330 + $0x20] sm:$0xf]
        %v1340 = vld [vmem:[%s1330 + $0x24] sm:$0xf]
        %v1341 = vld [vmem:[%s1330 + $0x28] sm:$0xf]
        %v1342 = vld [vmem:[%s1330 + $0x2c] sm:$0xf]
        %v1343 = vld [vmem:[%s1330 + $0x30] sm:$0xf]
        %v1344 = vld [vmem:[%s1330 + $0x34] sm:$0xf]
        %v1345 = vld [vmem:[%s1330 + $0x38] sm:$0xf]
        %v1346 = vld [vmem:[%s1330 + $0x3c] sm:$0xf]
        %v1347 = vld [vmem:[%s369 + $0x1] sm:$0x1]
        %1348 = vset.pattern.permute.xlu0 1
        %1349 = vperm.xlu0 %1348, %v543
        %v1350 = vpop.permute.xlu0 %1349
        %1352 = vset.pattern.permute.xlu0 1
        %1353 = vperm.xlu0 %1352, %v544
        %v1354 = vpop.permute.xlu0 %1353
        %1356 = vset.pattern.permute.xlu0 1
        %1357 = vperm.xlu0 %1356, %v545
        %v1358 = vpop.permute.xlu0 %1357
        %1360 = vset.pattern.permute.xlu0 1
        %1361 = vperm.xlu0 %1360, %v546
        %v1362 = vpop.permute.xlu0 %1361
        %1364 = vset.pattern.permute.xlu0 1
        %1365 = vperm.xlu0 %1364, %v547
        %v1366 = vpop.permute.xlu0 %1365
        %1368 = vset.pattern.permute.xlu0 1
        %1369 = vperm.xlu0 %1368, %v548
        %v1370 = vpop.permute.xlu0 %1369
        %1372 = vset.pattern.permute.xlu0 1
        %1373 = vperm.xlu0 %1372, %v549
        %v1374 = vpop.permute.xlu0 %1373
        %1376 = vset.pattern.permute.xlu0 1
        %1377 = vperm.xlu0 %1376, %v550
        %v1378 = vpop.permute.xlu0 %1377
        %1380 = vset.pattern.permute.xlu0 1
        %1381 = vperm.xlu0 %1380, %v551
        %v1382 = vpop.permute.xlu0 %1381
        %1384 = vset.pattern.permute.xlu0 1
        %1385 = vperm.xlu0 %1384, %v552
        %v1386 = vpop.permute.xlu0 %1385
        %1388 = vset.pattern.permute.xlu0 1
        %1389 = vperm.xlu0 %1388, %v553
        %v1390 = vpop.permute.xlu0 %1389
        %1392 = vset.pattern.permute.xlu0 1
        %1393 = vperm.xlu0 %1392, %v554
        %v1394 = vpop.permute.xlu0 %1393
        %1396 = vset.pattern.permute.xlu0 1
        %1397 = vperm.xlu0 %1396, %v555
        %v1398 = vpop.permute.xlu0 %1397
        %1400 = vset.pattern.permute.xlu0 1
        %1401 = vperm.xlu0 %1400, %v556
        %v1402 = vpop.permute.xlu0 %1401
        %1404 = vset.pattern.permute.xlu0 1
        %1405 = vperm.xlu0 %1404, %v557
        %v1406 = vpop.permute.xlu0 %1405
        %1408 = vset.pattern.permute.xlu0 1
        %1409 = vperm.xlu0 %1408, %v558
        %v1410 = vpop.permute.xlu0 %1409
        %v1412 = vlaneseq
        %v1413 = vshrl.u32 %v1412, 7
        %v1414 = vsub.s32 0, %v1413
        %v1415 = vrot.slane %v1347, %v1414
        %v1416 = vadd.f32 %v1350, %v1415
        %v1417 = vadd.f32 %v1354, %v1415
        %v1418 = vadd.f32 %v1358, %v1415
        %v1419 = vadd.f32 %v1362, %v1415
        %v1420 = vadd.f32 %v1366, %v1415
        %v1421 = vadd.f32 %v1370, %v1415
        %v1422 = vadd.f32 %v1374, %v1415
        %v1423 = vadd.f32 %v1378, %v1415
        %v1424 = vadd.f32 %v1382, %v1415
        %v1425 = vadd.f32 %v1386, %v1415
        %v1426 = vadd.f32 %v1390, %v1415
        %v1427 = vadd.f32 %v1394, %v1415
        %v1428 = vadd.f32 %v1398, %v1415
        %v1429 = vadd.f32 %v1402, %v1415
        %v1430 = vadd.f32 %v1406, %v1415
        %v1431 = vadd.f32 %v1410, %v1415
        %vm1432 = vcmp.gt.f32.partialorder %v1416, 0.0
        %vm1433 = vcmp.gt.f32.partialorder %v1417, 0.0
        %vm1434 = vcmp.gt.f32.partialorder %v1418, 0.0
        %vm1435 = vcmp.gt.f32.partialorder %v1419, 0.0
        %vm1436 = vcmp.gt.f32.partialorder %v1420, 0.0
        %vm1437 = vcmp.gt.f32.partialorder %v1421, 0.0
        %vm1438 = vcmp.gt.f32.partialorder %v1422, 0.0
        %vm1439 = vcmp.gt.f32.partialorder %v1423, 0.0
        %vm1440 = vcmp.gt.f32.partialorder %v1424, 0.0
        %vm1441 = vcmp.gt.f32.partialorder %v1425, 0.0
        %vm1442 = vcmp.gt.f32.partialorder %v1426, 0.0
        %vm1443 = vcmp.gt.f32.partialorder %v1427, 0.0
        %vm1444 = vcmp.gt.f32.partialorder %v1428, 0.0
        %vm1445 = vcmp.gt.f32.partialorder %v1429, 0.0
        %vm1446 = vcmp.gt.f32.partialorder %v1430, 0.0
        %vm1447 = vcmp.gt.f32.partialorder %v1431, 0.0
        %v1448 = vmul.f32 %v1416, 0.2
        %v1449 = vmul.f32 %v1417, 0.2
        %v1450 = vmul.f32 %v1418, 0.2
        %v1451 = vmul.f32 %v1419, 0.2
        %v1452 = vmul.f32 %v1420, 0.2
        %v1453 = vmul.f32 %v1421, 0.2
        %v1454 = vmul.f32 %v1422, 0.2
        %v1455 = vmul.f32 %v1423, 0.2
        %v1456 = vmul.f32 %v1424, 0.2
        %v1457 = vmul.f32 %v1425, 0.2
        %v1458 = vmul.f32 %v1426, 0.2
        %v1459 = vmul.f32 %v1427, 0.2
        %v1460 = vmul.f32 %v1428, 0.2
        %v1461 = vmul.f32 %v1429, 0.2
        %v1462 = vmul.f32 %v1430, 0.2
        %v1463 = vmul.f32 %v1431, 0.2
        %v1464 = vsel %vm1432, %v1416, %v1448
        %v1465 = vsel %vm1433, %v1417, %v1449
        %v1466 = vsel %vm1434, %v1418, %v1450
        %v1467 = vsel %vm1435, %v1419, %v1451
        %v1468 = vsel %vm1436, %v1420, %v1452
        %v1469 = vsel %vm1437, %v1421, %v1453
        %v1470 = vsel %vm1438, %v1422, %v1454
        %v1471 = vsel %vm1439, %v1423, %v1455
        %v1472 = vsel %vm1440, %v1424, %v1456
        %v1473 = vsel %vm1441, %v1425, %v1457
        %v1474 = vsel %vm1442, %v1426, %v1458
        %v1475 = vsel %vm1443, %v1427, %v1459
        %v1476 = vsel %vm1444, %v1428, %v1460
        %v1477 = vsel %vm1445, %v1429, %v1461
        %v1478 = vsel %vm1446, %v1430, %v1462
        %v1479 = vsel %vm1447, %v1431, %v1463
        %v1480 = vsel %vm809, %v1464, -1e+30
        %v1481 = vsel %vm810, %v1465, -1e+30
        %v1482 = vsel %vm811, %v1466, -1e+30
        %v1483 = vsel %vm812, %v1467, -1e+30
        %v1484 = vsel %vm813, %v1468, -1e+30
        %v1485 = vsel %vm814, %v1469, -1e+30
        %v1486 = vsel %vm815, %v1470, -1e+30
        %v1487 = vsel %vm816, %v1471, -1e+30
        %v1488 = vsel %vm817, %v1472, -1e+30
        %v1489 = vsel %vm818, %v1473, -1e+30
        %v1490 = vsel %vm819, %v1474, -1e+30
        %v1491 = vsel %vm820, %v1475, -1e+30
        %v1492 = vsel %vm821, %v1476, -1e+30
        %v1493 = vsel %vm822, %v1477, -1e+30
        %v1494 = vsel %vm823, %v1478, -1e+30
        %v1495 = vsel %vm824, %v1479, -1e+30
        %s1496 = scalar_lea.vmem [#allocation2], 128
        %v1497 = vld [vmem:[%s1496] sm:$0xff]
        %v1498 = vld [vmem:[%s1496 + $0x8] sm:$0xff]
        %v1499 = vld [vmem:[%s1496 + $0x10] sm:$0xff]
        %v1500 = vld [vmem:[%s1496 + $0x18] sm:$0xff]
        %v1501 = vld [vmem:[%s1496 + $0x20] sm:$0xff]
        %v1502 = vld [vmem:[%s1496 + $0x28] sm:$0xff]
        %v1503 = vld [vmem:[%s1496 + $0x30] sm:$0xff]
        %v1504 = vld [vmem:[%s1496 + $0x38] sm:$0xff]
        %v1505 = vld [vmem:[%s1496 + $0x40] sm:$0xff]
        %v1506 = vld [vmem:[%s1496 + $0x48] sm:$0xff]
        %v1507 = vld [vmem:[%s1496 + $0x50] sm:$0xff]
        %v1508 = vld [vmem:[%s1496 + $0x58] sm:$0xff]
        %v1509 = vld [vmem:[%s1496 + $0x60] sm:$0xff]
        %v1510 = vld [vmem:[%s1496 + $0x68] sm:$0xff]
        %v1511 = vld [vmem:[%s1496 + $0x70] sm:$0xff]
        %v1512 = vld [vmem:[%s1496 + $0x78] sm:$0xff]
        %1513 = vmax.xlane.f32.xlu0 %v1480
        %v1514 = vpop.xlane.xlu0 %1513
        %1515 = vmax.xlane.f32.xlu0 %v1481
        %v1516 = vpop.xlane.xlu0 %1515
        %1517 = vmax.xlane.f32.xlu0 %v1482
        %v1518 = vpop.xlane.xlu0 %1517
        %1519 = vmax.xlane.f32.xlu0 %v1483
        %v1520 = vpop.xlane.xlu0 %1519
        %1521 = vmax.xlane.f32.xlu0 %v1484
        %v1522 = vpop.xlane.xlu0 %1521
        %1523 = vmax.xlane.f32.xlu0 %v1485
        %v1524 = vpop.xlane.xlu0 %1523
        %1525 = vmax.xlane.f32.xlu0 %v1486
        %v1526 = vpop.xlane.xlu0 %1525
        %1527 = vmax.xlane.f32.xlu0 %v1487
        %v1528 = vpop.xlane.xlu0 %1527
        %1529 = vmax.xlane.f32.xlu0 %v1488
        %v1530 = vpop.xlane.xlu0 %1529
        %1531 = vmax.xlane.f32.xlu0 %v1489
        %v1532 = vpop.xlane.xlu0 %1531
        %1533 = vmax.xlane.f32.xlu0 %v1490
        %v1534 = vpop.xlane.xlu0 %1533
        %1535 = vmax.xlane.f32.xlu0 %v1491
        %v1536 = vpop.xlane.xlu0 %1535
        %1537 = vmax.xlane.f32.xlu0 %v1492
        %v1538 = vpop.xlane.xlu0 %1537
        %1539 = vmax.xlane.f32.xlu0 %v1493
        %v1540 = vpop.xlane.xlu0 %1539
        %1541 = vmax.xlane.f32.xlu0 %v1494
        %v1542 = vpop.xlane.xlu0 %1541
        %1543 = vmax.xlane.f32.xlu0 %v1495
        %v1544 = vpop.xlane.xlu0 %1543
        %v1545 = vmax.f32 %v1497, %v1514
        %v1546 = vmax.f32 %v1498, %v1516
        %v1547 = vmax.f32 %v1499, %v1518
        %v1548 = vmax.f32 %v1500, %v1520
        %v1549 = vmax.f32 %v1501, %v1522
        %v1550 = vmax.f32 %v1502, %v1524
        %v1551 = vmax.f32 %v1503, %v1526
        %v1552 = vmax.f32 %v1504, %v1528
        %v1553 = vmax.f32 %v1505, %v1530
        %v1554 = vmax.f32 %v1506, %v1532
        %v1555 = vmax.f32 %v1507, %v1534
        %v1556 = vmax.f32 %v1508, %v1536
        %v1557 = vmax.f32 %v1509, %v1538
        %v1558 = vmax.f32 %v1510, %v1540
        %v1559 = vmax.f32 %v1511, %v1542
        %v1560 = vmax.f32 %v1512, %v1544
        %v1561 = vsub.f32 %v1497, %v1545
        %v1562 = vsub.f32 %v1498, %v1546
        %v1563 = vsub.f32 %v1499, %v1547
        %v1564 = vsub.f32 %v1500, %v1548
        %v1565 = vsub.f32 %v1501, %v1549
        %v1566 = vsub.f32 %v1502, %v1550
        %v1567 = vsub.f32 %v1503, %v1551
        %v1568 = vsub.f32 %v1504, %v1552
        %v1569 = vsub.f32 %v1505, %v1553
        %v1570 = vsub.f32 %v1506, %v1554
        %v1571 = vsub.f32 %v1507, %v1555
        %v1572 = vsub.f32 %v1508, %v1556
        %v1573 = vsub.f32 %v1509, %v1557
        %v1574 = vsub.f32 %v1510, %v1558
        %v1575 = vsub.f32 %v1511, %v1559
        %v1576 = vsub.f32 %v1512, %v1560
        %v1577 = vmul.f32 %v1561, 1.442695
        %v1578 = vpow.pop %v1577
        %v1579 = vmul.f32 %v1562, 1.442695
        %v1580 = vpow.pop %v1579
        %v1581 = vmul.f32 %v1563, 1.442695
        %v1582 = vpow.pop %v1581
        %v1583 = vmul.f32 %v1564, 1.442695
        %v1584 = vpow.pop %v1583
        %v1585 = vmul.f32 %v1565, 1.442695
        %v1586 = vpow.pop %v1585
        %v1587 = vmul.f32 %v1566, 1.442695
        %v1588 = vpow.pop %v1587
        %v1589 = vmul.f32 %v1567, 1.442695
        %v1590 = vpow.pop %v1589
        %v1591 = vmul.f32 %v1568, 1.442695
        %v1592 = vpow.pop %v1591
        %v1593 = vmul.f32 %v1569, 1.442695
        %v1594 = vpow.pop %v1593
        %v1595 = vmul.f32 %v1570, 1.442695
        %v1596 = vpow.pop %v1595
        %v1597 = vmul.f32 %v1571, 1.442695
        %v1598 = vpow.pop %v1597
        %v1599 = vmul.f32 %v1572, 1.442695
        %v1600 = vpow.pop %v1599
        %v1601 = vmul.f32 %v1573, 1.442695
        %v1602 = vpow.pop %v1601
        %v1603 = vmul.f32 %v1574, 1.442695
        %v1604 = vpow.pop %v1603
        %v1605 = vmul.f32 %v1575, 1.442695
        %v1606 = vpow.pop %v1605
        %v1607 = vmul.f32 %v1576, 1.442695
        %v1608 = vpow.pop %v1607
        %1610 = vset.pattern.permute.xlu0 0
        %1611 = vperm.xlu0 %1610, %v1545
        %v1612 = vpop.permute.xlu0 %1611
        %1615 = vset.pattern.permute.xlu0 0
        %1616 = vperm.xlu0 %1615, %v1546
        %v1617 = vpop.permute.xlu0 %1616
        %1620 = vset.pattern.permute.xlu0 0
        %1621 = vperm.xlu0 %1620, %v1547
        %v1622 = vpop.permute.xlu0 %1621
        %1625 = vset.pattern.permute.xlu0 0
        %1626 = vperm.xlu0 %1625, %v1548
        %v1627 = vpop.permute.xlu0 %1626
        %1630 = vset.pattern.permute.xlu0 0
        %1631 = vperm.xlu0 %1630, %v1549
        %v1632 = vpop.permute.xlu0 %1631
        %1635 = vset.pattern.permute.xlu0 0
        %1636 = vperm.xlu0 %1635, %v1550
        %v1637 = vpop.permute.xlu0 %1636
        %1640 = vset.pattern.permute.xlu0 0
        %1641 = vperm.xlu0 %1640, %v1551
        %v1642 = vpop.permute.xlu0 %1641
        %1645 = vset.pattern.permute.xlu0 0
        %1646 = vperm.xlu0 %1645, %v1552
        %v1647 = vpop.permute.xlu0 %1646
        %1650 = vset.pattern.permute.xlu0 0
        %1651 = vperm.xlu0 %1650, %v1553
        %v1652 = vpop.permute.xlu0 %1651
        %1655 = vset.pattern.permute.xlu0 0
        %1656 = vperm.xlu0 %1655, %v1554
        %v1657 = vpop.permute.xlu0 %1656
        %1660 = vset.pattern.permute.xlu0 0
        %1661 = vperm.xlu0 %1660, %v1555
        %v1662 = vpop.permute.xlu0 %1661
        %1665 = vset.pattern.permute.xlu0 0
        %1666 = vperm.xlu0 %1665, %v1556
        %v1667 = vpop.permute.xlu0 %1666
        %1670 = vset.pattern.permute.xlu0 0
        %1671 = vperm.xlu0 %1670, %v1557
        %v1672 = vpop.permute.xlu0 %1671
        %1675 = vset.pattern.permute.xlu0 0
        %1676 = vperm.xlu0 %1675, %v1558
        %v1677 = vpop.permute.xlu0 %1676
        %1680 = vset.pattern.permute.xlu0 0
        %1681 = vperm.xlu0 %1680, %v1559
        %v1682 = vpop.permute.xlu0 %1681
        %1685 = vset.pattern.permute.xlu0 0
        %1686 = vperm.xlu0 %1685, %v1560
        %v1687 = vpop.permute.xlu0 %1686
        %v1689 = vsub.f32 %v1480, %v1612
        %v1690 = vsub.f32 %v1481, %v1617
        %v1691 = vsub.f32 %v1482, %v1622
        %v1692 = vsub.f32 %v1483, %v1627
        %v1693 = vsub.f32 %v1484, %v1632
        %v1694 = vsub.f32 %v1485, %v1637
        %v1695 = vsub.f32 %v1486, %v1642
        %v1696 = vsub.f32 %v1487, %v1647
        %v1697 = vsub.f32 %v1488, %v1652
        %v1698 = vsub.f32 %v1489, %v1657
        %v1699 = vsub.f32 %v1490, %v1662
        %v1700 = vsub.f32 %v1491, %v1667
        %v1701 = vsub.f32 %v1492, %v1672
        %v1702 = vsub.f32 %v1493, %v1677
        %v1703 = vsub.f32 %v1494, %v1682
        %v1704 = vsub.f32 %v1495, %v1687
        %v1705 = vpack.c.bf16 %v1690, %v1689
        %v1706 = vpack.c.bf16 %v1692, %v1691
        %v1707 = vpack.c.bf16 %v1694, %v1693
        %v1708 = vpack.c.bf16 %v1696, %v1695
        %v1709 = vpack.c.bf16 %v1698, %v1697
        %v1710 = vpack.c.bf16 %v1700, %v1699
        %v1711 = vpack.c.bf16 %v1702, %v1701
        %v1712 = vpack.c.bf16 %v1704, %v1703
        %v1714 = vmul.bf16 %v1705, 1069105081
        %v1715 = vpow.bf16.pop %v1714
        %v1717 = vmul.bf16 %v1706, 1069105081
        %v1718 = vpow.bf16.pop %v1717
        %v1720 = vmul.bf16 %v1707, 1069105081
        %v1721 = vpow.bf16.pop %v1720
        %v1723 = vmul.bf16 %v1708, 1069105081
        %v1724 = vpow.bf16.pop %v1723
        %v1726 = vmul.bf16 %v1709, 1069105081
        %v1727 = vpow.bf16.pop %v1726
        %v1729 = vmul.bf16 %v1710, 1069105081
        %v1730 = vpow.bf16.pop %v1729
        %v1732 = vmul.bf16 %v1711, 1069105081
        %v1733 = vpow.bf16.pop %v1732
        %v1735 = vmul.bf16 %v1712, 1069105081
        %v1736 = vpow.bf16.pop %v1735
        %s1737 = scalar_lea.vmem [#allocation3], 128
        %v1738 = vld [vmem:[%s1737] sm:$0xff]
        %v1739 = vld [vmem:[%s1737 + $0x8] sm:$0xff]
        %v1740 = vld [vmem:[%s1737 + $0x10] sm:$0xff]
        %v1741 = vld [vmem:[%s1737 + $0x18] sm:$0xff]
        %v1742 = vld [vmem:[%s1737 + $0x20] sm:$0xff]
        %v1743 = vld [vmem:[%s1737 + $0x28] sm:$0xff]
        %v1744 = vld [vmem:[%s1737 + $0x30] sm:$0xff]
        %v1745 = vld [vmem:[%s1737 + $0x38] sm:$0xff]
        %v1746 = vld [vmem:[%s1737 + $0x40] sm:$0xff]
        %v1747 = vld [vmem:[%s1737 + $0x48] sm:$0xff]
        %v1748 = vld [vmem:[%s1737 + $0x50] sm:$0xff]
        %v1749 = vld [vmem:[%s1737 + $0x58] sm:$0xff]
        %v1750 = vld [vmem:[%s1737 + $0x60] sm:$0xff]
        %v1751 = vld [vmem:[%s1737 + $0x68] sm:$0xff]
        %v1752 = vld [vmem:[%s1737 + $0x70] sm:$0xff]
        %v1753 = vld [vmem:[%s1737 + $0x78] sm:$0xff]
        %v1754 = vmul.f32 %v1578, %v1738
        %v1755 = vmul.f32 %v1580, %v1739
        %v1756 = vmul.f32 %v1582, %v1740
        %v1757 = vmul.f32 %v1584, %v1741
        %v1758 = vmul.f32 %v1586, %v1742
        %v1759 = vmul.f32 %v1588, %v1743
        %v1760 = vmul.f32 %v1590, %v1744
        %v1761 = vmul.f32 %v1592, %v1745
        %v1762 = vmul.f32 %v1594, %v1746
        %v1763 = vmul.f32 %v1596, %v1747
        %v1764 = vmul.f32 %v1598, %v1748
        %v1765 = vmul.f32 %v1600, %v1749
        %v1766 = vmul.f32 %v1602, %v1750
        %v1767 = vmul.f32 %v1604, %v1751
        %v1768 = vmul.f32 %v1606, %v1752
        %v1769 = vmul.f32 %v1608, %v1753
        %v1770 = vunpack.c.l.bf16 %v1715
        %v1771 = vunpack.c.h.bf16 %v1715
        %v1772 = vunpack.c.l.bf16 %v1718
        %v1773 = vunpack.c.h.bf16 %v1718
        %v1774 = vunpack.c.l.bf16 %v1721
        %v1775 = vunpack.c.h.bf16 %v1721
        %v1776 = vunpack.c.l.bf16 %v1724
        %v1777 = vunpack.c.h.bf16 %v1724
        %v1778 = vunpack.c.l.bf16 %v1727
        %v1779 = vunpack.c.h.bf16 %v1727
        %v1780 = vunpack.c.l.bf16 %v1730
        %v1781 = vunpack.c.h.bf16 %v1730
        %v1782 = vunpack.c.l.bf16 %v1733
        %v1783 = vunpack.c.h.bf16 %v1733
        %v1784 = vunpack.c.l.bf16 %v1736
        %v1785 = vunpack.c.h.bf16 %v1736
        %1786 = vadd.xlane.f32.xlu0 %v1770
        %v1787 = vpop.xlane.xlu0 %1786
        %1788 = vadd.xlane.f32.xlu0 %v1771
        %v1789 = vpop.xlane.xlu0 %1788
        %1790 = vadd.xlane.f32.xlu0 %v1772
        %v1791 = vpop.xlane.xlu0 %1790
        %1792 = vadd.xlane.f32.xlu0 %v1773
        %v1793 = vpop.xlane.xlu0 %1792
        %1794 = vadd.xlane.f32.xlu0 %v1774
        %v1795 = vpop.xlane.xlu0 %1794
        %1796 = vadd.xlane.f32.xlu0 %v1775
        %v1797 = vpop.xlane.xlu0 %1796
        %1798 = vadd.xlane.f32.xlu0 %v1776
        %v1799 = vpop.xlane.xlu0 %1798
        %1800 = vadd.xlane.f32.xlu0 %v1777
        %v1801 = vpop.xlane.xlu0 %1800
        %1802 = vadd.xlane.f32.xlu0 %v1778
        %v1803 = vpop.xlane.xlu0 %1802
        %1804 = vadd.xlane.f32.xlu0 %v1779
        %v1805 = vpop.xlane.xlu0 %1804
        %1806 = vadd.xlane.f32.xlu0 %v1780
        %v1807 = vpop.xlane.xlu0 %1806
        %1808 = vadd.xlane.f32.xlu0 %v1781
        %v1809 = vpop.xlane.xlu0 %1808
        %1810 = vadd.xlane.f32.xlu0 %v1782
        %v1811 = vpop.xlane.xlu0 %1810
        %1812 = vadd.xlane.f32.xlu0 %v1783
        %v1813 = vpop.xlane.xlu0 %1812
        %1814 = vadd.xlane.f32.xlu0 %v1784
        %v1815 = vpop.xlane.xlu0 %1814
        %1816 = vadd.xlane.f32.xlu0 %v1785
        %v1817 = vpop.xlane.xlu0 %1816
        %v1818 = vadd.f32 %v1754, %v1787
        %v1819 = vadd.f32 %v1755, %v1789
        %v1820 = vadd.f32 %v1756, %v1791
        %v1821 = vadd.f32 %v1757, %v1793
        %v1822 = vadd.f32 %v1758, %v1795
        %v1823 = vadd.f32 %v1759, %v1797
        %v1824 = vadd.f32 %v1760, %v1799
        %v1825 = vadd.f32 %v1761, %v1801
        %v1826 = vadd.f32 %v1762, %v1803
        %v1827 = vadd.f32 %v1763, %v1805
        %v1828 = vadd.f32 %v1764, %v1807
        %v1829 = vadd.f32 %v1765, %v1809
        %v1830 = vadd.f32 %v1766, %v1811
        %v1831 = vadd.f32 %v1767, %v1813
        %v1832 = vadd.f32 %v1768, %v1815
        %v1833 = vadd.f32 %v1769, %v1817
        %1834 = vst.msk [vmem:[%s1737] sm:$0xff] %vm1177, %v1818
        %1835 = vst.msk [vmem:[%s1737 + $0x8] sm:$0xff] %vm1177, %v1819
        %1836 = vst.msk [vmem:[%s1737 + $0x10] sm:$0xff] %vm1177, %v1820
        %1837 = vst.msk [vmem:[%s1737 + $0x18] sm:$0xff] %vm1177, %v1821
        %1838 = vst.msk [vmem:[%s1737 + $0x20] sm:$0xff] %vm1177, %v1822
        %1839 = vst.msk [vmem:[%s1737 + $0x28] sm:$0xff] %vm1177, %v1823
        %1840 = vst.msk [vmem:[%s1737 + $0x30] sm:$0xff] %vm1177, %v1824
        %1841 = vst.msk [vmem:[%s1737 + $0x38] sm:$0xff] %vm1177, %v1825
        %1842 = vst.msk [vmem:[%s1737 + $0x40] sm:$0xff] %vm1177, %v1826
        %1843 = vst.msk [vmem:[%s1737 + $0x48] sm:$0xff] %vm1177, %v1827
        %1844 = vst.msk [vmem:[%s1737 + $0x50] sm:$0xff] %vm1177, %v1828
        %1845 = vst.msk [vmem:[%s1737 + $0x58] sm:$0xff] %vm1177, %v1829
        %1846 = vst.msk [vmem:[%s1737 + $0x60] sm:$0xff] %vm1177, %v1830
        %1847 = vst.msk [vmem:[%s1737 + $0x68] sm:$0xff] %vm1177, %v1831
        %1848 = vst.msk [vmem:[%s1737 + $0x70] sm:$0xff] %vm1177, %v1832
        %1849 = vst.msk [vmem:[%s1737 + $0x78] sm:$0xff] %vm1177, %v1833
        %1850 = vst.msk [vmem:[%s1496] sm:$0xff] %vm1177, %v1545
        %1851 = vst.msk [vmem:[%s1496 + $0x8] sm:$0xff] %vm1177, %v1546
        %1852 = vst.msk [vmem:[%s1496 + $0x10] sm:$0xff] %vm1177, %v1547
        %1853 = vst.msk [vmem:[%s1496 + $0x18] sm:$0xff] %vm1177, %v1548
        %1854 = vst.msk [vmem:[%s1496 + $0x20] sm:$0xff] %vm1177, %v1549
        %1855 = vst.msk [vmem:[%s1496 + $0x28] sm:$0xff] %vm1177, %v1550
        %1856 = vst.msk [vmem:[%s1496 + $0x30] sm:$0xff] %vm1177, %v1551
        %1857 = vst.msk [vmem:[%s1496 + $0x38] sm:$0xff] %vm1177, %v1552
        %1858 = vst.msk [vmem:[%s1496 + $0x40] sm:$0xff] %vm1177, %v1553
        %1859 = vst.msk [vmem:[%s1496 + $0x48] sm:$0xff] %vm1177, %v1554
        %1860 = vst.msk [vmem:[%s1496 + $0x50] sm:$0xff] %vm1177, %v1555
        %1861 = vst.msk [vmem:[%s1496 + $0x58] sm:$0xff] %vm1177, %v1556
        %1862 = vst.msk [vmem:[%s1496 + $0x60] sm:$0xff] %vm1177, %v1557
        %1863 = vst.msk [vmem:[%s1496 + $0x68] sm:$0xff] %vm1177, %v1558
        %1864 = vst.msk [vmem:[%s1496 + $0x70] sm:$0xff] %vm1177, %v1559
        %1865 = vst.msk [vmem:[%s1496 + $0x78] sm:$0xff] %vm1177, %v1560
        %v1866 = vld [vmem:[%s3 + $0x1] sm:$0x1]
        %1868 = vset.pattern.permute.xlu0 0
        %1869 = vperm.xlu0 %1868, %v1578
        %v1870 = vpop.permute.xlu0 %1869
        %1873 = vset.pattern.permute.xlu0 0
        %1874 = vperm.xlu0 %1873, %v1580
        %v1875 = vpop.permute.xlu0 %1874
        %1878 = vset.pattern.permute.xlu0 0
        %1879 = vperm.xlu0 %1878, %v1582
        %v1880 = vpop.permute.xlu0 %1879
        %1883 = vset.pattern.permute.xlu0 0
        %1884 = vperm.xlu0 %1883, %v1584
        %v1885 = vpop.permute.xlu0 %1884
        %1888 = vset.pattern.permute.xlu0 0
        %1889 = vperm.xlu0 %1888, %v1586
        %v1890 = vpop.permute.xlu0 %1889
        %1893 = vset.pattern.permute.xlu0 0
        %1894 = vperm.xlu0 %1893, %v1588
        %v1895 = vpop.permute.xlu0 %1894
        %1898 = vset.pattern.permute.xlu0 0
        %1899 = vperm.xlu0 %1898, %v1590
        %v1900 = vpop.permute.xlu0 %1899
        %1903 = vset.pattern.permute.xlu0 0
        %1904 = vperm.xlu0 %1903, %v1592
        %v1905 = vpop.permute.xlu0 %1904
        %1908 = vset.pattern.permute.xlu0 0
        %1909 = vperm.xlu0 %1908, %v1594
        %v1910 = vpop.permute.xlu0 %1909
        %1913 = vset.pattern.permute.xlu0 0
        %1914 = vperm.xlu0 %1913, %v1596
        %v1915 = vpop.permute.xlu0 %1914
        %1918 = vset.pattern.permute.xlu0 0
        %1919 = vperm.xlu0 %1918, %v1598
        %v1920 = vpop.permute.xlu0 %1919
        %1923 = vset.pattern.permute.xlu0 0
        %1924 = vperm.xlu0 %1923, %v1600
        %v1925 = vpop.permute.xlu0 %1924
        %1928 = vset.pattern.permute.xlu0 0
        %1929 = vperm.xlu0 %1928, %v1602
        %v1930 = vpop.permute.xlu0 %1929
        %1933 = vset.pattern.permute.xlu0 0
        %1934 = vperm.xlu0 %1933, %v1604
        %v1935 = vpop.permute.xlu0 %1934
        %1938 = vset.pattern.permute.xlu0 0
        %1939 = vperm.xlu0 %1938, %v1606
        %v1940 = vpop.permute.xlu0 %1939
        %1943 = vset.pattern.permute.xlu0 0
        %1944 = vperm.xlu0 %1943, %v1608
        %v1945 = vpop.permute.xlu0 %1944
        %v1947 = vlaneseq
        %v1948 = vshrl.u32 %v1947, 7
        %v1949 = vsub.s32 0, %v1948
        %v1950 = vrot.slane %v1866, %v1949
        %v1951 = vmul.f32 %v1870, %v1950
        %v1952 = vmul.f32 %v1875, %v1950
        %v1953 = vmul.f32 %v1880, %v1950
        %v1954 = vmul.f32 %v1885, %v1950
        %v1955 = vmul.f32 %v1890, %v1950
        %v1956 = vmul.f32 %v1895, %v1950
        %v1957 = vmul.f32 %v1900, %v1950
        %v1958 = vmul.f32 %v1905, %v1950
        %v1959 = vmul.f32 %v1910, %v1950
        %v1960 = vmul.f32 %v1915, %v1950
        %v1961 = vmul.f32 %v1920, %v1950
        %v1962 = vmul.f32 %v1925, %v1950
        %v1963 = vmul.f32 %v1930, %v1950
        %v1964 = vmul.f32 %v1935, %v1950
        %v1965 = vmul.f32 %v1940, %v1950
        %v1966 = vmul.f32 %v1945, %v1950
        %v1967 = vadd.f32 %v1311, %v1951
        %v1968 = vadd.f32 %v1312, %v1952
        %v1969 = vadd.f32 %v1313, %v1953
        %v1970 = vadd.f32 %v1314, %v1954
        %v1971 = vadd.f32 %v1315, %v1955
        %v1972 = vadd.f32 %v1316, %v1956
        %v1973 = vadd.f32 %v1317, %v1957
        %v1974 = vadd.f32 %v1318, %v1958
        %v1975 = vadd.f32 %v1319, %v1959
        %v1976 = vadd.f32 %v1320, %v1960
        %v1977 = vadd.f32 %v1321, %v1961
        %v1978 = vadd.f32 %v1322, %v1962
        %v1979 = vadd.f32 %v1323, %v1963
        %v1980 = vadd.f32 %v1324, %v1964
        %v1981 = vadd.f32 %v1325, %v1965
        %v1982 = vadd.f32 %v1326, %v1966
        %s1983 = sadd.s32 %s1327, 32
        %s1984 = smul.addr %s1983, 4
        %s1985 = scalar_lea.vmem %s2, %s1984
        %v1986 = vld [vmem:[%s1985] sm:$0xf]
        %v1987 = vld [vmem:[%s1985 + $0x4] sm:$0xf]
        %v1988 = vld [vmem:[%s1985 + $0x8] sm:$0xf]
        %v1989 = vld [vmem:[%s1985 + $0xc] sm:$0xf]
        %v1990 = vld [vmem:[%s1985 + $0x10] sm:$0xf]
        %v1991 = vld [vmem:[%s1985 + $0x14] sm:$0xf]
        %v1992 = vld [vmem:[%s1985 + $0x18] sm:$0xf]
        %v1993 = vld [vmem:[%s1985 + $0x1c] sm:$0xf]
        %v1994 = vld [vmem:[%s1985 + $0x20] sm:$0xf]
        %v1995 = vld [vmem:[%s1985 + $0x24] sm:$0xf]
        %v1996 = vld [vmem:[%s1985 + $0x28] sm:$0xf]
        %v1997 = vld [vmem:[%s1985 + $0x2c] sm:$0xf]
        %v1998 = vld [vmem:[%s1985 + $0x30] sm:$0xf]
        %v1999 = vld [vmem:[%s1985 + $0x34] sm:$0xf]
        %v2000 = vld [vmem:[%s1985 + $0x38] sm:$0xf]
        %v2001 = vld [vmem:[%s1985 + $0x3c] sm:$0xf]
        %v2018 = vunpack.c.l.b16 %v1986
        %v2019 = vunpack.c.l.b16 %v1987
        %v2020 = vunpack.c.l.b16 %v1988
        %v2021 = vunpack.c.l.b16 %v1989
        %v2022 = vunpack.c.l.b16 %v1990
        %v2023 = vunpack.c.l.b16 %v1991
        %v2024 = vunpack.c.l.b16 %v1992
        %v2025 = vunpack.c.l.b16 %v1993
        %v2026 = vunpack.c.l.b16 %v1994
        %v2027 = vunpack.c.l.b16 %v1995
        %v2028 = vunpack.c.l.b16 %v1996
        %v2029 = vunpack.c.l.b16 %v1997
        %v2030 = vunpack.c.l.b16 %v1998
        %v2031 = vunpack.c.l.b16 %v1999
        %v2032 = vunpack.c.l.b16 %v2000
        %v2033 = vunpack.c.l.b16 %v2001
        %v2034 = vpack.c.b16 %v2019, %v2018
        %v2035 = vpack.c.b16 %v2021, %v2020
        %v2036 = vpack.c.b16 %v2023, %v2022
        %v2037 = vpack.c.b16 %v2025, %v2024
        %v2038 = vpack.c.b16 %v2027, %v2026
        %v2039 = vpack.c.b16 %v2029, %v2028
        %v2040 = vpack.c.b16 %v2031, %v2030
        %v2041 = vpack.c.b16 %v2033, %v2032
        %2050 = vmatprep.subr.bf16.mxu0 0
        %2051 = vmatpush1.bf16.msra.mxu0 %v2034
        %2052 = vmatprep.subr.bf16.mxu0 0
        %2053 = vmatpush1.bf16.msra.mxu0 %v2035
        %2054 = vmatprep.subr.bf16.mxu0 0
        %2055 = vmatpush1.bf16.msra.mxu0 %v2036
        %2056 = vmatprep.subr.bf16.mxu0 0
        %2057 = vmatpush1.bf16.msra.mxu0 %v2037
        %2058 = vmatprep.subr.bf16.mxu0 0
        %2059 = vmatpush1.bf16.msra.mxu0 %v2038
        %2060 = vmatprep.subr.bf16.mxu0 0
        %2061 = vmatpush1.bf16.msra.mxu0 %v2039
        %2062 = vmatprep.subr.bf16.mxu0 0
        %2063 = vmatpush1.bf16.msra.mxu0 %v2040
        %2064 = vmatprep.subr.bf16.mxu0 0
        %2065 = vmatpush1.bf16.msra.mxu0 %v2041
        %2066 = vmatprep.subr.bf16.mxu0 0
        %2067 = vmatpush1.bf16.msra.mxu0 0
        %2068 = vmatprep.subr.bf16.mxu0 0
        %2069 = vmatpush1.bf16.msra.mxu0 0
        %2070 = vmatprep.subr.bf16.mxu0 0
        %2071 = vmatpush1.bf16.msra.mxu0 0
        %2072 = vmatprep.subr.bf16.mxu0 0
        %2073 = vmatpush1.bf16.msra.mxu0 0
        %2074 = vmatprep.subr.bf16.mxu0 0
        %2075 = vmatpush1.bf16.msra.mxu0 0
        %2076 = vmatprep.subr.bf16.mxu0 0
        %2077 = vmatpush1.bf16.msra.mxu0 0
        %2078 = vmatprep.subr.bf16.mxu0 0
        %2079 = vmatpush1.bf16.msra.mxu0 0
        %2080 = vmatprep.subr.bf16.mxu0 0
        %2081 = vmatpush1.bf16.msra.mxu0 0
        %2082 = vmatprep.mubr.bf16.mxu0 0
        %2083 = vmatmul.mubr.bf16.gmra.mrb[0].mxu0 %v1715
        %v2084 = vpop.f32.mrb[0].mxu0
        %v2085 = vadd.f32 0.0, %v2084
        %v2086 = vpop.f32.mrb[0].mxu0
        %v2087 = vpop.f32.mrb[0].mxu0
        %v2088 = vadd.f32 0.0, %v2087
        %v2089 = vpop.f32.mrb[0].mxu0
        %2090 = vmatprep.mubr.bf16.mxu0 0
        %2091 = vmatmul.mubr.bf16.gmra.mrb[0].mxu0 %v1718
        %v2092 = vpop.f32.mrb[0].mxu0
        %v2093 = vadd.f32 0.0, %v2092
        %v2094 = vpop.f32.mrb[0].mxu0
        %v2095 = vpop.f32.mrb[0].mxu0
        %v2096 = vadd.f32 0.0, %v2095
        %v2097 = vpop.f32.mrb[0].mxu0
        %2098 = vmatprep.mubr.bf16.mxu0 0
        %2099 = vmatmul.mubr.bf16.gmra.mrb[0].mxu0 %v1721
        %v2100 = vpop.f32.mrb[0].mxu0
        %v2101 = vadd.f32 0.0, %v2100
        %v2102 = vpop.f32.mrb[0].mxu0
        %v2103 = vpop.f32.mrb[0].mxu0
        %v2104 = vadd.f32 0.0, %v2103
        %v2105 = vpop.f32.mrb[0].mxu0
        %2106 = vmatprep.mubr.bf16.mxu0 0
        %2107 = vmatmul.mubr.bf16.gmra.mrb[0].mxu0 %v1724
        %v2108 = vpop.f32.mrb[0].mxu0
        %v2109 = vadd.f32 0.0, %v2108
        %v2110 = vpop.f32.mrb[0].mxu0
        %v2111 = vpop.f32.mrb[0].mxu0
        %v2112 = vadd.f32 0.0, %v2111
        %v2113 = vpop.f32.mrb[0].mxu0
        %2114 = vmatprep.mubr.bf16.mxu0 0
        %2115 = vmatmul.mubr.bf16.gmra.mrb[0].mxu0 %v1727
        %v2116 = vpop.f32.mrb[0].mxu0
        %v2117 = vadd.f32 0.0, %v2116
        %v2118 = vpop.f32.mrb[0].mxu0
        %v2119 = vpop.f32.mrb[0].mxu0
        %v2120 = vadd.f32 0.0, %v2119
        %v2121 = vpop.f32.mrb[0].mxu0
        %2122 = vmatprep.mubr.bf16.mxu0 0
        %2123 = vmatmul.mubr.bf16.gmra.mrb[0].mxu0 %v1730
        %v2124 = vpop.f32.mrb[0].mxu0
        %v2125 = vadd.f32 0.0, %v2124
        %v2126 = vpop.f32.mrb[0].mxu0
        %v2127 = vpop.f32.mrb[0].mxu0
        %v2128 = vadd.f32 0.0, %v2127
        %v2129 = vpop.f32.mrb[0].mxu0
        %2130 = vmatprep.mubr.bf16.mxu0 0
        %2131 = vmatmul.mubr.bf16.gmra.mrb[0].mxu0 %v1733
        %v2132 = vpop.f32.mrb[0].mxu0
        %v2133 = vadd.f32 0.0, %v2132
        %v2134 = vpop.f32.mrb[0].mxu0
        %v2135 = vpop.f32.mrb[0].mxu0
        %v2136 = vadd.f32 0.0, %v2135
        %v2137 = vpop.f32.mrb[0].mxu0
        %2138 = vmatprep.mubr.bf16.mxu0 0
        %2139 = vmatmul.mubr.bf16.gmra.mrb[0].mxu0 %v1736
        %v2140 = vpop.f32.mrb[0].mxu0
        %v2141 = vadd.f32 0.0, %v2140
        %v2142 = vpop.f32.mrb[0].mxu0
        %v2143 = vpop.f32.mrb[0].mxu0
        %v2144 = vadd.f32 0.0, %v2143
        %v2145 = vpop.f32.mrb[0].mxu0
        %2146 = vdwg.mxu0
        %v2163 = vunpack.c.l.b16 %v1331
        %v2164 = vunpack.c.l.b16 %v1332
        %v2165 = vunpack.c.l.b16 %v1333
        %v2166 = vunpack.c.l.b16 %v1334
        %v2167 = vunpack.c.l.b16 %v1335
        %v2168 = vunpack.c.l.b16 %v1336
        %v2169 = vunpack.c.l.b16 %v1337
        %v2170 = vunpack.c.l.b16 %v1338
        %v2171 = vunpack.c.l.b16 %v1339
        %v2172 = vunpack.c.l.b16 %v1340
        %v2173 = vunpack.c.l.b16 %v1341
        %v2174 = vunpack.c.l.b16 %v1342
        %v2175 = vunpack.c.l.b16 %v1343
        %v2176 = vunpack.c.l.b16 %v1344
        %v2177 = vunpack.c.l.b16 %v1345
        %v2178 = vunpack.c.l.b16 %v1346
        %v2179 = vpack.c.b16 %v2164, %v2163
        %v2180 = vpack.c.b16 %v2166, %v2165
        %v2181 = vpack.c.b16 %v2168, %v2167
        %v2182 = vpack.c.b16 %v2170, %v2169
        %v2183 = vpack.c.b16 %v2172, %v2171
        %v2184 = vpack.c.b16 %v2174, %v2173
        %v2185 = vpack.c.b16 %v2176, %v2175
        %v2186 = vpack.c.b16 %v2178, %v2177
        %2195 = vmatprep.subr.bf16.mxu0 0
        %2196 = vmatpush1.bf16.msra.mxu0 %v2179
        %2197 = vmatprep.subr.bf16.mxu0 0
        %2198 = vmatpush1.bf16.msra.mxu0 %v2180
        %2199 = vmatprep.subr.bf16.mxu0 0
        %2200 = vmatpush1.bf16.msra.mxu0 %v2181
        %2201 = vmatprep.subr.bf16.mxu0 0
        %2202 = vmatpush1.bf16.msra.mxu0 %v2182
        %2203 = vmatprep.subr.bf16.mxu0 0
        %2204 = vmatpush1.bf16.msra.mxu0 %v2183
        %2205 = vmatprep.subr.bf16.mxu0 0
        %2206 = vmatpush1.bf16.msra.mxu0 %v2184
        %2207 = vmatprep.subr.bf16.mxu0 0
        %2208 = vmatpush1.bf16.msra.mxu0 %v2185
        %2209 = vmatprep.subr.bf16.mxu0 0
        %2210 = vmatpush1.bf16.msra.mxu0 %v2186
        %2211 = vmatprep.subr.bf16.mxu0 0
        %2212 = vmatpush1.bf16.msra.mxu0 0
        %2213 = vmatprep.subr.bf16.mxu0 0
        %2214 = vmatpush1.bf16.msra.mxu0 0
        %2215 = vmatprep.subr.bf16.mxu0 0
        %2216 = vmatpush1.bf16.msra.mxu0 0
        %2217 = vmatprep.subr.bf16.mxu0 0
        %2218 = vmatpush1.bf16.msra.mxu0 0
        %2219 = vmatprep.subr.bf16.mxu0 0
        %2220 = vmatpush1.bf16.msra.mxu0 0
        %2221 = vmatprep.subr.bf16.mxu0 0
        %2222 = vmatpush1.bf16.msra.mxu0 0
        %2223 = vmatprep.subr.bf16.mxu0 0
        %2224 = vmatpush1.bf16.msra.mxu0 0
        %2225 = vmatprep.subr.bf16.mxu0 0
        %2226 = vmatpush1.bf16.msra.mxu0 0
        %2227 = vmatprep.mubr.bf16.mxu0 0
        %2228 = vmatmul.mubr.bf16.gmra.mrb[0].mxu0 %v1059
        %v2229 = vpop.f32.mrb[0].mxu0
        %v2230 = vadd.f32 %v2085, %v2229
        %v2231 = vpop.f32.mrb[0].mxu0
        %v2232 = vpop.f32.mrb[0].mxu0
        %v2233 = vadd.f32 %v2088, %v2232
        %v2234 = vpop.f32.mrb[0].mxu0
        %2235 = vmatprep.mubr.bf16.mxu0 0
        %2236 = vmatmul.mubr.bf16.gmra.mrb[0].mxu0 %v1062
        %v2237 = vpop.f32.mrb[0].mxu0
        %v2238 = vadd.f32 %v2093, %v2237
        %v2239 = vpop.f32.mrb[0].mxu0
        %v2240 = vpop.f32.mrb[0].mxu0
        %v2241 = vadd.f32 %v2096, %v2240
        %v2242 = vpop.f32.mrb[0].mxu0
        %2243 = vmatprep.mubr.bf16.mxu0 0
        %2244 = vmatmul.mubr.bf16.gmra.mrb[0].mxu0 %v1065
        %v2245 = vpop.f32.mrb[0].mxu0
        %v2246 = vadd.f32 %v2101, %v2245
        %v2247 = vpop.f32.mrb[0].mxu0
        %v2248 = vpop.f32.mrb[0].mxu0
        %v2249 = vadd.f32 %v2104, %v2248
        %v2250 = vpop.f32.mrb[0].mxu0
        %2251 = vmatprep.mubr.bf16.mxu0 0
        %2252 = vmatmul.mubr.bf16.gmra.mrb[0].mxu0 %v1068
        %v2253 = vpop.f32.mrb[0].mxu0
        %v2254 = vadd.f32 %v2109, %v2253
        %v2255 = vpop.f32.mrb[0].mxu0
        %v2256 = vpop.f32.mrb[0].mxu0
        %v2257 = vadd.f32 %v2112, %v2256
        %v2258 = vpop.f32.mrb[0].mxu0
        %2259 = vmatprep.mubr.bf16.mxu0 0
        %2260 = vmatmul.mubr.bf16.gmra.mrb[0].mxu0 %v1071
        %v2261 = vpop.f32.mrb[0].mxu0
        %v2262 = vadd.f32 %v2117, %v2261
        %v2263 = vpop.f32.mrb[0].mxu0
        %v2264 = vpop.f32.mrb[0].mxu0
        %v2265 = vadd.f32 %v2120, %v2264
        %v2266 = vpop.f32.mrb[0].mxu0
        %2267 = vmatprep.mubr.bf16.mxu0 0
        %2268 = vmatmul.mubr.bf16.gmra.mrb[0].mxu0 %v1074
        %v2269 = vpop.f32.mrb[0].mxu0
        %v2270 = vadd.f32 %v2125, %v2269
        %v2271 = vpop.f32.mrb[0].mxu0
        %v2272 = vpop.f32.mrb[0].mxu0
        %v2273 = vadd.f32 %v2128, %v2272
        %v2274 = vpop.f32.mrb[0].mxu0
        %2275 = vmatprep.mubr.bf16.mxu0 0
        %2276 = vmatmul.mubr.bf16.gmra.mrb[0].mxu0 %v1077
        %v2277 = vpop.f32.mrb[0].mxu0
        %v2278 = vadd.f32 %v2133, %v2277
        %v2279 = vpop.f32.mrb[0].mxu0
        %v2280 = vpop.f32.mrb[0].mxu0
        %v2281 = vadd.f32 %v2136, %v2280
        %v2282 = vpop.f32.mrb[0].mxu0
        %2283 = vmatprep.mubr.bf16.mxu0 0
        %2284 = vmatmul.mubr.bf16.gmra.mrb[0].mxu0 %v1080
        %v2285 = vpop.f32.mrb[0].mxu0
        %v2286 = vadd.f32 %v2141, %v2285
        %v2287 = vpop.f32.mrb[0].mxu0
        %v2288 = vpop.f32.mrb[0].mxu0
        %v2289 = vadd.f32 %v2144, %v2288
        %v2290 = vpop.f32.mrb[0].mxu0
        %2291 = vdwg.mxu0
        %v2292 = vld [vmem:[%s369 + $0x2] sm:$0x1]
        %2293 = vset.pattern.permute.xlu0 2
        %2294 = vperm.xlu0 %2293, %v543
        %v2295 = vpop.permute.xlu0 %2294
        %2297 = vset.pattern.permute.xlu0 2
        %2298 = vperm.xlu0 %2297, %v544
        %v2299 = vpop.permute.xlu0 %2298
        %2301 = vset.pattern.permute.xlu0 2
        %2302 = vperm.xlu0 %2301, %v545
        %v2303 = vpop.permute.xlu0 %2302
        %2305 = vset.pattern.permute.xlu0 2
        %2306 = vperm.xlu0 %2305, %v546
        %v2307 = vpop.permute.xlu0 %2306
        %2309 = vset.pattern.permute.xlu0 2
        %2310 = vperm.xlu0 %2309, %v547
        %v2311 = vpop.permute.xlu0 %2310
        %2313 = vset.pattern.permute.xlu0 2
        %2314 = vperm.xlu0 %2313, %v548
        %v2315 = vpop.permute.xlu0 %2314
        %2317 = vset.pattern.permute.xlu0 2
        %2318 = vperm.xlu0 %2317, %v549
        %v2319 = vpop.permute.xlu0 %2318
        %2321 = vset.pattern.permute.xlu0 2
        %2322 = vperm.xlu0 %2321, %v550
        %v2323 = vpop.permute.xlu0 %2322
        %2325 = vset.pattern.permute.xlu0 2
        %2326 = vperm.xlu0 %2325, %v551
        %v2327 = vpop.permute.xlu0 %2326
        %2329 = vset.pattern.permute.xlu0 2
        %2330 = vperm.xlu0 %2329, %v552
        %v2331 = vpop.permute.xlu0 %2330
        %2333 = vset.pattern.permute.xlu0 2
        %2334 = vperm.xlu0 %2333, %v553
        %v2335 = vpop.permute.xlu0 %2334
        %2337 = vset.pattern.permute.xlu0 2
        %2338 = vperm.xlu0 %2337, %v554
        %v2339 = vpop.permute.xlu0 %2338
        %2341 = vset.pattern.permute.xlu0 2
        %2342 = vperm.xlu0 %2341, %v555
        %v2343 = vpop.permute.xlu0 %2342
        %2345 = vset.pattern.permute.xlu0 2
        %2346 = vperm.xlu0 %2345, %v556
        %v2347 = vpop.permute.xlu0 %2346
        %2349 = vset.pattern.permute.xlu0 2
        %2350 = vperm.xlu0 %2349, %v557
        %v2351 = vpop.permute.xlu0 %2350
        %2353 = vset.pattern.permute.xlu0 2
        %2354 = vperm.xlu0 %2353, %v558
        %v2355 = vpop.permute.xlu0 %2354
        %v2357 = vlaneseq
        %v2358 = vshrl.u32 %v2357, 7
        %v2359 = vsub.s32 0, %v2358
        %v2360 = vrot.slane %v2292, %v2359
        %v2361 = vadd.f32 %v2295, %v2360
        %v2362 = vadd.f32 %v2299, %v2360
        %v2363 = vadd.f32 %v2303, %v2360
        %v2364 = vadd.f32 %v2307, %v2360
        %v2365 = vadd.f32 %v2311, %v2360
        %v2366 = vadd.f32 %v2315, %v2360
        %v2367 = vadd.f32 %v2319, %v2360
        %v2368 = vadd.f32 %v2323, %v2360
        %v2369 = vadd.f32 %v2327, %v2360
        %v2370 = vadd.f32 %v2331, %v2360
        %v2371 = vadd.f32 %v2335, %v2360
        %v2372 = vadd.f32 %v2339, %v2360
        %v2373 = vadd.f32 %v2343, %v2360
        %v2374 = vadd.f32 %v2347, %v2360
        %v2375 = vadd.f32 %v2351, %v2360
        %v2376 = vadd.f32 %v2355, %v2360
        %vm2377 = vcmp.gt.f32.partialorder %v2361, 0.0
        %vm2378 = vcmp.gt.f32.partialorder %v2362, 0.0
        %vm2379 = vcmp.gt.f32.partialorder %v2363, 0.0
        %vm2380 = vcmp.gt.f32.partialorder %v2364, 0.0
        %vm2381 = vcmp.gt.f32.partialorder %v2365, 0.0
        %vm2382 = vcmp.gt.f32.partialorder %v2366, 0.0
        %vm2383 = vcmp.gt.f32.partialorder %v2367, 0.0
        %vm2384 = vcmp.gt.f32.partialorder %v2368, 0.0
        %vm2385 = vcmp.gt.f32.partialorder %v2369, 0.0
        %vm2386 = vcmp.gt.f32.partialorder %v2370, 0.0
        %vm2387 = vcmp.gt.f32.partialorder %v2371, 0.0
        %vm2388 = vcmp.gt.f32.partialorder %v2372, 0.0
        %vm2389 = vcmp.gt.f32.partialorder %v2373, 0.0
        %vm2390 = vcmp.gt.f32.partialorder %v2374, 0.0
        %vm2391 = vcmp.gt.f32.partialorder %v2375, 0.0
        %vm2392 = vcmp.gt.f32.partialorder %v2376, 0.0
        %v2393 = vmul.f32 %v2361, 0.2
        %v2394 = vmul.f32 %v2362, 0.2
        %v2395 = vmul.f32 %v2363, 0.2
        %v2396 = vmul.f32 %v2364, 0.2
        %v2397 = vmul.f32 %v2365, 0.2
        %v2398 = vmul.f32 %v2366, 0.2
        %v2399 = vmul.f32 %v2367, 0.2
        %v2400 = vmul.f32 %v2368, 0.2
        %v2401 = vmul.f32 %v2369, 0.2
        %v2402 = vmul.f32 %v2370, 0.2
        %v2403 = vmul.f32 %v2371, 0.2
        %v2404 = vmul.f32 %v2372, 0.2
        %v2405 = vmul.f32 %v2373, 0.2
        %v2406 = vmul.f32 %v2374, 0.2
        %v2407 = vmul.f32 %v2375, 0.2
        %v2408 = vmul.f32 %v2376, 0.2
        %v2409 = vsel %vm2377, %v2361, %v2393
        %v2410 = vsel %vm2378, %v2362, %v2394
        %v2411 = vsel %vm2379, %v2363, %v2395
        %v2412 = vsel %vm2380, %v2364, %v2396
        %v2413 = vsel %vm2381, %v2365, %v2397
        %v2414 = vsel %vm2382, %v2366, %v2398
        %v2415 = vsel %vm2383, %v2367, %v2399
        %v2416 = vsel %vm2384, %v2368, %v2400
        %v2417 = vsel %vm2385, %v2369, %v2401
        %v2418 = vsel %vm2386, %v2370, %v2402
        %v2419 = vsel %vm2387, %v2371, %v2403
        %v2420 = vsel %vm2388, %v2372, %v2404
        %v2421 = vsel %vm2389, %v2373, %v2405
        %v2422 = vsel %vm2390, %v2374, %v2406
        %v2423 = vsel %vm2391, %v2375, %v2407
        %v2424 = vsel %vm2392, %v2376, %v2408
        %v2425 = vsel %vm809, %v2409, -1e+30
        %v2426 = vsel %vm810, %v2410, -1e+30
        %v2427 = vsel %vm811, %v2411, -1e+30
        %v2428 = vsel %vm812, %v2412, -1e+30
        %v2429 = vsel %vm813, %v2413, -1e+30
        %v2430 = vsel %vm814, %v2414, -1e+30
        %v2431 = vsel %vm815, %v2415, -1e+30
        %v2432 = vsel %vm816, %v2416, -1e+30
        %v2433 = vsel %vm817, %v2417, -1e+30
        %v2434 = vsel %vm818, %v2418, -1e+30
        %v2435 = vsel %vm819, %v2419, -1e+30
        %v2436 = vsel %vm820, %v2420, -1e+30
        %v2437 = vsel %vm821, %v2421, -1e+30
        %v2438 = vsel %vm822, %v2422, -1e+30
        %v2439 = vsel %vm823, %v2423, -1e+30
        %v2440 = vsel %vm824, %v2424, -1e+30
        %s2441 = scalar_lea.vmem [#allocation2], 256
        %v2442 = vld [vmem:[%s2441] sm:$0xff]
        %v2443 = vld [vmem:[%s2441 + $0x8] sm:$0xff]
        %v2444 = vld [vmem:[%s2441 + $0x10] sm:$0xff]
        %v2445 = vld [vmem:[%s2441 + $0x18] sm:$0xff]
        %v2446 = vld [vmem:[%s2441 + $0x20] sm:$0xff]
        %v2447 = vld [vmem:[%s2441 + $0x28] sm:$0xff]
        %v2448 = vld [vmem:[%s2441 + $0x30] sm:$0xff]
        %v2449 = vld [vmem:[%s2441 + $0x38] sm:$0xff]
        %v2450 = vld [vmem:[%s2441 + $0x40] sm:$0xff]
        %v2451 = vld [vmem:[%s2441 + $0x48] sm:$0xff]
        %v2452 = vld [vmem:[%s2441 + $0x50] sm:$0xff]
        %v2453 = vld [vmem:[%s2441 + $0x58] sm:$0xff]
        %v2454 = vld [vmem:[%s2441 + $0x60] sm:$0xff]
        %v2455 = vld [vmem:[%s2441 + $0x68] sm:$0xff]
        %v2456 = vld [vmem:[%s2441 + $0x70] sm:$0xff]
        %v2457 = vld [vmem:[%s2441 + $0x78] sm:$0xff]
        %2458 = vmax.xlane.f32.xlu0 %v2425
        %v2459 = vpop.xlane.xlu0 %2458
        %2460 = vmax.xlane.f32.xlu0 %v2426
        %v2461 = vpop.xlane.xlu0 %2460
        %2462 = vmax.xlane.f32.xlu0 %v2427
        %v2463 = vpop.xlane.xlu0 %2462
        %2464 = vmax.xlane.f32.xlu0 %v2428
        %v2465 = vpop.xlane.xlu0 %2464
        %2466 = vmax.xlane.f32.xlu0 %v2429
        %v2467 = vpop.xlane.xlu0 %2466
        %2468 = vmax.xlane.f32.xlu0 %v2430
        %v2469 = vpop.xlane.xlu0 %2468
        %2470 = vmax.xlane.f32.xlu0 %v2431
        %v2471 = vpop.xlane.xlu0 %2470
        %2472 = vmax.xlane.f32.xlu0 %v2432
        %v2473 = vpop.xlane.xlu0 %2472
        %2474 = vmax.xlane.f32.xlu0 %v2433
        %v2475 = vpop.xlane.xlu0 %2474
        %2476 = vmax.xlane.f32.xlu0 %v2434
        %v2477 = vpop.xlane.xlu0 %2476
        %2478 = vmax.xlane.f32.xlu0 %v2435
        %v2479 = vpop.xlane.xlu0 %2478
        %2480 = vmax.xlane.f32.xlu0 %v2436
        %v2481 = vpop.xlane.xlu0 %2480
        %2482 = vmax.xlane.f32.xlu0 %v2437
        %v2483 = vpop.xlane.xlu0 %2482
        %2484 = vmax.xlane.f32.xlu0 %v2438
        %v2485 = vpop.xlane.xlu0 %2484
        %2486 = vmax.xlane.f32.xlu0 %v2439
        %v2487 = vpop.xlane.xlu0 %2486
        %2488 = vmax.xlane.f32.xlu0 %v2440
        %v2489 = vpop.xlane.xlu0 %2488
        %v2490 = vmax.f32 %v2442, %v2459
        %v2491 = vmax.f32 %v2443, %v2461
        %v2492 = vmax.f32 %v2444, %v2463
        %v2493 = vmax.f32 %v2445, %v2465
        %v2494 = vmax.f32 %v2446, %v2467
        %v2495 = vmax.f32 %v2447, %v2469
        %v2496 = vmax.f32 %v2448, %v2471
        %v2497 = vmax.f32 %v2449, %v2473
        %v2498 = vmax.f32 %v2450, %v2475
        %v2499 = vmax.f32 %v2451, %v2477
        %v2500 = vmax.f32 %v2452, %v2479
        %v2501 = vmax.f32 %v2453, %v2481
        %v2502 = vmax.f32 %v2454, %v2483
        %v2503 = vmax.f32 %v2455, %v2485
        %v2504 = vmax.f32 %v2456, %v2487
        %v2505 = vmax.f32 %v2457, %v2489
        %v2506 = vsub.f32 %v2442, %v2490
        %v2507 = vsub.f32 %v2443, %v2491
        %v2508 = vsub.f32 %v2444, %v2492
        %v2509 = vsub.f32 %v2445, %v2493
        %v2510 = vsub.f32 %v2446, %v2494
        %v2511 = vsub.f32 %v2447, %v2495
        %v2512 = vsub.f32 %v2448, %v2496
        %v2513 = vsub.f32 %v2449, %v2497
        %v2514 = vsub.f32 %v2450, %v2498
        %v2515 = vsub.f32 %v2451, %v2499
        %v2516 = vsub.f32 %v2452, %v2500
        %v2517 = vsub.f32 %v2453, %v2501
        %v2518 = vsub.f32 %v2454, %v2502
        %v2519 = vsub.f32 %v2455, %v2503
        %v2520 = vsub.f32 %v2456, %v2504
        %v2521 = vsub.f32 %v2457, %v2505
        %v2522 = vmul.f32 %v2506, 1.442695
        %v2523 = vpow.pop %v2522
        %v2524 = vmul.f32 %v2507, 1.442695
        %v2525 = vpow.pop %v2524
        %v2526 = vmul.f32 %v2508, 1.442695
        %v2527 = vpow.pop %v2526
        %v2528 = vmul.f32 %v2509, 1.442695
        %v2529 = vpow.pop %v2528
        %v2530 = vmul.f32 %v2510, 1.442695
        %v2531 = vpow.pop %v2530
        %v2532 = vmul.f32 %v2511, 1.442695
        %v2533 = vpow.pop %v2532
        %v2534 = vmul.f32 %v2512, 1.442695
        %v2535 = vpow.pop %v2534
        %v2536 = vmul.f32 %v2513, 1.442695
        %v2537 = vpow.pop %v2536
        %v2538 = vmul.f32 %v2514, 1.442695
        %v2539 = vpow.pop %v2538
        %v2540 = vmul.f32 %v2515, 1.442695
        %v2541 = vpow.pop %v2540
        %v2542 = vmul.f32 %v2516, 1.442695
        %v2543 = vpow.pop %v2542
        %v2544 = vmul.f32 %v2517, 1.442695
        %v2545 = vpow.pop %v2544
        %v2546 = vmul.f32 %v2518, 1.442695
        %v2547 = vpow.pop %v2546
        %v2548 = vmul.f32 %v2519, 1.442695
        %v2549 = vpow.pop %v2548
        %v2550 = vmul.f32 %v2520, 1.442695
        %v2551 = vpow.pop %v2550
        %v2552 = vmul.f32 %v2521, 1.442695
        %v2553 = vpow.pop %v2552
        %2555 = vset.pattern.permute.xlu0 0
        %2556 = vperm.xlu0 %2555, %v2490
        %v2557 = vpop.permute.xlu0 %2556
        %2560 = vset.pattern.permute.xlu0 0
        %2561 = vperm.xlu0 %2560, %v2491
        %v2562 = vpop.permute.xlu0 %2561
        %2565 = vset.pattern.permute.xlu0 0
        %2566 = vperm.xlu0 %2565, %v2492
        %v2567 = vpop.permute.xlu0 %2566
        %2570 = vset.pattern.permute.xlu0 0
        %2571 = vperm.xlu0 %2570, %v2493
        %v2572 = vpop.permute.xlu0 %2571
        %2575 = vset.pattern.permute.xlu0 0
        %2576 = vperm.xlu0 %2575, %v2494
        %v2577 = vpop.permute.xlu0 %2576
        %2580 = vset.pattern.permute.xlu0 0
        %2581 = vperm.xlu0 %2580, %v2495
        %v2582 = vpop.permute.xlu0 %2581
        %2585 = vset.pattern.permute.xlu0 0
        %2586 = vperm.xlu0 %2585, %v2496
        %v2587 = vpop.permute.xlu0 %2586
        %2590 = vset.pattern.permute.xlu0 0
        %2591 = vperm.xlu0 %2590, %v2497
        %v2592 = vpop.permute.xlu0 %2591
        %2595 = vset.pattern.permute.xlu0 0
        %2596 = vperm.xlu0 %2595, %v2498
        %v2597 = vpop.permute.xlu0 %2596
        %2600 = vset.pattern.permute.xlu0 0
        %2601 = vperm.xlu0 %2600, %v2499
        %v2602 = vpop.permute.xlu0 %2601
        %2605 = vset.pattern.permute.xlu0 0
        %2606 = vperm.xlu0 %2605, %v2500
        %v2607 = vpop.permute.xlu0 %2606
        %2610 = vset.pattern.permute.xlu0 0
        %2611 = vperm.xlu0 %2610, %v2501
        %v2612 = vpop.permute.xlu0 %2611
        %2615 = vset.pattern.permute.xlu0 0
        %2616 = vperm.xlu0 %2615, %v2502
        %v2617 = vpop.permute.xlu0 %2616
        %2620 = vset.pattern.permute.xlu0 0
        %2621 = vperm.xlu0 %2620, %v2503
        %v2622 = vpop.permute.xlu0 %2621
        %2625 = vset.pattern.permute.xlu0 0
        %2626 = vperm.xlu0 %2625, %v2504
        %v2627 = vpop.permute.xlu0 %2626
        %2630 = vset.pattern.permute.xlu0 0
        %2631 = vperm.xlu0 %2630, %v2505
        %v2632 = vpop.permute.xlu0 %2631
        %v2634 = vsub.f32 %v2425, %v2557
        %v2635 = vsub.f32 %v2426, %v2562
        %v2636 = vsub.f32 %v2427, %v2567
        %v2637 = vsub.f32 %v2428, %v2572
        %v2638 = vsub.f32 %v2429, %v2577
        %v2639 = vsub.f32 %v2430, %v2582
        %v2640 = vsub.f32 %v2431, %v2587
        %v2641 = vsub.f32 %v2432, %v2592
        %v2642 = vsub.f32 %v2433, %v2597
        %v2643 = vsub.f32 %v2434, %v2602
        %v2644 = vsub.f32 %v2435, %v2607
        %v2645 = vsub.f32 %v2436, %v2612
        %v2646 = vsub.f32 %v2437, %v2617
        %v2647 = vsub.f32 %v2438, %v2622
        %v2648 = vsub.f32 %v2439, %v2627
        %v2649 = vsub.f32 %v2440, %v2632
        %v2650 = vpack.c.bf16 %v2635, %v2634
        %v2651 = vpack.c.bf16 %v2637, %v2636
        %v2652 = vpack.c.bf16 %v2639, %v2638
        %v2653 = vpack.c.bf16 %v2641, %v2640
        %v2654 = vpack.c.bf16 %v2643, %v2642
        %v2655 = vpack.c.bf16 %v2645, %v2644
        %v2656 = vpack.c.bf16 %v2647, %v2646
        %v2657 = vpack.c.bf16 %v2649, %v2648
        %v2659 = vmul.bf16 %v2650, 1069105081
        %v2660 = vpow.bf16.pop %v2659
        %v2662 = vmul.bf16 %v2651, 1069105081
        %v2663 = vpow.bf16.pop %v2662
        %v2665 = vmul.bf16 %v2652, 1069105081
        %v2666 = vpow.bf16.pop %v2665
        %v2668 = vmul.bf16 %v2653, 1069105081
        %v2669 = vpow.bf16.pop %v2668
        %v2671 = vmul.bf16 %v2654, 1069105081
        %v2672 = vpow.bf16.pop %v2671
        %v2674 = vmul.bf16 %v2655, 1069105081
        %v2675 = vpow.bf16.pop %v2674
        %v2677 = vmul.bf16 %v2656, 1069105081
        %v2678 = vpow.bf16.pop %v2677
        %v2680 = vmul.bf16 %v2657, 1069105081
        %v2681 = vpow.bf16.pop %v2680
        %s2682 = scalar_lea.vmem [#allocation3], 256
        %v2683 = vld [vmem:[%s2682] sm:$0xff]
        %v2684 = vld [vmem:[%s2682 + $0x8] sm:$0xff]
        %v2685 = vld [vmem:[%s2682 + $0x10] sm:$0xff]
        %v2686 = vld [vmem:[%s2682 + $0x18] sm:$0xff]
        %v2687 = vld [vmem:[%s2682 + $0x20] sm:$0xff]
        %v2688 = vld [vmem:[%s2682 + $0x28] sm:$0xff]
        %v2689 = vld [vmem:[%s2682 + $0x30] sm:$0xff]
        %v2690 = vld [vmem:[%s2682 + $0x38] sm:$0xff]
        %v2691 = vld [vmem:[%s2682 + $0x40] sm:$0xff]
        %v2692 = vld [vmem:[%s2682 + $0x48] sm:$0xff]
        %v2693 = vld [vmem:[%s2682 + $0x50] sm:$0xff]
        %v2694 = vld [vmem:[%s2682 + $0x58] sm:$0xff]
        %v2695 = vld [vmem:[%s2682 + $0x60] sm:$0xff]
        %v2696 = vld [vmem:[%s2682 + $0x68] sm:$0xff]
        %v2697 = vld [vmem:[%s2682 + $0x70] sm:$0xff]
        %v2698 = vld [vmem:[%s2682 + $0x78] sm:$0xff]
        %v2699 = vmul.f32 %v2523, %v2683
        %v2700 = vmul.f32 %v2525, %v2684
        %v2701 = vmul.f32 %v2527, %v2685
        %v2702 = vmul.f32 %v2529, %v2686
        %v2703 = vmul.f32 %v2531, %v2687
        %v2704 = vmul.f32 %v2533, %v2688
        %v2705 = vmul.f32 %v2535, %v2689
        %v2706 = vmul.f32 %v2537, %v2690
        %v2707 = vmul.f32 %v2539, %v2691
        %v2708 = vmul.f32 %v2541, %v2692
        %v2709 = vmul.f32 %v2543, %v2693
        %v2710 = vmul.f32 %v2545, %v2694
        %v2711 = vmul.f32 %v2547, %v2695
        %v2712 = vmul.f32 %v2549, %v2696
        %v2713 = vmul.f32 %v2551, %v2697
        %v2714 = vmul.f32 %v2553, %v2698
        %v2715 = vunpack.c.l.bf16 %v2660
        %v2716 = vunpack.c.h.bf16 %v2660
        %v2717 = vunpack.c.l.bf16 %v2663
        %v2718 = vunpack.c.h.bf16 %v2663
        %v2719 = vunpack.c.l.bf16 %v2666
        %v2720 = vunpack.c.h.bf16 %v2666
        %v2721 = vunpack.c.l.bf16 %v2669
        %v2722 = vunpack.c.h.bf16 %v2669
        %v2723 = vunpack.c.l.bf16 %v2672
        %v2724 = vunpack.c.h.bf16 %v2672
        %v2725 = vunpack.c.l.bf16 %v2675
        %v2726 = vunpack.c.h.bf16 %v2675
        %v2727 = vunpack.c.l.bf16 %v2678
        %v2728 = vunpack.c.h.bf16 %v2678
        %v2729 = vunpack.c.l.bf16 %v2681
        %v2730 = vunpack.c.h.bf16 %v2681
        %2731 = vadd.xlane.f32.xlu0 %v2715
        %v2732 = vpop.xlane.xlu0 %2731
        %2733 = vadd.xlane.f32.xlu0 %v2716
        %v2734 = vpop.xlane.xlu0 %2733
        %2735 = vadd.xlane.f32.xlu0 %v2717
        %v2736 = vpop.xlane.xlu0 %2735
        %2737 = vadd.xlane.f32.xlu0 %v2718
        %v2738 = vpop.xlane.xlu0 %2737
        %2739 = vadd.xlane.f32.xlu0 %v2719
        %v2740 = vpop.xlane.xlu0 %2739
        %2741 = vadd.xlane.f32.xlu0 %v2720
        %v2742 = vpop.xlane.xlu0 %2741
        %2743 = vadd.xlane.f32.xlu0 %v2721
        %v2744 = vpop.xlane.xlu0 %2743
        %2745 = vadd.xlane.f32.xlu0 %v2722
        %v2746 = vpop.xlane.xlu0 %2745
        %2747 = vadd.xlane.f32.xlu0 %v2723
        %v2748 = vpop.xlane.xlu0 %2747
        %2749 = vadd.xlane.f32.xlu0 %v2724
        %v2750 = vpop.xlane.xlu0 %2749
        %2751 = vadd.xlane.f32.xlu0 %v2725
        %v2752 = vpop.xlane.xlu0 %2751
        %2753 = vadd.xlane.f32.xlu0 %v2726
        %v2754 = vpop.xlane.xlu0 %2753
        %2755 = vadd.xlane.f32.xlu0 %v2727
        %v2756 = vpop.xlane.xlu0 %2755
        %2757 = vadd.xlane.f32.xlu0 %v2728
        %v2758 = vpop.xlane.xlu0 %2757
        %2759 = vadd.xlane.f32.xlu0 %v2729
        %v2760 = vpop.xlane.xlu0 %2759
        %2761 = vadd.xlane.f32.xlu0 %v2730
        %v2762 = vpop.xlane.xlu0 %2761
        %v2763 = vadd.f32 %v2699, %v2732
        %v2764 = vadd.f32 %v2700, %v2734
        %v2765 = vadd.f32 %v2701, %v2736
        %v2766 = vadd.f32 %v2702, %v2738
        %v2767 = vadd.f32 %v2703, %v2740
        %v2768 = vadd.f32 %v2704, %v2742
        %v2769 = vadd.f32 %v2705, %v2744
        %v2770 = vadd.f32 %v2706, %v2746
        %v2771 = vadd.f32 %v2707, %v2748
        %v2772 = vadd.f32 %v2708, %v2750
        %v2773 = vadd.f32 %v2709, %v2752
        %v2774 = vadd.f32 %v2710, %v2754
        %v2775 = vadd.f32 %v2711, %v2756
        %v2776 = vadd.f32 %v2712, %v2758
        %v2777 = vadd.f32 %v2713, %v2760
        %v2778 = vadd.f32 %v2714, %v2762
        %2779 = vst.msk [vmem:[%s2682] sm:$0xff] %vm1177, %v2763
        %2780 = vst.msk [vmem:[%s2682 + $0x8] sm:$0xff] %vm1177, %v2764
        %2781 = vst.msk [vmem:[%s2682 + $0x10] sm:$0xff] %vm1177, %v2765
        %2782 = vst.msk [vmem:[%s2682 + $0x18] sm:$0xff] %vm1177, %v2766
        %2783 = vst.msk [vmem:[%s2682 + $0x20] sm:$0xff] %vm1177, %v2767
        %2784 = vst.msk [vmem:[%s2682 + $0x28] sm:$0xff] %vm1177, %v2768
        %2785 = vst.msk [vmem:[%s2682 + $0x30] sm:$0xff] %vm1177, %v2769
        %2786 = vst.msk [vmem:[%s2682 + $0x38] sm:$0xff] %vm1177, %v2770
        %2787 = vst.msk [vmem:[%s2682 + $0x40] sm:$0xff] %vm1177, %v2771
        %2788 = vst.msk [vmem:[%s2682 + $0x48] sm:$0xff] %vm1177, %v2772
        %2789 = vst.msk [vmem:[%s2682 + $0x50] sm:$0xff] %vm1177, %v2773
        %2790 = vst.msk [vmem:[%s2682 + $0x58] sm:$0xff] %vm1177, %v2774
        %2791 = vst.msk [vmem:[%s2682 + $0x60] sm:$0xff] %vm1177, %v2775
        %2792 = vst.msk [vmem:[%s2682 + $0x68] sm:$0xff] %vm1177, %v2776
        %2793 = vst.msk [vmem:[%s2682 + $0x70] sm:$0xff] %vm1177, %v2777
        %2794 = vst.msk [vmem:[%s2682 + $0x78] sm:$0xff] %vm1177, %v2778
        %2795 = vst.msk [vmem:[%s2441] sm:$0xff] %vm1177, %v2490
        %2796 = vst.msk [vmem:[%s2441 + $0x8] sm:$0xff] %vm1177, %v2491
        %2797 = vst.msk [vmem:[%s2441 + $0x10] sm:$0xff] %vm1177, %v2492
        %2798 = vst.msk [vmem:[%s2441 + $0x18] sm:$0xff] %vm1177, %v2493
        %2799 = vst.msk [vmem:[%s2441 + $0x20] sm:$0xff] %vm1177, %v2494
        %2800 = vst.msk [vmem:[%s2441 + $0x28] sm:$0xff] %vm1177, %v2495
        %2801 = vst.msk [vmem:[%s2441 + $0x30] sm:$0xff] %vm1177, %v2496
        %2802 = vst.msk [vmem:[%s2441 + $0x38] sm:$0xff] %vm1177, %v2497
        %2803 = vst.msk [vmem:[%s2441 + $0x40] sm:$0xff] %vm1177, %v2498
        %2804 = vst.msk [vmem:[%s2441 + $0x48] sm:$0xff] %vm1177, %v2499
        %2805 = vst.msk [vmem:[%s2441 + $0x50] sm:$0xff] %vm1177, %v2500
        %2806 = vst.msk [vmem:[%s2441 + $0x58] sm:$0xff] %vm1177, %v2501
        %2807 = vst.msk [vmem:[%s2441 + $0x60] sm:$0xff] %vm1177, %v2502
        %2808 = vst.msk [vmem:[%s2441 + $0x68] sm:$0xff] %vm1177, %v2503
        %2809 = vst.msk [vmem:[%s2441 + $0x70] sm:$0xff] %vm1177, %v2504
        %2810 = vst.msk [vmem:[%s2441 + $0x78] sm:$0xff] %vm1177, %v2505
        %v2811 = vld [vmem:[%s3 + $0x2] sm:$0x1]
        %2813 = vset.pattern.permute.xlu0 0
        %2814 = vperm.xlu0 %2813, %v2523
        %v2815 = vpop.permute.xlu0 %2814
        %2818 = vset.pattern.permute.xlu0 0
        %2819 = vperm.xlu0 %2818, %v2525
        %v2820 = vpop.permute.xlu0 %2819
        %2823 = vset.pattern.permute.xlu0 0
        %2824 = vperm.xlu0 %2823, %v2527
        %v2825 = vpop.permute.xlu0 %2824
        %2828 = vset.pattern.permute.xlu0 0
        %2829 = vperm.xlu0 %2828, %v2529
        %v2830 = vpop.permute.xlu0 %2829
        %2833 = vset.pattern.permute.xlu0 0
        %2834 = vperm.xlu0 %2833, %v2531
        %v2835 = vpop.permute.xlu0 %2834
        %2838 = vset.pattern.permute.xlu0 0
        %2839 = vperm.xlu0 %2838, %v2533
        %v2840 = vpop.permute.xlu0 %2839
        %2843 = vset.pattern.permute.xlu0 0
        %2844 = vperm.xlu0 %2843, %v2535
        %v2845 = vpop.permute.xlu0 %2844
        %2848 = vset.pattern.permute.xlu0 0
        %2849 = vperm.xlu0 %2848, %v2537
        %v2850 = vpop.permute.xlu0 %2849
        %2853 = vset.pattern.permute.xlu0 0
        %2854 = vperm.xlu0 %2853, %v2539
        %v2855 = vpop.permute.xlu0 %2854
        %2858 = vset.pattern.permute.xlu0 0
        %2859 = vperm.xlu0 %2858, %v2541
        %v2860 = vpop.permute.xlu0 %2859
        %2863 = vset.pattern.permute.xlu0 0
        %2864 = vperm.xlu0 %2863, %v2543
        %v2865 = vpop.permute.xlu0 %2864
        %2868 = vset.pattern.permute.xlu0 0
        %2869 = vperm.xlu0 %2868, %v2545
        %v2870 = vpop.permute.xlu0 %2869
        %2873 = vset.pattern.permute.xlu0 0
        %2874 = vperm.xlu0 %2873, %v2547
        %v2875 = vpop.permute.xlu0 %2874
        %2878 = vset.pattern.permute.xlu0 0
        %2879 = vperm.xlu0 %2878, %v2549
        %v2880 = vpop.permute.xlu0 %2879
        %2883 = vset.pattern.permute.xlu0 0
        %2884 = vperm.xlu0 %2883, %v2551
        %v2885 = vpop.permute.xlu0 %2884
        %2888 = vset.pattern.permute.xlu0 0
        %2889 = vperm.xlu0 %2888, %v2553
        %v2890 = vpop.permute.xlu0 %2889
        %v2892 = vlaneseq
        %v2893 = vshrl.u32 %v2892, 7
        %v2894 = vsub.s32 0, %v2893
        %v2895 = vrot.slane %v2811, %v2894
        %v2896 = vmul.f32 %v2815, %v2895
        %v2897 = vmul.f32 %v2820, %v2895
        %v2898 = vmul.f32 %v2825, %v2895
        %v2899 = vmul.f32 %v2830, %v2895
        %v2900 = vmul.f32 %v2835, %v2895
        %v2901 = vmul.f32 %v2840, %v2895
        %v2902 = vmul.f32 %v2845, %v2895
        %v2903 = vmul.f32 %v2850, %v2895
        %v2904 = vmul.f32 %v2855, %v2895
        %v2905 = vmul.f32 %v2860, %v2895
        %v2906 = vmul.f32 %v2865, %v2895
        %v2907 = vmul.f32 %v2870, %v2895
        %v2908 = vmul.f32 %v2875, %v2895
        %v2909 = vmul.f32 %v2880, %v2895
        %v2910 = vmul.f32 %v2885, %v2895
        %v2911 = vmul.f32 %v2890, %v2895
        %v2912 = vadd.f32 %v1967, %v2896
        %v2913 = vadd.f32 %v1968, %v2897
        %v2914 = vadd.f32 %v1969, %v2898
        %v2915 = vadd.f32 %v1970, %v2899
        %v2916 = vadd.f32 %v1971, %v2900
        %v2917 = vadd.f32 %v1972, %v2901
        %v2918 = vadd.f32 %v1973, %v2902
        %v2919 = vadd.f32 %v1974, %v2903
        %v2920 = vadd.f32 %v1975, %v2904
        %v2921 = vadd.f32 %v1976, %v2905
        %v2922 = vadd.f32 %v1977, %v2906
        %v2923 = vadd.f32 %v1978, %v2907
        %v2924 = vadd.f32 %v1979, %v2908
        %v2925 = vadd.f32 %v1980, %v2909
        %v2926 = vadd.f32 %v1981, %v2910
        %v2927 = vadd.f32 %v1982, %v2911
        %s2928 = sadd.s32 %s1327, 64
        %s2929 = smul.addr %s2928, 4
        %s2930 = scalar_lea.vmem %s2, %s2929
        %v2931 = vld [vmem:[%s2930] sm:$0xf]
        %v2932 = vld [vmem:[%s2930 + $0x4] sm:$0xf]
        %v2933 = vld [vmem:[%s2930 + $0x8] sm:$0xf]
        %v2934 = vld [vmem:[%s2930 + $0xc] sm:$0xf]
        %v2935 = vld [vmem:[%s2930 + $0x10] sm:$0xf]
        %v2936 = vld [vmem:[%s2930 + $0x14] sm:$0xf]
        %v2937 = vld [vmem:[%s2930 + $0x18] sm:$0xf]
        %v2938 = vld [vmem:[%s2930 + $0x1c] sm:$0xf]
        %v2939 = vld [vmem:[%s2930 + $0x20] sm:$0xf]
        %v2940 = vld [vmem:[%s2930 + $0x24] sm:$0xf]
        %v2941 = vld [vmem:[%s2930 + $0x28] sm:$0xf]
        %v2942 = vld [vmem:[%s2930 + $0x2c] sm:$0xf]
        %v2943 = vld [vmem:[%s2930 + $0x30] sm:$0xf]
        %v2944 = vld [vmem:[%s2930 + $0x34] sm:$0xf]
        %v2945 = vld [vmem:[%s2930 + $0x38] sm:$0xf]
        %v2946 = vld [vmem:[%s2930 + $0x3c] sm:$0xf]
        %v2963 = vunpack.c.l.b16 %v2931
        %v2964 = vunpack.c.l.b16 %v2932
        %v2965 = vunpack.c.l.b16 %v2933
        %v2966 = vunpack.c.l.b16 %v2934
        %v2967 = vunpack.c.l.b16 %v2935
        %v2968 = vunpack.c.l.b16 %v2936
        %v2969 = vunpack.c.l.b16 %v2937
        %v2970 = vunpack.c.l.b16 %v2938
        %v2971 = vunpack.c.l.b16 %v2939
        %v2972 = vunpack.c.l.b16 %v2940
        %v2973 = vunpack.c.l.b16 %v2941
        %v2974 = vunpack.c.l.b16 %v2942
        %v2975 = vunpack.c.l.b16 %v2943
        %v2976 = vunpack.c.l.b16 %v2944
        %v2977 = vunpack.c.l.b16 %v2945
        %v2978 = vunpack.c.l.b16 %v2946
        %v2979 = vpack.c.b16 %v2964, %v2963
        %v2980 = vpack.c.b16 %v2966, %v2965
        %v2981 = vpack.c.b16 %v2968, %v2967
        %v2982 = vpack.c.b16 %v2970, %v2969
        %v2983 = vpack.c.b16 %v2972, %v2971
        %v2984 = vpack.c.b16 %v2974, %v2973
        %v2985 = vpack.c.b16 %v2976, %v2975
        %v2986 = vpack.c.b16 %v2978, %v2977
        %2995 = vmatprep.subr.bf16.mxu0 0
        %2996 = vmatpush1.bf16.msra.mxu0 %v2979
        %2997 = vmatprep.subr.bf16.mxu0 0
        %2998 = vmatpush1.bf16.msra.mxu0 %v2980
        %2999 = vmatprep.subr.bf16.mxu0 0
        %3000 = vmatpush1.bf16.msra.mxu0 %v2981
        %3001 = vmatprep.subr.bf16.mxu0 0
        %3002 = vmatpush1.bf16.msra.mxu0 %v2982
        %3003 = vmatprep.subr.bf16.mxu0 0
        %3004 = vmatpush1.bf16.msra.mxu0 %v2983
        %3005 = vmatprep.subr.bf16.mxu0 0
        %3006 = vmatpush1.bf16.msra.mxu0 %v2984
        %3007 = vmatprep.subr.bf16.mxu0 0
        %3008 = vmatpush1.bf16.msra.mxu0 %v2985
        %3009 = vmatprep.subr.bf16.mxu0 0
        %3010 = vmatpush1.bf16.msra.mxu0 %v2986
        %3011 = vmatprep.subr.bf16.mxu0 0
        %3012 = vmatpush1.bf16.msra.mxu0 0
        %3013 = vmatprep.subr.bf16.mxu0 0
        %3014 = vmatpush1.bf16.msra.mxu0 0
        %3015 = vmatprep.subr.bf16.mxu0 0
        %3016 = vmatpush1.bf16.msra.mxu0 0
        %3017 = vmatprep.subr.bf16.mxu0 0
        %3018 = vmatpush1.bf16.msra.mxu0 0
        %3019 = vmatprep.subr.bf16.mxu0 0
        %3020 = vmatpush1.bf16.msra.mxu0 0
        %3021 = vmatprep.subr.bf16.mxu0 0
        %3022 = vmatpush1.bf16.msra.mxu0 0
        %3023 = vmatprep.subr.bf16.mxu0 0
        %3024 = vmatpush1.bf16.msra.mxu0 0
        %3025 = vmatprep.subr.bf16.mxu0 0
        %3026 = vmatpush1.bf16.msra.mxu0 0
        %3027 = vmatprep.mubr.bf16.mxu0 0
        %3028 = vmatmul.mubr.bf16.gmra.mrb[0].mxu0 %v2660
        %v3029 = vpop.f32.mrb[0].mxu0
        %v3030 = vadd.f32 0.0, %v3029
        %v3031 = vpop.f32.mrb[0].mxu0
        %v3032 = vpop.f32.mrb[0].mxu0
        %v3033 = vadd.f32 0.0, %v3032
        %v3034 = vpop.f32.mrb[0].mxu0
        %3035 = vmatprep.mubr.bf16.mxu0 0
        %3036 = vmatmul.mubr.bf16.gmra.mrb[0].mxu0 %v2663
        %v3037 = vpop.f32.mrb[0].mxu0
        %v3038 = vadd.f32 0.0, %v3037
        %v3039 = vpop.f32.mrb[0].mxu0
        %v3040 = vpop.f32.mrb[0].mxu0
        %v3041 = vadd.f32 0.0, %v3040
        %v3042 = vpop.f32.mrb[0].mxu0
        %3043 = vmatprep.mubr.bf16.mxu0 0
        %3044 = vmatmul.mubr.bf16.gmra.mrb[0].mxu0 %v2666
        %v3045 = vpop.f32.mrb[0].mxu0
        %v3046 = vadd.f32 0.0, %v3045
        %v3047 = vpop.f32.mrb[0].mxu0
        %v3048 = vpop.f32.mrb[0].mxu0
        %v3049 = vadd.f32 0.0, %v3048
        %v3050 = vpop.f32.mrb[0].mxu0
        %3051 = vmatprep.mubr.bf16.mxu0 0
        %3052 = vmatmul.mubr.bf16.gmra.mrb[0].mxu0 %v2669
        %v3053 = vpop.f32.mrb[0].mxu0
        %v3054 = vadd.f32 0.0, %v3053
        %v3055 = vpop.f32.mrb[0].mxu0
        %v3056 = vpop.f32.mrb[0].mxu0
        %v3057 = vadd.f32 0.0, %v3056
        %v3058 = vpop.f32.mrb[0].mxu0
        %3059 = vmatprep.mubr.bf16.mxu0 0
        %3060 = vmatmul.mubr.bf16.gmra.mrb[0].mxu0 %v2672
        %v3061 = vpop.f32.mrb[0].mxu0
        %v3062 = vadd.f32 0.0, %v3061
        %v3063 = vpop.f32.mrb[0].mxu0
        %v3064 = vpop.f32.mrb[0].mxu0
        %v3065 = vadd.f32 0.0, %v3064
        %v3066 = vpop.f32.mrb[0].mxu0
        %3067 = vmatprep.mubr.bf16.mxu0 0
        %3068 = vmatmul.mubr.bf16.gmra.mrb[0].mxu0 %v2675
        %v3069 = vpop.f32.mrb[0].mxu0
        %v3070 = vadd.f32 0.0, %v3069
        %v3071 = vpop.f32.mrb[0].mxu0
        %v3072 = vpop.f32.mrb[0].mxu0
        %v3073 = vadd.f32 0.0, %v3072
        %v3074 = vpop.f32.mrb[0].mxu0
        %3075 = vmatprep.mubr.bf16.mxu0 0
        %3076 = vmatmul.mubr.bf16.gmra.mrb[0].mxu0 %v2678
        %v3077 = vpop.f32.mrb[0].mxu0
        %v3078 = vadd.f32 0.0, %v3077
        %v3079 = vpop.f32.mrb[0].mxu0
        %v3080 = vpop.f32.mrb[0].mxu0
        %v3081 = vadd.f32 0.0, %v3080
        %v3082 = vpop.f32.mrb[0].mxu0
        %3083 = vmatprep.mubr.bf16.mxu0 0
        %3084 = vmatmul.mubr.bf16.gmra.mrb[0].mxu0 %v2681
        %v3085 = vpop.f32.mrb[0].mxu0
        %v3086 = vadd.f32 0.0, %v3085
        %v3087 = vpop.f32.mrb[0].mxu0
        %v3088 = vpop.f32.mrb[0].mxu0
        %v3089 = vadd.f32 0.0, %v3088
        %v3090 = vpop.f32.mrb[0].mxu0
        %3091 = vdwg.mxu0
        %v3092 = vadd.f32 %v2230, %v3030
        %v3093 = vadd.f32 %v2233, %v3033
        %v3094 = vadd.f32 %v2238, %v3038
        %v3095 = vadd.f32 %v2241, %v3041
        %v3096 = vadd.f32 %v2246, %v3046
        %v3097 = vadd.f32 %v2249, %v3049
        %v3098 = vadd.f32 %v2254, %v3054
        %v3099 = vadd.f32 %v2257, %v3057
        %v3100 = vadd.f32 %v2262, %v3062
        %v3101 = vadd.f32 %v2265, %v3065
        %v3102 = vadd.f32 %v2270, %v3070
        %v3103 = vadd.f32 %v2273, %v3073
        %v3104 = vadd.f32 %v2278, %v3078
        %v3105 = vadd.f32 %v2281, %v3081
        %v3106 = vadd.f32 %v2286, %v3086
        %v3107 = vadd.f32 %v2289, %v3089
        %v3108 = vld [vmem:[%s369 + $0x3] sm:$0x1]
        %3109 = vset.pattern.permute.xlu0 3
        %3110 = vperm.xlu0 %3109, %v543
        %v3111 = vpop.permute.xlu0 %3110
        %3113 = vset.pattern.permute.xlu0 3
        %3114 = vperm.xlu0 %3113, %v544
        %v3115 = vpop.permute.xlu0 %3114
        %3117 = vset.pattern.permute.xlu0 3
        %3118 = vperm.xlu0 %3117, %v545
        %v3119 = vpop.permute.xlu0 %3118
        %3121 = vset.pattern.permute.xlu0 3
        %3122 = vperm.xlu0 %3121, %v546
        %v3123 = vpop.permute.xlu0 %3122
        %3125 = vset.pattern.permute.xlu0 3
        %3126 = vperm.xlu0 %3125, %v547
        %v3127 = vpop.permute.xlu0 %3126
        %3129 = vset.pattern.permute.xlu0 3
        %3130 = vperm.xlu0 %3129, %v548
        %v3131 = vpop.permute.xlu0 %3130
        %3133 = vset.pattern.permute.xlu0 3
        %3134 = vperm.xlu0 %3133, %v549
        %v3135 = vpop.permute.xlu0 %3134
        %3137 = vset.pattern.permute.xlu0 3
        %3138 = vperm.xlu0 %3137, %v550
        %v3139 = vpop.permute.xlu0 %3138
        %3141 = vset.pattern.permute.xlu0 3
        %3142 = vperm.xlu0 %3141, %v551
        %v3143 = vpop.permute.xlu0 %3142
        %3145 = vset.pattern.permute.xlu0 3
        %3146 = vperm.xlu0 %3145, %v552
        %v3147 = vpop.permute.xlu0 %3146
        %3149 = vset.pattern.permute.xlu0 3
        %3150 = vperm.xlu0 %3149, %v553
        %v3151 = vpop.permute.xlu0 %3150
        %3153 = vset.pattern.permute.xlu0 3
        %3154 = vperm.xlu0 %3153, %v554
        %v3155 = vpop.permute.xlu0 %3154
        %3157 = vset.pattern.permute.xlu0 3
        %3158 = vperm.xlu0 %3157, %v555
        %v3159 = vpop.permute.xlu0 %3158
        %3161 = vset.pattern.permute.xlu0 3
        %3162 = vperm.xlu0 %3161, %v556
        %v3163 = vpop.permute.xlu0 %3162
        %3165 = vset.pattern.permute.xlu0 3
        %3166 = vperm.xlu0 %3165, %v557
        %v3167 = vpop.permute.xlu0 %3166
        %3169 = vset.pattern.permute.xlu0 3
        %3170 = vperm.xlu0 %3169, %v558
        %v3171 = vpop.permute.xlu0 %3170
        %v3173 = vlaneseq
        %v3174 = vshrl.u32 %v3173, 7
        %v3175 = vsub.s32 0, %v3174
        %v3176 = vrot.slane %v3108, %v3175
        %v3177 = vadd.f32 %v3111, %v3176
        %v3178 = vadd.f32 %v3115, %v3176
        %v3179 = vadd.f32 %v3119, %v3176
        %v3180 = vadd.f32 %v3123, %v3176
        %v3181 = vadd.f32 %v3127, %v3176
        %v3182 = vadd.f32 %v3131, %v3176
        %v3183 = vadd.f32 %v3135, %v3176
        %v3184 = vadd.f32 %v3139, %v3176
        %v3185 = vadd.f32 %v3143, %v3176
        %v3186 = vadd.f32 %v3147, %v3176
        %v3187 = vadd.f32 %v3151, %v3176
        %v3188 = vadd.f32 %v3155, %v3176
        %v3189 = vadd.f32 %v3159, %v3176
        %v3190 = vadd.f32 %v3163, %v3176
        %v3191 = vadd.f32 %v3167, %v3176
        %v3192 = vadd.f32 %v3171, %v3176
        %vm3193 = vcmp.gt.f32.partialorder %v3177, 0.0
        %vm3194 = vcmp.gt.f32.partialorder %v3178, 0.0
        %vm3195 = vcmp.gt.f32.partialorder %v3179, 0.0
        %vm3196 = vcmp.gt.f32.partialorder %v3180, 0.0
        %vm3197 = vcmp.gt.f32.partialorder %v3181, 0.0
        %vm3198 = vcmp.gt.f32.partialorder %v3182, 0.0
        %vm3199 = vcmp.gt.f32.partialorder %v3183, 0.0
        %vm3200 = vcmp.gt.f32.partialorder %v3184, 0.0
        %vm3201 = vcmp.gt.f32.partialorder %v3185, 0.0
        %vm3202 = vcmp.gt.f32.partialorder %v3186, 0.0
        %vm3203 = vcmp.gt.f32.partialorder %v3187, 0.0
        %vm3204 = vcmp.gt.f32.partialorder %v3188, 0.0
        %vm3205 = vcmp.gt.f32.partialorder %v3189, 0.0
        %vm3206 = vcmp.gt.f32.partialorder %v3190, 0.0
        %vm3207 = vcmp.gt.f32.partialorder %v3191, 0.0
        %vm3208 = vcmp.gt.f32.partialorder %v3192, 0.0
        %v3209 = vmul.f32 %v3177, 0.2
        %v3210 = vmul.f32 %v3178, 0.2
        %v3211 = vmul.f32 %v3179, 0.2
        %v3212 = vmul.f32 %v3180, 0.2
        %v3213 = vmul.f32 %v3181, 0.2
        %v3214 = vmul.f32 %v3182, 0.2
        %v3215 = vmul.f32 %v3183, 0.2
        %v3216 = vmul.f32 %v3184, 0.2
        %v3217 = vmul.f32 %v3185, 0.2
        %v3218 = vmul.f32 %v3186, 0.2
        %v3219 = vmul.f32 %v3187, 0.2
        %v3220 = vmul.f32 %v3188, 0.2
        %v3221 = vmul.f32 %v3189, 0.2
        %v3222 = vmul.f32 %v3190, 0.2
        %v3223 = vmul.f32 %v3191, 0.2
        %v3224 = vmul.f32 %v3192, 0.2
        %v3225 = vsel %vm3193, %v3177, %v3209
        %v3226 = vsel %vm3194, %v3178, %v3210
        %v3227 = vsel %vm3195, %v3179, %v3211
        %v3228 = vsel %vm3196, %v3180, %v3212
        %v3229 = vsel %vm3197, %v3181, %v3213
        %v3230 = vsel %vm3198, %v3182, %v3214
        %v3231 = vsel %vm3199, %v3183, %v3215
        %v3232 = vsel %vm3200, %v3184, %v3216
        %v3233 = vsel %vm3201, %v3185, %v3217
        %v3234 = vsel %vm3202, %v3186, %v3218
        %v3235 = vsel %vm3203, %v3187, %v3219
        %v3236 = vsel %vm3204, %v3188, %v3220
        %v3237 = vsel %vm3205, %v3189, %v3221
        %v3238 = vsel %vm3206, %v3190, %v3222
        %v3239 = vsel %vm3207, %v3191, %v3223
        %v3240 = vsel %vm3208, %v3192, %v3224
        %v3241 = vsel %vm809, %v3225, -1e+30
        %v3242 = vsel %vm810, %v3226, -1e+30
        %v3243 = vsel %vm811, %v3227, -1e+30
        %v3244 = vsel %vm812, %v3228, -1e+30
        %v3245 = vsel %vm813, %v3229, -1e+30
        %v3246 = vsel %vm814, %v3230, -1e+30
        %v3247 = vsel %vm815, %v3231, -1e+30
        %v3248 = vsel %vm816, %v3232, -1e+30
        %v3249 = vsel %vm817, %v3233, -1e+30
        %v3250 = vsel %vm818, %v3234, -1e+30
        %v3251 = vsel %vm819, %v3235, -1e+30
        %v3252 = vsel %vm820, %v3236, -1e+30
        %v3253 = vsel %vm821, %v3237, -1e+30
        %v3254 = vsel %vm822, %v3238, -1e+30
        %v3255 = vsel %vm823, %v3239, -1e+30
        %v3256 = vsel %vm824, %v3240, -1e+30
        %s3257 = scalar_lea.vmem [#allocation2], 384
        %v3258 = vld [vmem:[%s3257] sm:$0xff]
        %v3259 = vld [vmem:[%s3257 + $0x8] sm:$0xff]
        %v3260 = vld [vmem:[%s3257 + $0x10] sm:$0xff]
        %v3261 = vld [vmem:[%s3257 + $0x18] sm:$0xff]
        %v3262 = vld [vmem:[%s3257 + $0x20] sm:$0xff]
        %v3263 = vld [vmem:[%s3257 + $0x28] sm:$0xff]
        %v3264 = vld [vmem:[%s3257 + $0x30] sm:$0xff]
        %v3265 = vld [vmem:[%s3257 + $0x38] sm:$0xff]
        %v3266 = vld [vmem:[%s3257 + $0x40] sm:$0xff]
        %v3267 = vld [vmem:[%s3257 + $0x48] sm:$0xff]
        %v3268 = vld [vmem:[%s3257 + $0x50] sm:$0xff]
        %v3269 = vld [vmem:[%s3257 + $0x58] sm:$0xff]
        %v3270 = vld [vmem:[%s3257 + $0x60] sm:$0xff]
        %v3271 = vld [vmem:[%s3257 + $0x68] sm:$0xff]
        %v3272 = vld [vmem:[%s3257 + $0x70] sm:$0xff]
        %v3273 = vld [vmem:[%s3257 + $0x78] sm:$0xff]
        %3274 = vmax.xlane.f32.xlu0 %v3241
        %v3275 = vpop.xlane.xlu0 %3274
        %3276 = vmax.xlane.f32.xlu0 %v3242
        %v3277 = vpop.xlane.xlu0 %3276
        %3278 = vmax.xlane.f32.xlu0 %v3243
        %v3279 = vpop.xlane.xlu0 %3278
        %3280 = vmax.xlane.f32.xlu0 %v3244
        %v3281 = vpop.xlane.xlu0 %3280
        %3282 = vmax.xlane.f32.xlu0 %v3245
        %v3283 = vpop.xlane.xlu0 %3282
        %3284 = vmax.xlane.f32.xlu0 %v3246
        %v3285 = vpop.xlane.xlu0 %3284
        %3286 = vmax.xlane.f32.xlu0 %v3247
        %v3287 = vpop.xlane.xlu0 %3286
        %3288 = vmax.xlane.f32.xlu0 %v3248
        %v3289 = vpop.xlane.xlu0 %3288
        %3290 = vmax.xlane.f32.xlu0 %v3249
        %v3291 = vpop.xlane.xlu0 %3290
        %3292 = vmax.xlane.f32.xlu0 %v3250
        %v3293 = vpop.xlane.xlu0 %3292
        %3294 = vmax.xlane.f32.xlu0 %v3251
        %v3295 = vpop.xlane.xlu0 %3294
        %3296 = vmax.xlane.f32.xlu0 %v3252
        %v3297 = vpop.xlane.xlu0 %3296
        %3298 = vmax.xlane.f32.xlu0 %v3253
        %v3299 = vpop.xlane.xlu0 %3298
        %3300 = vmax.xlane.f32.xlu0 %v3254
        %v3301 = vpop.xlane.xlu0 %3300
        %3302 = vmax.xlane.f32.xlu0 %v3255
        %v3303 = vpop.xlane.xlu0 %3302
        %3304 = vmax.xlane.f32.xlu0 %v3256
        %v3305 = vpop.xlane.xlu0 %3304
        %v3306 = vmax.f32 %v3258, %v3275
        %v3307 = vmax.f32 %v3259, %v3277
        %v3308 = vmax.f32 %v3260, %v3279
        %v3309 = vmax.f32 %v3261, %v3281
        %v3310 = vmax.f32 %v3262, %v3283
        %v3311 = vmax.f32 %v3263, %v3285
        %v3312 = vmax.f32 %v3264, %v3287
        %v3313 = vmax.f32 %v3265, %v3289
        %v3314 = vmax.f32 %v3266, %v3291
        %v3315 = vmax.f32 %v3267, %v3293
        %v3316 = vmax.f32 %v3268, %v3295
        %v3317 = vmax.f32 %v3269, %v3297
        %v3318 = vmax.f32 %v3270, %v3299
        %v3319 = vmax.f32 %v3271, %v3301
        %v3320 = vmax.f32 %v3272, %v3303
        %v3321 = vmax.f32 %v3273, %v3305
        %v3322 = vsub.f32 %v3258, %v3306
        %v3323 = vsub.f32 %v3259, %v3307
        %v3324 = vsub.f32 %v3260, %v3308
        %v3325 = vsub.f32 %v3261, %v3309
        %v3326 = vsub.f32 %v3262, %v3310
        %v3327 = vsub.f32 %v3263, %v3311
        %v3328 = vsub.f32 %v3264, %v3312
        %v3329 = vsub.f32 %v3265, %v3313
        %v3330 = vsub.f32 %v3266, %v3314
        %v3331 = vsub.f32 %v3267, %v3315
        %v3332 = vsub.f32 %v3268, %v3316
        %v3333 = vsub.f32 %v3269, %v3317
        %v3334 = vsub.f32 %v3270, %v3318
        %v3335 = vsub.f32 %v3271, %v3319
        %v3336 = vsub.f32 %v3272, %v3320
        %v3337 = vsub.f32 %v3273, %v3321
        %v3338 = vmul.f32 %v3322, 1.442695
        %v3339 = vpow.pop %v3338
        %v3340 = vmul.f32 %v3323, 1.442695
        %v3341 = vpow.pop %v3340
        %v3342 = vmul.f32 %v3324, 1.442695
        %v3343 = vpow.pop %v3342
        %v3344 = vmul.f32 %v3325, 1.442695
        %v3345 = vpow.pop %v3344
        %v3346 = vmul.f32 %v3326, 1.442695
        %v3347 = vpow.pop %v3346
        %v3348 = vmul.f32 %v3327, 1.442695
        %v3349 = vpow.pop %v3348
        %v3350 = vmul.f32 %v3328, 1.442695
        %v3351 = vpow.pop %v3350
        %v3352 = vmul.f32 %v3329, 1.442695
        %v3353 = vpow.pop %v3352
        %v3354 = vmul.f32 %v3330, 1.442695
        %v3355 = vpow.pop %v3354
        %v3356 = vmul.f32 %v3331, 1.442695
        %v3357 = vpow.pop %v3356
        %v3358 = vmul.f32 %v3332, 1.442695
        %v3359 = vpow.pop %v3358
        %v3360 = vmul.f32 %v3333, 1.442695
        %v3361 = vpow.pop %v3360
        %v3362 = vmul.f32 %v3334, 1.442695
        %v3363 = vpow.pop %v3362
        %v3364 = vmul.f32 %v3335, 1.442695
        %v3365 = vpow.pop %v3364
        %v3366 = vmul.f32 %v3336, 1.442695
        %v3367 = vpow.pop %v3366
        %v3368 = vmul.f32 %v3337, 1.442695
        %v3369 = vpow.pop %v3368
        %3371 = vset.pattern.permute.xlu0 0
        %3372 = vperm.xlu0 %3371, %v3306
        %v3373 = vpop.permute.xlu0 %3372
        %3376 = vset.pattern.permute.xlu0 0
        %3377 = vperm.xlu0 %3376, %v3307
        %v3378 = vpop.permute.xlu0 %3377
        %3381 = vset.pattern.permute.xlu0 0
        %3382 = vperm.xlu0 %3381, %v3308
        %v3383 = vpop.permute.xlu0 %3382
        %3386 = vset.pattern.permute.xlu0 0
        %3387 = vperm.xlu0 %3386, %v3309
        %v3388 = vpop.permute.xlu0 %3387
        %3391 = vset.pattern.permute.xlu0 0
        %3392 = vperm.xlu0 %3391, %v3310
        %v3393 = vpop.permute.xlu0 %3392
        %3396 = vset.pattern.permute.xlu0 0
        %3397 = vperm.xlu0 %3396, %v3311
        %v3398 = vpop.permute.xlu0 %3397
        %3401 = vset.pattern.permute.xlu0 0
        %3402 = vperm.xlu0 %3401, %v3312
        %v3403 = vpop.permute.xlu0 %3402
        %3406 = vset.pattern.permute.xlu0 0
        %3407 = vperm.xlu0 %3406, %v3313
        %v3408 = vpop.permute.xlu0 %3407
        %3411 = vset.pattern.permute.xlu0 0
        %3412 = vperm.xlu0 %3411, %v3314
        %v3413 = vpop.permute.xlu0 %3412
        %3416 = vset.pattern.permute.xlu0 0
        %3417 = vperm.xlu0 %3416, %v3315
        %v3418 = vpop.permute.xlu0 %3417
        %3421 = vset.pattern.permute.xlu0 0
        %3422 = vperm.xlu0 %3421, %v3316
        %v3423 = vpop.permute.xlu0 %3422
        %3426 = vset.pattern.permute.xlu0 0
        %3427 = vperm.xlu0 %3426, %v3317
        %v3428 = vpop.permute.xlu0 %3427
        %3431 = vset.pattern.permute.xlu0 0
        %3432 = vperm.xlu0 %3431, %v3318
        %v3433 = vpop.permute.xlu0 %3432
        %3436 = vset.pattern.permute.xlu0 0
        %3437 = vperm.xlu0 %3436, %v3319
        %v3438 = vpop.permute.xlu0 %3437
        %3441 = vset.pattern.permute.xlu0 0
        %3442 = vperm.xlu0 %3441, %v3320
        %v3443 = vpop.permute.xlu0 %3442
        %3446 = vset.pattern.permute.xlu0 0
        %3447 = vperm.xlu0 %3446, %v3321
        %v3448 = vpop.permute.xlu0 %3447
        %v3450 = vsub.f32 %v3241, %v3373
        %v3451 = vsub.f32 %v3242, %v3378
        %v3452 = vsub.f32 %v3243, %v3383
        %v3453 = vsub.f32 %v3244, %v3388
        %v3454 = vsub.f32 %v3245, %v3393
        %v3455 = vsub.f32 %v3246, %v3398
        %v3456 = vsub.f32 %v3247, %v3403
        %v3457 = vsub.f32 %v3248, %v3408
        %v3458 = vsub.f32 %v3249, %v3413
        %v3459 = vsub.f32 %v3250, %v3418
        %v3460 = vsub.f32 %v3251, %v3423
        %v3461 = vsub.f32 %v3252, %v3428
        %v3462 = vsub.f32 %v3253, %v3433
        %v3463 = vsub.f32 %v3254, %v3438
        %v3464 = vsub.f32 %v3255, %v3443
        %v3465 = vsub.f32 %v3256, %v3448
        %v3466 = vpack.c.bf16 %v3451, %v3450
        %v3467 = vpack.c.bf16 %v3453, %v3452
        %v3468 = vpack.c.bf16 %v3455, %v3454
        %v3469 = vpack.c.bf16 %v3457, %v3456
        %v3470 = vpack.c.bf16 %v3459, %v3458
        %v3471 = vpack.c.bf16 %v3461, %v3460
        %v3472 = vpack.c.bf16 %v3463, %v3462
        %v3473 = vpack.c.bf16 %v3465, %v3464
        %v3475 = vmul.bf16 %v3466, 1069105081
        %v3476 = vpow.bf16.pop %v3475
        %v3478 = vmul.bf16 %v3467, 1069105081
        %v3479 = vpow.bf16.pop %v3478
        %v3481 = vmul.bf16 %v3468, 1069105081
        %v3482 = vpow.bf16.pop %v3481
        %v3484 = vmul.bf16 %v3469, 1069105081
        %v3485 = vpow.bf16.pop %v3484
        %v3487 = vmul.bf16 %v3470, 1069105081
        %v3488 = vpow.bf16.pop %v3487
        %v3490 = vmul.bf16 %v3471, 1069105081
        %v3491 = vpow.bf16.pop %v3490
        %v3493 = vmul.bf16 %v3472, 1069105081
        %v3494 = vpow.bf16.pop %v3493
        %v3496 = vmul.bf16 %v3473, 1069105081
        %v3497 = vpow.bf16.pop %v3496
        %s3498 = scalar_lea.vmem [#allocation3], 384
        %v3499 = vld [vmem:[%s3498] sm:$0xff]
        %v3500 = vld [vmem:[%s3498 + $0x8] sm:$0xff]
        %v3501 = vld [vmem:[%s3498 + $0x10] sm:$0xff]
        %v3502 = vld [vmem:[%s3498 + $0x18] sm:$0xff]
        %v3503 = vld [vmem:[%s3498 + $0x20] sm:$0xff]
        %v3504 = vld [vmem:[%s3498 + $0x28] sm:$0xff]
        %v3505 = vld [vmem:[%s3498 + $0x30] sm:$0xff]
        %v3506 = vld [vmem:[%s3498 + $0x38] sm:$0xff]
        %v3507 = vld [vmem:[%s3498 + $0x40] sm:$0xff]
        %v3508 = vld [vmem:[%s3498 + $0x48] sm:$0xff]
        %v3509 = vld [vmem:[%s3498 + $0x50] sm:$0xff]
        %v3510 = vld [vmem:[%s3498 + $0x58] sm:$0xff]
        %v3511 = vld [vmem:[%s3498 + $0x60] sm:$0xff]
        %v3512 = vld [vmem:[%s3498 + $0x68] sm:$0xff]
        %v3513 = vld [vmem:[%s3498 + $0x70] sm:$0xff]
        %v3514 = vld [vmem:[%s3498 + $0x78] sm:$0xff]
        %v3515 = vmul.f32 %v3339, %v3499
        %v3516 = vmul.f32 %v3341, %v3500
        %v3517 = vmul.f32 %v3343, %v3501
        %v3518 = vmul.f32 %v3345, %v3502
        %v3519 = vmul.f32 %v3347, %v3503
        %v3520 = vmul.f32 %v3349, %v3504
        %v3521 = vmul.f32 %v3351, %v3505
        %v3522 = vmul.f32 %v3353, %v3506
        %v3523 = vmul.f32 %v3355, %v3507
        %v3524 = vmul.f32 %v3357, %v3508
        %v3525 = vmul.f32 %v3359, %v3509
        %v3526 = vmul.f32 %v3361, %v3510
        %v3527 = vmul.f32 %v3363, %v3511
        %v3528 = vmul.f32 %v3365, %v3512
        %v3529 = vmul.f32 %v3367, %v3513
        %v3530 = vmul.f32 %v3369, %v3514
        %v3531 = vunpack.c.l.bf16 %v3476
        %v3532 = vunpack.c.h.bf16 %v3476
        %v3533 = vunpack.c.l.bf16 %v3479
        %v3534 = vunpack.c.h.bf16 %v3479
        %v3535 = vunpack.c.l.bf16 %v3482
        %v3536 = vunpack.c.h.bf16 %v3482
        %v3537 = vunpack.c.l.bf16 %v3485
        %v3538 = vunpack.c.h.bf16 %v3485
        %v3539 = vunpack.c.l.bf16 %v3488
        %v3540 = vunpack.c.h.bf16 %v3488
        %v3541 = vunpack.c.l.bf16 %v3491
        %v3542 = vunpack.c.h.bf16 %v3491
        %v3543 = vunpack.c.l.bf16 %v3494
        %v3544 = vunpack.c.h.bf16 %v3494
        %v3545 = vunpack.c.l.bf16 %v3497
        %v3546 = vunpack.c.h.bf16 %v3497
        %3547 = vadd.xlane.f32.xlu0 %v3531
        %v3548 = vpop.xlane.xlu0 %3547
        %3549 = vadd.xlane.f32.xlu0 %v3532
        %v3550 = vpop.xlane.xlu0 %3549
        %3551 = vadd.xlane.f32.xlu0 %v3533
        %v3552 = vpop.xlane.xlu0 %3551
        %3553 = vadd.xlane.f32.xlu0 %v3534
        %v3554 = vpop.xlane.xlu0 %3553
        %3555 = vadd.xlane.f32.xlu0 %v3535
        %v3556 = vpop.xlane.xlu0 %3555
        %3557 = vadd.xlane.f32.xlu0 %v3536
        %v3558 = vpop.xlane.xlu0 %3557
        %3559 = vadd.xlane.f32.xlu0 %v3537
        %v3560 = vpop.xlane.xlu0 %3559
        %3561 = vadd.xlane.f32.xlu0 %v3538
        %v3562 = vpop.xlane.xlu0 %3561
        %3563 = vadd.xlane.f32.xlu0 %v3539
        %v3564 = vpop.xlane.xlu0 %3563
        %3565 = vadd.xlane.f32.xlu0 %v3540
        %v3566 = vpop.xlane.xlu0 %3565
        %3567 = vadd.xlane.f32.xlu0 %v3541
        %v3568 = vpop.xlane.xlu0 %3567
        %3569 = vadd.xlane.f32.xlu0 %v3542
        %v3570 = vpop.xlane.xlu0 %3569
        %3571 = vadd.xlane.f32.xlu0 %v3543
        %v3572 = vpop.xlane.xlu0 %3571
        %3573 = vadd.xlane.f32.xlu0 %v3544
        %v3574 = vpop.xlane.xlu0 %3573
        %3575 = vadd.xlane.f32.xlu0 %v3545
        %v3576 = vpop.xlane.xlu0 %3575
        %3577 = vadd.xlane.f32.xlu0 %v3546
        %v3578 = vpop.xlane.xlu0 %3577
        %v3579 = vadd.f32 %v3515, %v3548
        %v3580 = vadd.f32 %v3516, %v3550
        %v3581 = vadd.f32 %v3517, %v3552
        %v3582 = vadd.f32 %v3518, %v3554
        %v3583 = vadd.f32 %v3519, %v3556
        %v3584 = vadd.f32 %v3520, %v3558
        %v3585 = vadd.f32 %v3521, %v3560
        %v3586 = vadd.f32 %v3522, %v3562
        %v3587 = vadd.f32 %v3523, %v3564
        %v3588 = vadd.f32 %v3524, %v3566
        %v3589 = vadd.f32 %v3525, %v3568
        %v3590 = vadd.f32 %v3526, %v3570
        %v3591 = vadd.f32 %v3527, %v3572
        %v3592 = vadd.f32 %v3528, %v3574
        %v3593 = vadd.f32 %v3529, %v3576
        %v3594 = vadd.f32 %v3530, %v3578
        %3595 = vst.msk [vmem:[%s3498] sm:$0xff] %vm1177, %v3579
        %3596 = vst.msk [vmem:[%s3498 + $0x8] sm:$0xff] %vm1177, %v3580
        %3597 = vst.msk [vmem:[%s3498 + $0x10] sm:$0xff] %vm1177, %v3581
        %3598 = vst.msk [vmem:[%s3498 + $0x18] sm:$0xff] %vm1177, %v3582
        %3599 = vst.msk [vmem:[%s3498 + $0x20] sm:$0xff] %vm1177, %v3583
        %3600 = vst.msk [vmem:[%s3498 + $0x28] sm:$0xff] %vm1177, %v3584
        %3601 = vst.msk [vmem:[%s3498 + $0x30] sm:$0xff] %vm1177, %v3585
        %3602 = vst.msk [vmem:[%s3498 + $0x38] sm:$0xff] %vm1177, %v3586
        %3603 = vst.msk [vmem:[%s3498 + $0x40] sm:$0xff] %vm1177, %v3587
        %3604 = vst.msk [vmem:[%s3498 + $0x48] sm:$0xff] %vm1177, %v3588
        %3605 = vst.msk [vmem:[%s3498 + $0x50] sm:$0xff] %vm1177, %v3589
        %3606 = vst.msk [vmem:[%s3498 + $0x58] sm:$0xff] %vm1177, %v3590
        %3607 = vst.msk [vmem:[%s3498 + $0x60] sm:$0xff] %vm1177, %v3591
        %3608 = vst.msk [vmem:[%s3498 + $0x68] sm:$0xff] %vm1177, %v3592
        %3609 = vst.msk [vmem:[%s3498 + $0x70] sm:$0xff] %vm1177, %v3593
        %3610 = vst.msk [vmem:[%s3498 + $0x78] sm:$0xff] %vm1177, %v3594
        %3611 = vst.msk [vmem:[%s3257] sm:$0xff] %vm1177, %v3306
        %3612 = vst.msk [vmem:[%s3257 + $0x8] sm:$0xff] %vm1177, %v3307
        %3613 = vst.msk [vmem:[%s3257 + $0x10] sm:$0xff] %vm1177, %v3308
        %3614 = vst.msk [vmem:[%s3257 + $0x18] sm:$0xff] %vm1177, %v3309
        %3615 = vst.msk [vmem:[%s3257 + $0x20] sm:$0xff] %vm1177, %v3310
        %3616 = vst.msk [vmem:[%s3257 + $0x28] sm:$0xff] %vm1177, %v3311
        %3617 = vst.msk [vmem:[%s3257 + $0x30] sm:$0xff] %vm1177, %v3312
        %3618 = vst.msk [vmem:[%s3257 + $0x38] sm:$0xff] %vm1177, %v3313
        %3619 = vst.msk [vmem:[%s3257 + $0x40] sm:$0xff] %vm1177, %v3314
        %3620 = vst.msk [vmem:[%s3257 + $0x48] sm:$0xff] %vm1177, %v3315
        %3621 = vst.msk [vmem:[%s3257 + $0x50] sm:$0xff] %vm1177, %v3316
        %3622 = vst.msk [vmem:[%s3257 + $0x58] sm:$0xff] %vm1177, %v3317
        %3623 = vst.msk [vmem:[%s3257 + $0x60] sm:$0xff] %vm1177, %v3318
        %3624 = vst.msk [vmem:[%s3257 + $0x68] sm:$0xff] %vm1177, %v3319
        %3625 = vst.msk [vmem:[%s3257 + $0x70] sm:$0xff] %vm1177, %v3320
        %3626 = vst.msk [vmem:[%s3257 + $0x78] sm:$0xff] %vm1177, %v3321
        %v3627 = vld [vmem:[%s3 + $0x3] sm:$0x1]
        %3629 = vset.pattern.permute.xlu0 0
        %3630 = vperm.xlu0 %3629, %v3339
        %v3631 = vpop.permute.xlu0 %3630
        %3634 = vset.pattern.permute.xlu0 0
        %3635 = vperm.xlu0 %3634, %v3341
        %v3636 = vpop.permute.xlu0 %3635
        %3639 = vset.pattern.permute.xlu0 0
        %3640 = vperm.xlu0 %3639, %v3343
        %v3641 = vpop.permute.xlu0 %3640
        %3644 = vset.pattern.permute.xlu0 0
        %3645 = vperm.xlu0 %3644, %v3345
        %v3646 = vpop.permute.xlu0 %3645
        %3649 = vset.pattern.permute.xlu0 0
        %3650 = vperm.xlu0 %3649, %v3347
        %v3651 = vpop.permute.xlu0 %3650
        %3654 = vset.pattern.permute.xlu0 0
        %3655 = vperm.xlu0 %3654, %v3349
        %v3656 = vpop.permute.xlu0 %3655
        %3659 = vset.pattern.permute.xlu0 0
        %3660 = vperm.xlu0 %3659, %v3351
        %v3661 = vpop.permute.xlu0 %3660
        %3664 = vset.pattern.permute.xlu0 0
        %3665 = vperm.xlu0 %3664, %v3353
        %v3666 = vpop.permute.xlu0 %3665
        %3669 = vset.pattern.permute.xlu0 0
        %3670 = vperm.xlu0 %3669, %v3355
        %v3671 = vpop.permute.xlu0 %3670
        %3674 = vset.pattern.permute.xlu0 0
        %3675 = vperm.xlu0 %3674, %v3357
        %v3676 = vpop.permute.xlu0 %3675
        %3679 = vset.pattern.permute.xlu0 0
        %3680 = vperm.xlu0 %3679, %v3359
        %v3681 = vpop.permute.xlu0 %3680
        %3684 = vset.pattern.permute.xlu0 0
        %3685 = vperm.xlu0 %3684, %v3361
        %v3686 = vpop.permute.xlu0 %3685
        %3689 = vset.pattern.permute.xlu0 0
        %3690 = vperm.xlu0 %3689, %v3363
        %v3691 = vpop.permute.xlu0 %3690
        %3694 = vset.pattern.permute.xlu0 0
        %3695 = vperm.xlu0 %3694, %v3365
        %v3696 = vpop.permute.xlu0 %3695
        %3699 = vset.pattern.permute.xlu0 0
        %3700 = vperm.xlu0 %3699, %v3367
        %v3701 = vpop.permute.xlu0 %3700
        %3704 = vset.pattern.permute.xlu0 0
        %3705 = vperm.xlu0 %3704, %v3369
        %v3706 = vpop.permute.xlu0 %3705
        %v3708 = vlaneseq
        %v3709 = vshrl.u32 %v3708, 7
        %v3710 = vsub.s32 0, %v3709
        %v3711 = vrot.slane %v3627, %v3710
        %v3712 = vmul.f32 %v3631, %v3711
        %v3713 = vmul.f32 %v3636, %v3711
        %v3714 = vmul.f32 %v3641, %v3711
        %v3715 = vmul.f32 %v3646, %v3711
        %v3716 = vmul.f32 %v3651, %v3711
        %v3717 = vmul.f32 %v3656, %v3711
        %v3718 = vmul.f32 %v3661, %v3711
        %v3719 = vmul.f32 %v3666, %v3711
        %v3720 = vmul.f32 %v3671, %v3711
        %v3721 = vmul.f32 %v3676, %v3711
        %v3722 = vmul.f32 %v3681, %v3711
        %v3723 = vmul.f32 %v3686, %v3711
        %v3724 = vmul.f32 %v3691, %v3711
        %v3725 = vmul.f32 %v3696, %v3711
        %v3726 = vmul.f32 %v3701, %v3711
        %v3727 = vmul.f32 %v3706, %v3711
        %v3728 = vadd.f32 %v2912, %v3712
        %v3729 = vadd.f32 %v2913, %v3713
        %v3730 = vadd.f32 %v2914, %v3714
        %v3731 = vadd.f32 %v2915, %v3715
        %v3732 = vadd.f32 %v2916, %v3716
        %v3733 = vadd.f32 %v2917, %v3717
        %v3734 = vadd.f32 %v2918, %v3718
        %v3735 = vadd.f32 %v2919, %v3719
        %v3736 = vadd.f32 %v2920, %v3720
        %v3737 = vadd.f32 %v2921, %v3721
        %v3738 = vadd.f32 %v2922, %v3722
        %v3739 = vadd.f32 %v2923, %v3723
        %v3740 = vadd.f32 %v2924, %v3724
        %v3741 = vadd.f32 %v2925, %v3725
        %v3742 = vadd.f32 %v2926, %v3726
        %v3743 = vadd.f32 %v2927, %v3727
        %s3744 = sadd.s32 %s1327, 96
        %s3745 = smul.addr %s3744, 4
        %s3746 = scalar_lea.vmem %s2, %s3745
        %v3747 = vld [vmem:[%s3746] sm:$0xf]
        %v3748 = vld [vmem:[%s3746 + $0x4] sm:$0xf]
        %v3749 = vld [vmem:[%s3746 + $0x8] sm:$0xf]
        %v3750 = vld [vmem:[%s3746 + $0xc] sm:$0xf]
        %v3751 = vld [vmem:[%s3746 + $0x10] sm:$0xf]
        %v3752 = vld [vmem:[%s3746 + $0x14] sm:$0xf]
        %v3753 = vld [vmem:[%s3746 + $0x18] sm:$0xf]
        %v3754 = vld [vmem:[%s3746 + $0x1c] sm:$0xf]
        %v3755 = vld [vmem:[%s3746 + $0x20] sm:$0xf]
        %v3756 = vld [vmem:[%s3746 + $0x24] sm:$0xf]
        %v3757 = vld [vmem:[%s3746 + $0x28] sm:$0xf]
        %v3758 = vld [vmem:[%s3746 + $0x2c] sm:$0xf]
        %v3759 = vld [vmem:[%s3746 + $0x30] sm:$0xf]
        %v3760 = vld [vmem:[%s3746 + $0x34] sm:$0xf]
        %v3761 = vld [vmem:[%s3746 + $0x38] sm:$0xf]
        %v3762 = vld [vmem:[%s3746 + $0x3c] sm:$0xf]
        %v3779 = vunpack.c.l.b16 %v3747
        %v3780 = vunpack.c.l.b16 %v3748
        %v3781 = vunpack.c.l.b16 %v3749
        %v3782 = vunpack.c.l.b16 %v3750
        %v3783 = vunpack.c.l.b16 %v3751
        %v3784 = vunpack.c.l.b16 %v3752
        %v3785 = vunpack.c.l.b16 %v3753
        %v3786 = vunpack.c.l.b16 %v3754
        %v3787 = vunpack.c.l.b16 %v3755
        %v3788 = vunpack.c.l.b16 %v3756
        %v3789 = vunpack.c.l.b16 %v3757
        %v3790 = vunpack.c.l.b16 %v3758
        %v3791 = vunpack.c.l.b16 %v3759
        %v3792 = vunpack.c.l.b16 %v3760
        %v3793 = vunpack.c.l.b16 %v3761
        %v3794 = vunpack.c.l.b16 %v3762
        %v3795 = vpack.c.b16 %v3780, %v3779
        %v3796 = vpack.c.b16 %v3782, %v3781
        %v3797 = vpack.c.b16 %v3784, %v3783
        %v3798 = vpack.c.b16 %v3786, %v3785
        %v3799 = vpack.c.b16 %v3788, %v3787
        %v3800 = vpack.c.b16 %v3790, %v3789
        %v3801 = vpack.c.b16 %v3792, %v3791
        %v3802 = vpack.c.b16 %v3794, %v3793
        %3811 = vmatprep.subr.bf16.mxu0 0
        %3812 = vmatpush1.bf16.msra.mxu0 %v3795
        %3813 = vmatprep.subr.bf16.mxu0 0
        %3814 = vmatpush1.bf16.msra.mxu0 %v3796
        %3815 = vmatprep.subr.bf16.mxu0 0
        %3816 = vmatpush1.bf16.msra.mxu0 %v3797
        %3817 = vmatprep.subr.bf16.mxu0 0
        %3818 = vmatpush1.bf16.msra.mxu0 %v3798
        %3819 = vmatprep.subr.bf16.mxu0 0
        %3820 = vmatpush1.bf16.msra.mxu0 %v3799
        %3821 = vmatprep.subr.bf16.mxu0 0
        %3822 = vmatpush1.bf16.msra.mxu0 %v3800
        %3823 = vmatprep.subr.bf16.mxu0 0
        %3824 = vmatpush1.bf16.msra.mxu0 %v3801
        %3825 = vmatprep.subr.bf16.mxu0 0
        %3826 = vmatpush1.bf16.msra.mxu0 %v3802
        %3827 = vmatprep.subr.bf16.mxu0 0
        %3828 = vmatpush1.bf16.msra.mxu0 0
        %3829 = vmatprep.subr.bf16.mxu0 0
        %3830 = vmatpush1.bf16.msra.mxu0 0
        %3831 = vmatprep.subr.bf16.mxu0 0
        %3832 = vmatpush1.bf16.msra.mxu0 0
        %3833 = vmatprep.subr.bf16.mxu0 0
        %3834 = vmatpush1.bf16.msra.mxu0 0
        %3835 = vmatprep.subr.bf16.mxu0 0
        %3836 = vmatpush1.bf16.msra.mxu0 0
        %3837 = vmatprep.subr.bf16.mxu0 0
        %3838 = vmatpush1.bf16.msra.mxu0 0
        %3839 = vmatprep.subr.bf16.mxu0 0
        %3840 = vmatpush1.bf16.msra.mxu0 0
        %3841 = vmatprep.subr.bf16.mxu0 0
        %3842 = vmatpush1.bf16.msra.mxu0 0
        %3843 = vmatprep.mubr.bf16.mxu0 0
        %3844 = vmatmul.mubr.bf16.gmra.mrb[0].mxu0 %v3476
        %v3845 = vpop.f32.mrb[0].mxu0
        %v3846 = vadd.f32 0.0, %v3845
        %v3847 = vpop.f32.mrb[0].mxu0
        %v3848 = vpop.f32.mrb[0].mxu0
        %v3849 = vadd.f32 0.0, %v3848
        %v3850 = vpop.f32.mrb[0].mxu0
        %3851 = vmatprep.mubr.bf16.mxu0 0
        %3852 = vmatmul.mubr.bf16.gmra.mrb[0].mxu0 %v3479
        %v3853 = vpop.f32.mrb[0].mxu0
        %v3854 = vadd.f32 0.0, %v3853
        %v3855 = vpop.f32.mrb[0].mxu0
        %v3856 = vpop.f32.mrb[0].mxu0
        %v3857 = vadd.f32 0.0, %v3856
        %v3858 = vpop.f32.mrb[0].mxu0
        %3859 = vmatprep.mubr.bf16.mxu0 0
        %3860 = vmatmul.mubr.bf16.gmra.mrb[0].mxu0 %v3482
        %v3861 = vpop.f32.mrb[0].mxu0
        %v3862 = vadd.f32 0.0, %v3861
        %v3863 = vpop.f32.mrb[0].mxu0
        %v3864 = vpop.f32.mrb[0].mxu0
        %v3865 = vadd.f32 0.0, %v3864
        %v3866 = vpop.f32.mrb[0].mxu0
        %3867 = vmatprep.mubr.bf16.mxu0 0
        %3868 = vmatmul.mubr.bf16.gmra.mrb[0].mxu0 %v3485
        %v3869 = vpop.f32.mrb[0].mxu0
        %v3870 = vadd.f32 0.0, %v3869
        %v3871 = vpop.f32.mrb[0].mxu0
        %v3872 = vpop.f32.mrb[0].mxu0
        %v3873 = vadd.f32 0.0, %v3872
        %v3874 = vpop.f32.mrb[0].mxu0
        %3875 = vmatprep.mubr.bf16.mxu0 0
        %3876 = vmatmul.mubr.bf16.gmra.mrb[0].mxu0 %v3488
        %v3877 = vpop.f32.mrb[0].mxu0
        %v3878 = vadd.f32 0.0, %v3877
        %v3879 = vpop.f32.mrb[0].mxu0
        %v3880 = vpop.f32.mrb[0].mxu0
        %v3881 = vadd.f32 0.0, %v3880
        %v3882 = vpop.f32.mrb[0].mxu0
        %3883 = vmatprep.mubr.bf16.mxu0 0
        %3884 = vmatmul.mubr.bf16.gmra.mrb[0].mxu0 %v3491
        %v3885 = vpop.f32.mrb[0].mxu0
        %v3886 = vadd.f32 0.0, %v3885
        %v3887 = vpop.f32.mrb[0].mxu0
        %v3888 = vpop.f32.mrb[0].mxu0
        %v3889 = vadd.f32 0.0, %v3888
        %v3890 = vpop.f32.mrb[0].mxu0
        %3891 = vmatprep.mubr.bf16.mxu0 0
        %3892 = vmatmul.mubr.bf16.gmra.mrb[0].mxu0 %v3494
        %v3893 = vpop.f32.mrb[0].mxu0
        %v3894 = vadd.f32 0.0, %v3893
        %v3895 = vpop.f32.mrb[0].mxu0
        %v3896 = vpop.f32.mrb[0].mxu0
        %v3897 = vadd.f32 0.0, %v3896
        %v3898 = vpop.f32.mrb[0].mxu0
        %3899 = vmatprep.mubr.bf16.mxu0 0
        %3900 = vmatmul.mubr.bf16.gmra.mrb[0].mxu0 %v3497
        %v3901 = vpop.f32.mrb[0].mxu0
        %v3902 = vadd.f32 0.0, %v3901
        %v3903 = vpop.f32.mrb[0].mxu0
        %v3904 = vpop.f32.mrb[0].mxu0
        %v3905 = vadd.f32 0.0, %v3904
        %v3906 = vpop.f32.mrb[0].mxu0
        %3907 = vdwg.mxu0
        %v3908 = vadd.f32 %v3092, %v3846
        %v3909 = vadd.f32 %v3093, %v3849
        %v3910 = vadd.f32 %v3094, %v3854
        %v3911 = vadd.f32 %v3095, %v3857
        %v3912 = vadd.f32 %v3096, %v3862
        %v3913 = vadd.f32 %v3097, %v3865
        %v3914 = vadd.f32 %v3098, %v3870
        %v3915 = vadd.f32 %v3099, %v3873
        %v3916 = vadd.f32 %v3100, %v3878
        %v3917 = vadd.f32 %v3101, %v3881
        %v3918 = vadd.f32 %v3102, %v3886
        %v3919 = vadd.f32 %v3103, %v3889
        %v3920 = vadd.f32 %v3104, %v3894
        %v3921 = vadd.f32 %v3105, %v3897
        %v3922 = vadd.f32 %v3106, %v3902
        %v3923 = vadd.f32 %v3107, %v3905
        %v3924 = vld [vmem:[#allocation4] sm:$0xff]
        %v3925 = vld [vmem:[#allocation4 + $0x8] sm:$0xff]
        %v3926 = vld [vmem:[#allocation4 + $0x10] sm:$0xff]
        %v3927 = vld [vmem:[#allocation4 + $0x18] sm:$0xff]
        %v3928 = vld [vmem:[#allocation4 + $0x20] sm:$0xff]
        %v3929 = vld [vmem:[#allocation4 + $0x28] sm:$0xff]
        %v3930 = vld [vmem:[#allocation4 + $0x30] sm:$0xff]
        %v3931 = vld [vmem:[#allocation4 + $0x38] sm:$0xff]
        %v3932 = vld [vmem:[#allocation4 + $0x40] sm:$0xff]
        %v3933 = vld [vmem:[#allocation4 + $0x48] sm:$0xff]
        %v3934 = vld [vmem:[#allocation4 + $0x50] sm:$0xff]
        %v3935 = vld [vmem:[#allocation4 + $0x58] sm:$0xff]
        %v3936 = vld [vmem:[#allocation4 + $0x60] sm:$0xff]
        %v3937 = vld [vmem:[#allocation4 + $0x68] sm:$0xff]
        %v3938 = vld [vmem:[#allocation4 + $0x70] sm:$0xff]
        %v3939 = vld [vmem:[#allocation4 + $0x78] sm:$0xff]
        %v3940 = vmul.f32 %v3924, %v3728
        %v3941 = vmul.f32 %v3925, %v3729
        %v3942 = vmul.f32 %v3926, %v3730
        %v3943 = vmul.f32 %v3927, %v3731
        %v3944 = vmul.f32 %v3928, %v3732
        %v3945 = vmul.f32 %v3929, %v3733
        %v3946 = vmul.f32 %v3930, %v3734
        %v3947 = vmul.f32 %v3931, %v3735
        %v3948 = vmul.f32 %v3932, %v3736
        %v3949 = vmul.f32 %v3933, %v3737
        %v3950 = vmul.f32 %v3934, %v3738
        %v3951 = vmul.f32 %v3935, %v3739
        %v3952 = vmul.f32 %v3936, %v3740
        %v3953 = vmul.f32 %v3937, %v3741
        %v3954 = vmul.f32 %v3938, %v3742
        %v3955 = vmul.f32 %v3939, %v3743
        %v3956 = vadd.f32 %v3940, %v3908
        %v3957 = vadd.f32 %v3941, %v3909
        %v3958 = vadd.f32 %v3942, %v3910
        %v3959 = vadd.f32 %v3943, %v3911
        %v3960 = vadd.f32 %v3944, %v3912
        %v3961 = vadd.f32 %v3945, %v3913
        %v3962 = vadd.f32 %v3946, %v3914
        %v3963 = vadd.f32 %v3947, %v3915
        %v3964 = vadd.f32 %v3948, %v3916
        %v3965 = vadd.f32 %v3949, %v3917
        %v3966 = vadd.f32 %v3950, %v3918
        %v3967 = vadd.f32 %v3951, %v3919
        %v3968 = vadd.f32 %v3952, %v3920
        %v3969 = vadd.f32 %v3953, %v3921
        %v3970 = vadd.f32 %v3954, %v3922
        %v3971 = vadd.f32 %v3955, %v3923
        %3972 = vst [vmem:[#allocation4] sm:$0xff] %v3956
        %3973 = vst [vmem:[#allocation4 + $0x8] sm:$0xff] %v3957
        %3974 = vst [vmem:[#allocation4 + $0x10] sm:$0xff] %v3958
        %3975 = vst [vmem:[#allocation4 + $0x18] sm:$0xff] %v3959
        %3976 = vst [vmem:[#allocation4 + $0x20] sm:$0xff] %v3960
        %3977 = vst [vmem:[#allocation4 + $0x28] sm:$0xff] %v3961
        %3978 = vst [vmem:[#allocation4 + $0x30] sm:$0xff] %v3962
        %3979 = vst [vmem:[#allocation4 + $0x38] sm:$0xff] %v3963
        %3980 = vst [vmem:[#allocation4 + $0x40] sm:$0xff] %v3964
        %3981 = vst [vmem:[#allocation4 + $0x48] sm:$0xff] %v3965
        %3982 = vst [vmem:[#allocation4 + $0x50] sm:$0xff] %v3966
        %3983 = vst [vmem:[#allocation4 + $0x58] sm:$0xff] %v3967
        %3984 = vst [vmem:[#allocation4 + $0x60] sm:$0xff] %v3968
        %3985 = vst [vmem:[#allocation4 + $0x68] sm:$0xff] %v3969
        %3986 = vst [vmem:[#allocation4 + $0x70] sm:$0xff] %v3970
        %3987 = vst [vmem:[#allocation4 + $0x78] sm:$0xff] %v3971
        %p3988 = scmp.eq.s32.totalorder %s23, 1
        // Predicated region
        $region91: #{gat_forward.2} parent=81 // pred_check
          %p3989 = pneg %p3988
        $region92: #{gat_forward.2} parent=81 // pred_check_branch
          %3991 = sbr.rel (%p3989) target = $region94
        $region93: #{gat_forward.2} parent=81 // pred_region
          %v3992 = vld [vmem:[#allocation3] sm:$0xff]
          %v3993 = vld [vmem:[#allocation3 + $0x8] sm:$0xff]
          %v3994 = vld [vmem:[#allocation3 + $0x10] sm:$0xff]
          %v3995 = vld [vmem:[#allocation3 + $0x18] sm:$0xff]
          %v3996 = vld [vmem:[#allocation3 + $0x20] sm:$0xff]
          %v3997 = vld [vmem:[#allocation3 + $0x28] sm:$0xff]
          %v3998 = vld [vmem:[#allocation3 + $0x30] sm:$0xff]
          %v3999 = vld [vmem:[#allocation3 + $0x38] sm:$0xff]
          %v4000 = vld [vmem:[#allocation3 + $0x40] sm:$0xff]
          %v4001 = vld [vmem:[#allocation3 + $0x48] sm:$0xff]
          %v4002 = vld [vmem:[#allocation3 + $0x50] sm:$0xff]
          %v4003 = vld [vmem:[#allocation3 + $0x58] sm:$0xff]
          %v4004 = vld [vmem:[#allocation3 + $0x60] sm:$0xff]
          %v4005 = vld [vmem:[#allocation3 + $0x68] sm:$0xff]
          %v4006 = vld [vmem:[#allocation3 + $0x70] sm:$0xff]
          %v4007 = vld [vmem:[#allocation3 + $0x78] sm:$0xff]
          %v4008 = vld [vmem:[#allocation3 + $0x80] sm:$0xff]
          %v4009 = vld [vmem:[#allocation3 + $0x88] sm:$0xff]
          %v4010 = vld [vmem:[#allocation3 + $0x90] sm:$0xff]
          %v4011 = vld [vmem:[#allocation3 + $0x98] sm:$0xff]
          %v4012 = vld [vmem:[#allocation3 + $0xa0] sm:$0xff]
          %v4013 = vld [vmem:[#allocation3 + $0xa8] sm:$0xff]
          %v4014 = vld [vmem:[#allocation3 + $0xb0] sm:$0xff]
          %v4015 = vld [vmem:[#allocation3 + $0xb8] sm:$0xff]
          %v4016 = vld [vmem:[#allocation3 + $0xc0] sm:$0xff]
          %v4017 = vld [vmem:[#allocation3 + $0xc8] sm:$0xff]
          %v4018 = vld [vmem:[#allocation3 + $0xd0] sm:$0xff]
          %v4019 = vld [vmem:[#allocation3 + $0xd8] sm:$0xff]
          %v4020 = vld [vmem:[#allocation3 + $0xe0] sm:$0xff]
          %v4021 = vld [vmem:[#allocation3 + $0xe8] sm:$0xff]
          %v4022 = vld [vmem:[#allocation3 + $0xf0] sm:$0xff]
          %v4023 = vld [vmem:[#allocation3 + $0xf8] sm:$0xff]
          %v4024 = vld [vmem:[#allocation3 + $0x100] sm:$0xff]
          %v4025 = vld [vmem:[#allocation3 + $0x108] sm:$0xff]
          %v4026 = vld [vmem:[#allocation3 + $0x110] sm:$0xff]
          %v4027 = vld [vmem:[#allocation3 + $0x118] sm:$0xff]
          %v4028 = vld [vmem:[#allocation3 + $0x120] sm:$0xff]
          %v4029 = vld [vmem:[#allocation3 + $0x128] sm:$0xff]
          %v4030 = vld [vmem:[#allocation3 + $0x130] sm:$0xff]
          %v4031 = vld [vmem:[#allocation3 + $0x138] sm:$0xff]
          %v4032 = vld [vmem:[#allocation3 + $0x140] sm:$0xff]
          %v4033 = vld [vmem:[#allocation3 + $0x148] sm:$0xff]
          %v4034 = vld [vmem:[#allocation3 + $0x150] sm:$0xff]
          %v4035 = vld [vmem:[#allocation3 + $0x158] sm:$0xff]
          %v4036 = vld [vmem:[#allocation3 + $0x160] sm:$0xff]
          %v4037 = vld [vmem:[#allocation3 + $0x168] sm:$0xff]
          %v4038 = vld [vmem:[#allocation3 + $0x170] sm:$0xff]
          %v4039 = vld [vmem:[#allocation3 + $0x178] sm:$0xff]
          %v4040 = vld [vmem:[#allocation3 + $0x180] sm:$0xff]
          %v4041 = vld [vmem:[#allocation3 + $0x188] sm:$0xff]
          %v4042 = vld [vmem:[#allocation3 + $0x190] sm:$0xff]
          %v4043 = vld [vmem:[#allocation3 + $0x198] sm:$0xff]
          %v4044 = vld [vmem:[#allocation3 + $0x1a0] sm:$0xff]
          %v4045 = vld [vmem:[#allocation3 + $0x1a8] sm:$0xff]
          %v4046 = vld [vmem:[#allocation3 + $0x1b0] sm:$0xff]
          %v4047 = vld [vmem:[#allocation3 + $0x1b8] sm:$0xff]
          %v4048 = vld [vmem:[#allocation3 + $0x1c0] sm:$0xff]
          %v4049 = vld [vmem:[#allocation3 + $0x1c8] sm:$0xff]
          %v4050 = vld [vmem:[#allocation3 + $0x1d0] sm:$0xff]
          %v4051 = vld [vmem:[#allocation3 + $0x1d8] sm:$0xff]
          %v4052 = vld [vmem:[#allocation3 + $0x1e0] sm:$0xff]
          %v4053 = vld [vmem:[#allocation3 + $0x1e8] sm:$0xff]
          %v4054 = vld [vmem:[#allocation3 + $0x1f0] sm:$0xff]
          %v4055 = vld [vmem:[#allocation3 + $0x1f8] sm:$0xff]
          %v4056 = vrcp.pop %v3992
          %v4057 = vrcp.pop %v3993
          %v4058 = vrcp.pop %v3994
          %v4059 = vrcp.pop %v3995
          %v4060 = vrcp.pop %v3996
          %v4061 = vrcp.pop %v3997
          %v4062 = vrcp.pop %v3998
          %v4063 = vrcp.pop %v3999
          %v4064 = vrcp.pop %v4000
          %v4065 = vrcp.pop %v4001
          %v4066 = vrcp.pop %v4002
          %v4067 = vrcp.pop %v4003
          %v4068 = vrcp.pop %v4004
          %v4069 = vrcp.pop %v4005
          %v4070 = vrcp.pop %v4006
          %v4071 = vrcp.pop %v4007
          %v4072 = vrcp.pop %v4008
          %v4073 = vrcp.pop %v4009
          %v4074 = vrcp.pop %v4010
          %v4075 = vrcp.pop %v4011
          %v4076 = vrcp.pop %v4012
          %v4077 = vrcp.pop %v4013
          %v4078 = vrcp.pop %v4014
          %v4079 = vrcp.pop %v4015
          %v4080 = vrcp.pop %v4016
          %v4081 = vrcp.pop %v4017
          %v4082 = vrcp.pop %v4018
          %v4083 = vrcp.pop %v4019
          %v4084 = vrcp.pop %v4020
          %v4085 = vrcp.pop %v4021
          %v4086 = vrcp.pop %v4022
          %v4087 = vrcp.pop %v4023
          %v4088 = vrcp.pop %v4024
          %v4089 = vrcp.pop %v4025
          %v4090 = vrcp.pop %v4026
          %v4091 = vrcp.pop %v4027
          %v4092 = vrcp.pop %v4028
          %v4093 = vrcp.pop %v4029
          %v4094 = vrcp.pop %v4030
          %v4095 = vrcp.pop %v4031
          %v4096 = vrcp.pop %v4032
          %v4097 = vrcp.pop %v4033
          %v4098 = vrcp.pop %v4034
          %v4099 = vrcp.pop %v4035
          %v4100 = vrcp.pop %v4036
          %v4101 = vrcp.pop %v4037
          %v4102 = vrcp.pop %v4038
          %v4103 = vrcp.pop %v4039
          %v4104 = vrcp.pop %v4040
          %v4105 = vrcp.pop %v4041
          %v4106 = vrcp.pop %v4042
          %v4107 = vrcp.pop %v4043
          %v4108 = vrcp.pop %v4044
          %v4109 = vrcp.pop %v4045
          %v4110 = vrcp.pop %v4046
          %v4111 = vrcp.pop %v4047
          %v4112 = vrcp.pop %v4048
          %v4113 = vrcp.pop %v4049
          %v4114 = vrcp.pop %v4050
          %v4115 = vrcp.pop %v4051
          %v4116 = vrcp.pop %v4052
          %v4117 = vrcp.pop %v4053
          %v4118 = vrcp.pop %v4054
          %v4119 = vrcp.pop %v4055
          %v4120 = vld [vmem:[%s3] sm:$0x1]
          %4122 = vset.pattern.permute.xlu0 0
          %4123 = vperm.xlu0 %4122, %v4056
          %v4124 = vpop.permute.xlu0 %4123
          %4127 = vset.pattern.permute.xlu0 0
          %4128 = vperm.xlu0 %4127, %v4057
          %v4129 = vpop.permute.xlu0 %4128
          %4132 = vset.pattern.permute.xlu0 0
          %4133 = vperm.xlu0 %4132, %v4058
          %v4134 = vpop.permute.xlu0 %4133
          %4137 = vset.pattern.permute.xlu0 0
          %4138 = vperm.xlu0 %4137, %v4059
          %v4139 = vpop.permute.xlu0 %4138
          %4142 = vset.pattern.permute.xlu0 0
          %4143 = vperm.xlu0 %4142, %v4060
          %v4144 = vpop.permute.xlu0 %4143
          %4147 = vset.pattern.permute.xlu0 0
          %4148 = vperm.xlu0 %4147, %v4061
          %v4149 = vpop.permute.xlu0 %4148
          %4152 = vset.pattern.permute.xlu0 0
          %4153 = vperm.xlu0 %4152, %v4062
          %v4154 = vpop.permute.xlu0 %4153
          %4157 = vset.pattern.permute.xlu0 0
          %4158 = vperm.xlu0 %4157, %v4063
          %v4159 = vpop.permute.xlu0 %4158
          %4162 = vset.pattern.permute.xlu0 0
          %4163 = vperm.xlu0 %4162, %v4064
          %v4164 = vpop.permute.xlu0 %4163
          %4167 = vset.pattern.permute.xlu0 0
          %4168 = vperm.xlu0 %4167, %v4065
          %v4169 = vpop.permute.xlu0 %4168
          %4172 = vset.pattern.permute.xlu0 0
          %4173 = vperm.xlu0 %4172, %v4066
          %v4174 = vpop.permute.xlu0 %4173
          %4177 = vset.pattern.permute.xlu0 0
          %4178 = vperm.xlu0 %4177, %v4067
          %v4179 = vpop.permute.xlu0 %4178
          %4182 = vset.pattern.permute.xlu0 0
          %4183 = vperm.xlu0 %4182, %v4068
          %v4184 = vpop.permute.xlu0 %4183
          %4187 = vset.pattern.permute.xlu0 0
          %4188 = vperm.xlu0 %4187, %v4069
          %v4189 = vpop.permute.xlu0 %4188
          %4192 = vset.pattern.permute.xlu0 0
          %4193 = vperm.xlu0 %4192, %v4070
          %v4194 = vpop.permute.xlu0 %4193
          %4197 = vset.pattern.permute.xlu0 0
          %4198 = vperm.xlu0 %4197, %v4071
          %v4199 = vpop.permute.xlu0 %4198
          %v4201 = vlaneseq
          %v4202 = vshrl.u32 %v4201, 7
          %v4203 = vsub.s32 0, %v4202
          %v4204 = vrot.slane %v4120, %v4203
          %v4205 = vmul.f32 %v4124, %v4204
          %v4206 = vmul.f32 %v4129, %v4204
          %v4207 = vmul.f32 %v4134, %v4204
          %v4208 = vmul.f32 %v4139, %v4204
          %v4209 = vmul.f32 %v4144, %v4204
          %v4210 = vmul.f32 %v4149, %v4204
          %v4211 = vmul.f32 %v4154, %v4204
          %v4212 = vmul.f32 %v4159, %v4204
          %v4213 = vmul.f32 %v4164, %v4204
          %v4214 = vmul.f32 %v4169, %v4204
          %v4215 = vmul.f32 %v4174, %v4204
          %v4216 = vmul.f32 %v4179, %v4204
          %v4217 = vmul.f32 %v4184, %v4204
          %v4218 = vmul.f32 %v4189, %v4204
          %v4219 = vmul.f32 %v4194, %v4204
          %v4220 = vmul.f32 %v4199, %v4204
          %v4221 = vadd.f32 %v4205, 0.0
          %v4222 = vadd.f32 %v4206, 0.0
          %v4223 = vadd.f32 %v4207, 0.0
          %v4224 = vadd.f32 %v4208, 0.0
          %v4225 = vadd.f32 %v4209, 0.0
          %v4226 = vadd.f32 %v4210, 0.0
          %v4227 = vadd.f32 %v4211, 0.0
          %v4228 = vadd.f32 %v4212, 0.0
          %v4229 = vadd.f32 %v4213, 0.0
          %v4230 = vadd.f32 %v4214, 0.0
          %v4231 = vadd.f32 %v4215, 0.0
          %v4232 = vadd.f32 %v4216, 0.0
          %v4233 = vadd.f32 %v4217, 0.0
          %v4234 = vadd.f32 %v4218, 0.0
          %v4235 = vadd.f32 %v4219, 0.0
          %v4236 = vadd.f32 %v4220, 0.0
          %v4237 = vld [vmem:[%s3 + $0x1] sm:$0x1]
          %4239 = vset.pattern.permute.xlu0 0
          %4240 = vperm.xlu0 %4239, %v4072
          %v4241 = vpop.permute.xlu0 %4240
          %4244 = vset.pattern.permute.xlu0 0
          %4245 = vperm.xlu0 %4244, %v4073
          %v4246 = vpop.permute.xlu0 %4245
          %4249 = vset.pattern.permute.xlu0 0
          %4250 = vperm.xlu0 %4249, %v4074
          %v4251 = vpop.permute.xlu0 %4250
          %4254 = vset.pattern.permute.xlu0 0
          %4255 = vperm.xlu0 %4254, %v4075
          %v4256 = vpop.permute.xlu0 %4255
          %4259 = vset.pattern.permute.xlu0 0
          %4260 = vperm.xlu0 %4259, %v4076
          %v4261 = vpop.permute.xlu0 %4260
          %4264 = vset.pattern.permute.xlu0 0
          %4265 = vperm.xlu0 %4264, %v4077
          %v4266 = vpop.permute.xlu0 %4265
          %4269 = vset.pattern.permute.xlu0 0
          %4270 = vperm.xlu0 %4269, %v4078
          %v4271 = vpop.permute.xlu0 %4270
          %4274 = vset.pattern.permute.xlu0 0
          %4275 = vperm.xlu0 %4274, %v4079
          %v4276 = vpop.permute.xlu0 %4275
          %4279 = vset.pattern.permute.xlu0 0
          %4280 = vperm.xlu0 %4279, %v4080
          %v4281 = vpop.permute.xlu0 %4280
          %4284 = vset.pattern.permute.xlu0 0
          %4285 = vperm.xlu0 %4284, %v4081
          %v4286 = vpop.permute.xlu0 %4285
          %4289 = vset.pattern.permute.xlu0 0
          %4290 = vperm.xlu0 %4289, %v4082
          %v4291 = vpop.permute.xlu0 %4290
          %4294 = vset.pattern.permute.xlu0 0
          %4295 = vperm.xlu0 %4294, %v4083
          %v4296 = vpop.permute.xlu0 %4295
          %4299 = vset.pattern.permute.xlu0 0
          %4300 = vperm.xlu0 %4299, %v4084
          %v4301 = vpop.permute.xlu0 %4300
          %4304 = vset.pattern.permute.xlu0 0
          %4305 = vperm.xlu0 %4304, %v4085
          %v4306 = vpop.permute.xlu0 %4305
          %4309 = vset.pattern.permute.xlu0 0
          %4310 = vperm.xlu0 %4309, %v4086
          %v4311 = vpop.permute.xlu0 %4310
          %4314 = vset.pattern.permute.xlu0 0
          %4315 = vperm.xlu0 %4314, %v4087
          %v4316 = vpop.permute.xlu0 %4315
          %v4318 = vlaneseq
          %v4319 = vshrl.u32 %v4318, 7
          %v4320 = vsub.s32 0, %v4319
          %v4321 = vrot.slane %v4237, %v4320
          %v4322 = vmul.f32 %v4241, %v4321
          %v4323 = vmul.f32 %v4246, %v4321
          %v4324 = vmul.f32 %v4251, %v4321
          %v4325 = vmul.f32 %v4256, %v4321
          %v4326 = vmul.f32 %v4261, %v4321
          %v4327 = vmul.f32 %v4266, %v4321
          %v4328 = vmul.f32 %v4271, %v4321
          %v4329 = vmul.f32 %v4276, %v4321
          %v4330 = vmul.f32 %v4281, %v4321
          %v4331 = vmul.f32 %v4286, %v4321
          %v4332 = vmul.f32 %v4291, %v4321
          %v4333 = vmul.f32 %v4296, %v4321
          %v4334 = vmul.f32 %v4301, %v4321
          %v4335 = vmul.f32 %v4306, %v4321
          %v4336 = vmul.f32 %v4311, %v4321
          %v4337 = vmul.f32 %v4316, %v4321
          %v4338 = vadd.f32 %v4221, %v4322
          %v4339 = vadd.f32 %v4222, %v4323
          %v4340 = vadd.f32 %v4223, %v4324
          %v4341 = vadd.f32 %v4224, %v4325
          %v4342 = vadd.f32 %v4225, %v4326
          %v4343 = vadd.f32 %v4226, %v4327
          %v4344 = vadd.f32 %v4227, %v4328
          %v4345 = vadd.f32 %v4228, %v4329
          %v4346 = vadd.f32 %v4229, %v4330
          %v4347 = vadd.f32 %v4230, %v4331
          %v4348 = vadd.f32 %v4231, %v4332
          %v4349 = vadd.f32 %v4232, %v4333
          %v4350 = vadd.f32 %v4233, %v4334
          %v4351 = vadd.f32 %v4234, %v4335
          %v4352 = vadd.f32 %v4235, %v4336
          %v4353 = vadd.f32 %v4236, %v4337
          %v4354 = vld [vmem:[%s3 + $0x2] sm:$0x1]
          %4356 = vset.pattern.permute.xlu0 0
          %4357 = vperm.xlu0 %4356, %v4088
          %v4358 = vpop.permute.xlu0 %4357
          %4361 = vset.pattern.permute.xlu0 0
          %4362 = vperm.xlu0 %4361, %v4089
          %v4363 = vpop.permute.xlu0 %4362
          %4366 = vset.pattern.permute.xlu0 0
          %4367 = vperm.xlu0 %4366, %v4090
          %v4368 = vpop.permute.xlu0 %4367
          %4371 = vset.pattern.permute.xlu0 0
          %4372 = vperm.xlu0 %4371, %v4091
          %v4373 = vpop.permute.xlu0 %4372
          %4376 = vset.pattern.permute.xlu0 0
          %4377 = vperm.xlu0 %4376, %v4092
          %v4378 = vpop.permute.xlu0 %4377
          %4381 = vset.pattern.permute.xlu0 0
          %4382 = vperm.xlu0 %4381, %v4093
          %v4383 = vpop.permute.xlu0 %4382
          %4386 = vset.pattern.permute.xlu0 0
          %4387 = vperm.xlu0 %4386, %v4094
          %v4388 = vpop.permute.xlu0 %4387
          %4391 = vset.pattern.permute.xlu0 0
          %4392 = vperm.xlu0 %4391, %v4095
          %v4393 = vpop.permute.xlu0 %4392
          %4396 = vset.pattern.permute.xlu0 0
          %4397 = vperm.xlu0 %4396, %v4096
          %v4398 = vpop.permute.xlu0 %4397
          %4401 = vset.pattern.permute.xlu0 0
          %4402 = vperm.xlu0 %4401, %v4097
          %v4403 = vpop.permute.xlu0 %4402
          %4406 = vset.pattern.permute.xlu0 0
          %4407 = vperm.xlu0 %4406, %v4098
          %v4408 = vpop.permute.xlu0 %4407
          %4411 = vset.pattern.permute.xlu0 0
          %4412 = vperm.xlu0 %4411, %v4099
          %v4413 = vpop.permute.xlu0 %4412
          %4416 = vset.pattern.permute.xlu0 0
          %4417 = vperm.xlu0 %4416, %v4100
          %v4418 = vpop.permute.xlu0 %4417
          %4421 = vset.pattern.permute.xlu0 0
          %4422 = vperm.xlu0 %4421, %v4101
          %v4423 = vpop.permute.xlu0 %4422
          %4426 = vset.pattern.permute.xlu0 0
          %4427 = vperm.xlu0 %4426, %v4102
          %v4428 = vpop.permute.xlu0 %4427
          %4431 = vset.pattern.permute.xlu0 0
          %4432 = vperm.xlu0 %4431, %v4103
          %v4433 = vpop.permute.xlu0 %4432
          %v4435 = vlaneseq
          %v4436 = vshrl.u32 %v4435, 7
          %v4437 = vsub.s32 0, %v4436
          %v4438 = vrot.slane %v4354, %v4437
          %v4439 = vmul.f32 %v4358, %v4438
          %v4440 = vmul.f32 %v4363, %v4438
          %v4441 = vmul.f32 %v4368, %v4438
          %v4442 = vmul.f32 %v4373, %v4438
          %v4443 = vmul.f32 %v4378, %v4438
          %v4444 = vmul.f32 %v4383, %v4438
          %v4445 = vmul.f32 %v4388, %v4438
          %v4446 = vmul.f32 %v4393, %v4438
          %v4447 = vmul.f32 %v4398, %v4438
          %v4448 = vmul.f32 %v4403, %v4438
          %v4449 = vmul.f32 %v4408, %v4438
          %v4450 = vmul.f32 %v4413, %v4438
          %v4451 = vmul.f32 %v4418, %v4438
          %v4452 = vmul.f32 %v4423, %v4438
          %v4453 = vmul.f32 %v4428, %v4438
          %v4454 = vmul.f32 %v4433, %v4438
          %v4455 = vadd.f32 %v4338, %v4439
          %v4456 = vadd.f32 %v4339, %v4440
          %v4457 = vadd.f32 %v4340, %v4441
          %v4458 = vadd.f32 %v4341, %v4442
          %v4459 = vadd.f32 %v4342, %v4443
          %v4460 = vadd.f32 %v4343, %v4444
          %v4461 = vadd.f32 %v4344, %v4445
          %v4462 = vadd.f32 %v4345, %v4446
          %v4463 = vadd.f32 %v4346, %v4447
          %v4464 = vadd.f32 %v4347, %v4448
          %v4465 = vadd.f32 %v4348, %v4449
          %v4466 = vadd.f32 %v4349, %v4450
          %v4467 = vadd.f32 %v4350, %v4451
          %v4468 = vadd.f32 %v4351, %v4452
          %v4469 = vadd.f32 %v4352, %v4453
          %v4470 = vadd.f32 %v4353, %v4454
          %v4471 = vld [vmem:[%s3 + $0x3] sm:$0x1]
          %4473 = vset.pattern.permute.xlu0 0
          %4474 = vperm.xlu0 %4473, %v4104
          %v4475 = vpop.permute.xlu0 %4474
          %4478 = vset.pattern.permute.xlu0 0
          %4479 = vperm.xlu0 %4478, %v4105
          %v4480 = vpop.permute.xlu0 %4479
          %4483 = vset.pattern.permute.xlu0 0
          %4484 = vperm.xlu0 %4483, %v4106
          %v4485 = vpop.permute.xlu0 %4484
          %4488 = vset.pattern.permute.xlu0 0
          %4489 = vperm.xlu0 %4488, %v4107
          %v4490 = vpop.permute.xlu0 %4489
          %4493 = vset.pattern.permute.xlu0 0
          %4494 = vperm.xlu0 %4493, %v4108
          %v4495 = vpop.permute.xlu0 %4494
          %4498 = vset.pattern.permute.xlu0 0
          %4499 = vperm.xlu0 %4498, %v4109
          %v4500 = vpop.permute.xlu0 %4499
          %4503 = vset.pattern.permute.xlu0 0
          %4504 = vperm.xlu0 %4503, %v4110
          %v4505 = vpop.permute.xlu0 %4504
          %4508 = vset.pattern.permute.xlu0 0
          %4509 = vperm.xlu0 %4508, %v4111
          %v4510 = vpop.permute.xlu0 %4509
          %4513 = vset.pattern.permute.xlu0 0
          %4514 = vperm.xlu0 %4513, %v4112
          %v4515 = vpop.permute.xlu0 %4514
          %4518 = vset.pattern.permute.xlu0 0
          %4519 = vperm.xlu0 %4518, %v4113
          %v4520 = vpop.permute.xlu0 %4519
          %4523 = vset.pattern.permute.xlu0 0
          %4524 = vperm.xlu0 %4523, %v4114
          %v4525 = vpop.permute.xlu0 %4524
          %4528 = vset.pattern.permute.xlu0 0
          %4529 = vperm.xlu0 %4528, %v4115
          %v4530 = vpop.permute.xlu0 %4529
          %4533 = vset.pattern.permute.xlu0 0
          %4534 = vperm.xlu0 %4533, %v4116
          %v4535 = vpop.permute.xlu0 %4534
          %4538 = vset.pattern.permute.xlu0 0
          %4539 = vperm.xlu0 %4538, %v4117
          %v4540 = vpop.permute.xlu0 %4539
          %4543 = vset.pattern.permute.xlu0 0
          %4544 = vperm.xlu0 %4543, %v4118
          %v4545 = vpop.permute.xlu0 %4544
          %4548 = vset.pattern.permute.xlu0 0
          %4549 = vperm.xlu0 %4548, %v4119
          %v4550 = vpop.permute.xlu0 %4549
          %v4552 = vlaneseq
          %v4553 = vshrl.u32 %v4552, 7
          %v4554 = vsub.s32 0, %v4553
          %v4555 = vrot.slane %v4471, %v4554
          %v4556 = vmul.f32 %v4475, %v4555
          %v4557 = vmul.f32 %v4480, %v4555
          %v4558 = vmul.f32 %v4485, %v4555
          %v4559 = vmul.f32 %v4490, %v4555
          %v4560 = vmul.f32 %v4495, %v4555
          %v4561 = vmul.f32 %v4500, %v4555
          %v4562 = vmul.f32 %v4505, %v4555
          %v4563 = vmul.f32 %v4510, %v4555
          %v4564 = vmul.f32 %v4515, %v4555
          %v4565 = vmul.f32 %v4520, %v4555
          %v4566 = vmul.f32 %v4525, %v4555
          %v4567 = vmul.f32 %v4530, %v4555
          %v4568 = vmul.f32 %v4535, %v4555
          %v4569 = vmul.f32 %v4540, %v4555
          %v4570 = vmul.f32 %v4545, %v4555
          %v4571 = vmul.f32 %v4550, %v4555
          %v4572 = vadd.f32 %v4455, %v4556
          %v4573 = vadd.f32 %v4456, %v4557
          %v4574 = vadd.f32 %v4457, %v4558
          %v4575 = vadd.f32 %v4458, %v4559
          %v4576 = vadd.f32 %v4459, %v4560
          %v4577 = vadd.f32 %v4460, %v4561
          %v4578 = vadd.f32 %v4461, %v4562
          %v4579 = vadd.f32 %v4462, %v4563
          %v4580 = vadd.f32 %v4463, %v4564
          %v4581 = vadd.f32 %v4464, %v4565
          %v4582 = vadd.f32 %v4465, %v4566
          %v4583 = vadd.f32 %v4466, %v4567
          %v4584 = vadd.f32 %v4467, %v4568
          %v4585 = vadd.f32 %v4468, %v4569
          %v4586 = vadd.f32 %v4469, %v4570
          %v4587 = vadd.f32 %v4470, %v4571
          %v4588 = vld [vmem:[#allocation4] sm:$0xff]
          %v4589 = vld [vmem:[#allocation4 + $0x8] sm:$0xff]
          %v4590 = vld [vmem:[#allocation4 + $0x10] sm:$0xff]
          %v4591 = vld [vmem:[#allocation4 + $0x18] sm:$0xff]
          %v4592 = vld [vmem:[#allocation4 + $0x20] sm:$0xff]
          %v4593 = vld [vmem:[#allocation4 + $0x28] sm:$0xff]
          %v4594 = vld [vmem:[#allocation4 + $0x30] sm:$0xff]
          %v4595 = vld [vmem:[#allocation4 + $0x38] sm:$0xff]
          %v4596 = vld [vmem:[#allocation4 + $0x40] sm:$0xff]
          %v4597 = vld [vmem:[#allocation4 + $0x48] sm:$0xff]
          %v4598 = vld [vmem:[#allocation4 + $0x50] sm:$0xff]
          %v4599 = vld [vmem:[#allocation4 + $0x58] sm:$0xff]
          %v4600 = vld [vmem:[#allocation4 + $0x60] sm:$0xff]
          %v4601 = vld [vmem:[#allocation4 + $0x68] sm:$0xff]
          %v4602 = vld [vmem:[#allocation4 + $0x70] sm:$0xff]
          %v4603 = vld [vmem:[#allocation4 + $0x78] sm:$0xff]
          %v4604 = vmul.f32 %v4588, %v4572
          %v4605 = vmul.f32 %v4589, %v4573
          %v4606 = vmul.f32 %v4590, %v4574
          %v4607 = vmul.f32 %v4591, %v4575
          %v4608 = vmul.f32 %v4592, %v4576
          %v4609 = vmul.f32 %v4593, %v4577
          %v4610 = vmul.f32 %v4594, %v4578
          %v4611 = vmul.f32 %v4595, %v4579
          %v4612 = vmul.f32 %v4596, %v4580
          %v4613 = vmul.f32 %v4597, %v4581
          %v4614 = vmul.f32 %v4598, %v4582
          %v4615 = vmul.f32 %v4599, %v4583
          %v4616 = vmul.f32 %v4600, %v4584
          %v4617 = vmul.f32 %v4601, %v4585
          %v4618 = vmul.f32 %v4602, %v4586
          %v4619 = vmul.f32 %v4603, %v4587
          %v4620 = vld [vmem:[%s4] sm:$0x1]
          %v4622 = vlaneseq
          %v4623 = vshrl.u32 %v4622, 7
          %v4624 = vsub.s32 0, %v4623
          %v4625 = vrot.slane %v4620, %v4624
          %v4627 = vadd.f32 %v4604, %v4625
          %v4628 = vadd.f32 %v4605, %v4625
          %v4629 = vadd.f32 %v4606, %v4625
          %v4630 = vadd.f32 %v4607, %v4625
          %v4631 = vadd.f32 %v4608, %v4625
          %v4632 = vadd.f32 %v4609, %v4625
          %v4633 = vadd.f32 %v4610, %v4625
          %v4634 = vadd.f32 %v4611, %v4625
          %v4635 = vadd.f32 %v4612, %v4625
          %v4636 = vadd.f32 %v4613, %v4625
          %v4637 = vadd.f32 %v4614, %v4625
          %v4638 = vadd.f32 %v4615, %v4625
          %v4639 = vadd.f32 %v4616, %v4625
          %v4640 = vadd.f32 %v4617, %v4625
          %v4641 = vadd.f32 %v4618, %v4625
          %v4642 = vadd.f32 %v4619, %v4625
          %vm4643 = vcmp.gt.f32.partialorder %v4627, 0.0
          %vm4644 = vcmp.gt.f32.partialorder %v4628, 0.0
          %vm4645 = vcmp.gt.f32.partialorder %v4629, 0.0
          %vm4646 = vcmp.gt.f32.partialorder %v4630, 0.0
          %vm4647 = vcmp.gt.f32.partialorder %v4631, 0.0
          %vm4648 = vcmp.gt.f32.partialorder %v4632, 0.0
          %vm4649 = vcmp.gt.f32.partialorder %v4633, 0.0
          %vm4650 = vcmp.gt.f32.partialorder %v4634, 0.0
          %vm4651 = vcmp.gt.f32.partialorder %v4635, 0.0
          %vm4652 = vcmp.gt.f32.partialorder %v4636, 0.0
          %vm4653 = vcmp.gt.f32.partialorder %v4637, 0.0
          %vm4654 = vcmp.gt.f32.partialorder %v4638, 0.0
          %vm4655 = vcmp.gt.f32.partialorder %v4639, 0.0
          %vm4656 = vcmp.gt.f32.partialorder %v4640, 0.0
          %vm4657 = vcmp.gt.f32.partialorder %v4641, 0.0
          %vm4658 = vcmp.gt.f32.partialorder %v4642, 0.0
          %v4659 = vmin.f32 %v4627, 0.0
          %v4660 = vmin.f32 %v4628, 0.0
          %v4661 = vmin.f32 %v4629, 0.0
          %v4662 = vmin.f32 %v4630, 0.0
          %v4663 = vmin.f32 %v4631, 0.0
          %v4664 = vmin.f32 %v4632, 0.0
          %v4665 = vmin.f32 %v4633, 0.0
          %v4666 = vmin.f32 %v4634, 0.0
          %v4667 = vmin.f32 %v4635, 0.0
          %v4668 = vmin.f32 %v4636, 0.0
          %v4669 = vmin.f32 %v4637, 0.0
          %v4670 = vmin.f32 %v4638, 0.0
          %v4671 = vmin.f32 %v4639, 0.0
          %v4672 = vmin.f32 %v4640, 0.0
          %v4673 = vmin.f32 %v4641, 0.0
          %v4674 = vmin.f32 %v4642, 0.0
          %v4675 = vmul.f32 %v4659, 1.442695
          %v4676 = vpow.pop %v4675
          %v4677 = vmul.f32 %v4660, 1.442695
          %v4678 = vpow.pop %v4677
          %v4679 = vmul.f32 %v4661, 1.442695
          %v4680 = vpow.pop %v4679
          %v4681 = vmul.f32 %v4662, 1.442695
          %v4682 = vpow.pop %v4681
          %v4683 = vmul.f32 %v4663, 1.442695
          %v4684 = vpow.pop %v4683
          %v4685 = vmul.f32 %v4664, 1.442695
          %v4686 = vpow.pop %v4685
          %v4687 = vmul.f32 %v4665, 1.442695
          %v4688 = vpow.pop %v4687
          %v4689 = vmul.f32 %v4666, 1.442695
          %v4690 = vpow.pop %v4689
          %v4691 = vmul.f32 %v4667, 1.442695
          %v4692 = vpow.pop %v4691
          %v4693 = vmul.f32 %v4668, 1.442695
          %v4694 = vpow.pop %v4693
          %v4695 = vmul.f32 %v4669, 1.442695
          %v4696 = vpow.pop %v4695
          %v4697 = vmul.f32 %v4670, 1.442695
          %v4698 = vpow.pop %v4697
          %v4699 = vmul.f32 %v4671, 1.442695
          %v4700 = vpow.pop %v4699
          %v4701 = vmul.f32 %v4672, 1.442695
          %v4702 = vpow.pop %v4701
          %v4703 = vmul.f32 %v4673, 1.442695
          %v4704 = vpow.pop %v4703
          %v4705 = vmul.f32 %v4674, 1.442695
          %v4706 = vpow.pop %v4705
          %v4707 = vsub.f32 %v4676, 1.0
          %v4708 = vsub.f32 %v4678, 1.0
          %v4709 = vsub.f32 %v4680, 1.0
          %v4710 = vsub.f32 %v4682, 1.0
          %v4711 = vsub.f32 %v4684, 1.0
          %v4712 = vsub.f32 %v4686, 1.0
          %v4713 = vsub.f32 %v4688, 1.0
          %v4714 = vsub.f32 %v4690, 1.0
          %v4715 = vsub.f32 %v4692, 1.0
          %v4716 = vsub.f32 %v4694, 1.0
          %v4717 = vsub.f32 %v4696, 1.0
          %v4718 = vsub.f32 %v4698, 1.0
          %v4719 = vsub.f32 %v4700, 1.0
          %v4720 = vsub.f32 %v4702, 1.0
          %v4721 = vsub.f32 %v4704, 1.0
          %v4722 = vsub.f32 %v4706, 1.0
          %v4723 = vsel %vm4643, %v4627, %v4707
          %v4724 = vsel %vm4644, %v4628, %v4708
          %v4725 = vsel %vm4645, %v4629, %v4709
          %v4726 = vsel %vm4646, %v4630, %v4710
          %v4727 = vsel %vm4647, %v4631, %v4711
          %v4728 = vsel %vm4648, %v4632, %v4712
          %v4729 = vsel %vm4649, %v4633, %v4713
          %v4730 = vsel %vm4650, %v4634, %v4714
          %v4731 = vsel %vm4651, %v4635, %v4715
          %v4732 = vsel %vm4652, %v4636, %v4716
          %v4733 = vsel %vm4653, %v4637, %v4717
          %v4734 = vsel %vm4654, %v4638, %v4718
          %v4735 = vsel %vm4655, %v4639, %v4719
          %v4736 = vsel %vm4656, %v4640, %v4720
          %v4737 = vsel %vm4657, %v4641, %v4721
          %v4738 = vsel %vm4658, %v4642, %v4722
          %v4739 = vpack.c.bf16 %v4724, %v4723
          %v4740 = vpack.c.bf16 %v4726, %v4725
          %v4741 = vpack.c.bf16 %v4728, %v4727
          %v4742 = vpack.c.bf16 %v4730, %v4729
          %v4743 = vpack.c.bf16 %v4732, %v4731
          %v4744 = vpack.c.bf16 %v4734, %v4733
          %v4745 = vpack.c.bf16 %v4736, %v4735
          %v4746 = vpack.c.bf16 %v4738, %v4737
          %v4755 = vunpack.c.l.b16 %v4739
          %v4756 = vunpack.c.h.b16 %v4739
          %v4757 = vunpack.c.l.b16 %v4740
          %v4758 = vunpack.c.h.b16 %v4740
          %v4759 = vunpack.c.l.b16 %v4741
          %v4760 = vunpack.c.h.b16 %v4741
          %v4761 = vunpack.c.l.b16 %v4742
          %v4762 = vunpack.c.h.b16 %v4742
          %v4763 = vunpack.c.l.b16 %v4743
          %v4764 = vunpack.c.h.b16 %v4743
          %v4765 = vunpack.c.l.b16 %v4744
          %v4766 = vunpack.c.h.b16 %v4744
          %v4767 = vunpack.c.l.b16 %v4745
          %v4768 = vunpack.c.h.b16 %v4745
          %v4769 = vunpack.c.l.b16 %v4746
          %v4770 = vunpack.c.h.b16 %v4746
          %v4771 = vpack.c.b16 %v4755, %v4755
          %v4772 = vpack.c.b16 %v4756, %v4756
          %v4773 = vpack.c.b16 %v4757, %v4757
          %v4774 = vpack.c.b16 %v4758, %v4758
          %v4775 = vpack.c.b16 %v4759, %v4759
          %v4776 = vpack.c.b16 %v4760, %v4760
          %v4777 = vpack.c.b16 %v4761, %v4761
          %v4778 = vpack.c.b16 %v4762, %v4762
          %v4779 = vpack.c.b16 %v4763, %v4763
          %v4780 = vpack.c.b16 %v4764, %v4764
          %v4781 = vpack.c.b16 %v4765, %v4765
          %v4782 = vpack.c.b16 %v4766, %v4766
          %v4783 = vpack.c.b16 %v4767, %v4767
          %v4784 = vpack.c.b16 %v4768, %v4768
          %v4785 = vpack.c.b16 %v4769, %v4769
          %v4786 = vpack.c.b16 %v4770, %v4770
          %4803 = vst [vmem:[%s381] sm:$0xf] %v4771
          %4804 = vst [vmem:[%s381 + $0x4] sm:$0xf] %v4772
          %4805 = vst [vmem:[%s381 + $0x8] sm:$0xf] %v4773
          %4806 = vst [vmem:[%s381 + $0xc] sm:$0xf] %v4774
          %4807 = vst [vmem:[%s381 + $0x10] sm:$0xf] %v4775
          %4808 = vst [vmem:[%s381 + $0x14] sm:$0xf] %v4776
          %4809 = vst [vmem:[%s381 + $0x18] sm:$0xf] %v4777
          %4810 = vst [vmem:[%s381 + $0x1c] sm:$0xf] %v4778
          %4811 = vst [vmem:[%s381 + $0x20] sm:$0xf] %v4779
          %4812 = vst [vmem:[%s381 + $0x24] sm:$0xf] %v4780
          %4813 = vst [vmem:[%s381 + $0x28] sm:$0xf] %v4781
          %4814 = vst [vmem:[%s381 + $0x2c] sm:$0xf] %v4782
          %4815 = vst [vmem:[%s381 + $0x30] sm:$0xf] %v4783
          %4816 = vst [vmem:[%s381 + $0x34] sm:$0xf] %v4784
          %4817 = vst [vmem:[%s381 + $0x38] sm:$0xf] %v4785
          %4818 = vst [vmem:[%s381 + $0x3c] sm:$0xf] %v4786
        $region94: #{gat_forward.2} parent=81 // pred_fallthru
          _
        %s4819 = smul.u32 16, %s22
        %p4820 = scmp.lt.s32.totalorder %s4819, 31
        %s4821 = scalar_select %p4820, %s4819, 31
        %s4822 = smul.addr %s4821, 4
        %s4823 = scalar_lea.vmem %s7, %s4822
        // Predicated region
        $region95: #{gat_forward.2} parent=81 // pred_check
          %p4824 = pneg %p212
        $region96: #{gat_forward.2} parent=81 // pred_check_branch
          %4826 = sbr.rel (%p4824) target = $region98
        $region97: #{gat_forward.2} parent=81 // pred_region
          %s4827 = smul.u32 16, %s22
        $region98: #{gat_forward.2} parent=81 // pred_fallthru
          _
      $region82: #{gat_forward.2} parent=5 // pred_fallthru
        _
      %p4828 = scmp.le.s32.totalorder 2, %s13
      // Predicated region
      $region99: #{gat_forward.2} parent=5 // pred_check
        %p4829 = pneg %p4828
      $region100: #{gat_forward.2} parent=5 // pred_check_branch
        %4831 = sbr.rel (%p4829) target = $region102
      $region101: #{gat_forward.2} parent=5 // pred_region
        %s4832 = ssub.s32 %s13, 2
        // Predicated region
        $region103: #{gat_forward.2} parent=101 // pred_check
          %p4833 = pneg %p218
        $region104: #{gat_forward.2} parent=101 // pred_check_branch
          %4835 = sbr.rel (%p4833) target = $region106
        $region105: #{gat_forward.2} parent=101 // pred_region
          %s4836 = smul.u32 16, %s24
          %p4837 = scmp.lt.s32.totalorder %s4836, 31
          %s4838 = scalar_select %p4837, %s4836, 31
          %s4839 = smul.addr %s4838, 4
          %s4840 = scalar_lea.vmem %s7, %s4839
        $region106: #{gat_forward.2} parent=101 // pred_fallthru
          _
      $region102: #{gat_forward.2} parent=5 // pred_fallthru
        _
    $region6: #{gat_forward.2} parent=1 // loop_footer
      %s17 = sadd.s32 1, %s13
    $region7: #{gat_forward.2} parent=1 // loop_footer_branch
      %12 = sbr.rel target = $region3
    $region8: #{gat_forward.2} parent=1 // loop_exit
      _

</llo_original>
